<compile_context>
chip_gen: v5e
topology: v5e:2x2
jax: 0.10.0
libtpu: 0.0.40
codegen_flags: <defaults>
</compile_context>

<pallas_src>
import functools
import math

import jax
import jax.numpy as jnp
from jax.experimental import pallas as pl
from jax.experimental.pallas import tpu as pltpu


def _g_spa_kernel(x_ref, w1_ref, w2_ref, o_ref):
    # x_ref : (1, tt, V, C)   per-(batch, frame-tile) input slab, channels last
    # w*_ref: (C, D)          full conv weights (transposed), resident in VMEM
    # o_ref : (1, tt, V, V)   softmax'd spatial affinity matrices
    w1 = w1_ref[...]
    w2 = w2_ref[...]
    tt = x_ref.shape[1]
    hp = jax.lax.Precision.HIGHEST
    for t in range(tt):                      # static unroll; tt kept small
        xt = x_ref[0, t]                     # [V, C], lane-dense (lane = C)
        a = jnp.dot(xt, w1, preferred_element_type=jnp.float32, precision=hp)  # [V, D]
        b = jnp.dot(xt, w2, preferred_element_type=jnp.float32, precision=hp)  # [V, D]
        # g3[v, u] = sum_d a[v, d] * b[u, d]   (A @ B^T on the MXU)
        g3 = jax.lax.dot_general(
            a, b, (((1,), (1,)), ((), ())),
            preferred_element_type=jnp.float32, precision=hp)                   # [V, V]
        # row softmax (max-subtracted, exact division for bitwise-stable check)
        g3 = g3 - jnp.max(g3, axis=-1, keepdims=True)
        e = jnp.exp(g3)
        o_ref[0, t] = (e / jnp.sum(e, axis=-1, keepdims=True)).astype(o_ref.dtype)


@functools.partial(jax.jit, static_argnames=("tt",))
def compute_g_spa(x_nchw, w1, w2, *, tt=None):
    """Fused compute_g_spa forward.

    x_nchw: [N, C, V, T]  (NCHW, exactly as the PyTorch module receives it)
    w1, w2: [D, C]        weights of the two bias-free 1x1 convs
    returns [N, T, V, V]  softmax over the last axis
    """
    N, C, V, T = x_nchw.shape
    D = w1.shape[0]
    if tt is None:
        tt = math.gcd(T, 8)          # frames per grid step; divides T, small unroll
    assert T % tt == 0

    # Single input layout change (channels last); replaces the reference's two
    # full-size output permutes.  Weight transposes are tiny.
    x_tvc = jnp.transpose(x_nchw, (0, 3, 2, 1))          # [N, T, V, C]
    w1_t = jnp.transpose(w1).astype(x_nchw.dtype)        # [C, D]
    w2_t = jnp.transpose(w2).astype(x_nchw.dtype)        # [C, D]

    return pl.pallas_call(
        _g_spa_kernel,
        out_shape=jax.ShapeDtypeStruct((N, T, V, V), x_nchw.dtype),
        grid_spec=pltpu.PrefetchScalarGridSpec(
            num_scalar_prefetch=0,
            grid=(N, T // tt),
            in_specs=[
                pl.BlockSpec((1, tt, V, C), lambda n, tb: (n, tb, 0, 0)),
                pl.BlockSpec((C, D), lambda n, tb: (0, 0)),   # weights stay resident
                pl.BlockSpec((C, D), lambda n, tb: (0, 0)),
            ],
            out_specs=pl.BlockSpec((1, tt, V, V), lambda n, tb: (n, tb, 0, 0)),
        ),
        compiler_params=pltpu.CompilerParams(
            dimension_semantics=("parallel", "parallel"),
        ),
    )(x_tvc, w1_t, w2_t)


if __name__ == "__main__":
    # Small shapes consistent with compute_g_spa: x1 = [batch, dim1, joints, frames].
    N, C, V, T = 2, 64, 16, 8     # dim1 = dim2 = 64 (scaled-down 64*3 default)
    D = 64

    key = jax.random.PRNGKey(0)
    kx, k1, k2 = jax.random.split(key, 3)
    x = jax.random.normal(kx, (N, C, V, T), dtype=jnp.float32)
    bound = 1.0 / jnp.sqrt(jnp.float32(C))   # Conv2d default init range
    w1 = jax.random.uniform(k1, (D, C), jnp.float32, -bound, bound)
    w2 = jax.random.uniform(k2, (D, C), jnp.float32, -bound, bound)

    out = compute_g_spa(x, w1, w2)
    jax.block_until_ready(out)

    # Pure-JAX reference mirroring the PyTorch module exactly.
    hp = jax.lax.Precision.HIGHEST
    g1 = jnp.einsum("oc,ncvt->novt", w1, x, precision=hp)      # conv1x1 #1
    g2 = jnp.einsum("oc,ncvt->novt", w2, x, precision=hp)      # conv1x1 #2
    g1p = jnp.transpose(g1, (0, 3, 2, 1))                      # [N, T, V, D]
    g2p = jnp.transpose(g2, (0, 3, 1, 2))                      # [N, T, D, V]
    g3 = jnp.einsum("ntvd,ntdu->ntvu", g1p, g2p, precision=hp)
    ref = jax.nn.softmax(g3, axis=-1)

    assert out.shape == (N, T, V, V)
    assert jnp.allclose(out, ref, atol=1e-4, rtol=1e-4), float(jnp.max(jnp.abs(out - ref)))
    assert jnp.allclose(jnp.sum(out, axis=-1), 1.0, atol=1e-5)

    print("KERNEL_OK")
</pallas_src>

<mosaic_0001>
module attributes {stable_mosaic.version = 11 : i64} {
  func.func @_g_spa_kernel(%arg0: i32, %arg1: i32, %arg2: memref<1x8x16x64xf32, #tpu.memory_space<vmem>>, %arg3: memref<64x64xf32, #tpu.memory_space<vmem>>, %arg4: memref<64x64xf32, #tpu.memory_space<vmem>>, %arg5: memref<1x8x16x16xf32, #tpu.memory_space<vmem>>) attributes {dimension_semantics = [#tpu.dimension_semantics<parallel>, #tpu.dimension_semantics<parallel>], iteration_bounds = array<i64: 2, 1>, scalar_prefetch = 0 : i64, scratch_operands = 0 : i64, tpu.core_type = #tpu.core_type<tc>, window_params = [{transform_indices = @transform_0, window_bounds = array<i64: 1, 8, 16, 64>}, {pipeline_mode = #tpu.pipeline_mode<synchronous>, transform_indices = @transform_1, window_bounds = array<i64: 64, 64>}, {pipeline_mode = #tpu.pipeline_mode<synchronous>, transform_indices = @transform_2, window_bounds = array<i64: 64, 64>}, {transform_indices = @transform_3, window_bounds = array<i64: 1, 8, 16, 16>}]} {
    %c0 = arith.constant 0 : index
    %c0_0 = arith.constant 0 : index
    %0 = vector.load %arg3[%c0, %c0_0] : memref<64x64xf32, #tpu.memory_space<vmem>>, vector<64x64xf32>
    %c0_1 = arith.constant 0 : index
    %c0_2 = arith.constant 0 : index
    %1 = vector.load %arg4[%c0_1, %c0_2] : memref<64x64xf32, #tpu.memory_space<vmem>>, vector<64x64xf32>
    %c0_3 = arith.constant 0 : index
    %c0_4 = arith.constant 0 : index
    %c0_5 = arith.constant 0 : index
    %c0_6 = arith.constant 0 : index
    %2 = vector.load %arg2[%c0_3, %c0_4, %c0_5, %c0_6] : memref<1x8x16x64xf32, #tpu.memory_space<vmem>>, vector<1x1x16x64xf32>
    %3 = vector.shape_cast %2 : vector<1x1x16x64xf32> to vector<16x64xf32>
    %cst = arith.constant dense<0.000000e+00> : vector<16x64xf32>
    %4 = tpu.matmul %3, %0, %cst {dimension_numbers = #tpu.dot_dimension_numbers<[1], [0], [0], [1], [0, 0, 1, 1], [], []>, precision = #tpu.contract_precision<fp32>} : vector<16x64xf32>, vector<64x64xf32>, vector<16x64xf32> -> vector<16x64xf32>
    %cst_7 = arith.constant dense<0.000000e+00> : vector<16x64xf32>
    %5 = tpu.matmul %3, %1, %cst_7 {dimension_numbers = #tpu.dot_dimension_numbers<[1], [0], [0], [1], [0, 0, 1, 1], [], []>, precision = #tpu.contract_precision<fp32>} : vector<16x64xf32>, vector<64x64xf32>, vector<16x64xf32> -> vector<16x64xf32>
    %cst_8 = arith.constant dense<0.000000e+00> : vector<16x16xf32>
    %6 = tpu.matmul %4, %5, %cst_8 {dimension_numbers = #tpu.dot_dimension_numbers<[1], [1], [0], [0], [0, 0, 1, 0], [], []>, precision = #tpu.contract_precision<fp32>} : vector<16x64xf32>, vector<16x64xf32>, vector<16x16xf32> -> vector<16x16xf32>
    %cst_9 = arith.constant dense<0xFF800000> : vector<16xf32>
    %7 = vector.multi_reduction <maximumf>, %6, %cst_9 [1] : vector<16x16xf32> to vector<16xf32>
    %8 = vector.shape_cast %7 : vector<16xf32> to vector<16x1xf32>
    %9 = vector.broadcast %8 : vector<16x1xf32> to vector<16x16xf32>
    %10 = arith.subf %6, %9 : vector<16x16xf32>
    %11 = math.exp %10 : vector<16x16xf32>
    %cst_10 = arith.constant dense<0.000000e+00> : vector<16xf32>
    %12 = vector.multi_reduction <add>, %11, %cst_10 [1] : vector<16x16xf32> to vector<16xf32>
    %13 = vector.shape_cast %12 : vector<16xf32> to vector<16x1xf32>
    %14 = vector.broadcast %13 : vector<16x1xf32> to vector<16x16xf32>
    %15 = arith.divf %11, %14 : vector<16x16xf32>
    %c0_11 = arith.constant 0 : index
    %c0_12 = arith.constant 0 : index
    %c0_13 = arith.constant 0 : index
    %c0_14 = arith.constant 0 : index
    %16 = vector.load %arg5[%c0_11, %c0_12, %c0_13, %c0_14] : memref<1x8x16x16xf32, #tpu.memory_space<vmem>>, vector<1x1x16x16xf32>
    %17 = vector.shape_cast %16 : vector<1x1x16x16xf32> to vector<16x16xf32>
    %18 = vector.shape_cast %15 : vector<16x16xf32> to vector<1x1x16x16xf32>
    tpu.vector_store %arg5[%c0_11, %c0_12, %c0_13, %c0_14], %18 {strides = array<i32>} : memref<1x8x16x16xf32, #tpu.memory_space<vmem>>, vector<1x1x16x16xf32>,
    %c0_15 = arith.constant 0 : index
    %c1 = arith.constant 1 : index
    %c0_16 = arith.constant 0 : index
    %c0_17 = arith.constant 0 : index
    %19 = vector.load %arg2[%c0_15, %c1, %c0_16, %c0_17] : memref<1x8x16x64xf32, #tpu.memory_space<vmem>>, vector<1x1x16x64xf32>
    %20 = vector.shape_cast %19 : vector<1x1x16x64xf32> to vector<16x64xf32>
    %cst_18 = arith.constant dense<0.000000e+00> : vector<16x64xf32>
    %21 = tpu.matmul %20, %0, %cst_18 {dimension_numbers = #tpu.dot_dimension_numbers<[1], [0], [0], [1], [0, 0, 1, 1], [], []>, precision = #tpu.contract_precision<fp32>} : vector<16x64xf32>, vector<64x64xf32>, vector<16x64xf32> -> vector<16x64xf32>
    %cst_19 = arith.constant dense<0.000000e+00> : vector<16x64xf32>
    %22 = tpu.matmul %20, %1, %cst_19 {dimension_numbers = #tpu.dot_dimension_numbers<[1], [0], [0], [1], [0, 0, 1, 1], [], []>, precision = #tpu.contract_precision<fp32>} : vector<16x64xf32>, vector<64x64xf32>, vector<16x64xf32> -> vector<16x64xf32>
    %cst_20 = arith.constant dense<0.000000e+00> : vector<16x16xf32>
    %23 = tpu.matmul %21, %22, %cst_20 {dimension_numbers = #tpu.dot_dimension_numbers<[1], [1], [0], [0], [0, 0, 1, 0], [], []>, precision = #tpu.contract_precision<fp32>} : vector<16x64xf32>, vector<16x64xf32>, vector<16x16xf32> -> vector<16x16xf32>
    %cst_21 = arith.constant dense<0xFF800000> : vector<16xf32>
    %24 = vector.multi_reduction <maximumf>, %23, %cst_21 [1] : vector<16x16xf32> to vector<16xf32>
    %25 = vector.shape_cast %24 : vector<16xf32> to vector<16x1xf32>
    %26 = vector.broadcast %25 : vector<16x1xf32> to vector<16x16xf32>
    %27 = arith.subf %23, %26 : vector<16x16xf32>
    %28 = math.exp %27 : vector<16x16xf32>
    %cst_22 = arith.constant dense<0.000000e+00> : vector<16xf32>
    %29 = vector.multi_reduction <add>, %28, %cst_22 [1] : vector<16x16xf32> to vector<16xf32>
    %30 = vector.shape_cast %29 : vector<16xf32> to vector<16x1xf32>
    %31 = vector.broadcast %30 : vector<16x1xf32> to vector<16x16xf32>
    %32 = arith.divf %28, %31 : vector<16x16xf32>
    %c0_23 = arith.constant 0 : index
    %c1_24 = arith.constant 1 : index
    %c0_25 = arith.constant 0 : index
    %c0_26 = arith.constant 0 : index
    %33 = vector.load %arg5[%c0_23, %c1_24, %c0_25, %c0_26] : memref<1x8x16x16xf32, #tpu.memory_space<vmem>>, vector<1x1x16x16xf32>
    %34 = vector.shape_cast %33 : vector<1x1x16x16xf32> to vector<16x16xf32>
    %35 = vector.shape_cast %32 : vector<16x16xf32> to vector<1x1x16x16xf32>
    tpu.vector_store %arg5[%c0_23, %c1_24, %c0_25, %c0_26], %35 {strides = array<i32>} : memref<1x8x16x16xf32, #tpu.memory_space<vmem>>, vector<1x1x16x16xf32>,
    %c0_27 = arith.constant 0 : index
    %c2 = arith.constant 2 : index
    %c0_28 = arith.constant 0 : index
    %c0_29 = arith.constant 0 : index
    %36 = vector.load %arg2[%c0_27, %c2, %c0_28, %c0_29] : memref<1x8x16x64xf32, #tpu.memory_space<vmem>>, vector<1x1x16x64xf32>
    %37 = vector.shape_cast %36 : vector<1x1x16x64xf32> to vector<16x64xf32>
    %cst_30 = arith.constant dense<0.000000e+00> : vector<16x64xf32>
    %38 = tpu.matmul %37, %0, %cst_30 {dimension_numbers = #tpu.dot_dimension_numbers<[1], [0], [0], [1], [0, 0, 1, 1], [], []>, precision = #tpu.contract_precision<fp32>} : vector<16x64xf32>, vector<64x64xf32>, vector<16x64xf32> -> vector<16x64xf32>
    %cst_31 = arith.constant dense<0.000000e+00> : vector<16x64xf32>
    %39 = tpu.matmul %37, %1, %cst_31 {dimension_numbers = #tpu.dot_dimension_numbers<[1], [0], [0], [1], [0, 0, 1, 1], [], []>, precision = #tpu.contract_precision<fp32>} : vector<16x64xf32>, vector<64x64xf32>, vector<16x64xf32> -> vector<16x64xf32>
    %cst_32 = arith.constant dense<0.000000e+00> : vector<16x16xf32>
    %40 = tpu.matmul %38, %39, %cst_32 {dimension_numbers = #tpu.dot_dimension_numbers<[1], [1], [0], [0], [0, 0, 1, 0], [], []>, precision = #tpu.contract_precision<fp32>} : vector<16x64xf32>, vector<16x64xf32>, vector<16x16xf32> -> vector<16x16xf32>
    %cst_33 = arith.constant dense<0xFF800000> : vector<16xf32>
    %41 = vector.multi_reduction <maximumf>, %40, %cst_33 [1] : vector<16x16xf32> to vector<16xf32>
    %42 = vector.shape_cast %41 : vector<16xf32> to vector<16x1xf32>
    %43 = vector.broadcast %42 : vector<16x1xf32> to vector<16x16xf32>
    %44 = arith.subf %40, %43 : vector<16x16xf32>
    %45 = math.exp %44 : vector<16x16xf32>
    %cst_34 = arith.constant dense<0.000000e+00> : vector<16xf32>
    %46 = vector.multi_reduction <add>, %45, %cst_34 [1] : vector<16x16xf32> to vector<16xf32>
    %47 = vector.shape_cast %46 : vector<16xf32> to vector<16x1xf32>
    %48 = vector.broadcast %47 : vector<16x1xf32> to vector<16x16xf32>
    %49 = arith.divf %45, %48 : vector<16x16xf32>
    %c0_35 = arith.constant 0 : index
    %c2_36 = arith.constant 2 : index
    %c0_37 = arith.constant 0 : index
    %c0_38 = arith.constant 0 : index
    %50 = vector.load %arg5[%c0_35, %c2_36, %c0_37, %c0_38] : memref<1x8x16x16xf32, #tpu.memory_space<vmem>>, vector<1x1x16x16xf32>
    %51 = vector.shape_cast %50 : vector<1x1x16x16xf32> to vector<16x16xf32>
    %52 = vector.shape_cast %49 : vector<16x16xf32> to vector<1x1x16x16xf32>
    tpu.vector_store %arg5[%c0_35, %c2_36, %c0_37, %c0_38], %52 {strides = array<i32>} : memref<1x8x16x16xf32, #tpu.memory_space<vmem>>, vector<1x1x16x16xf32>,
    %c0_39 = arith.constant 0 : index
    %c3 = arith.constant 3 : index
    %c0_40 = arith.constant 0 : index
    %c0_41 = arith.constant 0 : index
    %53 = vector.load %arg2[%c0_39, %c3, %c0_40, %c0_41] : memref<1x8x16x64xf32, #tpu.memory_space<vmem>>, vector<1x1x16x64xf32>
    %54 = vector.shape_cast %53 : vector<1x1x16x64xf32> to vector<16x64xf32>
    %cst_42 = arith.constant dense<0.000000e+00> : vector<16x64xf32>
    %55 = tpu.matmul %54, %0, %cst_42 {dimension_numbers = #tpu.dot_dimension_numbers<[1], [0], [0], [1], [0, 0, 1, 1], [], []>, precision = #tpu.contract_precision<fp32>} : vector<16x64xf32>, vector<64x64xf32>, vector<16x64xf32> -> vector<16x64xf32>
    %cst_43 = arith.constant dense<0.000000e+00> : vector<16x64xf32>
    %56 = tpu.matmul %54, %1, %cst_43 {dimension_numbers = #tpu.dot_dimension_numbers<[1], [0], [0], [1], [0, 0, 1, 1], [], []>, precision = #tpu.contract_precision<fp32>} : vector<16x64xf32>, vector<64x64xf32>, vector<16x64xf32> -> vector<16x64xf32>
    %cst_44 = arith.constant dense<0.000000e+00> : vector<16x16xf32>
    %57 = tpu.matmul %55, %56, %cst_44 {dimension_numbers = #tpu.dot_dimension_numbers<[1], [1], [0], [0], [0, 0, 1, 0], [], []>, precision = #tpu.contract_precision<fp32>} : vector<16x64xf32>, vector<16x64xf32>, vector<16x16xf32> -> vector<16x16xf32>
    %cst_45 = arith.constant dense<0xFF800000> : vector<16xf32>
    %58 = vector.multi_reduction <maximumf>, %57, %cst_45 [1] : vector<16x16xf32> to vector<16xf32>
    %59 = vector.shape_cast %58 : vector<16xf32> to vector<16x1xf32>
    %60 = vector.broadcast %59 : vector<16x1xf32> to vector<16x16xf32>
    %61 = arith.subf %57, %60 : vector<16x16xf32>
    %62 = math.exp %61 : vector<16x16xf32>
    %cst_46 = arith.constant dense<0.000000e+00> : vector<16xf32>
    %63 = vector.multi_reduction <add>, %62, %cst_46 [1] : vector<16x16xf32> to vector<16xf32>
    %64 = vector.shape_cast %63 : vector<16xf32> to vector<16x1xf32>
    %65 = vector.broadcast %64 : vector<16x1xf32> to vector<16x16xf32>
    %66 = arith.divf %62, %65 : vector<16x16xf32>
    %c0_47 = arith.constant 0 : index
    %c3_48 = arith.constant 3 : index
    %c0_49 = arith.constant 0 : index
    %c0_50 = arith.constant 0 : index
    %67 = vector.load %arg5[%c0_47, %c3_48, %c0_49, %c0_50] : memref<1x8x16x16xf32, #tpu.memory_space<vmem>>, vector<1x1x16x16xf32>
    %68 = vector.shape_cast %67 : vector<1x1x16x16xf32> to vector<16x16xf32>
    %69 = vector.shape_cast %66 : vector<16x16xf32> to vector<1x1x16x16xf32>
    tpu.vector_store %arg5[%c0_47, %c3_48, %c0_49, %c0_50], %69 {strides = array<i32>} : memref<1x8x16x16xf32, #tpu.memory_space<vmem>>, vector<1x1x16x16xf32>,
    %c0_51 = arith.constant 0 : index
    %c4 = arith.constant 4 : index
    %c0_52 = arith.constant 0 : index
    %c0_53 = arith.constant 0 : index
    %70 = vector.load %arg2[%c0_51, %c4, %c0_52, %c0_53] : memref<1x8x16x64xf32, #tpu.memory_space<vmem>>, vector<1x1x16x64xf32>
    %71 = vector.shape_cast %70 : vector<1x1x16x64xf32> to vector<16x64xf32>
    %cst_54 = arith.constant dense<0.000000e+00> : vector<16x64xf32>
    %72 = tpu.matmul %71, %0, %cst_54 {dimension_numbers = #tpu.dot_dimension_numbers<[1], [0], [0], [1], [0, 0, 1, 1], [], []>, precision = #tpu.contract_precision<fp32>} : vector<16x64xf32>, vector<64x64xf32>, vector<16x64xf32> -> vector<16x64xf32>
    %cst_55 = arith.constant dense<0.000000e+00> : vector<16x64xf32>
    %73 = tpu.matmul %71, %1, %cst_55 {dimension_numbers = #tpu.dot_dimension_numbers<[1], [0], [0], [1], [0, 0, 1, 1], [], []>, precision = #tpu.contract_precision<fp32>} : vector<16x64xf32>, vector<64x64xf32>, vector<16x64xf32> -> vector<16x64xf32>
    %cst_56 = arith.constant dense<0.000000e+00> : vector<16x16xf32>
    %74 = tpu.matmul %72, %73, %cst_56 {dimension_numbers = #tpu.dot_dimension_numbers<[1], [1], [0], [0], [0, 0, 1, 0], [], []>, precision = #tpu.contract_precision<fp32>} : vector<16x64xf32>, vector<16x64xf32>, vector<16x16xf32> -> vector<16x16xf32>
    %cst_57 = arith.constant dense<0xFF800000> : vector<16xf32>
    %75 = vector.multi_reduction <maximumf>, %74, %cst_57 [1] : vector<16x16xf32> to vector<16xf32>
    %76 = vector.shape_cast %75 : vector<16xf32> to vector<16x1xf32>
    %77 = vector.broadcast %76 : vector<16x1xf32> to vector<16x16xf32>
    %78 = arith.subf %74, %77 : vector<16x16xf32>
    %79 = math.exp %78 : vector<16x16xf32>
    %cst_58 = arith.constant dense<0.000000e+00> : vector<16xf32>
    %80 = vector.multi_reduction <add>, %79, %cst_58 [1] : vector<16x16xf32> to vector<16xf32>
    %81 = vector.shape_cast %80 : vector<16xf32> to vector<16x1xf32>
    %82 = vector.broadcast %81 : vector<16x1xf32> to vector<16x16xf32>
    %83 = arith.divf %79, %82 : vector<16x16xf32>
    %c0_59 = arith.constant 0 : index
    %c4_60 = arith.constant 4 : index
    %c0_61 = arith.constant 0 : index
    %c0_62 = arith.constant 0 : index
    %84 = vector.load %arg5[%c0_59, %c4_60, %c0_61, %c0_62] : memref<1x8x16x16xf32, #tpu.memory_space<vmem>>, vector<1x1x16x16xf32>
    %85 = vector.shape_cast %84 : vector<1x1x16x16xf32> to vector<16x16xf32>
    %86 = vector.shape_cast %83 : vector<16x16xf32> to vector<1x1x16x16xf32>
    tpu.vector_store %arg5[%c0_59, %c4_60, %c0_61, %c0_62], %86 {strides = array<i32>} : memref<1x8x16x16xf32, #tpu.memory_space<vmem>>, vector<1x1x16x16xf32>,
    %c0_63 = arith.constant 0 : index
    %c5 = arith.constant 5 : index
    %c0_64 = arith.constant 0 : index
    %c0_65 = arith.constant 0 : index
    %87 = vector.load %arg2[%c0_63, %c5, %c0_64, %c0_65] : memref<1x8x16x64xf32, #tpu.memory_space<vmem>>, vector<1x1x16x64xf32>
    %88 = vector.shape_cast %87 : vector<1x1x16x64xf32> to vector<16x64xf32>
    %cst_66 = arith.constant dense<0.000000e+00> : vector<16x64xf32>
    %89 = tpu.matmul %88, %0, %cst_66 {dimension_numbers = #tpu.dot_dimension_numbers<[1], [0], [0], [1], [0, 0, 1, 1], [], []>, precision = #tpu.contract_precision<fp32>} : vector<16x64xf32>, vector<64x64xf32>, vector<16x64xf32> -> vector<16x64xf32>
    %cst_67 = arith.constant dense<0.000000e+00> : vector<16x64xf32>
    %90 = tpu.matmul %88, %1, %cst_67 {dimension_numbers = #tpu.dot_dimension_numbers<[1], [0], [0], [1], [0, 0, 1, 1], [], []>, precision = #tpu.contract_precision<fp32>} : vector<16x64xf32>, vector<64x64xf32>, vector<16x64xf32> -> vector<16x64xf32>
    %cst_68 = arith.constant dense<0.000000e+00> : vector<16x16xf32>
    %91 = tpu.matmul %89, %90, %cst_68 {dimension_numbers = #tpu.dot_dimension_numbers<[1], [1], [0], [0], [0, 0, 1, 0], [], []>, precision = #tpu.contract_precision<fp32>} : vector<16x64xf32>, vector<16x64xf32>, vector<16x16xf32> -> vector<16x16xf32>
    %cst_69 = arith.constant dense<0xFF800000> : vector<16xf32>
    %92 = vector.multi_reduction <maximumf>, %91, %cst_69 [1] : vector<16x16xf32> to vector<16xf32>
    %93 = vector.shape_cast %92 : vector<16xf32> to vector<16x1xf32>
    %94 = vector.broadcast %93 : vector<16x1xf32> to vector<16x16xf32>
    %95 = arith.subf %91, %94 : vector<16x16xf32>
    %96 = math.exp %95 : vector<16x16xf32>
    %cst_70 = arith.constant dense<0.000000e+00> : vector<16xf32>
    %97 = vector.multi_reduction <add>, %96, %cst_70 [1] : vector<16x16xf32> to vector<16xf32>
    %98 = vector.shape_cast %97 : vector<16xf32> to vector<16x1xf32>
    %99 = vector.broadcast %98 : vector<16x1xf32> to vector<16x16xf32>
    %100 = arith.divf %96, %99 : vector<16x16xf32>
    %c0_71 = arith.constant 0 : index
    %c5_72 = arith.constant 5 : index
    %c0_73 = arith.constant 0 : index
    %c0_74 = arith.constant 0 : index
    %101 = vector.load %arg5[%c0_71, %c5_72, %c0_73, %c0_74] : memref<1x8x16x16xf32, #tpu.memory_space<vmem>>, vector<1x1x16x16xf32>
    %102 = vector.shape_cast %101 : vector<1x1x16x16xf32> to vector<16x16xf32>
    %103 = vector.shape_cast %100 : vector<16x16xf32> to vector<1x1x16x16xf32>
    tpu.vector_store %arg5[%c0_71, %c5_72, %c0_73, %c0_74], %103 {strides = array<i32>} : memref<1x8x16x16xf32, #tpu.memory_space<vmem>>, vector<1x1x16x16xf32>,
    %c0_75 = arith.constant 0 : index
    %c6 = arith.constant 6 : index
    %c0_76 = arith.constant 0 : index
    %c0_77 = arith.constant 0 : index
    %104 = vector.load %arg2[%c0_75, %c6, %c0_76, %c0_77] : memref<1x8x16x64xf32, #tpu.memory_space<vmem>>, vector<1x1x16x64xf32>
    %105 = vector.shape_cast %104 : vector<1x1x16x64xf32> to vector<16x64xf32>
    %cst_78 = arith.constant dense<0.000000e+00> : vector<16x64xf32>
    %106 = tpu.matmul %105, %0, %cst_78 {dimension_numbers = #tpu.dot_dimension_numbers<[1], [0], [0], [1], [0, 0, 1, 1], [], []>, precision = #tpu.contract_precision<fp32>} : vector<16x64xf32>, vector<64x64xf32>, vector<16x64xf32> -> vector<16x64xf32>
    %cst_79 = arith.constant dense<0.000000e+00> : vector<16x64xf32>
    %107 = tpu.matmul %105, %1, %cst_79 {dimension_numbers = #tpu.dot_dimension_numbers<[1], [0], [0], [1], [0, 0, 1, 1], [], []>, precision = #tpu.contract_precision<fp32>} : vector<16x64xf32>, vector<64x64xf32>, vector<16x64xf32> -> vector<16x64xf32>
    %cst_80 = arith.constant dense<0.000000e+00> : vector<16x16xf32>
    %108 = tpu.matmul %106, %107, %cst_80 {dimension_numbers = #tpu.dot_dimension_numbers<[1], [1], [0], [0], [0, 0, 1, 0], [], []>, precision = #tpu.contract_precision<fp32>} : vector<16x64xf32>, vector<16x64xf32>, vector<16x16xf32> -> vector<16x16xf32>
    %cst_81 = arith.constant dense<0xFF800000> : vector<16xf32>
    %109 = vector.multi_reduction <maximumf>, %108, %cst_81 [1] : vector<16x16xf32> to vector<16xf32>
    %110 = vector.shape_cast %109 : vector<16xf32> to vector<16x1xf32>
    %111 = vector.broadcast %110 : vector<16x1xf32> to vector<16x16xf32>
    %112 = arith.subf %108, %111 : vector<16x16xf32>
    %113 = math.exp %112 : vector<16x16xf32>
    %cst_82 = arith.constant dense<0.000000e+00> : vector<16xf32>
    %114 = vector.multi_reduction <add>, %113, %cst_82 [1] : vector<16x16xf32> to vector<16xf32>
    %115 = vector.shape_cast %114 : vector<16xf32> to vector<16x1xf32>
    %116 = vector.broadcast %115 : vector<16x1xf32> to vector<16x16xf32>
    %117 = arith.divf %113, %116 : vector<16x16xf32>
    %c0_83 = arith.constant 0 : index
    %c6_84 = arith.constant 6 : index
    %c0_85 = arith.constant 0 : index
    %c0_86 = arith.constant 0 : index
    %118 = vector.load %arg5[%c0_83, %c6_84, %c0_85, %c0_86] : memref<1x8x16x16xf32, #tpu.memory_space<vmem>>, vector<1x1x16x16xf32>
    %119 = vector.shape_cast %118 : vector<1x1x16x16xf32> to vector<16x16xf32>
    %120 = vector.shape_cast %117 : vector<16x16xf32> to vector<1x1x16x16xf32>
    tpu.vector_store %arg5[%c0_83, %c6_84, %c0_85, %c0_86], %120 {strides = array<i32>} : memref<1x8x16x16xf32, #tpu.memory_space<vmem>>, vector<1x1x16x16xf32>,
    %c0_87 = arith.constant 0 : index
    %c7 = arith.constant 7 : index
    %c0_88 = arith.constant 0 : index
    %c0_89 = arith.constant 0 : index
    %121 = vector.load %arg2[%c0_87, %c7, %c0_88, %c0_89] : memref<1x8x16x64xf32, #tpu.memory_space<vmem>>, vector<1x1x16x64xf32>
    %122 = vector.shape_cast %121 : vector<1x1x16x64xf32> to vector<16x64xf32>
    %cst_90 = arith.constant dense<0.000000e+00> : vector<16x64xf32>
    %123 = tpu.matmul %122, %0, %cst_90 {dimension_numbers = #tpu.dot_dimension_numbers<[1], [0], [0], [1], [0, 0, 1, 1], [], []>, precision = #tpu.contract_precision<fp32>} : vector<16x64xf32>, vector<64x64xf32>, vector<16x64xf32> -> vector<16x64xf32>
    %cst_91 = arith.constant dense<0.000000e+00> : vector<16x64xf32>
    %124 = tpu.matmul %122, %1, %cst_91 {dimension_numbers = #tpu.dot_dimension_numbers<[1], [0], [0], [1], [0, 0, 1, 1], [], []>, precision = #tpu.contract_precision<fp32>} : vector<16x64xf32>, vector<64x64xf32>, vector<16x64xf32> -> vector<16x64xf32>
    %cst_92 = arith.constant dense<0.000000e+00> : vector<16x16xf32>
    %125 = tpu.matmul %123, %124, %cst_92 {dimension_numbers = #tpu.dot_dimension_numbers<[1], [1], [0], [0], [0, 0, 1, 0], [], []>, precision = #tpu.contract_precision<fp32>} : vector<16x64xf32>, vector<16x64xf32>, vector<16x16xf32> -> vector<16x16xf32>
    %cst_93 = arith.constant dense<0xFF800000> : vector<16xf32>
    %126 = vector.multi_reduction <maximumf>, %125, %cst_93 [1] : vector<16x16xf32> to vector<16xf32>
    %127 = vector.shape_cast %126 : vector<16xf32> to vector<16x1xf32>
    %128 = vector.broadcast %127 : vector<16x1xf32> to vector<16x16xf32>
    %129 = arith.subf %125, %128 : vector<16x16xf32>
    %130 = math.exp %129 : vector<16x16xf32>
    %cst_94 = arith.constant dense<0.000000e+00> : vector<16xf32>
    %131 = vector.multi_reduction <add>, %130, %cst_94 [1] : vector<16x16xf32> to vector<16xf32>
    %132 = vector.shape_cast %131 : vector<16xf32> to vector<16x1xf32>
    %133 = vector.broadcast %132 : vector<16x1xf32> to vector<16x16xf32>
    %134 = arith.divf %130, %133 : vector<16x16xf32>
    %c0_95 = arith.constant 0 : index
    %c7_96 = arith.constant 7 : index
    %c0_97 = arith.constant 0 : index
    %c0_98 = arith.constant 0 : index
    %135 = vector.load %arg5[%c0_95, %c7_96, %c0_97, %c0_98] : memref<1x8x16x16xf32, #tpu.memory_space<vmem>>, vector<1x1x16x16xf32>
    %136 = vector.shape_cast %135 : vector<1x1x16x16xf32> to vector<16x16xf32>
    %137 = vector.shape_cast %134 : vector<16x16xf32> to vector<1x1x16x16xf32>
    tpu.vector_store %arg5[%c0_95, %c7_96, %c0_97, %c0_98], %137 {strides = array<i32>} : memref<1x8x16x16xf32, #tpu.memory_space<vmem>>, vector<1x1x16x16xf32>,
    return
  }
  func.func @transform_0(%arg0: i32, %arg1: i32) -> (i32, i32, i32, i32) {
    %c0_i32 = arith.constant 0 : i32
    %c0_i32_0 = arith.constant 0 : i32
    %c0_i32_1 = arith.constant 0 : i32
    return %arg0, %arg1, %c0_i32, %c0_i32_0 : i32, i32, i32, i32
  }
  func.func @transform_1(%arg0: i32, %arg1: i32) -> (i32, i32) {
    %c0_i32 = arith.constant 0 : i32
    %c0_i32_0 = arith.constant 0 : i32
    %c0_i32_1 = arith.constant 0 : i32
    return %c0_i32, %c0_i32_0 : i32, i32
  }
  func.func @transform_2(%arg0: i32, %arg1: i32) -> (i32, i32) {
    %c0_i32 = arith.constant 0 : i32
    %c0_i32_0 = arith.constant 0 : i32
    %c0_i32_1 = arith.constant 0 : i32
    return %c0_i32, %c0_i32_0 : i32, i32
  }
  func.func @transform_3(%arg0: i32, %arg1: i32) -> (i32, i32, i32, i32) {
    %c0_i32 = arith.constant 0 : i32
    %c0_i32_0 = arith.constant 0 : i32
    %c0_i32_1 = arith.constant 0 : i32
    return %arg0, %arg1, %c0_i32, %c0_i32_0 : i32, i32, i32, i32
  }
}

</mosaic_0001>

<llo_original>
// kernel: compute_g_spa.1
$region0: #{compute_g_spa.1}
  #allocation0 [shape = 'u32[]', space=smem, size = 0x4, offset = 0x4, fixed_abs, tag = 'smem constant byte address 0x4 - core index']
  #allocation1 [shape = 'u32[72,128]{1,0:T(1,128)}', space=vmem, size = 0x9000, scoped, tag = 'internal scratch']
  %s0 = inlined_call_operand.vmem [shape: f32[2,8,16,64], index: 0, kind: input, shape index: {}]
  %s1 = inlined_call_operand.vmem [shape: f32[64,64], index: 1, kind: input, shape index: {}]
  %s2 = inlined_call_operand.vmem [shape: f32[64,64], index: 2, kind: input, shape index: {}]
  %s3 = inlined_call_operand.hbm [shape: f32[2,8,16,16], index: 3, kind: output, shape index: {}]
  %s4 = sld [smem:[#allocation0]]
  $region45: #{compute_g_spa.1} parent=0
    _
  %s6 = ssub.s32 1, %s4
  %s7 = scalar_select 0, %s6, %s4
  $region1: #{compute_g_spa.1} parent=0
    #allocation2 [shape = 'u8[131072]{0}', space=vmem, size = 0x20000, scoped, tag = 'output window, operand 0']
    #allocation3 [shape = 's32[2]{0}', space=sflag, size = 0x8, scoped, tag = 'scoped memory for compute_g_spa.1']
    %8 = vsyncpa [#allocation3], 0
    %s9 = scalar_lea.sflag [#allocation3], 1
    %10 = vsyncpa %s9, 0
    loop: start=0, step=1, limit=4
    $region2: #{compute_g_spa.1} parent=1 // loop_pre_header
      _
    $region3: #{compute_g_spa.1} parent=1 // loop_header
      %s12 = sphi 0, %s16
      %p13 = scmp.ge.s32.totalorder %s12, 4
      %s19 = sphi 0, %s31
      %s20 = sphi 0, %s27
      %s21 = sphi 0, %s19
      %s22 = sphi 0, %s20
      %s23 = sphi 0, %s21
      %s24 = sphi 0, %s22
      %s36 = sphi 0, %s38
      %s39 = sphi 0, %s36
      %s40 = sphi 0, %s39
      %s56 = sphi 0, %s40
      %s60 = sphi 0, %s60
      %s62 = sphi 0, %s60
      %s63 = sphi 0, %s62
      %s77 = sphi 0, %s63
      %s81 = sphi 0, %s81
      %s83 = sphi 0, %s81
      %s84 = sphi 0, %s83
      %s98 = sphi 0, %s84
      %s106 = sphi 0, %s108
      %s109 = sphi 0, %s106
      %s110 = sphi 0, %s109
      %s126 = sphi 0, %s110
    $region4: #{compute_g_spa.1} parent=1 // loop_header_branch
      %15 = sbr.rel (%p13) target = $region8
    $region5: #{compute_g_spa.1} parent=1 // loop_body
      %s17 = ssub.s32 %s12, 1
      %s18 = ssub.s32 %s12, 2
      %s25 = sadd.s32 1, %s20
      %p26 = scmp.ge.s32.totalorder %s25, 1
      %s27 = scalar_select %p26, 0, %s25
      %s28 = sadd.s32 1, %s19
      %s29 = scalar_select %p26, %s28, %s19
      %p30 = scmp.ge.s32.totalorder %s29, 2
      %s31 = scalar_select %p30, 0, %s29
      %s32 = ssub.s32 %s19, %s31
      %s33 = ssub.s32 %s20, %s27
      %s34 = sor.u32 %s32, %s33
      %p35 = scmp.eq.s32.totalorder %s34, 0
      %s37 = sadd.s32 %s36, 1
      %s38 = scalar_select %p35, %s36, %s37
      %p41 = pneg %p35
      %p42 = scmp.eq.s32.totalorder %s12, 1
      %p43 = por %p41, %p42
      %p44 = scmp.ne.s32.totalorder %s36, %s39
      %p45 = scmp.eq.s32.totalorder %s12, 0
      %p46 = por %p44, %p45
      %p47 = scmp.ne.s32.totalorder %s36, %s39
      %p48 = scmp.eq.s32.totalorder %s17, 1
      %p49 = por %p47, %p48
      %p50 = scmp.ne.s32.totalorder %s39, %s40
      %p51 = scmp.eq.s32.totalorder %s17, 0
      %p52 = por %p50, %p51
      %p53 = scmp.ne.s32.totalorder %s39, %s40
      %p54 = scmp.eq.s32.totalorder %s18, 1
      %p55 = por %p53, %p54
      %p57 = scmp.ne.s32.totalorder %s40, %s56
      %p58 = scmp.eq.s32.totalorder %s18, 0
      %p59 = por %p57, %p58
      %s61 = sadd.s32 %s60, 1
      %p64 = scmp.eq.s32.totalorder %s12, 1
      %p65 = scmp.ne.s32.totalorder %s60, %s62
      %p66 = scmp.eq.s32.totalorder %s12, 0
      %p67 = por %p65, %p66
      %p68 = scmp.ne.s32.totalorder %s60, %s62
      %p69 = scmp.eq.s32.totalorder %s17, 1
      %p70 = por %p68, %p69
      %p71 = scmp.ne.s32.totalorder %s62, %s63
      %p72 = scmp.eq.s32.totalorder %s17, 0
      %p73 = por %p71, %p72
      %p74 = scmp.ne.s32.totalorder %s62, %s63
      %p75 = scmp.eq.s32.totalorder %s18, 1
      %p76 = por %p74, %p75
      %p78 = scmp.ne.s32.totalorder %s63, %s77
      %p79 = scmp.eq.s32.totalorder %s18, 0
      %p80 = por %p78, %p79
      %s82 = sadd.s32 %s81, 1
      %p85 = scmp.eq.s32.totalorder %s12, 1
      %p86 = scmp.ne.s32.totalorder %s81, %s83
      %p87 = scmp.eq.s32.totalorder %s12, 0
      %p88 = por %p86, %p87
      %p89 = scmp.ne.s32.totalorder %s81, %s83
      %p90 = scmp.eq.s32.totalorder %s17, 1
      %p91 = por %p89, %p90
      %p92 = scmp.ne.s32.totalorder %s83, %s84
      %p93 = scmp.eq.s32.totalorder %s17, 0
      %p94 = por %p92, %p93
      %p95 = scmp.ne.s32.totalorder %s83, %s84
      %p96 = scmp.eq.s32.totalorder %s18, 1
      %p97 = por %p95, %p96
      %p99 = scmp.ne.s32.totalorder %s84, %s98
      %p100 = scmp.eq.s32.totalorder %s18, 0
      %p101 = por %p99, %p100
      %s102 = ssub.s32 %s19, %s31
      %s103 = ssub.s32 %s20, %s27
      %s104 = sor.u32 %s102, %s103
      %p105 = scmp.eq.s32.totalorder %s104, 0
      %s107 = sadd.s32 %s106, 1
      %s108 = scalar_select %p105, %s106, %s107
      %p111 = pneg %p105
      %p112 = scmp.eq.s32.totalorder %s12, 1
      %p113 = por %p111, %p112
      %p114 = scmp.ne.s32.totalorder %s106, %s109
      %p115 = scmp.eq.s32.totalorder %s12, 0
      %p116 = por %p114, %p115
      %p117 = scmp.ne.s32.totalorder %s106, %s109
      %p118 = scmp.eq.s32.totalorder %s17, 1
      %p119 = por %p117, %p118
      %p120 = scmp.ne.s32.totalorder %s109, %s110
      %p121 = scmp.eq.s32.totalorder %s17, 0
      %p122 = por %p120, %p121
      %p123 = scmp.ne.s32.totalorder %s109, %s110
      %p124 = scmp.eq.s32.totalorder %s18, 1
      %p125 = por %p123, %p124
      %p127 = scmp.ne.s32.totalorder %s110, %s126
      %p128 = scmp.eq.s32.totalorder %s18, 0
      %p129 = por %p127, %p128
      %p130 = scmp.le.s32.totalorder 1, %s12
      %p131 = scmp.lt.s32.totalorder %s12, 3
      %p132 = pnand %p130, %p131
      %p133 = pneg %p132
      // Predicated region
      $region9: #{compute_g_spa.1} parent=5 // pred_check
        _
      $region10: #{compute_g_spa.1} parent=5 // pred_check_branch
        %135 = sbr.rel (%p132) target = $region12
      $region11: #{compute_g_spa.1} parent=5 // pred_region
        %s136 = ssub.s32 %s12, 1
        // Predicated region
        $region13: #{compute_g_spa.1} parent=11 // pred_check
          %p137 = pneg %p73
        $region14: #{compute_g_spa.1} parent=11 // pred_check_branch
          %139 = sbr.rel (%p137) target = $region16
        $region15: #{compute_g_spa.1} parent=11 // pred_region
          _
        $region16: #{compute_g_spa.1} parent=11 // pred_fallthru
          _
        // Predicated region
        $region17: #{compute_g_spa.1} parent=11 // pred_check
          %p140 = pneg %p94
        $region18: #{compute_g_spa.1} parent=11 // pred_check_branch
          %142 = sbr.rel (%p140) target = $region20
        $region19: #{compute_g_spa.1} parent=11 // pred_region
          _
        $region20: #{compute_g_spa.1} parent=11 // pred_fallthru
          _
      $region12: #{compute_g_spa.1} parent=5 // pred_fallthru
        _
      %p143 = scmp.lt.s32.totalorder %s12, 2
      // Predicated region
      $region21: #{compute_g_spa.1} parent=5 // pred_check
        %p144 = pneg %p143
      $region22: #{compute_g_spa.1} parent=5 // pred_check_branch
        %146 = sbr.rel (%p144) target = $region24
      $region23: #{compute_g_spa.1} parent=5 // pred_region
        // Predicated region
        $region25: #{compute_g_spa.1} parent=23 // pred_check
          %p147 = pneg %p46
        $region26: #{compute_g_spa.1} parent=23 // pred_check_branch
          %149 = sbr.rel (%p147) target = $region28
        $region27: #{compute_g_spa.1} parent=23 // pred_region
          %s150 = smul.u32 8, %s20
          %p151 = scmp.lt.s32.totalorder %s19, 1
          %s152 = scalar_select %p151, %s19, 1
          %p153 = scmp.lt.s32.totalorder %s150, 7
          %s154 = scalar_select %p153, %s150, 7
          %s155 = smul.addr %s154, 2
          %s156 = smul.addr %s152, 16
          %s157 = sadd.s32 %s155, %s156
          %s158 = smul.addr %s157, 8
          %s159 = scalar_lea.vmem %s0, %s158
          %s160 = smul.u32 8, %s20
        $region28: #{compute_g_spa.1} parent=23 // pred_fallthru
          _
      $region24: #{compute_g_spa.1} parent=5 // pred_fallthru
        _
      %p161 = scmp.le.s32.totalorder 1, %s12
      %p162 = scmp.lt.s32.totalorder %s12, 3
      %p163 = pnand %p161, %p162
      %p164 = pneg %p163
      // Predicated region
      $region29: #{compute_g_spa.1} parent=5 // pred_check
        _
      $region30: #{compute_g_spa.1} parent=5 // pred_check_branch
        %166 = sbr.rel (%p163) target = $region32
      $region31: #{compute_g_spa.1} parent=5 // pred_region
        %s167 = ssub.s32 %s12, 1
        %s168 = smul.u32 8, %s22
        %p169 = scmp.lt.s32.totalorder %s21, 1
        %s170 = scalar_select %p169, %s21, 1
        %p171 = scmp.lt.s32.totalorder %s168, 7
        %s172 = scalar_select %p171, %s168, 7
        %s173 = smul.addr %s172, 2
        %s174 = smul.addr %s170, 16
        %s175 = sadd.s32 %s173, %s174
        %s176 = smul.addr %s175, 8
        %s177 = scalar_lea.vmem %s0, %s176
        %p178 = pneg %p52
        %p179 = pneg %p49
        %p180 = pneg %p73
        %p181 = pneg %p70
        %p182 = pneg %p94
        %p183 = pneg %p91
        %p184 = pneg %p122
        %p185 = pneg %p119
        %s186 = sand.u32 %s109, 1
        %s187 = scalar_lea.sflag [#allocation3], %s186
        %s188 = sand.u32 %s109, 1
        %s189 = smul.addr %s188, 128
        %s190 = scalar_lea.vmem [#allocation2], %s189
        %s191 = smul.u32 8, %s22
        %p192 = scmp.lt.s32.totalorder %s21, 1
        %s193 = scalar_select %p192, %s21, 1
        %p194 = scmp.lt.s32.totalorder %s191, 7
        %s195 = scalar_select %p194, %s191, 7
        %s196 = smul.addr %s195, 2
        %s197 = smul.addr %s193, 16
        %s198 = sadd.s32 %s196, %s197
        %s199 = smul.addr %s198, 8
        %s200 = scalar_lea.vmem %s0, %s199
        %s201 = smul.u32 8, %s22
        %s202 = smul.u32 8, %s22
        %v203 = vld [vmem:[%s1] sm:$0xff]
        %v204 = vld [vmem:[%s1 + $0x8] sm:$0xff]
        %v205 = vld [vmem:[%s1 + $0x10] sm:$0xff]
        %v206 = vld [vmem:[%s1 + $0x18] sm:$0xff]
        %v207 = vld [vmem:[%s1 + $0x20] sm:$0xff]
        %v208 = vld [vmem:[%s1 + $0x28] sm:$0xff]
        %v209 = vld [vmem:[%s1 + $0x30] sm:$0xff]
        %v210 = vld [vmem:[%s1 + $0x38] sm:$0xff]
        %v211 = vld [vmem:[%s2] sm:$0xff]
        %v212 = vld [vmem:[%s2 + $0x8] sm:$0xff]
        %v213 = vld [vmem:[%s2 + $0x10] sm:$0xff]
        %v214 = vld [vmem:[%s2 + $0x18] sm:$0xff]
        %v215 = vld [vmem:[%s2 + $0x20] sm:$0xff]
        %v216 = vld [vmem:[%s2 + $0x28] sm:$0xff]
        %v217 = vld [vmem:[%s2 + $0x30] sm:$0xff]
        %v218 = vld [vmem:[%s2 + $0x38] sm:$0xff]
        %v219 = vld [vmem:[%s200] sm:$0xff]
        %v220 = vld [vmem:[%s200 + $0x8] sm:$0xff]
        %vm221 = vcmask 523264
        %v223 = vsel %vm221, %v219, 0
        %v226 = vsel %vm221, %v220, 0
        %228 = vmatpush.msra.mxu0 0.0
        %229 = vmatpush.msra.mxu0 0.0
        %230 = vmatpush.msra.mxu0 0.0
        %231 = vmatpush.msra.mxu0 0.0
        %232 = vmatpush.msra.mxu0 0.0
        %233 = vmatpush.msra.mxu0 0.0
        %234 = vmatpush.msra.mxu0 0.0
        %235 = vmatpush.msra.mxu0 0.0
        %v236 = vand.u32 %v210, 4294901760
        %237 = vmatpush.msra.mxu0 %v236
        %v238 = vand.u32 %v209, 4294901760
        %239 = vmatpush.msra.mxu0 %v238
        %v240 = vand.u32 %v208, 4294901760
        %241 = vmatpush.msra.mxu0 %v240
        %v242 = vand.u32 %v207, 4294901760
        %243 = vmatpush.msra.mxu0 %v242
        %v244 = vand.u32 %v206, 4294901760
        %245 = vmatpush.msra.mxu0 %v244
        %v246 = vand.u32 %v205, 4294901760
        %247 = vmatpush.msra.mxu0 %v246
        %v248 = vand.u32 %v204, 4294901760
        %249 = vmatpush.msra.mxu0 %v248
        %v250 = vand.u32 %v203, 4294901760
        %251 = vmatpush.msra.mxu0 %v250
        %v252 = vand.u32 %v223, 4294901760
        %v253 = vsub.f32 %v223, %v252
        %v254 = vand.u32 %v253, 4294901760
        %v255 = vsub.f32 %v253, %v254
        %v256 = vand.u32 %v255, 4294901760
        %257 = vmatmul.f32.gmra.mxu0 %v256
        %v258 = vpop.f32.mrf.mxu0
        %v259 = vadd.f32 0.0, %v258
        %v260 = vand.u32 %v226, 4294901760
        %v261 = vsub.f32 %v226, %v260
        %v262 = vand.u32 %v261, 4294901760
        %v263 = vsub.f32 %v261, %v262
        %v264 = vand.u32 %v263, 4294901760
        %265 = vmatmul.f32.gmra.mxu0 %v264
        %v266 = vpop.f32.mrf.mxu0
        %v267 = vadd.f32 0.0, %v266
        %268 = vdwg.mxu0
        %269 = vmatpush.msra.mxu0 0.0
        %270 = vmatpush.msra.mxu0 0.0
        %271 = vmatpush.msra.mxu0 0.0
        %272 = vmatpush.msra.mxu0 0.0
        %273 = vmatpush.msra.mxu0 0.0
        %274 = vmatpush.msra.mxu0 0.0
        %275 = vmatpush.msra.mxu0 0.0
        %276 = vmatpush.msra.mxu0 0.0
        %v277 = vand.u32 %v210, 4294901760
        %v278 = vsub.f32 %v210, %v277
        %v279 = vand.u32 %v278, 4294901760
        %v280 = vsub.f32 %v278, %v279
        %v281 = vand.u32 %v280, 4294901760
        %282 = vmatpush.msra.mxu0 %v281
        %v283 = vand.u32 %v209, 4294901760
        %v284 = vsub.f32 %v209, %v283
        %v285 = vand.u32 %v284, 4294901760
        %v286 = vsub.f32 %v284, %v285
        %v287 = vand.u32 %v286, 4294901760
        %288 = vmatpush.msra.mxu0 %v287
        %v289 = vand.u32 %v208, 4294901760
        %v290 = vsub.f32 %v208, %v289
        %v291 = vand.u32 %v290, 4294901760
        %v292 = vsub.f32 %v290, %v291
        %v293 = vand.u32 %v292, 4294901760
        %294 = vmatpush.msra.mxu0 %v293
        %v295 = vand.u32 %v207, 4294901760
        %v296 = vsub.f32 %v207, %v295
        %v297 = vand.u32 %v296, 4294901760
        %v298 = vsub.f32 %v296, %v297
        %v299 = vand.u32 %v298, 4294901760
        %300 = vmatpush.msra.mxu0 %v299
        %v301 = vand.u32 %v206, 4294901760
        %v302 = vsub.f32 %v206, %v301
        %v303 = vand.u32 %v302, 4294901760
        %v304 = vsub.f32 %v302, %v303
        %v305 = vand.u32 %v304, 4294901760
        %306 = vmatpush.msra.mxu0 %v305
        %v307 = vand.u32 %v205, 4294901760
        %v308 = vsub.f32 %v205, %v307
        %v309 = vand.u32 %v308, 4294901760
        %v310 = vsub.f32 %v308, %v309
        %v311 = vand.u32 %v310, 4294901760
        %312 = vmatpush.msra.mxu0 %v311
        %v313 = vand.u32 %v204, 4294901760
        %v314 = vsub.f32 %v204, %v313
        %v315 = vand.u32 %v314, 4294901760
        %v316 = vsub.f32 %v314, %v315
        %v317 = vand.u32 %v316, 4294901760
        %318 = vmatpush.msra.mxu0 %v317
        %v319 = vand.u32 %v203, 4294901760
        %v320 = vsub.f32 %v203, %v319
        %v321 = vand.u32 %v320, 4294901760
        %v322 = vsub.f32 %v320, %v321
        %v323 = vand.u32 %v322, 4294901760
        %324 = vmatpush.msra.mxu0 %v323
        %v325 = vand.u32 %v223, 4294901760
        %326 = vmatmul.f32.gmra.mxu0 %v325
        %v327 = vpop.f32.mrf.mxu0
        %v328 = vadd.f32 %v259, %v327
        %v329 = vand.u32 %v226, 4294901760
        %330 = vmatmul.f32.gmra.mxu0 %v329
        %v331 = vpop.f32.mrf.mxu0
        %v332 = vadd.f32 %v267, %v331
        %333 = vdwg.mxu0
        %334 = vmatpush.msra.mxu0 0.0
        %335 = vmatpush.msra.mxu0 0.0
        %336 = vmatpush.msra.mxu0 0.0
        %337 = vmatpush.msra.mxu0 0.0
        %338 = vmatpush.msra.mxu0 0.0
        %339 = vmatpush.msra.mxu0 0.0
        %340 = vmatpush.msra.mxu0 0.0
        %341 = vmatpush.msra.mxu0 0.0
        %v342 = vand.u32 %v210, 4294901760
        %v343 = vsub.f32 %v210, %v342
        %344 = vmatpush.msra.mxu0 %v343
        %v345 = vand.u32 %v209, 4294901760
        %v346 = vsub.f32 %v209, %v345
        %347 = vmatpush.msra.mxu0 %v346
        %v348 = vand.u32 %v208, 4294901760
        %v349 = vsub.f32 %v208, %v348
        %350 = vmatpush.msra.mxu0 %v349
        %v351 = vand.u32 %v207, 4294901760
        %v352 = vsub.f32 %v207, %v351
        %353 = vmatpush.msra.mxu0 %v352
        %v354 = vand.u32 %v206, 4294901760
        %v355 = vsub.f32 %v206, %v354
        %356 = vmatpush.msra.mxu0 %v355
        %v357 = vand.u32 %v205, 4294901760
        %v358 = vsub.f32 %v205, %v357
        %359 = vmatpush.msra.mxu0 %v358
        %v360 = vand.u32 %v204, 4294901760
        %v361 = vsub.f32 %v204, %v360
        %362 = vmatpush.msra.mxu0 %v361
        %v363 = vand.u32 %v203, 4294901760
        %v364 = vsub.f32 %v203, %v363
        %365 = vmatpush.msra.mxu0 %v364
        %v366 = vand.u32 %v223, 4294901760
        %v367 = vsub.f32 %v223, %v366
        %368 = vmatmul.f32.gmra.mxu0 %v367
        %v369 = vpop.f32.mrf.mxu0
        %v370 = vadd.f32 %v328, %v369
        %v371 = vand.u32 %v226, 4294901760
        %v372 = vsub.f32 %v226, %v371
        %373 = vmatmul.f32.gmra.mxu0 %v372
        %v374 = vpop.f32.mrf.mxu0
        %v375 = vadd.f32 %v332, %v374
        %376 = vdwg.mxu0
        %377 = vmatpush.msra.mxu0 0.0
        %378 = vmatpush.msra.mxu0 0.0
        %379 = vmatpush.msra.mxu0 0.0
        %380 = vmatpush.msra.mxu0 0.0
        %381 = vmatpush.msra.mxu0 0.0
        %382 = vmatpush.msra.mxu0 0.0
        %383 = vmatpush.msra.mxu0 0.0
        %384 = vmatpush.msra.mxu0 0.0
        %v385 = vand.u32 %v210, 4294901760
        %386 = vmatpush.msra.mxu0 %v385
        %v387 = vand.u32 %v209, 4294901760
        %388 = vmatpush.msra.mxu0 %v387
        %v389 = vand.u32 %v208, 4294901760
        %390 = vmatpush.msra.mxu0 %v389
        %v391 = vand.u32 %v207, 4294901760
        %392 = vmatpush.msra.mxu0 %v391
        %v393 = vand.u32 %v206, 4294901760
        %394 = vmatpush.msra.mxu0 %v393
        %v395 = vand.u32 %v205, 4294901760
        %396 = vmatpush.msra.mxu0 %v395
        %v397 = vand.u32 %v204, 4294901760
        %398 = vmatpush.msra.mxu0 %v397
        %v399 = vand.u32 %v203, 4294901760
        %400 = vmatpush.msra.mxu0 %v399
        %v401 = vand.u32 %v223, 4294901760
        %v402 = vsub.f32 %v223, %v401
        %v403 = vand.u32 %v402, 4294901760
        %404 = vmatmul.f32.gmra.mxu0 %v403
        %v405 = vpop.f32.mrf.mxu0
        %v406 = vadd.f32 %v370, %v405
        %v407 = vand.u32 %v226, 4294901760
        %v408 = vsub.f32 %v226, %v407
        %v409 = vand.u32 %v408, 4294901760
        %410 = vmatmul.f32.gmra.mxu0 %v409
        %v411 = vpop.f32.mrf.mxu0
        %v412 = vadd.f32 %v375, %v411
        %413 = vdwg.mxu0
        %414 = vmatpush.msra.mxu0 0.0
        %415 = vmatpush.msra.mxu0 0.0
        %416 = vmatpush.msra.mxu0 0.0
        %417 = vmatpush.msra.mxu0 0.0
        %418 = vmatpush.msra.mxu0 0.0
        %419 = vmatpush.msra.mxu0 0.0
        %420 = vmatpush.msra.mxu0 0.0
        %421 = vmatpush.msra.mxu0 0.0
        %v422 = vand.u32 %v210, 4294901760
        %v423 = vsub.f32 %v210, %v422
        %v424 = vand.u32 %v423, 4294901760
        %425 = vmatpush.msra.mxu0 %v424
        %v426 = vand.u32 %v209, 4294901760
        %v427 = vsub.f32 %v209, %v426
        %v428 = vand.u32 %v427, 4294901760
        %429 = vmatpush.msra.mxu0 %v428
        %v430 = vand.u32 %v208, 4294901760
        %v431 = vsub.f32 %v208, %v430
        %v432 = vand.u32 %v431, 4294901760
        %433 = vmatpush.msra.mxu0 %v432
        %v434 = vand.u32 %v207, 4294901760
        %v435 = vsub.f32 %v207, %v434
        %v436 = vand.u32 %v435, 4294901760
        %437 = vmatpush.msra.mxu0 %v436
        %v438 = vand.u32 %v206, 4294901760
        %v439 = vsub.f32 %v206, %v438
        %v440 = vand.u32 %v439, 4294901760
        %441 = vmatpush.msra.mxu0 %v440
        %v442 = vand.u32 %v205, 4294901760
        %v443 = vsub.f32 %v205, %v442
        %v444 = vand.u32 %v443, 4294901760
        %445 = vmatpush.msra.mxu0 %v444
        %v446 = vand.u32 %v204, 4294901760
        %v447 = vsub.f32 %v204, %v446
        %v448 = vand.u32 %v447, 4294901760
        %449 = vmatpush.msra.mxu0 %v448
        %v450 = vand.u32 %v203, 4294901760
        %v451 = vsub.f32 %v203, %v450
        %v452 = vand.u32 %v451, 4294901760
        %453 = vmatpush.msra.mxu0 %v452
        %v454 = vand.u32 %v223, 4294901760
        %455 = vmatmul.f32.gmra.mxu0 %v454
        %v456 = vpop.f32.mrf.mxu0
        %v457 = vadd.f32 %v406, %v456
        %v458 = vand.u32 %v226, 4294901760
        %459 = vmatmul.f32.gmra.mxu0 %v458
        %v460 = vpop.f32.mrf.mxu0
        %v461 = vadd.f32 %v412, %v460
        %462 = vdwg.mxu0
        %463 = vmatpush.msra.mxu0 0.0
        %464 = vmatpush.msra.mxu0 0.0
        %465 = vmatpush.msra.mxu0 0.0
        %466 = vmatpush.msra.mxu0 0.0
        %467 = vmatpush.msra.mxu0 0.0
        %468 = vmatpush.msra.mxu0 0.0
        %469 = vmatpush.msra.mxu0 0.0
        %470 = vmatpush.msra.mxu0 0.0
        %v471 = vand.u32 %v210, 4294901760
        %472 = vmatpush.msra.mxu0 %v471
        %v473 = vand.u32 %v209, 4294901760
        %474 = vmatpush.msra.mxu0 %v473
        %v475 = vand.u32 %v208, 4294901760
        %476 = vmatpush.msra.mxu0 %v475
        %v477 = vand.u32 %v207, 4294901760
        %478 = vmatpush.msra.mxu0 %v477
        %v479 = vand.u32 %v206, 4294901760
        %480 = vmatpush.msra.mxu0 %v479
        %v481 = vand.u32 %v205, 4294901760
        %482 = vmatpush.msra.mxu0 %v481
        %v483 = vand.u32 %v204, 4294901760
        %484 = vmatpush.msra.mxu0 %v483
        %v485 = vand.u32 %v203, 4294901760
        %486 = vmatpush.msra.mxu0 %v485
        %v487 = vand.u32 %v223, 4294901760
        %488 = vmatmul.f32.gmra.mxu0 %v487
        %v489 = vpop.f32.mrf.mxu0
        %v490 = vadd.f32 %v457, %v489
        %v491 = vand.u32 %v226, 4294901760
        %492 = vmatmul.f32.gmra.mxu0 %v491
        %v493 = vpop.f32.mrf.mxu0
        %v494 = vadd.f32 %v461, %v493
        %495 = vdwg.mxu0
        %496 = vmatpush.msra.mxu0 0.0
        %497 = vmatpush.msra.mxu0 0.0
        %498 = vmatpush.msra.mxu0 0.0
        %499 = vmatpush.msra.mxu0 0.0
        %500 = vmatpush.msra.mxu0 0.0
        %501 = vmatpush.msra.mxu0 0.0
        %502 = vmatpush.msra.mxu0 0.0
        %503 = vmatpush.msra.mxu0 0.0
        %v504 = vand.u32 %v218, 4294901760
        %505 = vmatpush.msra.mxu0 %v504
        %v506 = vand.u32 %v217, 4294901760
        %507 = vmatpush.msra.mxu0 %v506
        %v508 = vand.u32 %v216, 4294901760
        %509 = vmatpush.msra.mxu0 %v508
        %v510 = vand.u32 %v215, 4294901760
        %511 = vmatpush.msra.mxu0 %v510
        %v512 = vand.u32 %v214, 4294901760
        %513 = vmatpush.msra.mxu0 %v512
        %v514 = vand.u32 %v213, 4294901760
        %515 = vmatpush.msra.mxu0 %v514
        %v516 = vand.u32 %v212, 4294901760
        %517 = vmatpush.msra.mxu0 %v516
        %v518 = vand.u32 %v211, 4294901760
        %519 = vmatpush.msra.mxu0 %v518
        %v520 = vand.u32 %v223, 4294901760
        %v521 = vsub.f32 %v223, %v520
        %v522 = vand.u32 %v521, 4294901760
        %v523 = vsub.f32 %v521, %v522
        %v524 = vand.u32 %v523, 4294901760
        %525 = vmatmul.f32.gmra.mxu0 %v524
        %v526 = vpop.f32.mrf.mxu0
        %v527 = vadd.f32 0.0, %v526
        %v528 = vand.u32 %v226, 4294901760
        %v529 = vsub.f32 %v226, %v528
        %v530 = vand.u32 %v529, 4294901760
        %v531 = vsub.f32 %v529, %v530
        %v532 = vand.u32 %v531, 4294901760
        %533 = vmatmul.f32.gmra.mxu0 %v532
        %v534 = vpop.f32.mrf.mxu0
        %v535 = vadd.f32 0.0, %v534
        %536 = vdwg.mxu0
        %537 = vmatpush.msra.mxu0 0.0
        %538 = vmatpush.msra.mxu0 0.0
        %539 = vmatpush.msra.mxu0 0.0
        %540 = vmatpush.msra.mxu0 0.0
        %541 = vmatpush.msra.mxu0 0.0
        %542 = vmatpush.msra.mxu0 0.0
        %543 = vmatpush.msra.mxu0 0.0
        %544 = vmatpush.msra.mxu0 0.0
        %v545 = vand.u32 %v218, 4294901760
        %v546 = vsub.f32 %v218, %v545
        %v547 = vand.u32 %v546, 4294901760
        %v548 = vsub.f32 %v546, %v547
        %v549 = vand.u32 %v548, 4294901760
        %550 = vmatpush.msra.mxu0 %v549
        %v551 = vand.u32 %v217, 4294901760
        %v552 = vsub.f32 %v217, %v551
        %v553 = vand.u32 %v552, 4294901760
        %v554 = vsub.f32 %v552, %v553
        %v555 = vand.u32 %v554, 4294901760
        %556 = vmatpush.msra.mxu0 %v555
        %v557 = vand.u32 %v216, 4294901760
        %v558 = vsub.f32 %v216, %v557
        %v559 = vand.u32 %v558, 4294901760
        %v560 = vsub.f32 %v558, %v559
        %v561 = vand.u32 %v560, 4294901760
        %562 = vmatpush.msra.mxu0 %v561
        %v563 = vand.u32 %v215, 4294901760
        %v564 = vsub.f32 %v215, %v563
        %v565 = vand.u32 %v564, 4294901760
        %v566 = vsub.f32 %v564, %v565
        %v567 = vand.u32 %v566, 4294901760
        %568 = vmatpush.msra.mxu0 %v567
        %v569 = vand.u32 %v214, 4294901760
        %v570 = vsub.f32 %v214, %v569
        %v571 = vand.u32 %v570, 4294901760
        %v572 = vsub.f32 %v570, %v571
        %v573 = vand.u32 %v572, 4294901760
        %574 = vmatpush.msra.mxu0 %v573
        %v575 = vand.u32 %v213, 4294901760
        %v576 = vsub.f32 %v213, %v575
        %v577 = vand.u32 %v576, 4294901760
        %v578 = vsub.f32 %v576, %v577
        %v579 = vand.u32 %v578, 4294901760
        %580 = vmatpush.msra.mxu0 %v579
        %v581 = vand.u32 %v212, 4294901760
        %v582 = vsub.f32 %v212, %v581
        %v583 = vand.u32 %v582, 4294901760
        %v584 = vsub.f32 %v582, %v583
        %v585 = vand.u32 %v584, 4294901760
        %586 = vmatpush.msra.mxu0 %v585
        %v587 = vand.u32 %v211, 4294901760
        %v588 = vsub.f32 %v211, %v587
        %v589 = vand.u32 %v588, 4294901760
        %v590 = vsub.f32 %v588, %v589
        %v591 = vand.u32 %v590, 4294901760
        %592 = vmatpush.msra.mxu0 %v591
        %v593 = vand.u32 %v223, 4294901760
        %594 = vmatmul.f32.gmra.mxu0 %v593
        %v595 = vpop.f32.mrf.mxu0
        %v596 = vadd.f32 %v527, %v595
        %v597 = vand.u32 %v226, 4294901760
        %598 = vmatmul.f32.gmra.mxu0 %v597
        %v599 = vpop.f32.mrf.mxu0
        %v600 = vadd.f32 %v535, %v599
        %601 = vdwg.mxu0
        %602 = vmatpush.msra.mxu0 0.0
        %603 = vmatpush.msra.mxu0 0.0
        %604 = vmatpush.msra.mxu0 0.0
        %605 = vmatpush.msra.mxu0 0.0
        %606 = vmatpush.msra.mxu0 0.0
        %607 = vmatpush.msra.mxu0 0.0
        %608 = vmatpush.msra.mxu0 0.0
        %609 = vmatpush.msra.mxu0 0.0
        %v610 = vand.u32 %v218, 4294901760
        %v611 = vsub.f32 %v218, %v610
        %612 = vmatpush.msra.mxu0 %v611
        %v613 = vand.u32 %v217, 4294901760
        %v614 = vsub.f32 %v217, %v613
        %615 = vmatpush.msra.mxu0 %v614
        %v616 = vand.u32 %v216, 4294901760
        %v617 = vsub.f32 %v216, %v616
        %618 = vmatpush.msra.mxu0 %v617
        %v619 = vand.u32 %v215, 4294901760
        %v620 = vsub.f32 %v215, %v619
        %621 = vmatpush.msra.mxu0 %v620
        %v622 = vand.u32 %v214, 4294901760
        %v623 = vsub.f32 %v214, %v622
        %624 = vmatpush.msra.mxu0 %v623
        %v625 = vand.u32 %v213, 4294901760
        %v626 = vsub.f32 %v213, %v625
        %627 = vmatpush.msra.mxu0 %v626
        %v628 = vand.u32 %v212, 4294901760
        %v629 = vsub.f32 %v212, %v628
        %630 = vmatpush.msra.mxu0 %v629
        %v631 = vand.u32 %v211, 4294901760
        %v632 = vsub.f32 %v211, %v631
        %633 = vmatpush.msra.mxu0 %v632
        %v634 = vand.u32 %v223, 4294901760
        %v635 = vsub.f32 %v223, %v634
        %636 = vmatmul.f32.gmra.mxu0 %v635
        %v637 = vpop.f32.mrf.mxu0
        %v638 = vadd.f32 %v596, %v637
        %v639 = vand.u32 %v226, 4294901760
        %v640 = vsub.f32 %v226, %v639
        %641 = vmatmul.f32.gmra.mxu0 %v640
        %v642 = vpop.f32.mrf.mxu0
        %v643 = vadd.f32 %v600, %v642
        %644 = vdwg.mxu0
        %645 = vmatpush.msra.mxu0 0.0
        %646 = vmatpush.msra.mxu0 0.0
        %647 = vmatpush.msra.mxu0 0.0
        %648 = vmatpush.msra.mxu0 0.0
        %649 = vmatpush.msra.mxu0 0.0
        %650 = vmatpush.msra.mxu0 0.0
        %651 = vmatpush.msra.mxu0 0.0
        %652 = vmatpush.msra.mxu0 0.0
        %v653 = vand.u32 %v218, 4294901760
        %654 = vmatpush.msra.mxu0 %v653
        %v655 = vand.u32 %v217, 4294901760
        %656 = vmatpush.msra.mxu0 %v655
        %v657 = vand.u32 %v216, 4294901760
        %658 = vmatpush.msra.mxu0 %v657
        %v659 = vand.u32 %v215, 4294901760
        %660 = vmatpush.msra.mxu0 %v659
        %v661 = vand.u32 %v214, 4294901760
        %662 = vmatpush.msra.mxu0 %v661
        %v663 = vand.u32 %v213, 4294901760
        %664 = vmatpush.msra.mxu0 %v663
        %v665 = vand.u32 %v212, 4294901760
        %666 = vmatpush.msra.mxu0 %v665
        %v667 = vand.u32 %v211, 4294901760
        %668 = vmatpush.msra.mxu0 %v667
        %v669 = vand.u32 %v223, 4294901760
        %v670 = vsub.f32 %v223, %v669
        %v671 = vand.u32 %v670, 4294901760
        %672 = vmatmul.f32.gmra.mxu0 %v671
        %v673 = vpop.f32.mrf.mxu0
        %v674 = vadd.f32 %v638, %v673
        %v675 = vand.u32 %v226, 4294901760
        %v676 = vsub.f32 %v226, %v675
        %v677 = vand.u32 %v676, 4294901760
        %678 = vmatmul.f32.gmra.mxu0 %v677
        %v679 = vpop.f32.mrf.mxu0
        %v680 = vadd.f32 %v643, %v679
        %681 = vdwg.mxu0
        %682 = vmatpush.msra.mxu0 0.0
        %683 = vmatpush.msra.mxu0 0.0
        %684 = vmatpush.msra.mxu0 0.0
        %685 = vmatpush.msra.mxu0 0.0
        %686 = vmatpush.msra.mxu0 0.0
        %687 = vmatpush.msra.mxu0 0.0
        %688 = vmatpush.msra.mxu0 0.0
        %689 = vmatpush.msra.mxu0 0.0
        %v690 = vand.u32 %v218, 4294901760
        %v691 = vsub.f32 %v218, %v690
        %v692 = vand.u32 %v691, 4294901760
        %693 = vmatpush.msra.mxu0 %v692
        %v694 = vand.u32 %v217, 4294901760
        %v695 = vsub.f32 %v217, %v694
        %v696 = vand.u32 %v695, 4294901760
        %697 = vmatpush.msra.mxu0 %v696
        %v698 = vand.u32 %v216, 4294901760
        %v699 = vsub.f32 %v216, %v698
        %v700 = vand.u32 %v699, 4294901760
        %701 = vmatpush.msra.mxu0 %v700
        %v702 = vand.u32 %v215, 4294901760
        %v703 = vsub.f32 %v215, %v702
        %v704 = vand.u32 %v703, 4294901760
        %705 = vmatpush.msra.mxu0 %v704
        %v706 = vand.u32 %v214, 4294901760
        %v707 = vsub.f32 %v214, %v706
        %v708 = vand.u32 %v707, 4294901760
        %709 = vmatpush.msra.mxu0 %v708
        %v710 = vand.u32 %v213, 4294901760
        %v711 = vsub.f32 %v213, %v710
        %v712 = vand.u32 %v711, 4294901760
        %713 = vmatpush.msra.mxu0 %v712
        %v714 = vand.u32 %v212, 4294901760
        %v715 = vsub.f32 %v212, %v714
        %v716 = vand.u32 %v715, 4294901760
        %717 = vmatpush.msra.mxu0 %v716
        %v718 = vand.u32 %v211, 4294901760
        %v719 = vsub.f32 %v211, %v718
        %v720 = vand.u32 %v719, 4294901760
        %721 = vmatpush.msra.mxu0 %v720
        %v722 = vand.u32 %v223, 4294901760
        %723 = vmatmul.f32.gmra.mxu0 %v722
        %v724 = vpop.f32.mrf.mxu0
        %v725 = vadd.f32 %v674, %v724
        %v726 = vand.u32 %v226, 4294901760
        %727 = vmatmul.f32.gmra.mxu0 %v726
        %v728 = vpop.f32.mrf.mxu0
        %v729 = vadd.f32 %v680, %v728
        %730 = vdwg.mxu0
        %731 = vmatpush.msra.mxu0 0.0
        %732 = vmatpush.msra.mxu0 0.0
        %733 = vmatpush.msra.mxu0 0.0
        %734 = vmatpush.msra.mxu0 0.0
        %735 = vmatpush.msra.mxu0 0.0
        %736 = vmatpush.msra.mxu0 0.0
        %737 = vmatpush.msra.mxu0 0.0
        %738 = vmatpush.msra.mxu0 0.0
        %v739 = vand.u32 %v218, 4294901760
        %740 = vmatpush.msra.mxu0 %v739
        %v741 = vand.u32 %v217, 4294901760
        %742 = vmatpush.msra.mxu0 %v741
        %v743 = vand.u32 %v216, 4294901760
        %744 = vmatpush.msra.mxu0 %v743
        %v745 = vand.u32 %v215, 4294901760
        %746 = vmatpush.msra.mxu0 %v745
        %v747 = vand.u32 %v214, 4294901760
        %748 = vmatpush.msra.mxu0 %v747
        %v749 = vand.u32 %v213, 4294901760
        %750 = vmatpush.msra.mxu0 %v749
        %v751 = vand.u32 %v212, 4294901760
        %752 = vmatpush.msra.mxu0 %v751
        %v753 = vand.u32 %v211, 4294901760
        %754 = vmatpush.msra.mxu0 %v753
        %v755 = vand.u32 %v223, 4294901760
        %756 = vmatmul.f32.gmra.mxu0 %v755
        %v757 = vpop.f32.mrf.mxu0
        %v758 = vadd.f32 %v725, %v757
        %v759 = vand.u32 %v226, 4294901760
        %760 = vmatmul.f32.gmra.mxu0 %v759
        %v761 = vpop.f32.mrf.mxu0
        %v762 = vadd.f32 %v729, %v761
        %763 = vdwg.mxu0
        %v765 = vsel %vm221, %v490, 0
        %v768 = vsel %vm221, %v494, 0
        %v771 = vsel %vm221, %v758, 0
        %v774 = vsel %vm221, %v762, 0
        %776 = vmatpush.xpose.msra.mxu0 0.0
        %777 = vmatpush.xpose.msra.mxu0 0.0
        %778 = vmatpush.xpose.msra.mxu0 0.0
        %779 = vmatpush.xpose.msra.mxu0 0.0
        %780 = vmatpush.xpose.msra.mxu0 0.0
        %781 = vmatpush.xpose.msra.mxu0 0.0
        %782 = vmatpush.xpose.msra.mxu0 0.0
        %783 = vmatpush.xpose.msra.mxu0 0.0
        %784 = vmatpush.xpose.msra.mxu0 0.0
        %785 = vmatpush.xpose.msra.mxu0 0.0
        %786 = vmatpush.xpose.msra.mxu0 0.0
        %787 = vmatpush.xpose.msra.mxu0 0.0
        %788 = vmatpush.xpose.msra.mxu0 0.0
        %789 = vmatpush.xpose.msra.mxu0 0.0
        %v790 = vand.u32 %v774, 4294901760
        %791 = vmatpush.xpose.msra.mxu0 %v790
        %v792 = vand.u32 %v771, 4294901760
        %793 = vmatpush.xpose.msra.mxu0 %v792
        %v794 = vand.u32 %v765, 4294901760
        %v795 = vsub.f32 %v765, %v794
        %v796 = vand.u32 %v795, 4294901760
        %v797 = vsub.f32 %v795, %v796
        %v798 = vand.u32 %v797, 4294901760
        %799 = vmatmul.f32.gmra.mxu0 %v798
        %v800 = vpop.f32.mrf.mxu0
        %v801 = vadd.f32 0.0, %v800
        %v802 = vand.u32 %v768, 4294901760
        %v803 = vsub.f32 %v768, %v802
        %v804 = vand.u32 %v803, 4294901760
        %v805 = vsub.f32 %v803, %v804
        %v806 = vand.u32 %v805, 4294901760
        %807 = vmatmul.f32.gmra.mxu0 %v806
        %v808 = vpop.f32.mrf.mxu0
        %v809 = vadd.f32 0.0, %v808
        %810 = vdwg.mxu0
        %811 = vmatpush.xpose.msra.mxu0 0.0
        %812 = vmatpush.xpose.msra.mxu0 0.0
        %813 = vmatpush.xpose.msra.mxu0 0.0
        %814 = vmatpush.xpose.msra.mxu0 0.0
        %815 = vmatpush.xpose.msra.mxu0 0.0
        %816 = vmatpush.xpose.msra.mxu0 0.0
        %817 = vmatpush.xpose.msra.mxu0 0.0
        %818 = vmatpush.xpose.msra.mxu0 0.0
        %819 = vmatpush.xpose.msra.mxu0 0.0
        %820 = vmatpush.xpose.msra.mxu0 0.0
        %821 = vmatpush.xpose.msra.mxu0 0.0
        %822 = vmatpush.xpose.msra.mxu0 0.0
        %823 = vmatpush.xpose.msra.mxu0 0.0
        %824 = vmatpush.xpose.msra.mxu0 0.0
        %v825 = vand.u32 %v774, 4294901760
        %v826 = vsub.f32 %v774, %v825
        %v827 = vand.u32 %v826, 4294901760
        %v828 = vsub.f32 %v826, %v827
        %v829 = vand.u32 %v828, 4294901760
        %830 = vmatpush.xpose.msra.mxu0 %v829
        %v831 = vand.u32 %v771, 4294901760
        %v832 = vsub.f32 %v771, %v831
        %v833 = vand.u32 %v832, 4294901760
        %v834 = vsub.f32 %v832, %v833
        %v835 = vand.u32 %v834, 4294901760
        %836 = vmatpush.xpose.msra.mxu0 %v835
        %v837 = vand.u32 %v765, 4294901760
        %838 = vmatmul.f32.gmra.mxu0 %v837
        %v839 = vpop.f32.mrf.mxu0
        %v840 = vadd.f32 %v801, %v839
        %v841 = vand.u32 %v768, 4294901760
        %842 = vmatmul.f32.gmra.mxu0 %v841
        %v843 = vpop.f32.mrf.mxu0
        %v844 = vadd.f32 %v809, %v843
        %845 = vdwg.mxu0
        %846 = vmatpush.xpose.msra.mxu0 0.0
        %847 = vmatpush.xpose.msra.mxu0 0.0
        %848 = vmatpush.xpose.msra.mxu0 0.0
        %849 = vmatpush.xpose.msra.mxu0 0.0
        %850 = vmatpush.xpose.msra.mxu0 0.0
        %851 = vmatpush.xpose.msra.mxu0 0.0
        %852 = vmatpush.xpose.msra.mxu0 0.0
        %853 = vmatpush.xpose.msra.mxu0 0.0
        %854 = vmatpush.xpose.msra.mxu0 0.0
        %855 = vmatpush.xpose.msra.mxu0 0.0
        %856 = vmatpush.xpose.msra.mxu0 0.0
        %857 = vmatpush.xpose.msra.mxu0 0.0
        %858 = vmatpush.xpose.msra.mxu0 0.0
        %859 = vmatpush.xpose.msra.mxu0 0.0
        %v860 = vand.u32 %v774, 4294901760
        %v861 = vsub.f32 %v774, %v860
        %862 = vmatpush.xpose.msra.mxu0 %v861
        %v863 = vand.u32 %v771, 4294901760
        %v864 = vsub.f32 %v771, %v863
        %865 = vmatpush.xpose.msra.mxu0 %v864
        %v866 = vand.u32 %v765, 4294901760
        %v867 = vsub.f32 %v765, %v866
        %868 = vmatmul.f32.gmra.mxu0 %v867
        %v869 = vpop.f32.mrf.mxu0
        %v870 = vadd.f32 %v840, %v869
        %v871 = vand.u32 %v768, 4294901760
        %v872 = vsub.f32 %v768, %v871
        %873 = vmatmul.f32.gmra.mxu0 %v872
        %v874 = vpop.f32.mrf.mxu0
        %v875 = vadd.f32 %v844, %v874
        %876 = vdwg.mxu0
        %877 = vmatpush.xpose.msra.mxu0 0.0
        %878 = vmatpush.xpose.msra.mxu0 0.0
        %879 = vmatpush.xpose.msra.mxu0 0.0
        %880 = vmatpush.xpose.msra.mxu0 0.0
        %881 = vmatpush.xpose.msra.mxu0 0.0
        %882 = vmatpush.xpose.msra.mxu0 0.0
        %883 = vmatpush.xpose.msra.mxu0 0.0
        %884 = vmatpush.xpose.msra.mxu0 0.0
        %885 = vmatpush.xpose.msra.mxu0 0.0
        %886 = vmatpush.xpose.msra.mxu0 0.0
        %887 = vmatpush.xpose.msra.mxu0 0.0
        %888 = vmatpush.xpose.msra.mxu0 0.0
        %889 = vmatpush.xpose.msra.mxu0 0.0
        %890 = vmatpush.xpose.msra.mxu0 0.0
        %v891 = vand.u32 %v774, 4294901760
        %892 = vmatpush.xpose.msra.mxu0 %v891
        %v893 = vand.u32 %v771, 4294901760
        %894 = vmatpush.xpose.msra.mxu0 %v893
        %v895 = vand.u32 %v765, 4294901760
        %v896 = vsub.f32 %v765, %v895
        %v897 = vand.u32 %v896, 4294901760
        %898 = vmatmul.f32.gmra.mxu0 %v897
        %v899 = vpop.f32.mrf.mxu0
        %v900 = vadd.f32 %v870, %v899
        %v901 = vand.u32 %v768, 4294901760
        %v902 = vsub.f32 %v768, %v901
        %v903 = vand.u32 %v902, 4294901760
        %904 = vmatmul.f32.gmra.mxu0 %v903
        %v905 = vpop.f32.mrf.mxu0
        %v906 = vadd.f32 %v875, %v905
        %907 = vdwg.mxu0
        %908 = vmatpush.xpose.msra.mxu0 0.0
        %909 = vmatpush.xpose.msra.mxu0 0.0
        %910 = vmatpush.xpose.msra.mxu0 0.0
        %911 = vmatpush.xpose.msra.mxu0 0.0
        %912 = vmatpush.xpose.msra.mxu0 0.0
        %913 = vmatpush.xpose.msra.mxu0 0.0
        %914 = vmatpush.xpose.msra.mxu0 0.0
        %915 = vmatpush.xpose.msra.mxu0 0.0
        %916 = vmatpush.xpose.msra.mxu0 0.0
        %917 = vmatpush.xpose.msra.mxu0 0.0
        %918 = vmatpush.xpose.msra.mxu0 0.0
        %919 = vmatpush.xpose.msra.mxu0 0.0
        %920 = vmatpush.xpose.msra.mxu0 0.0
        %921 = vmatpush.xpose.msra.mxu0 0.0
        %v922 = vand.u32 %v774, 4294901760
        %v923 = vsub.f32 %v774, %v922
        %v924 = vand.u32 %v923, 4294901760
        %925 = vmatpush.xpose.msra.mxu0 %v924
        %v926 = vand.u32 %v771, 4294901760
        %v927 = vsub.f32 %v771, %v926
        %v928 = vand.u32 %v927, 4294901760
        %929 = vmatpush.xpose.msra.mxu0 %v928
        %v930 = vand.u32 %v765, 4294901760
        %931 = vmatmul.f32.gmra.mxu0 %v930
        %v932 = vpop.f32.mrf.mxu0
        %v933 = vadd.f32 %v900, %v932
        %v934 = vand.u32 %v768, 4294901760
        %935 = vmatmul.f32.gmra.mxu0 %v934
        %v936 = vpop.f32.mrf.mxu0
        %v937 = vadd.f32 %v906, %v936
        %938 = vdwg.mxu0
        %939 = vmatpush.xpose.msra.mxu0 0.0
        %940 = vmatpush.xpose.msra.mxu0 0.0
        %941 = vmatpush.xpose.msra.mxu0 0.0
        %942 = vmatpush.xpose.msra.mxu0 0.0
        %943 = vmatpush.xpose.msra.mxu0 0.0
        %944 = vmatpush.xpose.msra.mxu0 0.0
        %945 = vmatpush.xpose.msra.mxu0 0.0
        %946 = vmatpush.xpose.msra.mxu0 0.0
        %947 = vmatpush.xpose.msra.mxu0 0.0
        %948 = vmatpush.xpose.msra.mxu0 0.0
        %949 = vmatpush.xpose.msra.mxu0 0.0
        %950 = vmatpush.xpose.msra.mxu0 0.0
        %951 = vmatpush.xpose.msra.mxu0 0.0
        %952 = vmatpush.xpose.msra.mxu0 0.0
        %v953 = vand.u32 %v774, 4294901760
        %954 = vmatpush.xpose.msra.mxu0 %v953
        %v955 = vand.u32 %v771, 4294901760
        %956 = vmatpush.xpose.msra.mxu0 %v955
        %v957 = vand.u32 %v765, 4294901760
        %958 = vmatmul.f32.gmra.mxu0 %v957
        %v959 = vpop.f32.mrf.mxu0
        %v960 = vadd.f32 %v933, %v959
        %v961 = vand.u32 %v768, 4294901760
        %962 = vmatmul.f32.gmra.mxu0 %v961
        %v963 = vpop.f32.mrf.mxu0
        %v964 = vadd.f32 %v937, %v963
        %965 = vdwg.mxu0
        %vm966 = vcmask 130048
        %v967 = vsel %vm966, %v960, -inf
        %968 = vmax.xlane.f32.xlu0 %v967
        %v969 = vpop.xlane.xlu0 %968
        %v970 = vsel %vm966, %v964, -inf
        %971 = vmax.xlane.f32.xlu0 %v970
        %v972 = vpop.xlane.xlu0 %971
        %v973 = vsub.f32 %v960, %v969
        %v974 = vsub.f32 %v964, %v972
        %v975 = vmul.f32 %v973, 1.442695
        %v976 = vpow.pop %v975
        %v977 = vmul.f32 %v974, 1.442695
        %v978 = vpow.pop %v977
        %v979 = vsel %vm966, %v976, 0.0
        %980 = vadd.xlane.f32.xlu0 %v979
        %v981 = vpop.xlane.xlu0 %980
        %v982 = vsel %vm966, %v978, 0.0
        %983 = vadd.xlane.f32.xlu0 %v982
        %v984 = vpop.xlane.xlu0 %983
        %v985 = vrcp.pop %v981
        %v986 = vmul.f32 %v981, %v985
        %v987 = vsub.f32 1.0, %v986
        %v988 = vmul.f32 %v985, %v987
        %v989 = vadd.f32 %v985, %v988
        %vm990 = vweird.f32 %v981
        %vm991 = vweird.f32 %v985
        %vm992 = vmor %vm990, %vm991
        %v993 = vsel %vm992, %v985, %v989
        %v994 = vand.u32 2147483647, %v981
        %vm995 = vcmp.eq.f32.partialorder %v994, 8.507059e+37
        %v996 = vand.u32 %v981, 2147483648
        %v997 = vor.u32 1.1754944e-38, %v996
        %v998 = vsel %vm995, %v997, %v993
        %v999 = vmul.f32 %v976, %v998
        %v1000 = vrcp.pop %v984
        %v1001 = vmul.f32 %v984, %v1000
        %v1002 = vsub.f32 1.0, %v1001
        %v1003 = vmul.f32 %v1000, %v1002
        %v1004 = vadd.f32 %v1000, %v1003
        %vm1005 = vweird.f32 %v984
        %vm1006 = vweird.f32 %v1000
        %vm1007 = vmor %vm1005, %vm1006
        %v1008 = vsel %vm1007, %v1000, %v1004
        %v1009 = vand.u32 2147483647, %v984
        %vm1010 = vcmp.eq.f32.partialorder %v1009, 8.507059e+37
        %v1011 = vand.u32 %v984, 2147483648
        %v1012 = vor.u32 1.1754944e-38, %v1011
        %v1013 = vsel %vm1010, %v1012, %v1008
        %v1014 = vmul.f32 %v978, %v1013
        %1015 = vst.msk [vmem:[%s190] sm:$0xff] %vm966, %v999
        %1016 = vst.msk [vmem:[%s190 + $0x8] sm:$0xff] %vm966, %v1014
        %s1017 = scalar_lea.vmem %s200, 16
        %v1018 = vld [vmem:[%s1017] sm:$0xff]
        %v1019 = vld [vmem:[%s1017 + $0x8] sm:$0xff]
        %v1021 = vsel %vm221, %v1018, 0
        %v1024 = vsel %vm221, %v1019, 0
        %1026 = vmatpush.msra.mxu0 0.0
        %1027 = vmatpush.msra.mxu0 0.0
        %1028 = vmatpush.msra.mxu0 0.0
        %1029 = vmatpush.msra.mxu0 0.0
        %1030 = vmatpush.msra.mxu0 0.0
        %1031 = vmatpush.msra.mxu0 0.0
        %1032 = vmatpush.msra.mxu0 0.0
        %1033 = vmatpush.msra.mxu0 0.0
        %v1034 = vand.u32 %v210, 4294901760
        %1035 = vmatpush.msra.mxu0 %v1034
        %v1036 = vand.u32 %v209, 4294901760
        %1037 = vmatpush.msra.mxu0 %v1036
        %v1038 = vand.u32 %v208, 4294901760
        %1039 = vmatpush.msra.mxu0 %v1038
        %v1040 = vand.u32 %v207, 4294901760
        %1041 = vmatpush.msra.mxu0 %v1040
        %v1042 = vand.u32 %v206, 4294901760
        %1043 = vmatpush.msra.mxu0 %v1042
        %v1044 = vand.u32 %v205, 4294901760
        %1045 = vmatpush.msra.mxu0 %v1044
        %v1046 = vand.u32 %v204, 4294901760
        %1047 = vmatpush.msra.mxu0 %v1046
        %v1048 = vand.u32 %v203, 4294901760
        %1049 = vmatpush.msra.mxu0 %v1048
        %v1050 = vand.u32 %v1021, 4294901760
        %v1051 = vsub.f32 %v1021, %v1050
        %v1052 = vand.u32 %v1051, 4294901760
        %v1053 = vsub.f32 %v1051, %v1052
        %v1054 = vand.u32 %v1053, 4294901760
        %1055 = vmatmul.f32.gmra.mxu0 %v1054
        %v1056 = vpop.f32.mrf.mxu0
        %v1057 = vadd.f32 0.0, %v1056
        %v1058 = vand.u32 %v1024, 4294901760
        %v1059 = vsub.f32 %v1024, %v1058
        %v1060 = vand.u32 %v1059, 4294901760
        %v1061 = vsub.f32 %v1059, %v1060
        %v1062 = vand.u32 %v1061, 4294901760
        %1063 = vmatmul.f32.gmra.mxu0 %v1062
        %v1064 = vpop.f32.mrf.mxu0
        %v1065 = vadd.f32 0.0, %v1064
        %1066 = vdwg.mxu0
        %1067 = vmatpush.msra.mxu0 0.0
        %1068 = vmatpush.msra.mxu0 0.0
        %1069 = vmatpush.msra.mxu0 0.0
        %1070 = vmatpush.msra.mxu0 0.0
        %1071 = vmatpush.msra.mxu0 0.0
        %1072 = vmatpush.msra.mxu0 0.0
        %1073 = vmatpush.msra.mxu0 0.0
        %1074 = vmatpush.msra.mxu0 0.0
        %v1075 = vand.u32 %v210, 4294901760
        %v1076 = vsub.f32 %v210, %v1075
        %v1077 = vand.u32 %v1076, 4294901760
        %v1078 = vsub.f32 %v1076, %v1077
        %v1079 = vand.u32 %v1078, 4294901760
        %1080 = vmatpush.msra.mxu0 %v1079
        %v1081 = vand.u32 %v209, 4294901760
        %v1082 = vsub.f32 %v209, %v1081
        %v1083 = vand.u32 %v1082, 4294901760
        %v1084 = vsub.f32 %v1082, %v1083
        %v1085 = vand.u32 %v1084, 4294901760
        %1086 = vmatpush.msra.mxu0 %v1085
        %v1087 = vand.u32 %v208, 4294901760
        %v1088 = vsub.f32 %v208, %v1087
        %v1089 = vand.u32 %v1088, 4294901760
        %v1090 = vsub.f32 %v1088, %v1089
        %v1091 = vand.u32 %v1090, 4294901760
        %1092 = vmatpush.msra.mxu0 %v1091
        %v1093 = vand.u32 %v207, 4294901760
        %v1094 = vsub.f32 %v207, %v1093
        %v1095 = vand.u32 %v1094, 4294901760
        %v1096 = vsub.f32 %v1094, %v1095
        %v1097 = vand.u32 %v1096, 4294901760
        %1098 = vmatpush.msra.mxu0 %v1097
        %v1099 = vand.u32 %v206, 4294901760
        %v1100 = vsub.f32 %v206, %v1099
        %v1101 = vand.u32 %v1100, 4294901760
        %v1102 = vsub.f32 %v1100, %v1101
        %v1103 = vand.u32 %v1102, 4294901760
        %1104 = vmatpush.msra.mxu0 %v1103
        %v1105 = vand.u32 %v205, 4294901760
        %v1106 = vsub.f32 %v205, %v1105
        %v1107 = vand.u32 %v1106, 4294901760
        %v1108 = vsub.f32 %v1106, %v1107
        %v1109 = vand.u32 %v1108, 4294901760
        %1110 = vmatpush.msra.mxu0 %v1109
        %v1111 = vand.u32 %v204, 4294901760
        %v1112 = vsub.f32 %v204, %v1111
        %v1113 = vand.u32 %v1112, 4294901760
        %v1114 = vsub.f32 %v1112, %v1113
        %v1115 = vand.u32 %v1114, 4294901760
        %1116 = vmatpush.msra.mxu0 %v1115
        %v1117 = vand.u32 %v203, 4294901760
        %v1118 = vsub.f32 %v203, %v1117
        %v1119 = vand.u32 %v1118, 4294901760
        %v1120 = vsub.f32 %v1118, %v1119
        %v1121 = vand.u32 %v1120, 4294901760
        %1122 = vmatpush.msra.mxu0 %v1121
        %v1123 = vand.u32 %v1021, 4294901760
        %1124 = vmatmul.f32.gmra.mxu0 %v1123
        %v1125 = vpop.f32.mrf.mxu0
        %v1126 = vadd.f32 %v1057, %v1125
        %v1127 = vand.u32 %v1024, 4294901760
        %1128 = vmatmul.f32.gmra.mxu0 %v1127
        %v1129 = vpop.f32.mrf.mxu0
        %v1130 = vadd.f32 %v1065, %v1129
        %1131 = vdwg.mxu0
        %1132 = vmatpush.msra.mxu0 0.0
        %1133 = vmatpush.msra.mxu0 0.0
        %1134 = vmatpush.msra.mxu0 0.0
        %1135 = vmatpush.msra.mxu0 0.0
        %1136 = vmatpush.msra.mxu0 0.0
        %1137 = vmatpush.msra.mxu0 0.0
        %1138 = vmatpush.msra.mxu0 0.0
        %1139 = vmatpush.msra.mxu0 0.0
        %v1140 = vand.u32 %v210, 4294901760
        %v1141 = vsub.f32 %v210, %v1140
        %1142 = vmatpush.msra.mxu0 %v1141
        %v1143 = vand.u32 %v209, 4294901760
        %v1144 = vsub.f32 %v209, %v1143
        %1145 = vmatpush.msra.mxu0 %v1144
        %v1146 = vand.u32 %v208, 4294901760
        %v1147 = vsub.f32 %v208, %v1146
        %1148 = vmatpush.msra.mxu0 %v1147
        %v1149 = vand.u32 %v207, 4294901760
        %v1150 = vsub.f32 %v207, %v1149
        %1151 = vmatpush.msra.mxu0 %v1150
        %v1152 = vand.u32 %v206, 4294901760
        %v1153 = vsub.f32 %v206, %v1152
        %1154 = vmatpush.msra.mxu0 %v1153
        %v1155 = vand.u32 %v205, 4294901760
        %v1156 = vsub.f32 %v205, %v1155
        %1157 = vmatpush.msra.mxu0 %v1156
        %v1158 = vand.u32 %v204, 4294901760
        %v1159 = vsub.f32 %v204, %v1158
        %1160 = vmatpush.msra.mxu0 %v1159
        %v1161 = vand.u32 %v203, 4294901760
        %v1162 = vsub.f32 %v203, %v1161
        %1163 = vmatpush.msra.mxu0 %v1162
        %v1164 = vand.u32 %v1021, 4294901760
        %v1165 = vsub.f32 %v1021, %v1164
        %1166 = vmatmul.f32.gmra.mxu0 %v1165
        %v1167 = vpop.f32.mrf.mxu0
        %v1168 = vadd.f32 %v1126, %v1167
        %v1169 = vand.u32 %v1024, 4294901760
        %v1170 = vsub.f32 %v1024, %v1169
        %1171 = vmatmul.f32.gmra.mxu0 %v1170
        %v1172 = vpop.f32.mrf.mxu0
        %v1173 = vadd.f32 %v1130, %v1172
        %1174 = vdwg.mxu0
        %1175 = vmatpush.msra.mxu0 0.0
        %1176 = vmatpush.msra.mxu0 0.0
        %1177 = vmatpush.msra.mxu0 0.0
        %1178 = vmatpush.msra.mxu0 0.0
        %1179 = vmatpush.msra.mxu0 0.0
        %1180 = vmatpush.msra.mxu0 0.0
        %1181 = vmatpush.msra.mxu0 0.0
        %1182 = vmatpush.msra.mxu0 0.0
        %v1183 = vand.u32 %v210, 4294901760
        %1184 = vmatpush.msra.mxu0 %v1183
        %v1185 = vand.u32 %v209, 4294901760
        %1186 = vmatpush.msra.mxu0 %v1185
        %v1187 = vand.u32 %v208, 4294901760
        %1188 = vmatpush.msra.mxu0 %v1187
        %v1189 = vand.u32 %v207, 4294901760
        %1190 = vmatpush.msra.mxu0 %v1189
        %v1191 = vand.u32 %v206, 4294901760
        %1192 = vmatpush.msra.mxu0 %v1191
        %v1193 = vand.u32 %v205, 4294901760
        %1194 = vmatpush.msra.mxu0 %v1193
        %v1195 = vand.u32 %v204, 4294901760
        %1196 = vmatpush.msra.mxu0 %v1195
        %v1197 = vand.u32 %v203, 4294901760
        %1198 = vmatpush.msra.mxu0 %v1197
        %v1199 = vand.u32 %v1021, 4294901760
        %v1200 = vsub.f32 %v1021, %v1199
        %v1201 = vand.u32 %v1200, 4294901760
        %1202 = vmatmul.f32.gmra.mxu0 %v1201
        %v1203 = vpop.f32.mrf.mxu0
        %v1204 = vadd.f32 %v1168, %v1203
        %v1205 = vand.u32 %v1024, 4294901760
        %v1206 = vsub.f32 %v1024, %v1205
        %v1207 = vand.u32 %v1206, 4294901760
        %1208 = vmatmul.f32.gmra.mxu0 %v1207
        %v1209 = vpop.f32.mrf.mxu0
        %v1210 = vadd.f32 %v1173, %v1209
        %1211 = vdwg.mxu0
        %1212 = vmatpush.msra.mxu0 0.0
        %1213 = vmatpush.msra.mxu0 0.0
        %1214 = vmatpush.msra.mxu0 0.0
        %1215 = vmatpush.msra.mxu0 0.0
        %1216 = vmatpush.msra.mxu0 0.0
        %1217 = vmatpush.msra.mxu0 0.0
        %1218 = vmatpush.msra.mxu0 0.0
        %1219 = vmatpush.msra.mxu0 0.0
        %v1220 = vand.u32 %v210, 4294901760
        %v1221 = vsub.f32 %v210, %v1220
        %v1222 = vand.u32 %v1221, 4294901760
        %1223 = vmatpush.msra.mxu0 %v1222
        %v1224 = vand.u32 %v209, 4294901760
        %v1225 = vsub.f32 %v209, %v1224
        %v1226 = vand.u32 %v1225, 4294901760
        %1227 = vmatpush.msra.mxu0 %v1226
        %v1228 = vand.u32 %v208, 4294901760
        %v1229 = vsub.f32 %v208, %v1228
        %v1230 = vand.u32 %v1229, 4294901760
        %1231 = vmatpush.msra.mxu0 %v1230
        %v1232 = vand.u32 %v207, 4294901760
        %v1233 = vsub.f32 %v207, %v1232
        %v1234 = vand.u32 %v1233, 4294901760
        %1235 = vmatpush.msra.mxu0 %v1234
        %v1236 = vand.u32 %v206, 4294901760
        %v1237 = vsub.f32 %v206, %v1236
        %v1238 = vand.u32 %v1237, 4294901760
        %1239 = vmatpush.msra.mxu0 %v1238
        %v1240 = vand.u32 %v205, 4294901760
        %v1241 = vsub.f32 %v205, %v1240
        %v1242 = vand.u32 %v1241, 4294901760
        %1243 = vmatpush.msra.mxu0 %v1242
        %v1244 = vand.u32 %v204, 4294901760
        %v1245 = vsub.f32 %v204, %v1244
        %v1246 = vand.u32 %v1245, 4294901760
        %1247 = vmatpush.msra.mxu0 %v1246
        %v1248 = vand.u32 %v203, 4294901760
        %v1249 = vsub.f32 %v203, %v1248
        %v1250 = vand.u32 %v1249, 4294901760
        %1251 = vmatpush.msra.mxu0 %v1250
        %v1252 = vand.u32 %v1021, 4294901760
        %1253 = vmatmul.f32.gmra.mxu0 %v1252
        %v1254 = vpop.f32.mrf.mxu0
        %v1255 = vadd.f32 %v1204, %v1254
        %v1256 = vand.u32 %v1024, 4294901760
        %1257 = vmatmul.f32.gmra.mxu0 %v1256
        %v1258 = vpop.f32.mrf.mxu0
        %v1259 = vadd.f32 %v1210, %v1258
        %1260 = vdwg.mxu0
        %1261 = vmatpush.msra.mxu0 0.0
        %1262 = vmatpush.msra.mxu0 0.0
        %1263 = vmatpush.msra.mxu0 0.0
        %1264 = vmatpush.msra.mxu0 0.0
        %1265 = vmatpush.msra.mxu0 0.0
        %1266 = vmatpush.msra.mxu0 0.0
        %1267 = vmatpush.msra.mxu0 0.0
        %1268 = vmatpush.msra.mxu0 0.0
        %v1269 = vand.u32 %v210, 4294901760
        %1270 = vmatpush.msra.mxu0 %v1269
        %v1271 = vand.u32 %v209, 4294901760
        %1272 = vmatpush.msra.mxu0 %v1271
        %v1273 = vand.u32 %v208, 4294901760
        %1274 = vmatpush.msra.mxu0 %v1273
        %v1275 = vand.u32 %v207, 4294901760
        %1276 = vmatpush.msra.mxu0 %v1275
        %v1277 = vand.u32 %v206, 4294901760
        %1278 = vmatpush.msra.mxu0 %v1277
        %v1279 = vand.u32 %v205, 4294901760
        %1280 = vmatpush.msra.mxu0 %v1279
        %v1281 = vand.u32 %v204, 4294901760
        %1282 = vmatpush.msra.mxu0 %v1281
        %v1283 = vand.u32 %v203, 4294901760
        %1284 = vmatpush.msra.mxu0 %v1283
        %v1285 = vand.u32 %v1021, 4294901760
        %1286 = vmatmul.f32.gmra.mxu0 %v1285
        %v1287 = vpop.f32.mrf.mxu0
        %v1288 = vadd.f32 %v1255, %v1287
        %v1289 = vand.u32 %v1024, 4294901760
        %1290 = vmatmul.f32.gmra.mxu0 %v1289
        %v1291 = vpop.f32.mrf.mxu0
        %v1292 = vadd.f32 %v1259, %v1291
        %1293 = vdwg.mxu0
        %1294 = vmatpush.msra.mxu0 0.0
        %1295 = vmatpush.msra.mxu0 0.0
        %1296 = vmatpush.msra.mxu0 0.0
        %1297 = vmatpush.msra.mxu0 0.0
        %1298 = vmatpush.msra.mxu0 0.0
        %1299 = vmatpush.msra.mxu0 0.0
        %1300 = vmatpush.msra.mxu0 0.0
        %1301 = vmatpush.msra.mxu0 0.0
        %v1302 = vand.u32 %v218, 4294901760
        %1303 = vmatpush.msra.mxu0 %v1302
        %v1304 = vand.u32 %v217, 4294901760
        %1305 = vmatpush.msra.mxu0 %v1304
        %v1306 = vand.u32 %v216, 4294901760
        %1307 = vmatpush.msra.mxu0 %v1306
        %v1308 = vand.u32 %v215, 4294901760
        %1309 = vmatpush.msra.mxu0 %v1308
        %v1310 = vand.u32 %v214, 4294901760
        %1311 = vmatpush.msra.mxu0 %v1310
        %v1312 = vand.u32 %v213, 4294901760
        %1313 = vmatpush.msra.mxu0 %v1312
        %v1314 = vand.u32 %v212, 4294901760
        %1315 = vmatpush.msra.mxu0 %v1314
        %v1316 = vand.u32 %v211, 4294901760
        %1317 = vmatpush.msra.mxu0 %v1316
        %v1318 = vand.u32 %v1021, 4294901760
        %v1319 = vsub.f32 %v1021, %v1318
        %v1320 = vand.u32 %v1319, 4294901760
        %v1321 = vsub.f32 %v1319, %v1320
        %v1322 = vand.u32 %v1321, 4294901760
        %1323 = vmatmul.f32.gmra.mxu0 %v1322
        %v1324 = vpop.f32.mrf.mxu0
        %v1325 = vadd.f32 0.0, %v1324
        %v1326 = vand.u32 %v1024, 4294901760
        %v1327 = vsub.f32 %v1024, %v1326
        %v1328 = vand.u32 %v1327, 4294901760
        %v1329 = vsub.f32 %v1327, %v1328
        %v1330 = vand.u32 %v1329, 4294901760
        %1331 = vmatmul.f32.gmra.mxu0 %v1330
        %v1332 = vpop.f32.mrf.mxu0
        %v1333 = vadd.f32 0.0, %v1332
        %1334 = vdwg.mxu0
        %1335 = vmatpush.msra.mxu0 0.0
        %1336 = vmatpush.msra.mxu0 0.0
        %1337 = vmatpush.msra.mxu0 0.0
        %1338 = vmatpush.msra.mxu0 0.0
        %1339 = vmatpush.msra.mxu0 0.0
        %1340 = vmatpush.msra.mxu0 0.0
        %1341 = vmatpush.msra.mxu0 0.0
        %1342 = vmatpush.msra.mxu0 0.0
        %v1343 = vand.u32 %v218, 4294901760
        %v1344 = vsub.f32 %v218, %v1343
        %v1345 = vand.u32 %v1344, 4294901760
        %v1346 = vsub.f32 %v1344, %v1345
        %v1347 = vand.u32 %v1346, 4294901760
        %1348 = vmatpush.msra.mxu0 %v1347
        %v1349 = vand.u32 %v217, 4294901760
        %v1350 = vsub.f32 %v217, %v1349
        %v1351 = vand.u32 %v1350, 4294901760
        %v1352 = vsub.f32 %v1350, %v1351
        %v1353 = vand.u32 %v1352, 4294901760
        %1354 = vmatpush.msra.mxu0 %v1353
        %v1355 = vand.u32 %v216, 4294901760
        %v1356 = vsub.f32 %v216, %v1355
        %v1357 = vand.u32 %v1356, 4294901760
        %v1358 = vsub.f32 %v1356, %v1357
        %v1359 = vand.u32 %v1358, 4294901760
        %1360 = vmatpush.msra.mxu0 %v1359
        %v1361 = vand.u32 %v215, 4294901760
        %v1362 = vsub.f32 %v215, %v1361
        %v1363 = vand.u32 %v1362, 4294901760
        %v1364 = vsub.f32 %v1362, %v1363
        %v1365 = vand.u32 %v1364, 4294901760
        %1366 = vmatpush.msra.mxu0 %v1365
        %v1367 = vand.u32 %v214, 4294901760
        %v1368 = vsub.f32 %v214, %v1367
        %v1369 = vand.u32 %v1368, 4294901760
        %v1370 = vsub.f32 %v1368, %v1369
        %v1371 = vand.u32 %v1370, 4294901760
        %1372 = vmatpush.msra.mxu0 %v1371
        %v1373 = vand.u32 %v213, 4294901760
        %v1374 = vsub.f32 %v213, %v1373
        %v1375 = vand.u32 %v1374, 4294901760
        %v1376 = vsub.f32 %v1374, %v1375
        %v1377 = vand.u32 %v1376, 4294901760
        %1378 = vmatpush.msra.mxu0 %v1377
        %v1379 = vand.u32 %v212, 4294901760
        %v1380 = vsub.f32 %v212, %v1379
        %v1381 = vand.u32 %v1380, 4294901760
        %v1382 = vsub.f32 %v1380, %v1381
        %v1383 = vand.u32 %v1382, 4294901760
        %1384 = vmatpush.msra.mxu0 %v1383
        %v1385 = vand.u32 %v211, 4294901760
        %v1386 = vsub.f32 %v211, %v1385
        %v1387 = vand.u32 %v1386, 4294901760
        %v1388 = vsub.f32 %v1386, %v1387
        %v1389 = vand.u32 %v1388, 4294901760
        %1390 = vmatpush.msra.mxu0 %v1389
        %v1391 = vand.u32 %v1021, 4294901760
        %1392 = vmatmul.f32.gmra.mxu0 %v1391
        %v1393 = vpop.f32.mrf.mxu0
        %v1394 = vadd.f32 %v1325, %v1393
        %v1395 = vand.u32 %v1024, 4294901760
        %1396 = vmatmul.f32.gmra.mxu0 %v1395
        %v1397 = vpop.f32.mrf.mxu0
        %v1398 = vadd.f32 %v1333, %v1397
        %1399 = vdwg.mxu0
        %1400 = vmatpush.msra.mxu0 0.0
        %1401 = vmatpush.msra.mxu0 0.0
        %1402 = vmatpush.msra.mxu0 0.0
        %1403 = vmatpush.msra.mxu0 0.0
        %1404 = vmatpush.msra.mxu0 0.0
        %1405 = vmatpush.msra.mxu0 0.0
        %1406 = vmatpush.msra.mxu0 0.0
        %1407 = vmatpush.msra.mxu0 0.0
        %v1408 = vand.u32 %v218, 4294901760
        %v1409 = vsub.f32 %v218, %v1408
        %1410 = vmatpush.msra.mxu0 %v1409
        %v1411 = vand.u32 %v217, 4294901760
        %v1412 = vsub.f32 %v217, %v1411
        %1413 = vmatpush.msra.mxu0 %v1412
        %v1414 = vand.u32 %v216, 4294901760
        %v1415 = vsub.f32 %v216, %v1414
        %1416 = vmatpush.msra.mxu0 %v1415
        %v1417 = vand.u32 %v215, 4294901760
        %v1418 = vsub.f32 %v215, %v1417
        %1419 = vmatpush.msra.mxu0 %v1418
        %v1420 = vand.u32 %v214, 4294901760
        %v1421 = vsub.f32 %v214, %v1420
        %1422 = vmatpush.msra.mxu0 %v1421
        %v1423 = vand.u32 %v213, 4294901760
        %v1424 = vsub.f32 %v213, %v1423
        %1425 = vmatpush.msra.mxu0 %v1424
        %v1426 = vand.u32 %v212, 4294901760
        %v1427 = vsub.f32 %v212, %v1426
        %1428 = vmatpush.msra.mxu0 %v1427
        %v1429 = vand.u32 %v211, 4294901760
        %v1430 = vsub.f32 %v211, %v1429
        %1431 = vmatpush.msra.mxu0 %v1430
        %v1432 = vand.u32 %v1021, 4294901760
        %v1433 = vsub.f32 %v1021, %v1432
        %1434 = vmatmul.f32.gmra.mxu0 %v1433
        %v1435 = vpop.f32.mrf.mxu0
        %v1436 = vadd.f32 %v1394, %v1435
        %v1437 = vand.u32 %v1024, 4294901760
        %v1438 = vsub.f32 %v1024, %v1437
        %1439 = vmatmul.f32.gmra.mxu0 %v1438
        %v1440 = vpop.f32.mrf.mxu0
        %v1441 = vadd.f32 %v1398, %v1440
        %1442 = vdwg.mxu0
        %1443 = vmatpush.msra.mxu0 0.0
        %1444 = vmatpush.msra.mxu0 0.0
        %1445 = vmatpush.msra.mxu0 0.0
        %1446 = vmatpush.msra.mxu0 0.0
        %1447 = vmatpush.msra.mxu0 0.0
        %1448 = vmatpush.msra.mxu0 0.0
        %1449 = vmatpush.msra.mxu0 0.0
        %1450 = vmatpush.msra.mxu0 0.0
        %v1451 = vand.u32 %v218, 4294901760
        %1452 = vmatpush.msra.mxu0 %v1451
        %v1453 = vand.u32 %v217, 4294901760
        %1454 = vmatpush.msra.mxu0 %v1453
        %v1455 = vand.u32 %v216, 4294901760
        %1456 = vmatpush.msra.mxu0 %v1455
        %v1457 = vand.u32 %v215, 4294901760
        %1458 = vmatpush.msra.mxu0 %v1457
        %v1459 = vand.u32 %v214, 4294901760
        %1460 = vmatpush.msra.mxu0 %v1459
        %v1461 = vand.u32 %v213, 4294901760
        %1462 = vmatpush.msra.mxu0 %v1461
        %v1463 = vand.u32 %v212, 4294901760
        %1464 = vmatpush.msra.mxu0 %v1463
        %v1465 = vand.u32 %v211, 4294901760
        %1466 = vmatpush.msra.mxu0 %v1465
        %v1467 = vand.u32 %v1021, 4294901760
        %v1468 = vsub.f32 %v1021, %v1467
        %v1469 = vand.u32 %v1468, 4294901760
        %1470 = vmatmul.f32.gmra.mxu0 %v1469
        %v1471 = vpop.f32.mrf.mxu0
        %v1472 = vadd.f32 %v1436, %v1471
        %v1473 = vand.u32 %v1024, 4294901760
        %v1474 = vsub.f32 %v1024, %v1473
        %v1475 = vand.u32 %v1474, 4294901760
        %1476 = vmatmul.f32.gmra.mxu0 %v1475
        %v1477 = vpop.f32.mrf.mxu0
        %v1478 = vadd.f32 %v1441, %v1477
        %1479 = vdwg.mxu0
        %1480 = vmatpush.msra.mxu0 0.0
        %1481 = vmatpush.msra.mxu0 0.0
        %1482 = vmatpush.msra.mxu0 0.0
        %1483 = vmatpush.msra.mxu0 0.0
        %1484 = vmatpush.msra.mxu0 0.0
        %1485 = vmatpush.msra.mxu0 0.0
        %1486 = vmatpush.msra.mxu0 0.0
        %1487 = vmatpush.msra.mxu0 0.0
        %v1488 = vand.u32 %v218, 4294901760
        %v1489 = vsub.f32 %v218, %v1488
        %v1490 = vand.u32 %v1489, 4294901760
        %1491 = vmatpush.msra.mxu0 %v1490
        %v1492 = vand.u32 %v217, 4294901760
        %v1493 = vsub.f32 %v217, %v1492
        %v1494 = vand.u32 %v1493, 4294901760
        %1495 = vmatpush.msra.mxu0 %v1494
        %v1496 = vand.u32 %v216, 4294901760
        %v1497 = vsub.f32 %v216, %v1496
        %v1498 = vand.u32 %v1497, 4294901760
        %1499 = vmatpush.msra.mxu0 %v1498
        %v1500 = vand.u32 %v215, 4294901760
        %v1501 = vsub.f32 %v215, %v1500
        %v1502 = vand.u32 %v1501, 4294901760
        %1503 = vmatpush.msra.mxu0 %v1502
        %v1504 = vand.u32 %v214, 4294901760
        %v1505 = vsub.f32 %v214, %v1504
        %v1506 = vand.u32 %v1505, 4294901760
        %1507 = vmatpush.msra.mxu0 %v1506
        %v1508 = vand.u32 %v213, 4294901760
        %v1509 = vsub.f32 %v213, %v1508
        %v1510 = vand.u32 %v1509, 4294901760
        %1511 = vmatpush.msra.mxu0 %v1510
        %v1512 = vand.u32 %v212, 4294901760
        %v1513 = vsub.f32 %v212, %v1512
        %v1514 = vand.u32 %v1513, 4294901760
        %1515 = vmatpush.msra.mxu0 %v1514
        %v1516 = vand.u32 %v211, 4294901760
        %v1517 = vsub.f32 %v211, %v1516
        %v1518 = vand.u32 %v1517, 4294901760
        %1519 = vmatpush.msra.mxu0 %v1518
        %v1520 = vand.u32 %v1021, 4294901760
        %1521 = vmatmul.f32.gmra.mxu0 %v1520
        %v1522 = vpop.f32.mrf.mxu0
        %v1523 = vadd.f32 %v1472, %v1522
        %v1524 = vand.u32 %v1024, 4294901760
        %1525 = vmatmul.f32.gmra.mxu0 %v1524
        %v1526 = vpop.f32.mrf.mxu0
        %v1527 = vadd.f32 %v1478, %v1526
        %1528 = vdwg.mxu0
        %1529 = vmatpush.msra.mxu0 0.0
        %1530 = vmatpush.msra.mxu0 0.0
        %1531 = vmatpush.msra.mxu0 0.0
        %1532 = vmatpush.msra.mxu0 0.0
        %1533 = vmatpush.msra.mxu0 0.0
        %1534 = vmatpush.msra.mxu0 0.0
        %1535 = vmatpush.msra.mxu0 0.0
        %1536 = vmatpush.msra.mxu0 0.0
        %v1537 = vand.u32 %v218, 4294901760
        %1538 = vmatpush.msra.mxu0 %v1537
        %v1539 = vand.u32 %v217, 4294901760
        %1540 = vmatpush.msra.mxu0 %v1539
        %v1541 = vand.u32 %v216, 4294901760
        %1542 = vmatpush.msra.mxu0 %v1541
        %v1543 = vand.u32 %v215, 4294901760
        %1544 = vmatpush.msra.mxu0 %v1543
        %v1545 = vand.u32 %v214, 4294901760
        %1546 = vmatpush.msra.mxu0 %v1545
        %v1547 = vand.u32 %v213, 4294901760
        %1548 = vmatpush.msra.mxu0 %v1547
        %v1549 = vand.u32 %v212, 4294901760
        %1550 = vmatpush.msra.mxu0 %v1549
        %v1551 = vand.u32 %v211, 4294901760
        %1552 = vmatpush.msra.mxu0 %v1551
        %v1553 = vand.u32 %v1021, 4294901760
        %1554 = vmatmul.f32.gmra.mxu0 %v1553
        %v1555 = vpop.f32.mrf.mxu0
        %v1556 = vadd.f32 %v1523, %v1555
        %v1557 = vand.u32 %v1024, 4294901760
        %1558 = vmatmul.f32.gmra.mxu0 %v1557
        %v1559 = vpop.f32.mrf.mxu0
        %v1560 = vadd.f32 %v1527, %v1559
        %1561 = vdwg.mxu0
        %v1563 = vsel %vm221, %v1288, 0
        %v1566 = vsel %vm221, %v1292, 0
        %v1569 = vsel %vm221, %v1556, 0
        %v1572 = vsel %vm221, %v1560, 0
        %1574 = vmatpush.xpose.msra.mxu0 0.0
        %1575 = vmatpush.xpose.msra.mxu0 0.0
        %1576 = vmatpush.xpose.msra.mxu0 0.0
        %1577 = vmatpush.xpose.msra.mxu0 0.0
        %1578 = vmatpush.xpose.msra.mxu0 0.0
        %1579 = vmatpush.xpose.msra.mxu0 0.0
        %1580 = vmatpush.xpose.msra.mxu0 0.0
        %1581 = vmatpush.xpose.msra.mxu0 0.0
        %1582 = vmatpush.xpose.msra.mxu0 0.0
        %1583 = vmatpush.xpose.msra.mxu0 0.0
        %1584 = vmatpush.xpose.msra.mxu0 0.0
        %1585 = vmatpush.xpose.msra.mxu0 0.0
        %1586 = vmatpush.xpose.msra.mxu0 0.0
        %1587 = vmatpush.xpose.msra.mxu0 0.0
        %v1588 = vand.u32 %v1572, 4294901760
        %1589 = vmatpush.xpose.msra.mxu0 %v1588
        %v1590 = vand.u32 %v1569, 4294901760
        %1591 = vmatpush.xpose.msra.mxu0 %v1590
        %v1592 = vand.u32 %v1563, 4294901760
        %v1593 = vsub.f32 %v1563, %v1592
        %v1594 = vand.u32 %v1593, 4294901760
        %v1595 = vsub.f32 %v1593, %v1594
        %v1596 = vand.u32 %v1595, 4294901760
        %1597 = vmatmul.f32.gmra.mxu0 %v1596
        %v1598 = vpop.f32.mrf.mxu0
        %v1599 = vadd.f32 0.0, %v1598
        %v1600 = vand.u32 %v1566, 4294901760
        %v1601 = vsub.f32 %v1566, %v1600
        %v1602 = vand.u32 %v1601, 4294901760
        %v1603 = vsub.f32 %v1601, %v1602
        %v1604 = vand.u32 %v1603, 4294901760
        %1605 = vmatmul.f32.gmra.mxu0 %v1604
        %v1606 = vpop.f32.mrf.mxu0
        %v1607 = vadd.f32 0.0, %v1606
        %1608 = vdwg.mxu0
        %1609 = vmatpush.xpose.msra.mxu0 0.0
        %1610 = vmatpush.xpose.msra.mxu0 0.0
        %1611 = vmatpush.xpose.msra.mxu0 0.0
        %1612 = vmatpush.xpose.msra.mxu0 0.0
        %1613 = vmatpush.xpose.msra.mxu0 0.0
        %1614 = vmatpush.xpose.msra.mxu0 0.0
        %1615 = vmatpush.xpose.msra.mxu0 0.0
        %1616 = vmatpush.xpose.msra.mxu0 0.0
        %1617 = vmatpush.xpose.msra.mxu0 0.0
        %1618 = vmatpush.xpose.msra.mxu0 0.0
        %1619 = vmatpush.xpose.msra.mxu0 0.0
        %1620 = vmatpush.xpose.msra.mxu0 0.0
        %1621 = vmatpush.xpose.msra.mxu0 0.0
        %1622 = vmatpush.xpose.msra.mxu0 0.0
        %v1623 = vand.u32 %v1572, 4294901760
        %v1624 = vsub.f32 %v1572, %v1623
        %v1625 = vand.u32 %v1624, 4294901760
        %v1626 = vsub.f32 %v1624, %v1625
        %v1627 = vand.u32 %v1626, 4294901760
        %1628 = vmatpush.xpose.msra.mxu0 %v1627
        %v1629 = vand.u32 %v1569, 4294901760
        %v1630 = vsub.f32 %v1569, %v1629
        %v1631 = vand.u32 %v1630, 4294901760
        %v1632 = vsub.f32 %v1630, %v1631
        %v1633 = vand.u32 %v1632, 4294901760
        %1634 = vmatpush.xpose.msra.mxu0 %v1633
        %v1635 = vand.u32 %v1563, 4294901760
        %1636 = vmatmul.f32.gmra.mxu0 %v1635
        %v1637 = vpop.f32.mrf.mxu0
        %v1638 = vadd.f32 %v1599, %v1637
        %v1639 = vand.u32 %v1566, 4294901760
        %1640 = vmatmul.f32.gmra.mxu0 %v1639
        %v1641 = vpop.f32.mrf.mxu0
        %v1642 = vadd.f32 %v1607, %v1641
        %1643 = vdwg.mxu0
        %1644 = vmatpush.xpose.msra.mxu0 0.0
        %1645 = vmatpush.xpose.msra.mxu0 0.0
        %1646 = vmatpush.xpose.msra.mxu0 0.0
        %1647 = vmatpush.xpose.msra.mxu0 0.0
        %1648 = vmatpush.xpose.msra.mxu0 0.0
        %1649 = vmatpush.xpose.msra.mxu0 0.0
        %1650 = vmatpush.xpose.msra.mxu0 0.0
        %1651 = vmatpush.xpose.msra.mxu0 0.0
        %1652 = vmatpush.xpose.msra.mxu0 0.0
        %1653 = vmatpush.xpose.msra.mxu0 0.0
        %1654 = vmatpush.xpose.msra.mxu0 0.0
        %1655 = vmatpush.xpose.msra.mxu0 0.0
        %1656 = vmatpush.xpose.msra.mxu0 0.0
        %1657 = vmatpush.xpose.msra.mxu0 0.0
        %v1658 = vand.u32 %v1572, 4294901760
        %v1659 = vsub.f32 %v1572, %v1658
        %1660 = vmatpush.xpose.msra.mxu0 %v1659
        %v1661 = vand.u32 %v1569, 4294901760
        %v1662 = vsub.f32 %v1569, %v1661
        %1663 = vmatpush.xpose.msra.mxu0 %v1662
        %v1664 = vand.u32 %v1563, 4294901760
        %v1665 = vsub.f32 %v1563, %v1664
        %1666 = vmatmul.f32.gmra.mxu0 %v1665
        %v1667 = vpop.f32.mrf.mxu0
        %v1668 = vadd.f32 %v1638, %v1667
        %v1669 = vand.u32 %v1566, 4294901760
        %v1670 = vsub.f32 %v1566, %v1669
        %1671 = vmatmul.f32.gmra.mxu0 %v1670
        %v1672 = vpop.f32.mrf.mxu0
        %v1673 = vadd.f32 %v1642, %v1672
        %1674 = vdwg.mxu0
        %1675 = vmatpush.xpose.msra.mxu0 0.0
        %1676 = vmatpush.xpose.msra.mxu0 0.0
        %1677 = vmatpush.xpose.msra.mxu0 0.0
        %1678 = vmatpush.xpose.msra.mxu0 0.0
        %1679 = vmatpush.xpose.msra.mxu0 0.0
        %1680 = vmatpush.xpose.msra.mxu0 0.0
        %1681 = vmatpush.xpose.msra.mxu0 0.0
        %1682 = vmatpush.xpose.msra.mxu0 0.0
        %1683 = vmatpush.xpose.msra.mxu0 0.0
        %1684 = vmatpush.xpose.msra.mxu0 0.0
        %1685 = vmatpush.xpose.msra.mxu0 0.0
        %1686 = vmatpush.xpose.msra.mxu0 0.0
        %1687 = vmatpush.xpose.msra.mxu0 0.0
        %1688 = vmatpush.xpose.msra.mxu0 0.0
        %v1689 = vand.u32 %v1572, 4294901760
        %1690 = vmatpush.xpose.msra.mxu0 %v1689
        %v1691 = vand.u32 %v1569, 4294901760
        %1692 = vmatpush.xpose.msra.mxu0 %v1691
        %v1693 = vand.u32 %v1563, 4294901760
        %v1694 = vsub.f32 %v1563, %v1693
        %v1695 = vand.u32 %v1694, 4294901760
        %1696 = vmatmul.f32.gmra.mxu0 %v1695
        %v1697 = vpop.f32.mrf.mxu0
        %v1698 = vadd.f32 %v1668, %v1697
        %v1699 = vand.u32 %v1566, 4294901760
        %v1700 = vsub.f32 %v1566, %v1699
        %v1701 = vand.u32 %v1700, 4294901760
        %1702 = vmatmul.f32.gmra.mxu0 %v1701
        %v1703 = vpop.f32.mrf.mxu0
        %v1704 = vadd.f32 %v1673, %v1703
        %1705 = vdwg.mxu0
        %1706 = vmatpush.xpose.msra.mxu0 0.0
        %1707 = vmatpush.xpose.msra.mxu0 0.0
        %1708 = vmatpush.xpose.msra.mxu0 0.0
        %1709 = vmatpush.xpose.msra.mxu0 0.0
        %1710 = vmatpush.xpose.msra.mxu0 0.0
        %1711 = vmatpush.xpose.msra.mxu0 0.0
        %1712 = vmatpush.xpose.msra.mxu0 0.0
        %1713 = vmatpush.xpose.msra.mxu0 0.0
        %1714 = vmatpush.xpose.msra.mxu0 0.0
        %1715 = vmatpush.xpose.msra.mxu0 0.0
        %1716 = vmatpush.xpose.msra.mxu0 0.0
        %1717 = vmatpush.xpose.msra.mxu0 0.0
        %1718 = vmatpush.xpose.msra.mxu0 0.0
        %1719 = vmatpush.xpose.msra.mxu0 0.0
        %v1720 = vand.u32 %v1572, 4294901760
        %v1721 = vsub.f32 %v1572, %v1720
        %v1722 = vand.u32 %v1721, 4294901760
        %1723 = vmatpush.xpose.msra.mxu0 %v1722
        %v1724 = vand.u32 %v1569, 4294901760
        %v1725 = vsub.f32 %v1569, %v1724
        %v1726 = vand.u32 %v1725, 4294901760
        %1727 = vmatpush.xpose.msra.mxu0 %v1726
        %v1728 = vand.u32 %v1563, 4294901760
        %1729 = vmatmul.f32.gmra.mxu0 %v1728
        %v1730 = vpop.f32.mrf.mxu0
        %v1731 = vadd.f32 %v1698, %v1730
        %v1732 = vand.u32 %v1566, 4294901760
        %1733 = vmatmul.f32.gmra.mxu0 %v1732
        %v1734 = vpop.f32.mrf.mxu0
        %v1735 = vadd.f32 %v1704, %v1734
        %1736 = vdwg.mxu0
        %1737 = vmatpush.xpose.msra.mxu0 0.0
        %1738 = vmatpush.xpose.msra.mxu0 0.0
        %1739 = vmatpush.xpose.msra.mxu0 0.0
        %1740 = vmatpush.xpose.msra.mxu0 0.0
        %1741 = vmatpush.xpose.msra.mxu0 0.0
        %1742 = vmatpush.xpose.msra.mxu0 0.0
        %1743 = vmatpush.xpose.msra.mxu0 0.0
        %1744 = vmatpush.xpose.msra.mxu0 0.0
        %1745 = vmatpush.xpose.msra.mxu0 0.0
        %1746 = vmatpush.xpose.msra.mxu0 0.0
        %1747 = vmatpush.xpose.msra.mxu0 0.0
        %1748 = vmatpush.xpose.msra.mxu0 0.0
        %1749 = vmatpush.xpose.msra.mxu0 0.0
        %1750 = vmatpush.xpose.msra.mxu0 0.0
        %v1751 = vand.u32 %v1572, 4294901760
        %1752 = vmatpush.xpose.msra.mxu0 %v1751
        %v1753 = vand.u32 %v1569, 4294901760
        %1754 = vmatpush.xpose.msra.mxu0 %v1753
        %v1755 = vand.u32 %v1563, 4294901760
        %1756 = vmatmul.f32.gmra.mxu0 %v1755
        %v1757 = vpop.f32.mrf.mxu0
        %v1758 = vadd.f32 %v1731, %v1757
        %v1759 = vand.u32 %v1566, 4294901760
        %1760 = vmatmul.f32.gmra.mxu0 %v1759
        %v1761 = vpop.f32.mrf.mxu0
        %v1762 = vadd.f32 %v1735, %v1761
        %1763 = vdwg.mxu0
        %v1764 = vsel %vm966, %v1758, -inf
        %1765 = vmax.xlane.f32.xlu0 %v1764
        %v1766 = vpop.xlane.xlu0 %1765
        %v1767 = vsel %vm966, %v1762, -inf
        %1768 = vmax.xlane.f32.xlu0 %v1767
        %v1769 = vpop.xlane.xlu0 %1768
        %v1770 = vsub.f32 %v1758, %v1766
        %v1771 = vsub.f32 %v1762, %v1769
        %v1772 = vmul.f32 %v1770, 1.442695
        %v1773 = vpow.pop %v1772
        %v1774 = vmul.f32 %v1771, 1.442695
        %v1775 = vpow.pop %v1774
        %v1776 = vsel %vm966, %v1773, 0.0
        %1777 = vadd.xlane.f32.xlu0 %v1776
        %v1778 = vpop.xlane.xlu0 %1777
        %v1779 = vsel %vm966, %v1775, 0.0
        %1780 = vadd.xlane.f32.xlu0 %v1779
        %v1781 = vpop.xlane.xlu0 %1780
        %v1782 = vrcp.pop %v1778
        %v1783 = vmul.f32 %v1778, %v1782
        %v1784 = vsub.f32 1.0, %v1783
        %v1785 = vmul.f32 %v1782, %v1784
        %v1786 = vadd.f32 %v1782, %v1785
        %vm1787 = vweird.f32 %v1778
        %vm1788 = vweird.f32 %v1782
        %vm1789 = vmor %vm1787, %vm1788
        %v1790 = vsel %vm1789, %v1782, %v1786
        %v1791 = vand.u32 2147483647, %v1778
        %vm1792 = vcmp.eq.f32.partialorder %v1791, 8.507059e+37
        %v1793 = vand.u32 %v1778, 2147483648
        %v1794 = vor.u32 1.1754944e-38, %v1793
        %v1795 = vsel %vm1792, %v1794, %v1790
        %v1796 = vmul.f32 %v1773, %v1795
        %v1797 = vrcp.pop %v1781
        %v1798 = vmul.f32 %v1781, %v1797
        %v1799 = vsub.f32 1.0, %v1798
        %v1800 = vmul.f32 %v1797, %v1799
        %v1801 = vadd.f32 %v1797, %v1800
        %vm1802 = vweird.f32 %v1781
        %vm1803 = vweird.f32 %v1797
        %vm1804 = vmor %vm1802, %vm1803
        %v1805 = vsel %vm1804, %v1797, %v1801
        %v1806 = vand.u32 2147483647, %v1781
        %vm1807 = vcmp.eq.f32.partialorder %v1806, 8.507059e+37
        %v1808 = vand.u32 %v1781, 2147483648
        %v1809 = vor.u32 1.1754944e-38, %v1808
        %v1810 = vsel %vm1807, %v1809, %v1805
        %v1811 = vmul.f32 %v1775, %v1810
        %s1812 = scalar_lea.vmem %s190, 16 [#allocation2]
        %1813 = vst.msk [vmem:[%s1812] sm:$0xff] %vm966, %v1796
        %1814 = vst.msk [vmem:[%s1812 + $0x8] sm:$0xff] %vm966, %v1811
        %s1815 = scalar_lea.vmem %s200, 32
        %v1816 = vld [vmem:[%s1815] sm:$0xff]
        %v1817 = vld [vmem:[%s1815 + $0x8] sm:$0xff]
        %v1819 = vsel %vm221, %v1816, 0
        %v1822 = vsel %vm221, %v1817, 0
        %1824 = vmatpush.msra.mxu0 0.0
        %1825 = vmatpush.msra.mxu0 0.0
        %1826 = vmatpush.msra.mxu0 0.0
        %1827 = vmatpush.msra.mxu0 0.0
        %1828 = vmatpush.msra.mxu0 0.0
        %1829 = vmatpush.msra.mxu0 0.0
        %1830 = vmatpush.msra.mxu0 0.0
        %1831 = vmatpush.msra.mxu0 0.0
        %v1832 = vand.u32 %v210, 4294901760
        %1833 = vmatpush.msra.mxu0 %v1832
        %v1834 = vand.u32 %v209, 4294901760
        %1835 = vmatpush.msra.mxu0 %v1834
        %v1836 = vand.u32 %v208, 4294901760
        %1837 = vmatpush.msra.mxu0 %v1836
        %v1838 = vand.u32 %v207, 4294901760
        %1839 = vmatpush.msra.mxu0 %v1838
        %v1840 = vand.u32 %v206, 4294901760
        %1841 = vmatpush.msra.mxu0 %v1840
        %v1842 = vand.u32 %v205, 4294901760
        %1843 = vmatpush.msra.mxu0 %v1842
        %v1844 = vand.u32 %v204, 4294901760
        %1845 = vmatpush.msra.mxu0 %v1844
        %v1846 = vand.u32 %v203, 4294901760
        %1847 = vmatpush.msra.mxu0 %v1846
        %v1848 = vand.u32 %v1819, 4294901760
        %v1849 = vsub.f32 %v1819, %v1848
        %v1850 = vand.u32 %v1849, 4294901760
        %v1851 = vsub.f32 %v1849, %v1850
        %v1852 = vand.u32 %v1851, 4294901760
        %1853 = vmatmul.f32.gmra.mxu0 %v1852
        %v1854 = vpop.f32.mrf.mxu0
        %v1855 = vadd.f32 0.0, %v1854
        %v1856 = vand.u32 %v1822, 4294901760
        %v1857 = vsub.f32 %v1822, %v1856
        %v1858 = vand.u32 %v1857, 4294901760
        %v1859 = vsub.f32 %v1857, %v1858
        %v1860 = vand.u32 %v1859, 4294901760
        %1861 = vmatmul.f32.gmra.mxu0 %v1860
        %v1862 = vpop.f32.mrf.mxu0
        %v1863 = vadd.f32 0.0, %v1862
        %1864 = vdwg.mxu0
        %1865 = vmatpush.msra.mxu0 0.0
        %1866 = vmatpush.msra.mxu0 0.0
        %1867 = vmatpush.msra.mxu0 0.0
        %1868 = vmatpush.msra.mxu0 0.0
        %1869 = vmatpush.msra.mxu0 0.0
        %1870 = vmatpush.msra.mxu0 0.0
        %1871 = vmatpush.msra.mxu0 0.0
        %1872 = vmatpush.msra.mxu0 0.0
        %v1873 = vand.u32 %v210, 4294901760
        %v1874 = vsub.f32 %v210, %v1873
        %v1875 = vand.u32 %v1874, 4294901760
        %v1876 = vsub.f32 %v1874, %v1875
        %v1877 = vand.u32 %v1876, 4294901760
        %1878 = vmatpush.msra.mxu0 %v1877
        %v1879 = vand.u32 %v209, 4294901760
        %v1880 = vsub.f32 %v209, %v1879
        %v1881 = vand.u32 %v1880, 4294901760
        %v1882 = vsub.f32 %v1880, %v1881
        %v1883 = vand.u32 %v1882, 4294901760
        %1884 = vmatpush.msra.mxu0 %v1883
        %v1885 = vand.u32 %v208, 4294901760
        %v1886 = vsub.f32 %v208, %v1885
        %v1887 = vand.u32 %v1886, 4294901760
        %v1888 = vsub.f32 %v1886, %v1887
        %v1889 = vand.u32 %v1888, 4294901760
        %1890 = vmatpush.msra.mxu0 %v1889
        %v1891 = vand.u32 %v207, 4294901760
        %v1892 = vsub.f32 %v207, %v1891
        %v1893 = vand.u32 %v1892, 4294901760
        %v1894 = vsub.f32 %v1892, %v1893
        %v1895 = vand.u32 %v1894, 4294901760
        %1896 = vmatpush.msra.mxu0 %v1895
        %v1897 = vand.u32 %v206, 4294901760
        %v1898 = vsub.f32 %v206, %v1897
        %v1899 = vand.u32 %v1898, 4294901760
        %v1900 = vsub.f32 %v1898, %v1899
        %v1901 = vand.u32 %v1900, 4294901760
        %1902 = vmatpush.msra.mxu0 %v1901
        %v1903 = vand.u32 %v205, 4294901760
        %v1904 = vsub.f32 %v205, %v1903
        %v1905 = vand.u32 %v1904, 4294901760
        %v1906 = vsub.f32 %v1904, %v1905
        %v1907 = vand.u32 %v1906, 4294901760
        %1908 = vmatpush.msra.mxu0 %v1907
        %v1909 = vand.u32 %v204, 4294901760
        %v1910 = vsub.f32 %v204, %v1909
        %v1911 = vand.u32 %v1910, 4294901760
        %v1912 = vsub.f32 %v1910, %v1911
        %v1913 = vand.u32 %v1912, 4294901760
        %1914 = vmatpush.msra.mxu0 %v1913
        %v1915 = vand.u32 %v203, 4294901760
        %v1916 = vsub.f32 %v203, %v1915
        %v1917 = vand.u32 %v1916, 4294901760
        %v1918 = vsub.f32 %v1916, %v1917
        %v1919 = vand.u32 %v1918, 4294901760
        %1920 = vmatpush.msra.mxu0 %v1919
        %v1921 = vand.u32 %v1819, 4294901760
        %1922 = vmatmul.f32.gmra.mxu0 %v1921
        %v1923 = vpop.f32.mrf.mxu0
        %v1924 = vadd.f32 %v1855, %v1923
        %v1925 = vand.u32 %v1822, 4294901760
        %1926 = vmatmul.f32.gmra.mxu0 %v1925
        %v1927 = vpop.f32.mrf.mxu0
        %v1928 = vadd.f32 %v1863, %v1927
        %1929 = vdwg.mxu0
        %1930 = vmatpush.msra.mxu0 0.0
        %1931 = vmatpush.msra.mxu0 0.0
        %1932 = vmatpush.msra.mxu0 0.0
        %1933 = vmatpush.msra.mxu0 0.0
        %1934 = vmatpush.msra.mxu0 0.0
        %1935 = vmatpush.msra.mxu0 0.0
        %1936 = vmatpush.msra.mxu0 0.0
        %1937 = vmatpush.msra.mxu0 0.0
        %v1938 = vand.u32 %v210, 4294901760
        %v1939 = vsub.f32 %v210, %v1938
        %1940 = vmatpush.msra.mxu0 %v1939
        %v1941 = vand.u32 %v209, 4294901760
        %v1942 = vsub.f32 %v209, %v1941
        %1943 = vmatpush.msra.mxu0 %v1942
        %v1944 = vand.u32 %v208, 4294901760
        %v1945 = vsub.f32 %v208, %v1944
        %1946 = vmatpush.msra.mxu0 %v1945
        %v1947 = vand.u32 %v207, 4294901760
        %v1948 = vsub.f32 %v207, %v1947
        %1949 = vmatpush.msra.mxu0 %v1948
        %v1950 = vand.u32 %v206, 4294901760
        %v1951 = vsub.f32 %v206, %v1950
        %1952 = vmatpush.msra.mxu0 %v1951
        %v1953 = vand.u32 %v205, 4294901760
        %v1954 = vsub.f32 %v205, %v1953
        %1955 = vmatpush.msra.mxu0 %v1954
        %v1956 = vand.u32 %v204, 4294901760
        %v1957 = vsub.f32 %v204, %v1956
        %1958 = vmatpush.msra.mxu0 %v1957
        %v1959 = vand.u32 %v203, 4294901760
        %v1960 = vsub.f32 %v203, %v1959
        %1961 = vmatpush.msra.mxu0 %v1960
        %v1962 = vand.u32 %v1819, 4294901760
        %v1963 = vsub.f32 %v1819, %v1962
        %1964 = vmatmul.f32.gmra.mxu0 %v1963
        %v1965 = vpop.f32.mrf.mxu0
        %v1966 = vadd.f32 %v1924, %v1965
        %v1967 = vand.u32 %v1822, 4294901760
        %v1968 = vsub.f32 %v1822, %v1967
        %1969 = vmatmul.f32.gmra.mxu0 %v1968
        %v1970 = vpop.f32.mrf.mxu0
        %v1971 = vadd.f32 %v1928, %v1970
        %1972 = vdwg.mxu0
        %1973 = vmatpush.msra.mxu0 0.0
        %1974 = vmatpush.msra.mxu0 0.0
        %1975 = vmatpush.msra.mxu0 0.0
        %1976 = vmatpush.msra.mxu0 0.0
        %1977 = vmatpush.msra.mxu0 0.0
        %1978 = vmatpush.msra.mxu0 0.0
        %1979 = vmatpush.msra.mxu0 0.0
        %1980 = vmatpush.msra.mxu0 0.0
        %v1981 = vand.u32 %v210, 4294901760
        %1982 = vmatpush.msra.mxu0 %v1981
        %v1983 = vand.u32 %v209, 4294901760
        %1984 = vmatpush.msra.mxu0 %v1983
        %v1985 = vand.u32 %v208, 4294901760
        %1986 = vmatpush.msra.mxu0 %v1985
        %v1987 = vand.u32 %v207, 4294901760
        %1988 = vmatpush.msra.mxu0 %v1987
        %v1989 = vand.u32 %v206, 4294901760
        %1990 = vmatpush.msra.mxu0 %v1989
        %v1991 = vand.u32 %v205, 4294901760
        %1992 = vmatpush.msra.mxu0 %v1991
        %v1993 = vand.u32 %v204, 4294901760
        %1994 = vmatpush.msra.mxu0 %v1993
        %v1995 = vand.u32 %v203, 4294901760
        %1996 = vmatpush.msra.mxu0 %v1995
        %v1997 = vand.u32 %v1819, 4294901760
        %v1998 = vsub.f32 %v1819, %v1997
        %v1999 = vand.u32 %v1998, 4294901760
        %2000 = vmatmul.f32.gmra.mxu0 %v1999
        %v2001 = vpop.f32.mrf.mxu0
        %v2002 = vadd.f32 %v1966, %v2001
        %v2003 = vand.u32 %v1822, 4294901760
        %v2004 = vsub.f32 %v1822, %v2003
        %v2005 = vand.u32 %v2004, 4294901760
        %2006 = vmatmul.f32.gmra.mxu0 %v2005
        %v2007 = vpop.f32.mrf.mxu0
        %v2008 = vadd.f32 %v1971, %v2007
        %2009 = vdwg.mxu0
        %2010 = vmatpush.msra.mxu0 0.0
        %2011 = vmatpush.msra.mxu0 0.0
        %2012 = vmatpush.msra.mxu0 0.0
        %2013 = vmatpush.msra.mxu0 0.0
        %2014 = vmatpush.msra.mxu0 0.0
        %2015 = vmatpush.msra.mxu0 0.0
        %2016 = vmatpush.msra.mxu0 0.0
        %2017 = vmatpush.msra.mxu0 0.0
        %v2018 = vand.u32 %v210, 4294901760
        %v2019 = vsub.f32 %v210, %v2018
        %v2020 = vand.u32 %v2019, 4294901760
        %2021 = vmatpush.msra.mxu0 %v2020
        %v2022 = vand.u32 %v209, 4294901760
        %v2023 = vsub.f32 %v209, %v2022
        %v2024 = vand.u32 %v2023, 4294901760
        %2025 = vmatpush.msra.mxu0 %v2024
        %v2026 = vand.u32 %v208, 4294901760
        %v2027 = vsub.f32 %v208, %v2026
        %v2028 = vand.u32 %v2027, 4294901760
        %2029 = vmatpush.msra.mxu0 %v2028
        %v2030 = vand.u32 %v207, 4294901760
        %v2031 = vsub.f32 %v207, %v2030
        %v2032 = vand.u32 %v2031, 4294901760
        %2033 = vmatpush.msra.mxu0 %v2032
        %v2034 = vand.u32 %v206, 4294901760
        %v2035 = vsub.f32 %v206, %v2034
        %v2036 = vand.u32 %v2035, 4294901760
        %2037 = vmatpush.msra.mxu0 %v2036
        %v2038 = vand.u32 %v205, 4294901760
        %v2039 = vsub.f32 %v205, %v2038
        %v2040 = vand.u32 %v2039, 4294901760
        %2041 = vmatpush.msra.mxu0 %v2040
        %v2042 = vand.u32 %v204, 4294901760
        %v2043 = vsub.f32 %v204, %v2042
        %v2044 = vand.u32 %v2043, 4294901760
        %2045 = vmatpush.msra.mxu0 %v2044
        %v2046 = vand.u32 %v203, 4294901760
        %v2047 = vsub.f32 %v203, %v2046
        %v2048 = vand.u32 %v2047, 4294901760
        %2049 = vmatpush.msra.mxu0 %v2048
        %v2050 = vand.u32 %v1819, 4294901760
        %2051 = vmatmul.f32.gmra.mxu0 %v2050
        %v2052 = vpop.f32.mrf.mxu0
        %v2053 = vadd.f32 %v2002, %v2052
        %v2054 = vand.u32 %v1822, 4294901760
        %2055 = vmatmul.f32.gmra.mxu0 %v2054
        %v2056 = vpop.f32.mrf.mxu0
        %v2057 = vadd.f32 %v2008, %v2056
        %2058 = vdwg.mxu0
        %2059 = vmatpush.msra.mxu0 0.0
        %2060 = vmatpush.msra.mxu0 0.0
        %2061 = vmatpush.msra.mxu0 0.0
        %2062 = vmatpush.msra.mxu0 0.0
        %2063 = vmatpush.msra.mxu0 0.0
        %2064 = vmatpush.msra.mxu0 0.0
        %2065 = vmatpush.msra.mxu0 0.0
        %2066 = vmatpush.msra.mxu0 0.0
        %v2067 = vand.u32 %v210, 4294901760
        %2068 = vmatpush.msra.mxu0 %v2067
        %v2069 = vand.u32 %v209, 4294901760
        %2070 = vmatpush.msra.mxu0 %v2069
        %v2071 = vand.u32 %v208, 4294901760
        %2072 = vmatpush.msra.mxu0 %v2071
        %v2073 = vand.u32 %v207, 4294901760
        %2074 = vmatpush.msra.mxu0 %v2073
        %v2075 = vand.u32 %v206, 4294901760
        %2076 = vmatpush.msra.mxu0 %v2075
        %v2077 = vand.u32 %v205, 4294901760
        %2078 = vmatpush.msra.mxu0 %v2077
        %v2079 = vand.u32 %v204, 4294901760
        %2080 = vmatpush.msra.mxu0 %v2079
        %v2081 = vand.u32 %v203, 4294901760
        %2082 = vmatpush.msra.mxu0 %v2081
        %v2083 = vand.u32 %v1819, 4294901760
        %2084 = vmatmul.f32.gmra.mxu0 %v2083
        %v2085 = vpop.f32.mrf.mxu0
        %v2086 = vadd.f32 %v2053, %v2085
        %v2087 = vand.u32 %v1822, 4294901760
        %2088 = vmatmul.f32.gmra.mxu0 %v2087
        %v2089 = vpop.f32.mrf.mxu0
        %v2090 = vadd.f32 %v2057, %v2089
        %2091 = vdwg.mxu0
        %2092 = vmatpush.msra.mxu0 0.0
        %2093 = vmatpush.msra.mxu0 0.0
        %2094 = vmatpush.msra.mxu0 0.0
        %2095 = vmatpush.msra.mxu0 0.0
        %2096 = vmatpush.msra.mxu0 0.0
        %2097 = vmatpush.msra.mxu0 0.0
        %2098 = vmatpush.msra.mxu0 0.0
        %2099 = vmatpush.msra.mxu0 0.0
        %v2100 = vand.u32 %v218, 4294901760
        %2101 = vmatpush.msra.mxu0 %v2100
        %v2102 = vand.u32 %v217, 4294901760
        %2103 = vmatpush.msra.mxu0 %v2102
        %v2104 = vand.u32 %v216, 4294901760
        %2105 = vmatpush.msra.mxu0 %v2104
        %v2106 = vand.u32 %v215, 4294901760
        %2107 = vmatpush.msra.mxu0 %v2106
        %v2108 = vand.u32 %v214, 4294901760
        %2109 = vmatpush.msra.mxu0 %v2108
        %v2110 = vand.u32 %v213, 4294901760
        %2111 = vmatpush.msra.mxu0 %v2110
        %v2112 = vand.u32 %v212, 4294901760
        %2113 = vmatpush.msra.mxu0 %v2112
        %v2114 = vand.u32 %v211, 4294901760
        %2115 = vmatpush.msra.mxu0 %v2114
        %v2116 = vand.u32 %v1819, 4294901760
        %v2117 = vsub.f32 %v1819, %v2116
        %v2118 = vand.u32 %v2117, 4294901760
        %v2119 = vsub.f32 %v2117, %v2118
        %v2120 = vand.u32 %v2119, 4294901760
        %2121 = vmatmul.f32.gmra.mxu0 %v2120
        %v2122 = vpop.f32.mrf.mxu0
        %v2123 = vadd.f32 0.0, %v2122
        %v2124 = vand.u32 %v1822, 4294901760
        %v2125 = vsub.f32 %v1822, %v2124
        %v2126 = vand.u32 %v2125, 4294901760
        %v2127 = vsub.f32 %v2125, %v2126
        %v2128 = vand.u32 %v2127, 4294901760
        %2129 = vmatmul.f32.gmra.mxu0 %v2128
        %v2130 = vpop.f32.mrf.mxu0
        %v2131 = vadd.f32 0.0, %v2130
        %2132 = vdwg.mxu0
        %2133 = vmatpush.msra.mxu0 0.0
        %2134 = vmatpush.msra.mxu0 0.0
        %2135 = vmatpush.msra.mxu0 0.0
        %2136 = vmatpush.msra.mxu0 0.0
        %2137 = vmatpush.msra.mxu0 0.0
        %2138 = vmatpush.msra.mxu0 0.0
        %2139 = vmatpush.msra.mxu0 0.0
        %2140 = vmatpush.msra.mxu0 0.0
        %v2141 = vand.u32 %v218, 4294901760
        %v2142 = vsub.f32 %v218, %v2141
        %v2143 = vand.u32 %v2142, 4294901760
        %v2144 = vsub.f32 %v2142, %v2143
        %v2145 = vand.u32 %v2144, 4294901760
        %2146 = vmatpush.msra.mxu0 %v2145
        %v2147 = vand.u32 %v217, 4294901760
        %v2148 = vsub.f32 %v217, %v2147
        %v2149 = vand.u32 %v2148, 4294901760
        %v2150 = vsub.f32 %v2148, %v2149
        %v2151 = vand.u32 %v2150, 4294901760
        %2152 = vmatpush.msra.mxu0 %v2151
        %v2153 = vand.u32 %v216, 4294901760
        %v2154 = vsub.f32 %v216, %v2153
        %v2155 = vand.u32 %v2154, 4294901760
        %v2156 = vsub.f32 %v2154, %v2155
        %v2157 = vand.u32 %v2156, 4294901760
        %2158 = vmatpush.msra.mxu0 %v2157
        %v2159 = vand.u32 %v215, 4294901760
        %v2160 = vsub.f32 %v215, %v2159
        %v2161 = vand.u32 %v2160, 4294901760
        %v2162 = vsub.f32 %v2160, %v2161
        %v2163 = vand.u32 %v2162, 4294901760
        %2164 = vmatpush.msra.mxu0 %v2163
        %v2165 = vand.u32 %v214, 4294901760
        %v2166 = vsub.f32 %v214, %v2165
        %v2167 = vand.u32 %v2166, 4294901760
        %v2168 = vsub.f32 %v2166, %v2167
        %v2169 = vand.u32 %v2168, 4294901760
        %2170 = vmatpush.msra.mxu0 %v2169
        %v2171 = vand.u32 %v213, 4294901760
        %v2172 = vsub.f32 %v213, %v2171
        %v2173 = vand.u32 %v2172, 4294901760
        %v2174 = vsub.f32 %v2172, %v2173
        %v2175 = vand.u32 %v2174, 4294901760
        %2176 = vmatpush.msra.mxu0 %v2175
        %v2177 = vand.u32 %v212, 4294901760
        %v2178 = vsub.f32 %v212, %v2177
        %v2179 = vand.u32 %v2178, 4294901760
        %v2180 = vsub.f32 %v2178, %v2179
        %v2181 = vand.u32 %v2180, 4294901760
        %2182 = vmatpush.msra.mxu0 %v2181
        %v2183 = vand.u32 %v211, 4294901760
        %v2184 = vsub.f32 %v211, %v2183
        %v2185 = vand.u32 %v2184, 4294901760
        %v2186 = vsub.f32 %v2184, %v2185
        %v2187 = vand.u32 %v2186, 4294901760
        %2188 = vmatpush.msra.mxu0 %v2187
        %v2189 = vand.u32 %v1819, 4294901760
        %2190 = vmatmul.f32.gmra.mxu0 %v2189
        %v2191 = vpop.f32.mrf.mxu0
        %v2192 = vadd.f32 %v2123, %v2191
        %v2193 = vand.u32 %v1822, 4294901760
        %2194 = vmatmul.f32.gmra.mxu0 %v2193
        %v2195 = vpop.f32.mrf.mxu0
        %v2196 = vadd.f32 %v2131, %v2195
        %2197 = vdwg.mxu0
        %2198 = vmatpush.msra.mxu0 0.0
        %2199 = vmatpush.msra.mxu0 0.0
        %2200 = vmatpush.msra.mxu0 0.0
        %2201 = vmatpush.msra.mxu0 0.0
        %2202 = vmatpush.msra.mxu0 0.0
        %2203 = vmatpush.msra.mxu0 0.0
        %2204 = vmatpush.msra.mxu0 0.0
        %2205 = vmatpush.msra.mxu0 0.0
        %v2206 = vand.u32 %v218, 4294901760
        %v2207 = vsub.f32 %v218, %v2206
        %2208 = vmatpush.msra.mxu0 %v2207
        %v2209 = vand.u32 %v217, 4294901760
        %v2210 = vsub.f32 %v217, %v2209
        %2211 = vmatpush.msra.mxu0 %v2210
        %v2212 = vand.u32 %v216, 4294901760
        %v2213 = vsub.f32 %v216, %v2212
        %2214 = vmatpush.msra.mxu0 %v2213
        %v2215 = vand.u32 %v215, 4294901760
        %v2216 = vsub.f32 %v215, %v2215
        %2217 = vmatpush.msra.mxu0 %v2216
        %v2218 = vand.u32 %v214, 4294901760
        %v2219 = vsub.f32 %v214, %v2218
        %2220 = vmatpush.msra.mxu0 %v2219
        %v2221 = vand.u32 %v213, 4294901760
        %v2222 = vsub.f32 %v213, %v2221
        %2223 = vmatpush.msra.mxu0 %v2222
        %v2224 = vand.u32 %v212, 4294901760
        %v2225 = vsub.f32 %v212, %v2224
        %2226 = vmatpush.msra.mxu0 %v2225
        %v2227 = vand.u32 %v211, 4294901760
        %v2228 = vsub.f32 %v211, %v2227
        %2229 = vmatpush.msra.mxu0 %v2228
        %v2230 = vand.u32 %v1819, 4294901760
        %v2231 = vsub.f32 %v1819, %v2230
        %2232 = vmatmul.f32.gmra.mxu0 %v2231
        %v2233 = vpop.f32.mrf.mxu0
        %v2234 = vadd.f32 %v2192, %v2233
        %v2235 = vand.u32 %v1822, 4294901760
        %v2236 = vsub.f32 %v1822, %v2235
        %2237 = vmatmul.f32.gmra.mxu0 %v2236
        %v2238 = vpop.f32.mrf.mxu0
        %v2239 = vadd.f32 %v2196, %v2238
        %2240 = vdwg.mxu0
        %2241 = vmatpush.msra.mxu0 0.0
        %2242 = vmatpush.msra.mxu0 0.0
        %2243 = vmatpush.msra.mxu0 0.0
        %2244 = vmatpush.msra.mxu0 0.0
        %2245 = vmatpush.msra.mxu0 0.0
        %2246 = vmatpush.msra.mxu0 0.0
        %2247 = vmatpush.msra.mxu0 0.0
        %2248 = vmatpush.msra.mxu0 0.0
        %v2249 = vand.u32 %v218, 4294901760
        %2250 = vmatpush.msra.mxu0 %v2249
        %v2251 = vand.u32 %v217, 4294901760
        %2252 = vmatpush.msra.mxu0 %v2251
        %v2253 = vand.u32 %v216, 4294901760
        %2254 = vmatpush.msra.mxu0 %v2253
        %v2255 = vand.u32 %v215, 4294901760
        %2256 = vmatpush.msra.mxu0 %v2255
        %v2257 = vand.u32 %v214, 4294901760
        %2258 = vmatpush.msra.mxu0 %v2257
        %v2259 = vand.u32 %v213, 4294901760
        %2260 = vmatpush.msra.mxu0 %v2259
        %v2261 = vand.u32 %v212, 4294901760
        %2262 = vmatpush.msra.mxu0 %v2261
        %v2263 = vand.u32 %v211, 4294901760
        %2264 = vmatpush.msra.mxu0 %v2263
        %v2265 = vand.u32 %v1819, 4294901760
        %v2266 = vsub.f32 %v1819, %v2265
        %v2267 = vand.u32 %v2266, 4294901760
        %2268 = vmatmul.f32.gmra.mxu0 %v2267
        %v2269 = vpop.f32.mrf.mxu0
        %v2270 = vadd.f32 %v2234, %v2269
        %v2271 = vand.u32 %v1822, 4294901760
        %v2272 = vsub.f32 %v1822, %v2271
        %v2273 = vand.u32 %v2272, 4294901760
        %2274 = vmatmul.f32.gmra.mxu0 %v2273
        %v2275 = vpop.f32.mrf.mxu0
        %v2276 = vadd.f32 %v2239, %v2275
        %2277 = vdwg.mxu0
        %2278 = vmatpush.msra.mxu0 0.0
        %2279 = vmatpush.msra.mxu0 0.0
        %2280 = vmatpush.msra.mxu0 0.0
        %2281 = vmatpush.msra.mxu0 0.0
        %2282 = vmatpush.msra.mxu0 0.0
        %2283 = vmatpush.msra.mxu0 0.0
        %2284 = vmatpush.msra.mxu0 0.0
        %2285 = vmatpush.msra.mxu0 0.0
        %v2286 = vand.u32 %v218, 4294901760
        %v2287 = vsub.f32 %v218, %v2286
        %v2288 = vand.u32 %v2287, 4294901760
        %2289 = vmatpush.msra.mxu0 %v2288
        %v2290 = vand.u32 %v217, 4294901760
        %v2291 = vsub.f32 %v217, %v2290
        %v2292 = vand.u32 %v2291, 4294901760
        %2293 = vmatpush.msra.mxu0 %v2292
        %v2294 = vand.u32 %v216, 4294901760
        %v2295 = vsub.f32 %v216, %v2294
        %v2296 = vand.u32 %v2295, 4294901760
        %2297 = vmatpush.msra.mxu0 %v2296
        %v2298 = vand.u32 %v215, 4294901760
        %v2299 = vsub.f32 %v215, %v2298
        %v2300 = vand.u32 %v2299, 4294901760
        %2301 = vmatpush.msra.mxu0 %v2300
        %v2302 = vand.u32 %v214, 4294901760
        %v2303 = vsub.f32 %v214, %v2302
        %v2304 = vand.u32 %v2303, 4294901760
        %2305 = vmatpush.msra.mxu0 %v2304
        %v2306 = vand.u32 %v213, 4294901760
        %v2307 = vsub.f32 %v213, %v2306
        %v2308 = vand.u32 %v2307, 4294901760
        %2309 = vmatpush.msra.mxu0 %v2308
        %v2310 = vand.u32 %v212, 4294901760
        %v2311 = vsub.f32 %v212, %v2310
        %v2312 = vand.u32 %v2311, 4294901760
        %2313 = vmatpush.msra.mxu0 %v2312
        %v2314 = vand.u32 %v211, 4294901760
        %v2315 = vsub.f32 %v211, %v2314
        %v2316 = vand.u32 %v2315, 4294901760
        %2317 = vmatpush.msra.mxu0 %v2316
        %v2318 = vand.u32 %v1819, 4294901760
        %2319 = vmatmul.f32.gmra.mxu0 %v2318
        %v2320 = vpop.f32.mrf.mxu0
        %v2321 = vadd.f32 %v2270, %v2320
        %v2322 = vand.u32 %v1822, 4294901760
        %2323 = vmatmul.f32.gmra.mxu0 %v2322
        %v2324 = vpop.f32.mrf.mxu0
        %v2325 = vadd.f32 %v2276, %v2324
        %2326 = vdwg.mxu0
        %2327 = vmatpush.msra.mxu0 0.0
        %2328 = vmatpush.msra.mxu0 0.0
        %2329 = vmatpush.msra.mxu0 0.0
        %2330 = vmatpush.msra.mxu0 0.0
        %2331 = vmatpush.msra.mxu0 0.0
        %2332 = vmatpush.msra.mxu0 0.0
        %2333 = vmatpush.msra.mxu0 0.0
        %2334 = vmatpush.msra.mxu0 0.0
        %v2335 = vand.u32 %v218, 4294901760
        %2336 = vmatpush.msra.mxu0 %v2335
        %v2337 = vand.u32 %v217, 4294901760
        %2338 = vmatpush.msra.mxu0 %v2337
        %v2339 = vand.u32 %v216, 4294901760
        %2340 = vmatpush.msra.mxu0 %v2339
        %v2341 = vand.u32 %v215, 4294901760
        %2342 = vmatpush.msra.mxu0 %v2341
        %v2343 = vand.u32 %v214, 4294901760
        %2344 = vmatpush.msra.mxu0 %v2343
        %v2345 = vand.u32 %v213, 4294901760
        %2346 = vmatpush.msra.mxu0 %v2345
        %v2347 = vand.u32 %v212, 4294901760
        %2348 = vmatpush.msra.mxu0 %v2347
        %v2349 = vand.u32 %v211, 4294901760
        %2350 = vmatpush.msra.mxu0 %v2349
        %v2351 = vand.u32 %v1819, 4294901760
        %2352 = vmatmul.f32.gmra.mxu0 %v2351
        %v2353 = vpop.f32.mrf.mxu0
        %v2354 = vadd.f32 %v2321, %v2353
        %v2355 = vand.u32 %v1822, 4294901760
        %2356 = vmatmul.f32.gmra.mxu0 %v2355
        %v2357 = vpop.f32.mrf.mxu0
        %v2358 = vadd.f32 %v2325, %v2357
        %2359 = vdwg.mxu0
        %v2361 = vsel %vm221, %v2086, 0
        %v2364 = vsel %vm221, %v2090, 0
        %v2367 = vsel %vm221, %v2354, 0
        %v2370 = vsel %vm221, %v2358, 0
        %2372 = vmatpush.xpose.msra.mxu0 0.0
        %2373 = vmatpush.xpose.msra.mxu0 0.0
        %2374 = vmatpush.xpose.msra.mxu0 0.0
        %2375 = vmatpush.xpose.msra.mxu0 0.0
        %2376 = vmatpush.xpose.msra.mxu0 0.0
        %2377 = vmatpush.xpose.msra.mxu0 0.0
        %2378 = vmatpush.xpose.msra.mxu0 0.0
        %2379 = vmatpush.xpose.msra.mxu0 0.0
        %2380 = vmatpush.xpose.msra.mxu0 0.0
        %2381 = vmatpush.xpose.msra.mxu0 0.0
        %2382 = vmatpush.xpose.msra.mxu0 0.0
        %2383 = vmatpush.xpose.msra.mxu0 0.0
        %2384 = vmatpush.xpose.msra.mxu0 0.0
        %2385 = vmatpush.xpose.msra.mxu0 0.0
        %v2386 = vand.u32 %v2370, 4294901760
        %2387 = vmatpush.xpose.msra.mxu0 %v2386
        %v2388 = vand.u32 %v2367, 4294901760
        %2389 = vmatpush.xpose.msra.mxu0 %v2388
        %v2390 = vand.u32 %v2361, 4294901760
        %v2391 = vsub.f32 %v2361, %v2390
        %v2392 = vand.u32 %v2391, 4294901760
        %v2393 = vsub.f32 %v2391, %v2392
        %v2394 = vand.u32 %v2393, 4294901760
        %2395 = vmatmul.f32.gmra.mxu0 %v2394
        %v2396 = vpop.f32.mrf.mxu0
        %v2397 = vadd.f32 0.0, %v2396
        %v2398 = vand.u32 %v2364, 4294901760
        %v2399 = vsub.f32 %v2364, %v2398
        %v2400 = vand.u32 %v2399, 4294901760
        %v2401 = vsub.f32 %v2399, %v2400
        %v2402 = vand.u32 %v2401, 4294901760
        %2403 = vmatmul.f32.gmra.mxu0 %v2402
        %v2404 = vpop.f32.mrf.mxu0
        %v2405 = vadd.f32 0.0, %v2404
        %2406 = vdwg.mxu0
        %2407 = vmatpush.xpose.msra.mxu0 0.0
        %2408 = vmatpush.xpose.msra.mxu0 0.0
        %2409 = vmatpush.xpose.msra.mxu0 0.0
        %2410 = vmatpush.xpose.msra.mxu0 0.0
        %2411 = vmatpush.xpose.msra.mxu0 0.0
        %2412 = vmatpush.xpose.msra.mxu0 0.0
        %2413 = vmatpush.xpose.msra.mxu0 0.0
        %2414 = vmatpush.xpose.msra.mxu0 0.0
        %2415 = vmatpush.xpose.msra.mxu0 0.0
        %2416 = vmatpush.xpose.msra.mxu0 0.0
        %2417 = vmatpush.xpose.msra.mxu0 0.0
        %2418 = vmatpush.xpose.msra.mxu0 0.0
        %2419 = vmatpush.xpose.msra.mxu0 0.0
        %2420 = vmatpush.xpose.msra.mxu0 0.0
        %v2421 = vand.u32 %v2370, 4294901760
        %v2422 = vsub.f32 %v2370, %v2421
        %v2423 = vand.u32 %v2422, 4294901760
        %v2424 = vsub.f32 %v2422, %v2423
        %v2425 = vand.u32 %v2424, 4294901760
        %2426 = vmatpush.xpose.msra.mxu0 %v2425
        %v2427 = vand.u32 %v2367, 4294901760
        %v2428 = vsub.f32 %v2367, %v2427
        %v2429 = vand.u32 %v2428, 4294901760
        %v2430 = vsub.f32 %v2428, %v2429
        %v2431 = vand.u32 %v2430, 4294901760
        %2432 = vmatpush.xpose.msra.mxu0 %v2431
        %v2433 = vand.u32 %v2361, 4294901760
        %2434 = vmatmul.f32.gmra.mxu0 %v2433
        %v2435 = vpop.f32.mrf.mxu0
        %v2436 = vadd.f32 %v2397, %v2435
        %v2437 = vand.u32 %v2364, 4294901760
        %2438 = vmatmul.f32.gmra.mxu0 %v2437
        %v2439 = vpop.f32.mrf.mxu0
        %v2440 = vadd.f32 %v2405, %v2439
        %2441 = vdwg.mxu0
        %2442 = vmatpush.xpose.msra.mxu0 0.0
        %2443 = vmatpush.xpose.msra.mxu0 0.0
        %2444 = vmatpush.xpose.msra.mxu0 0.0
        %2445 = vmatpush.xpose.msra.mxu0 0.0
        %2446 = vmatpush.xpose.msra.mxu0 0.0
        %2447 = vmatpush.xpose.msra.mxu0 0.0
        %2448 = vmatpush.xpose.msra.mxu0 0.0
        %2449 = vmatpush.xpose.msra.mxu0 0.0
        %2450 = vmatpush.xpose.msra.mxu0 0.0
        %2451 = vmatpush.xpose.msra.mxu0 0.0
        %2452 = vmatpush.xpose.msra.mxu0 0.0
        %2453 = vmatpush.xpose.msra.mxu0 0.0
        %2454 = vmatpush.xpose.msra.mxu0 0.0
        %2455 = vmatpush.xpose.msra.mxu0 0.0
        %v2456 = vand.u32 %v2370, 4294901760
        %v2457 = vsub.f32 %v2370, %v2456
        %2458 = vmatpush.xpose.msra.mxu0 %v2457
        %v2459 = vand.u32 %v2367, 4294901760
        %v2460 = vsub.f32 %v2367, %v2459
        %2461 = vmatpush.xpose.msra.mxu0 %v2460
        %v2462 = vand.u32 %v2361, 4294901760
        %v2463 = vsub.f32 %v2361, %v2462
        %2464 = vmatmul.f32.gmra.mxu0 %v2463
        %v2465 = vpop.f32.mrf.mxu0
        %v2466 = vadd.f32 %v2436, %v2465
        %v2467 = vand.u32 %v2364, 4294901760
        %v2468 = vsub.f32 %v2364, %v2467
        %2469 = vmatmul.f32.gmra.mxu0 %v2468
        %v2470 = vpop.f32.mrf.mxu0
        %v2471 = vadd.f32 %v2440, %v2470
        %2472 = vdwg.mxu0
        %2473 = vmatpush.xpose.msra.mxu0 0.0
        %2474 = vmatpush.xpose.msra.mxu0 0.0
        %2475 = vmatpush.xpose.msra.mxu0 0.0
        %2476 = vmatpush.xpose.msra.mxu0 0.0
        %2477 = vmatpush.xpose.msra.mxu0 0.0
        %2478 = vmatpush.xpose.msra.mxu0 0.0
        %2479 = vmatpush.xpose.msra.mxu0 0.0
        %2480 = vmatpush.xpose.msra.mxu0 0.0
        %2481 = vmatpush.xpose.msra.mxu0 0.0
        %2482 = vmatpush.xpose.msra.mxu0 0.0
        %2483 = vmatpush.xpose.msra.mxu0 0.0
        %2484 = vmatpush.xpose.msra.mxu0 0.0
        %2485 = vmatpush.xpose.msra.mxu0 0.0
        %2486 = vmatpush.xpose.msra.mxu0 0.0
        %v2487 = vand.u32 %v2370, 4294901760
        %2488 = vmatpush.xpose.msra.mxu0 %v2487
        %v2489 = vand.u32 %v2367, 4294901760
        %2490 = vmatpush.xpose.msra.mxu0 %v2489
        %v2491 = vand.u32 %v2361, 4294901760
        %v2492 = vsub.f32 %v2361, %v2491
        %v2493 = vand.u32 %v2492, 4294901760
        %2494 = vmatmul.f32.gmra.mxu0 %v2493
        %v2495 = vpop.f32.mrf.mxu0
        %v2496 = vadd.f32 %v2466, %v2495
        %v2497 = vand.u32 %v2364, 4294901760
        %v2498 = vsub.f32 %v2364, %v2497
        %v2499 = vand.u32 %v2498, 4294901760
        %2500 = vmatmul.f32.gmra.mxu0 %v2499
        %v2501 = vpop.f32.mrf.mxu0
        %v2502 = vadd.f32 %v2471, %v2501
        %2503 = vdwg.mxu0
        %2504 = vmatpush.xpose.msra.mxu0 0.0
        %2505 = vmatpush.xpose.msra.mxu0 0.0
        %2506 = vmatpush.xpose.msra.mxu0 0.0
        %2507 = vmatpush.xpose.msra.mxu0 0.0
        %2508 = vmatpush.xpose.msra.mxu0 0.0
        %2509 = vmatpush.xpose.msra.mxu0 0.0
        %2510 = vmatpush.xpose.msra.mxu0 0.0
        %2511 = vmatpush.xpose.msra.mxu0 0.0
        %2512 = vmatpush.xpose.msra.mxu0 0.0
        %2513 = vmatpush.xpose.msra.mxu0 0.0
        %2514 = vmatpush.xpose.msra.mxu0 0.0
        %2515 = vmatpush.xpose.msra.mxu0 0.0
        %2516 = vmatpush.xpose.msra.mxu0 0.0
        %2517 = vmatpush.xpose.msra.mxu0 0.0
        %v2518 = vand.u32 %v2370, 4294901760
        %v2519 = vsub.f32 %v2370, %v2518
        %v2520 = vand.u32 %v2519, 4294901760
        %2521 = vmatpush.xpose.msra.mxu0 %v2520
        %v2522 = vand.u32 %v2367, 4294901760
        %v2523 = vsub.f32 %v2367, %v2522
        %v2524 = vand.u32 %v2523, 4294901760
        %2525 = vmatpush.xpose.msra.mxu0 %v2524
        %v2526 = vand.u32 %v2361, 4294901760
        %2527 = vmatmul.f32.gmra.mxu0 %v2526
        %v2528 = vpop.f32.mrf.mxu0
        %v2529 = vadd.f32 %v2496, %v2528
        %v2530 = vand.u32 %v2364, 4294901760
        %2531 = vmatmul.f32.gmra.mxu0 %v2530
        %v2532 = vpop.f32.mrf.mxu0
        %v2533 = vadd.f32 %v2502, %v2532
        %2534 = vdwg.mxu0
        %2535 = vmatpush.xpose.msra.mxu0 0.0
        %2536 = vmatpush.xpose.msra.mxu0 0.0
        %2537 = vmatpush.xpose.msra.mxu0 0.0
        %2538 = vmatpush.xpose.msra.mxu0 0.0
        %2539 = vmatpush.xpose.msra.mxu0 0.0
        %2540 = vmatpush.xpose.msra.mxu0 0.0
        %2541 = vmatpush.xpose.msra.mxu0 0.0
        %2542 = vmatpush.xpose.msra.mxu0 0.0
        %2543 = vmatpush.xpose.msra.mxu0 0.0
        %2544 = vmatpush.xpose.msra.mxu0 0.0
        %2545 = vmatpush.xpose.msra.mxu0 0.0
        %2546 = vmatpush.xpose.msra.mxu0 0.0
        %2547 = vmatpush.xpose.msra.mxu0 0.0
        %2548 = vmatpush.xpose.msra.mxu0 0.0
        %v2549 = vand.u32 %v2370, 4294901760
        %2550 = vmatpush.xpose.msra.mxu0 %v2549
        %v2551 = vand.u32 %v2367, 4294901760
        %2552 = vmatpush.xpose.msra.mxu0 %v2551
        %v2553 = vand.u32 %v2361, 4294901760
        %2554 = vmatmul.f32.gmra.mxu0 %v2553
        %v2555 = vpop.f32.mrf.mxu0
        %v2556 = vadd.f32 %v2529, %v2555
        %v2557 = vand.u32 %v2364, 4294901760
        %2558 = vmatmul.f32.gmra.mxu0 %v2557
        %v2559 = vpop.f32.mrf.mxu0
        %v2560 = vadd.f32 %v2533, %v2559
        %2561 = vdwg.mxu0
        %v2562 = vsel %vm966, %v2556, -inf
        %2563 = vmax.xlane.f32.xlu0 %v2562
        %v2564 = vpop.xlane.xlu0 %2563
        %v2565 = vsel %vm966, %v2560, -inf
        %2566 = vmax.xlane.f32.xlu0 %v2565
        %v2567 = vpop.xlane.xlu0 %2566
        %v2568 = vsub.f32 %v2556, %v2564
        %v2569 = vsub.f32 %v2560, %v2567
        %v2570 = vmul.f32 %v2568, 1.442695
        %v2571 = vpow.pop %v2570
        %v2572 = vmul.f32 %v2569, 1.442695
        %v2573 = vpow.pop %v2572
        %v2574 = vsel %vm966, %v2571, 0.0
        %2575 = vadd.xlane.f32.xlu0 %v2574
        %v2576 = vpop.xlane.xlu0 %2575
        %v2577 = vsel %vm966, %v2573, 0.0
        %2578 = vadd.xlane.f32.xlu0 %v2577
        %v2579 = vpop.xlane.xlu0 %2578
        %v2580 = vrcp.pop %v2576
        %v2581 = vmul.f32 %v2576, %v2580
        %v2582 = vsub.f32 1.0, %v2581
        %v2583 = vmul.f32 %v2580, %v2582
        %v2584 = vadd.f32 %v2580, %v2583
        %vm2585 = vweird.f32 %v2576
        %vm2586 = vweird.f32 %v2580
        %vm2587 = vmor %vm2585, %vm2586
        %v2588 = vsel %vm2587, %v2580, %v2584
        %v2589 = vand.u32 2147483647, %v2576
        %vm2590 = vcmp.eq.f32.partialorder %v2589, 8.507059e+37
        %v2591 = vand.u32 %v2576, 2147483648
        %v2592 = vor.u32 1.1754944e-38, %v2591
        %v2593 = vsel %vm2590, %v2592, %v2588
        %v2594 = vmul.f32 %v2571, %v2593
        %v2595 = vrcp.pop %v2579
        %v2596 = vmul.f32 %v2579, %v2595
        %v2597 = vsub.f32 1.0, %v2596
        %v2598 = vmul.f32 %v2595, %v2597
        %v2599 = vadd.f32 %v2595, %v2598
        %vm2600 = vweird.f32 %v2579
        %vm2601 = vweird.f32 %v2595
        %vm2602 = vmor %vm2600, %vm2601
        %v2603 = vsel %vm2602, %v2595, %v2599
        %v2604 = vand.u32 2147483647, %v2579
        %vm2605 = vcmp.eq.f32.partialorder %v2604, 8.507059e+37
        %v2606 = vand.u32 %v2579, 2147483648
        %v2607 = vor.u32 1.1754944e-38, %v2606
        %v2608 = vsel %vm2605, %v2607, %v2603
        %v2609 = vmul.f32 %v2573, %v2608
        %s2610 = scalar_lea.vmem %s190, 32 [#allocation2]
        %2611 = vst.msk [vmem:[%s2610] sm:$0xff] %vm966, %v2594
        %2612 = vst.msk [vmem:[%s2610 + $0x8] sm:$0xff] %vm966, %v2609
        %s2613 = scalar_lea.vmem %s200, 48
        %v2614 = vld [vmem:[%s2613] sm:$0xff]
        %v2615 = vld [vmem:[%s2613 + $0x8] sm:$0xff]
        %v2617 = vsel %vm221, %v2614, 0
        %v2620 = vsel %vm221, %v2615, 0
        %2622 = vmatpush.msra.mxu0 0.0
        %2623 = vmatpush.msra.mxu0 0.0
        %2624 = vmatpush.msra.mxu0 0.0
        %2625 = vmatpush.msra.mxu0 0.0
        %2626 = vmatpush.msra.mxu0 0.0
        %2627 = vmatpush.msra.mxu0 0.0
        %2628 = vmatpush.msra.mxu0 0.0
        %2629 = vmatpush.msra.mxu0 0.0
        %v2630 = vand.u32 %v210, 4294901760
        %2631 = vmatpush.msra.mxu0 %v2630
        %v2632 = vand.u32 %v209, 4294901760
        %2633 = vmatpush.msra.mxu0 %v2632
        %v2634 = vand.u32 %v208, 4294901760
        %2635 = vmatpush.msra.mxu0 %v2634
        %v2636 = vand.u32 %v207, 4294901760
        %2637 = vmatpush.msra.mxu0 %v2636
        %v2638 = vand.u32 %v206, 4294901760
        %2639 = vmatpush.msra.mxu0 %v2638
        %v2640 = vand.u32 %v205, 4294901760
        %2641 = vmatpush.msra.mxu0 %v2640
        %v2642 = vand.u32 %v204, 4294901760
        %2643 = vmatpush.msra.mxu0 %v2642
        %v2644 = vand.u32 %v203, 4294901760
        %2645 = vmatpush.msra.mxu0 %v2644
        %v2646 = vand.u32 %v2617, 4294901760
        %v2647 = vsub.f32 %v2617, %v2646
        %v2648 = vand.u32 %v2647, 4294901760
        %v2649 = vsub.f32 %v2647, %v2648
        %v2650 = vand.u32 %v2649, 4294901760
        %2651 = vmatmul.f32.gmra.mxu0 %v2650
        %v2652 = vpop.f32.mrf.mxu0
        %v2653 = vadd.f32 0.0, %v2652
        %v2654 = vand.u32 %v2620, 4294901760
        %v2655 = vsub.f32 %v2620, %v2654
        %v2656 = vand.u32 %v2655, 4294901760
        %v2657 = vsub.f32 %v2655, %v2656
        %v2658 = vand.u32 %v2657, 4294901760
        %2659 = vmatmul.f32.gmra.mxu0 %v2658
        %v2660 = vpop.f32.mrf.mxu0
        %v2661 = vadd.f32 0.0, %v2660
        %2662 = vdwg.mxu0
        %2663 = vmatpush.msra.mxu0 0.0
        %2664 = vmatpush.msra.mxu0 0.0
        %2665 = vmatpush.msra.mxu0 0.0
        %2666 = vmatpush.msra.mxu0 0.0
        %2667 = vmatpush.msra.mxu0 0.0
        %2668 = vmatpush.msra.mxu0 0.0
        %2669 = vmatpush.msra.mxu0 0.0
        %2670 = vmatpush.msra.mxu0 0.0
        %v2671 = vand.u32 %v210, 4294901760
        %v2672 = vsub.f32 %v210, %v2671
        %v2673 = vand.u32 %v2672, 4294901760
        %v2674 = vsub.f32 %v2672, %v2673
        %v2675 = vand.u32 %v2674, 4294901760
        %2676 = vmatpush.msra.mxu0 %v2675
        %v2677 = vand.u32 %v209, 4294901760
        %v2678 = vsub.f32 %v209, %v2677
        %v2679 = vand.u32 %v2678, 4294901760
        %v2680 = vsub.f32 %v2678, %v2679
        %v2681 = vand.u32 %v2680, 4294901760
        %2682 = vmatpush.msra.mxu0 %v2681
        %v2683 = vand.u32 %v208, 4294901760
        %v2684 = vsub.f32 %v208, %v2683
        %v2685 = vand.u32 %v2684, 4294901760
        %v2686 = vsub.f32 %v2684, %v2685
        %v2687 = vand.u32 %v2686, 4294901760
        %2688 = vmatpush.msra.mxu0 %v2687
        %v2689 = vand.u32 %v207, 4294901760
        %v2690 = vsub.f32 %v207, %v2689
        %v2691 = vand.u32 %v2690, 4294901760
        %v2692 = vsub.f32 %v2690, %v2691
        %v2693 = vand.u32 %v2692, 4294901760
        %2694 = vmatpush.msra.mxu0 %v2693
        %v2695 = vand.u32 %v206, 4294901760
        %v2696 = vsub.f32 %v206, %v2695
        %v2697 = vand.u32 %v2696, 4294901760
        %v2698 = vsub.f32 %v2696, %v2697
        %v2699 = vand.u32 %v2698, 4294901760
        %2700 = vmatpush.msra.mxu0 %v2699
        %v2701 = vand.u32 %v205, 4294901760
        %v2702 = vsub.f32 %v205, %v2701
        %v2703 = vand.u32 %v2702, 4294901760
        %v2704 = vsub.f32 %v2702, %v2703
        %v2705 = vand.u32 %v2704, 4294901760
        %2706 = vmatpush.msra.mxu0 %v2705
        %v2707 = vand.u32 %v204, 4294901760
        %v2708 = vsub.f32 %v204, %v2707
        %v2709 = vand.u32 %v2708, 4294901760
        %v2710 = vsub.f32 %v2708, %v2709
        %v2711 = vand.u32 %v2710, 4294901760
        %2712 = vmatpush.msra.mxu0 %v2711
        %v2713 = vand.u32 %v203, 4294901760
        %v2714 = vsub.f32 %v203, %v2713
        %v2715 = vand.u32 %v2714, 4294901760
        %v2716 = vsub.f32 %v2714, %v2715
        %v2717 = vand.u32 %v2716, 4294901760
        %2718 = vmatpush.msra.mxu0 %v2717
        %v2719 = vand.u32 %v2617, 4294901760
        %2720 = vmatmul.f32.gmra.mxu0 %v2719
        %v2721 = vpop.f32.mrf.mxu0
        %v2722 = vadd.f32 %v2653, %v2721
        %v2723 = vand.u32 %v2620, 4294901760
        %2724 = vmatmul.f32.gmra.mxu0 %v2723
        %v2725 = vpop.f32.mrf.mxu0
        %v2726 = vadd.f32 %v2661, %v2725
        %2727 = vdwg.mxu0
        %2728 = vmatpush.msra.mxu0 0.0
        %2729 = vmatpush.msra.mxu0 0.0
        %2730 = vmatpush.msra.mxu0 0.0
        %2731 = vmatpush.msra.mxu0 0.0
        %2732 = vmatpush.msra.mxu0 0.0
        %2733 = vmatpush.msra.mxu0 0.0
        %2734 = vmatpush.msra.mxu0 0.0
        %2735 = vmatpush.msra.mxu0 0.0
        %v2736 = vand.u32 %v210, 4294901760
        %v2737 = vsub.f32 %v210, %v2736
        %2738 = vmatpush.msra.mxu0 %v2737
        %v2739 = vand.u32 %v209, 4294901760
        %v2740 = vsub.f32 %v209, %v2739
        %2741 = vmatpush.msra.mxu0 %v2740
        %v2742 = vand.u32 %v208, 4294901760
        %v2743 = vsub.f32 %v208, %v2742
        %2744 = vmatpush.msra.mxu0 %v2743
        %v2745 = vand.u32 %v207, 4294901760
        %v2746 = vsub.f32 %v207, %v2745
        %2747 = vmatpush.msra.mxu0 %v2746
        %v2748 = vand.u32 %v206, 4294901760
        %v2749 = vsub.f32 %v206, %v2748
        %2750 = vmatpush.msra.mxu0 %v2749
        %v2751 = vand.u32 %v205, 4294901760
        %v2752 = vsub.f32 %v205, %v2751
        %2753 = vmatpush.msra.mxu0 %v2752
        %v2754 = vand.u32 %v204, 4294901760
        %v2755 = vsub.f32 %v204, %v2754
        %2756 = vmatpush.msra.mxu0 %v2755
        %v2757 = vand.u32 %v203, 4294901760
        %v2758 = vsub.f32 %v203, %v2757
        %2759 = vmatpush.msra.mxu0 %v2758
        %v2760 = vand.u32 %v2617, 4294901760
        %v2761 = vsub.f32 %v2617, %v2760
        %2762 = vmatmul.f32.gmra.mxu0 %v2761
        %v2763 = vpop.f32.mrf.mxu0
        %v2764 = vadd.f32 %v2722, %v2763
        %v2765 = vand.u32 %v2620, 4294901760
        %v2766 = vsub.f32 %v2620, %v2765
        %2767 = vmatmul.f32.gmra.mxu0 %v2766
        %v2768 = vpop.f32.mrf.mxu0
        %v2769 = vadd.f32 %v2726, %v2768
        %2770 = vdwg.mxu0
        %2771 = vmatpush.msra.mxu0 0.0
        %2772 = vmatpush.msra.mxu0 0.0
        %2773 = vmatpush.msra.mxu0 0.0
        %2774 = vmatpush.msra.mxu0 0.0
        %2775 = vmatpush.msra.mxu0 0.0
        %2776 = vmatpush.msra.mxu0 0.0
        %2777 = vmatpush.msra.mxu0 0.0
        %2778 = vmatpush.msra.mxu0 0.0
        %v2779 = vand.u32 %v210, 4294901760
        %2780 = vmatpush.msra.mxu0 %v2779
        %v2781 = vand.u32 %v209, 4294901760
        %2782 = vmatpush.msra.mxu0 %v2781
        %v2783 = vand.u32 %v208, 4294901760
        %2784 = vmatpush.msra.mxu0 %v2783
        %v2785 = vand.u32 %v207, 4294901760
        %2786 = vmatpush.msra.mxu0 %v2785
        %v2787 = vand.u32 %v206, 4294901760
        %2788 = vmatpush.msra.mxu0 %v2787
        %v2789 = vand.u32 %v205, 4294901760
        %2790 = vmatpush.msra.mxu0 %v2789
        %v2791 = vand.u32 %v204, 4294901760
        %2792 = vmatpush.msra.mxu0 %v2791
        %v2793 = vand.u32 %v203, 4294901760
        %2794 = vmatpush.msra.mxu0 %v2793
        %v2795 = vand.u32 %v2617, 4294901760
        %v2796 = vsub.f32 %v2617, %v2795
        %v2797 = vand.u32 %v2796, 4294901760
        %2798 = vmatmul.f32.gmra.mxu0 %v2797
        %v2799 = vpop.f32.mrf.mxu0
        %v2800 = vadd.f32 %v2764, %v2799
        %v2801 = vand.u32 %v2620, 4294901760
        %v2802 = vsub.f32 %v2620, %v2801
        %v2803 = vand.u32 %v2802, 4294901760
        %2804 = vmatmul.f32.gmra.mxu0 %v2803
        %v2805 = vpop.f32.mrf.mxu0
        %v2806 = vadd.f32 %v2769, %v2805
        %2807 = vdwg.mxu0
        %2808 = vmatpush.msra.mxu0 0.0
        %2809 = vmatpush.msra.mxu0 0.0
        %2810 = vmatpush.msra.mxu0 0.0
        %2811 = vmatpush.msra.mxu0 0.0
        %2812 = vmatpush.msra.mxu0 0.0
        %2813 = vmatpush.msra.mxu0 0.0
        %2814 = vmatpush.msra.mxu0 0.0
        %2815 = vmatpush.msra.mxu0 0.0
        %v2816 = vand.u32 %v210, 4294901760
        %v2817 = vsub.f32 %v210, %v2816
        %v2818 = vand.u32 %v2817, 4294901760
        %2819 = vmatpush.msra.mxu0 %v2818
        %v2820 = vand.u32 %v209, 4294901760
        %v2821 = vsub.f32 %v209, %v2820
        %v2822 = vand.u32 %v2821, 4294901760
        %2823 = vmatpush.msra.mxu0 %v2822
        %v2824 = vand.u32 %v208, 4294901760
        %v2825 = vsub.f32 %v208, %v2824
        %v2826 = vand.u32 %v2825, 4294901760
        %2827 = vmatpush.msra.mxu0 %v2826
        %v2828 = vand.u32 %v207, 4294901760
        %v2829 = vsub.f32 %v207, %v2828
        %v2830 = vand.u32 %v2829, 4294901760
        %2831 = vmatpush.msra.mxu0 %v2830
        %v2832 = vand.u32 %v206, 4294901760
        %v2833 = vsub.f32 %v206, %v2832
        %v2834 = vand.u32 %v2833, 4294901760
        %2835 = vmatpush.msra.mxu0 %v2834
        %v2836 = vand.u32 %v205, 4294901760
        %v2837 = vsub.f32 %v205, %v2836
        %v2838 = vand.u32 %v2837, 4294901760
        %2839 = vmatpush.msra.mxu0 %v2838
        %v2840 = vand.u32 %v204, 4294901760
        %v2841 = vsub.f32 %v204, %v2840
        %v2842 = vand.u32 %v2841, 4294901760
        %2843 = vmatpush.msra.mxu0 %v2842
        %v2844 = vand.u32 %v203, 4294901760
        %v2845 = vsub.f32 %v203, %v2844
        %v2846 = vand.u32 %v2845, 4294901760
        %2847 = vmatpush.msra.mxu0 %v2846
        %v2848 = vand.u32 %v2617, 4294901760
        %2849 = vmatmul.f32.gmra.mxu0 %v2848
        %v2850 = vpop.f32.mrf.mxu0
        %v2851 = vadd.f32 %v2800, %v2850
        %v2852 = vand.u32 %v2620, 4294901760
        %2853 = vmatmul.f32.gmra.mxu0 %v2852
        %v2854 = vpop.f32.mrf.mxu0
        %v2855 = vadd.f32 %v2806, %v2854
        %2856 = vdwg.mxu0
        %2857 = vmatpush.msra.mxu0 0.0
        %2858 = vmatpush.msra.mxu0 0.0
        %2859 = vmatpush.msra.mxu0 0.0
        %2860 = vmatpush.msra.mxu0 0.0
        %2861 = vmatpush.msra.mxu0 0.0
        %2862 = vmatpush.msra.mxu0 0.0
        %2863 = vmatpush.msra.mxu0 0.0
        %2864 = vmatpush.msra.mxu0 0.0
        %v2865 = vand.u32 %v210, 4294901760
        %2866 = vmatpush.msra.mxu0 %v2865
        %v2867 = vand.u32 %v209, 4294901760
        %2868 = vmatpush.msra.mxu0 %v2867
        %v2869 = vand.u32 %v208, 4294901760
        %2870 = vmatpush.msra.mxu0 %v2869
        %v2871 = vand.u32 %v207, 4294901760
        %2872 = vmatpush.msra.mxu0 %v2871
        %v2873 = vand.u32 %v206, 4294901760
        %2874 = vmatpush.msra.mxu0 %v2873
        %v2875 = vand.u32 %v205, 4294901760
        %2876 = vmatpush.msra.mxu0 %v2875
        %v2877 = vand.u32 %v204, 4294901760
        %2878 = vmatpush.msra.mxu0 %v2877
        %v2879 = vand.u32 %v203, 4294901760
        %2880 = vmatpush.msra.mxu0 %v2879
        %v2881 = vand.u32 %v2617, 4294901760
        %2882 = vmatmul.f32.gmra.mxu0 %v2881
        %v2883 = vpop.f32.mrf.mxu0
        %v2884 = vadd.f32 %v2851, %v2883
        %v2885 = vand.u32 %v2620, 4294901760
        %2886 = vmatmul.f32.gmra.mxu0 %v2885
        %v2887 = vpop.f32.mrf.mxu0
        %v2888 = vadd.f32 %v2855, %v2887
        %2889 = vdwg.mxu0
        %2890 = vmatpush.msra.mxu0 0.0
        %2891 = vmatpush.msra.mxu0 0.0
        %2892 = vmatpush.msra.mxu0 0.0
        %2893 = vmatpush.msra.mxu0 0.0
        %2894 = vmatpush.msra.mxu0 0.0
        %2895 = vmatpush.msra.mxu0 0.0
        %2896 = vmatpush.msra.mxu0 0.0
        %2897 = vmatpush.msra.mxu0 0.0
        %v2898 = vand.u32 %v218, 4294901760
        %2899 = vmatpush.msra.mxu0 %v2898
        %v2900 = vand.u32 %v217, 4294901760
        %2901 = vmatpush.msra.mxu0 %v2900
        %v2902 = vand.u32 %v216, 4294901760
        %2903 = vmatpush.msra.mxu0 %v2902
        %v2904 = vand.u32 %v215, 4294901760
        %2905 = vmatpush.msra.mxu0 %v2904
        %v2906 = vand.u32 %v214, 4294901760
        %2907 = vmatpush.msra.mxu0 %v2906
        %v2908 = vand.u32 %v213, 4294901760
        %2909 = vmatpush.msra.mxu0 %v2908
        %v2910 = vand.u32 %v212, 4294901760
        %2911 = vmatpush.msra.mxu0 %v2910
        %v2912 = vand.u32 %v211, 4294901760
        %2913 = vmatpush.msra.mxu0 %v2912
        %v2914 = vand.u32 %v2617, 4294901760
        %v2915 = vsub.f32 %v2617, %v2914
        %v2916 = vand.u32 %v2915, 4294901760
        %v2917 = vsub.f32 %v2915, %v2916
        %v2918 = vand.u32 %v2917, 4294901760
        %2919 = vmatmul.f32.gmra.mxu0 %v2918
        %v2920 = vpop.f32.mrf.mxu0
        %v2921 = vadd.f32 0.0, %v2920
        %v2922 = vand.u32 %v2620, 4294901760
        %v2923 = vsub.f32 %v2620, %v2922
        %v2924 = vand.u32 %v2923, 4294901760
        %v2925 = vsub.f32 %v2923, %v2924
        %v2926 = vand.u32 %v2925, 4294901760
        %2927 = vmatmul.f32.gmra.mxu0 %v2926
        %v2928 = vpop.f32.mrf.mxu0
        %v2929 = vadd.f32 0.0, %v2928
        %2930 = vdwg.mxu0
        %2931 = vmatpush.msra.mxu0 0.0
        %2932 = vmatpush.msra.mxu0 0.0
        %2933 = vmatpush.msra.mxu0 0.0
        %2934 = vmatpush.msra.mxu0 0.0
        %2935 = vmatpush.msra.mxu0 0.0
        %2936 = vmatpush.msra.mxu0 0.0
        %2937 = vmatpush.msra.mxu0 0.0
        %2938 = vmatpush.msra.mxu0 0.0
        %v2939 = vand.u32 %v218, 4294901760
        %v2940 = vsub.f32 %v218, %v2939
        %v2941 = vand.u32 %v2940, 4294901760
        %v2942 = vsub.f32 %v2940, %v2941
        %v2943 = vand.u32 %v2942, 4294901760
        %2944 = vmatpush.msra.mxu0 %v2943
        %v2945 = vand.u32 %v217, 4294901760
        %v2946 = vsub.f32 %v217, %v2945
        %v2947 = vand.u32 %v2946, 4294901760
        %v2948 = vsub.f32 %v2946, %v2947
        %v2949 = vand.u32 %v2948, 4294901760
        %2950 = vmatpush.msra.mxu0 %v2949
        %v2951 = vand.u32 %v216, 4294901760
        %v2952 = vsub.f32 %v216, %v2951
        %v2953 = vand.u32 %v2952, 4294901760
        %v2954 = vsub.f32 %v2952, %v2953
        %v2955 = vand.u32 %v2954, 4294901760
        %2956 = vmatpush.msra.mxu0 %v2955
        %v2957 = vand.u32 %v215, 4294901760
        %v2958 = vsub.f32 %v215, %v2957
        %v2959 = vand.u32 %v2958, 4294901760
        %v2960 = vsub.f32 %v2958, %v2959
        %v2961 = vand.u32 %v2960, 4294901760
        %2962 = vmatpush.msra.mxu0 %v2961
        %v2963 = vand.u32 %v214, 4294901760
        %v2964 = vsub.f32 %v214, %v2963
        %v2965 = vand.u32 %v2964, 4294901760
        %v2966 = vsub.f32 %v2964, %v2965
        %v2967 = vand.u32 %v2966, 4294901760
        %2968 = vmatpush.msra.mxu0 %v2967
        %v2969 = vand.u32 %v213, 4294901760
        %v2970 = vsub.f32 %v213, %v2969
        %v2971 = vand.u32 %v2970, 4294901760
        %v2972 = vsub.f32 %v2970, %v2971
        %v2973 = vand.u32 %v2972, 4294901760
        %2974 = vmatpush.msra.mxu0 %v2973
        %v2975 = vand.u32 %v212, 4294901760
        %v2976 = vsub.f32 %v212, %v2975
        %v2977 = vand.u32 %v2976, 4294901760
        %v2978 = vsub.f32 %v2976, %v2977
        %v2979 = vand.u32 %v2978, 4294901760
        %2980 = vmatpush.msra.mxu0 %v2979
        %v2981 = vand.u32 %v211, 4294901760
        %v2982 = vsub.f32 %v211, %v2981
        %v2983 = vand.u32 %v2982, 4294901760
        %v2984 = vsub.f32 %v2982, %v2983
        %v2985 = vand.u32 %v2984, 4294901760
        %2986 = vmatpush.msra.mxu0 %v2985
        %v2987 = vand.u32 %v2617, 4294901760
        %2988 = vmatmul.f32.gmra.mxu0 %v2987
        %v2989 = vpop.f32.mrf.mxu0
        %v2990 = vadd.f32 %v2921, %v2989
        %v2991 = vand.u32 %v2620, 4294901760
        %2992 = vmatmul.f32.gmra.mxu0 %v2991
        %v2993 = vpop.f32.mrf.mxu0
        %v2994 = vadd.f32 %v2929, %v2993
        %2995 = vdwg.mxu0
        %2996 = vmatpush.msra.mxu0 0.0
        %2997 = vmatpush.msra.mxu0 0.0
        %2998 = vmatpush.msra.mxu0 0.0
        %2999 = vmatpush.msra.mxu0 0.0
        %3000 = vmatpush.msra.mxu0 0.0
        %3001 = vmatpush.msra.mxu0 0.0
        %3002 = vmatpush.msra.mxu0 0.0
        %3003 = vmatpush.msra.mxu0 0.0
        %v3004 = vand.u32 %v218, 4294901760
        %v3005 = vsub.f32 %v218, %v3004
        %3006 = vmatpush.msra.mxu0 %v3005
        %v3007 = vand.u32 %v217, 4294901760
        %v3008 = vsub.f32 %v217, %v3007
        %3009 = vmatpush.msra.mxu0 %v3008
        %v3010 = vand.u32 %v216, 4294901760
        %v3011 = vsub.f32 %v216, %v3010
        %3012 = vmatpush.msra.mxu0 %v3011
        %v3013 = vand.u32 %v215, 4294901760
        %v3014 = vsub.f32 %v215, %v3013
        %3015 = vmatpush.msra.mxu0 %v3014
        %v3016 = vand.u32 %v214, 4294901760
        %v3017 = vsub.f32 %v214, %v3016
        %3018 = vmatpush.msra.mxu0 %v3017
        %v3019 = vand.u32 %v213, 4294901760
        %v3020 = vsub.f32 %v213, %v3019
        %3021 = vmatpush.msra.mxu0 %v3020
        %v3022 = vand.u32 %v212, 4294901760
        %v3023 = vsub.f32 %v212, %v3022
        %3024 = vmatpush.msra.mxu0 %v3023
        %v3025 = vand.u32 %v211, 4294901760
        %v3026 = vsub.f32 %v211, %v3025
        %3027 = vmatpush.msra.mxu0 %v3026
        %v3028 = vand.u32 %v2617, 4294901760
        %v3029 = vsub.f32 %v2617, %v3028
        %3030 = vmatmul.f32.gmra.mxu0 %v3029
        %v3031 = vpop.f32.mrf.mxu0
        %v3032 = vadd.f32 %v2990, %v3031
        %v3033 = vand.u32 %v2620, 4294901760
        %v3034 = vsub.f32 %v2620, %v3033
        %3035 = vmatmul.f32.gmra.mxu0 %v3034
        %v3036 = vpop.f32.mrf.mxu0
        %v3037 = vadd.f32 %v2994, %v3036
        %3038 = vdwg.mxu0
        %3039 = vmatpush.msra.mxu0 0.0
        %3040 = vmatpush.msra.mxu0 0.0
        %3041 = vmatpush.msra.mxu0 0.0
        %3042 = vmatpush.msra.mxu0 0.0
        %3043 = vmatpush.msra.mxu0 0.0
        %3044 = vmatpush.msra.mxu0 0.0
        %3045 = vmatpush.msra.mxu0 0.0
        %3046 = vmatpush.msra.mxu0 0.0
        %v3047 = vand.u32 %v218, 4294901760
        %3048 = vmatpush.msra.mxu0 %v3047
        %v3049 = vand.u32 %v217, 4294901760
        %3050 = vmatpush.msra.mxu0 %v3049
        %v3051 = vand.u32 %v216, 4294901760
        %3052 = vmatpush.msra.mxu0 %v3051
        %v3053 = vand.u32 %v215, 4294901760
        %3054 = vmatpush.msra.mxu0 %v3053
        %v3055 = vand.u32 %v214, 4294901760
        %3056 = vmatpush.msra.mxu0 %v3055
        %v3057 = vand.u32 %v213, 4294901760
        %3058 = vmatpush.msra.mxu0 %v3057
        %v3059 = vand.u32 %v212, 4294901760
        %3060 = vmatpush.msra.mxu0 %v3059
        %v3061 = vand.u32 %v211, 4294901760
        %3062 = vmatpush.msra.mxu0 %v3061
        %v3063 = vand.u32 %v2617, 4294901760
        %v3064 = vsub.f32 %v2617, %v3063
        %v3065 = vand.u32 %v3064, 4294901760
        %3066 = vmatmul.f32.gmra.mxu0 %v3065
        %v3067 = vpop.f32.mrf.mxu0
        %v3068 = vadd.f32 %v3032, %v3067
        %v3069 = vand.u32 %v2620, 4294901760
        %v3070 = vsub.f32 %v2620, %v3069
        %v3071 = vand.u32 %v3070, 4294901760
        %3072 = vmatmul.f32.gmra.mxu0 %v3071
        %v3073 = vpop.f32.mrf.mxu0
        %v3074 = vadd.f32 %v3037, %v3073
        %3075 = vdwg.mxu0
        %3076 = vmatpush.msra.mxu0 0.0
        %3077 = vmatpush.msra.mxu0 0.0
        %3078 = vmatpush.msra.mxu0 0.0
        %3079 = vmatpush.msra.mxu0 0.0
        %3080 = vmatpush.msra.mxu0 0.0
        %3081 = vmatpush.msra.mxu0 0.0
        %3082 = vmatpush.msra.mxu0 0.0
        %3083 = vmatpush.msra.mxu0 0.0
        %v3084 = vand.u32 %v218, 4294901760
        %v3085 = vsub.f32 %v218, %v3084
        %v3086 = vand.u32 %v3085, 4294901760
        %3087 = vmatpush.msra.mxu0 %v3086
        %v3088 = vand.u32 %v217, 4294901760
        %v3089 = vsub.f32 %v217, %v3088
        %v3090 = vand.u32 %v3089, 4294901760
        %3091 = vmatpush.msra.mxu0 %v3090
        %v3092 = vand.u32 %v216, 4294901760
        %v3093 = vsub.f32 %v216, %v3092
        %v3094 = vand.u32 %v3093, 4294901760
        %3095 = vmatpush.msra.mxu0 %v3094
        %v3096 = vand.u32 %v215, 4294901760
        %v3097 = vsub.f32 %v215, %v3096
        %v3098 = vand.u32 %v3097, 4294901760
        %3099 = vmatpush.msra.mxu0 %v3098
        %v3100 = vand.u32 %v214, 4294901760
        %v3101 = vsub.f32 %v214, %v3100
        %v3102 = vand.u32 %v3101, 4294901760
        %3103 = vmatpush.msra.mxu0 %v3102
        %v3104 = vand.u32 %v213, 4294901760
        %v3105 = vsub.f32 %v213, %v3104
        %v3106 = vand.u32 %v3105, 4294901760
        %3107 = vmatpush.msra.mxu0 %v3106
        %v3108 = vand.u32 %v212, 4294901760
        %v3109 = vsub.f32 %v212, %v3108
        %v3110 = vand.u32 %v3109, 4294901760
        %3111 = vmatpush.msra.mxu0 %v3110
        %v3112 = vand.u32 %v211, 4294901760
        %v3113 = vsub.f32 %v211, %v3112
        %v3114 = vand.u32 %v3113, 4294901760
        %3115 = vmatpush.msra.mxu0 %v3114
        %v3116 = vand.u32 %v2617, 4294901760
        %3117 = vmatmul.f32.gmra.mxu0 %v3116
        %v3118 = vpop.f32.mrf.mxu0
        %v3119 = vadd.f32 %v3068, %v3118
        %v3120 = vand.u32 %v2620, 4294901760
        %3121 = vmatmul.f32.gmra.mxu0 %v3120
        %v3122 = vpop.f32.mrf.mxu0
        %v3123 = vadd.f32 %v3074, %v3122
        %3124 = vdwg.mxu0
        %3125 = vmatpush.msra.mxu0 0.0
        %3126 = vmatpush.msra.mxu0 0.0
        %3127 = vmatpush.msra.mxu0 0.0
        %3128 = vmatpush.msra.mxu0 0.0
        %3129 = vmatpush.msra.mxu0 0.0
        %3130 = vmatpush.msra.mxu0 0.0
        %3131 = vmatpush.msra.mxu0 0.0
        %3132 = vmatpush.msra.mxu0 0.0
        %v3133 = vand.u32 %v218, 4294901760
        %3134 = vmatpush.msra.mxu0 %v3133
        %v3135 = vand.u32 %v217, 4294901760
        %3136 = vmatpush.msra.mxu0 %v3135
        %v3137 = vand.u32 %v216, 4294901760
        %3138 = vmatpush.msra.mxu0 %v3137
        %v3139 = vand.u32 %v215, 4294901760
        %3140 = vmatpush.msra.mxu0 %v3139
        %v3141 = vand.u32 %v214, 4294901760
        %3142 = vmatpush.msra.mxu0 %v3141
        %v3143 = vand.u32 %v213, 4294901760
        %3144 = vmatpush.msra.mxu0 %v3143
        %v3145 = vand.u32 %v212, 4294901760
        %3146 = vmatpush.msra.mxu0 %v3145
        %v3147 = vand.u32 %v211, 4294901760
        %3148 = vmatpush.msra.mxu0 %v3147
        %v3149 = vand.u32 %v2617, 4294901760
        %3150 = vmatmul.f32.gmra.mxu0 %v3149
        %v3151 = vpop.f32.mrf.mxu0
        %v3152 = vadd.f32 %v3119, %v3151
        %v3153 = vand.u32 %v2620, 4294901760
        %3154 = vmatmul.f32.gmra.mxu0 %v3153
        %v3155 = vpop.f32.mrf.mxu0
        %v3156 = vadd.f32 %v3123, %v3155
        %3157 = vdwg.mxu0
        %v3159 = vsel %vm221, %v2884, 0
        %v3162 = vsel %vm221, %v2888, 0
        %v3165 = vsel %vm221, %v3152, 0
        %v3168 = vsel %vm221, %v3156, 0
        %3170 = vmatpush.xpose.msra.mxu0 0.0
        %3171 = vmatpush.xpose.msra.mxu0 0.0
        %3172 = vmatpush.xpose.msra.mxu0 0.0
        %3173 = vmatpush.xpose.msra.mxu0 0.0
        %3174 = vmatpush.xpose.msra.mxu0 0.0
        %3175 = vmatpush.xpose.msra.mxu0 0.0
        %3176 = vmatpush.xpose.msra.mxu0 0.0
        %3177 = vmatpush.xpose.msra.mxu0 0.0
        %3178 = vmatpush.xpose.msra.mxu0 0.0
        %3179 = vmatpush.xpose.msra.mxu0 0.0
        %3180 = vmatpush.xpose.msra.mxu0 0.0
        %3181 = vmatpush.xpose.msra.mxu0 0.0
        %3182 = vmatpush.xpose.msra.mxu0 0.0
        %3183 = vmatpush.xpose.msra.mxu0 0.0
        %v3184 = vand.u32 %v3168, 4294901760
        %3185 = vmatpush.xpose.msra.mxu0 %v3184
        %v3186 = vand.u32 %v3165, 4294901760
        %3187 = vmatpush.xpose.msra.mxu0 %v3186
        %v3188 = vand.u32 %v3159, 4294901760
        %v3189 = vsub.f32 %v3159, %v3188
        %v3190 = vand.u32 %v3189, 4294901760
        %v3191 = vsub.f32 %v3189, %v3190
        %v3192 = vand.u32 %v3191, 4294901760
        %3193 = vmatmul.f32.gmra.mxu0 %v3192
        %v3194 = vpop.f32.mrf.mxu0
        %v3195 = vadd.f32 0.0, %v3194
        %v3196 = vand.u32 %v3162, 4294901760
        %v3197 = vsub.f32 %v3162, %v3196
        %v3198 = vand.u32 %v3197, 4294901760
        %v3199 = vsub.f32 %v3197, %v3198
        %v3200 = vand.u32 %v3199, 4294901760
        %3201 = vmatmul.f32.gmra.mxu0 %v3200
        %v3202 = vpop.f32.mrf.mxu0
        %v3203 = vadd.f32 0.0, %v3202
        %3204 = vdwg.mxu0
        %3205 = vmatpush.xpose.msra.mxu0 0.0
        %3206 = vmatpush.xpose.msra.mxu0 0.0
        %3207 = vmatpush.xpose.msra.mxu0 0.0
        %3208 = vmatpush.xpose.msra.mxu0 0.0
        %3209 = vmatpush.xpose.msra.mxu0 0.0
        %3210 = vmatpush.xpose.msra.mxu0 0.0
        %3211 = vmatpush.xpose.msra.mxu0 0.0
        %3212 = vmatpush.xpose.msra.mxu0 0.0
        %3213 = vmatpush.xpose.msra.mxu0 0.0
        %3214 = vmatpush.xpose.msra.mxu0 0.0
        %3215 = vmatpush.xpose.msra.mxu0 0.0
        %3216 = vmatpush.xpose.msra.mxu0 0.0
        %3217 = vmatpush.xpose.msra.mxu0 0.0
        %3218 = vmatpush.xpose.msra.mxu0 0.0
        %v3219 = vand.u32 %v3168, 4294901760
        %v3220 = vsub.f32 %v3168, %v3219
        %v3221 = vand.u32 %v3220, 4294901760
        %v3222 = vsub.f32 %v3220, %v3221
        %v3223 = vand.u32 %v3222, 4294901760
        %3224 = vmatpush.xpose.msra.mxu0 %v3223
        %v3225 = vand.u32 %v3165, 4294901760
        %v3226 = vsub.f32 %v3165, %v3225
        %v3227 = vand.u32 %v3226, 4294901760
        %v3228 = vsub.f32 %v3226, %v3227
        %v3229 = vand.u32 %v3228, 4294901760
        %3230 = vmatpush.xpose.msra.mxu0 %v3229
        %v3231 = vand.u32 %v3159, 4294901760
        %3232 = vmatmul.f32.gmra.mxu0 %v3231
        %v3233 = vpop.f32.mrf.mxu0
        %v3234 = vadd.f32 %v3195, %v3233
        %v3235 = vand.u32 %v3162, 4294901760
        %3236 = vmatmul.f32.gmra.mxu0 %v3235
        %v3237 = vpop.f32.mrf.mxu0
        %v3238 = vadd.f32 %v3203, %v3237
        %3239 = vdwg.mxu0
        %3240 = vmatpush.xpose.msra.mxu0 0.0
        %3241 = vmatpush.xpose.msra.mxu0 0.0
        %3242 = vmatpush.xpose.msra.mxu0 0.0
        %3243 = vmatpush.xpose.msra.mxu0 0.0
        %3244 = vmatpush.xpose.msra.mxu0 0.0
        %3245 = vmatpush.xpose.msra.mxu0 0.0
        %3246 = vmatpush.xpose.msra.mxu0 0.0
        %3247 = vmatpush.xpose.msra.mxu0 0.0
        %3248 = vmatpush.xpose.msra.mxu0 0.0
        %3249 = vmatpush.xpose.msra.mxu0 0.0
        %3250 = vmatpush.xpose.msra.mxu0 0.0
        %3251 = vmatpush.xpose.msra.mxu0 0.0
        %3252 = vmatpush.xpose.msra.mxu0 0.0
        %3253 = vmatpush.xpose.msra.mxu0 0.0
        %v3254 = vand.u32 %v3168, 4294901760
        %v3255 = vsub.f32 %v3168, %v3254
        %3256 = vmatpush.xpose.msra.mxu0 %v3255
        %v3257 = vand.u32 %v3165, 4294901760
        %v3258 = vsub.f32 %v3165, %v3257
        %3259 = vmatpush.xpose.msra.mxu0 %v3258
        %v3260 = vand.u32 %v3159, 4294901760
        %v3261 = vsub.f32 %v3159, %v3260
        %3262 = vmatmul.f32.gmra.mxu0 %v3261
        %v3263 = vpop.f32.mrf.mxu0
        %v3264 = vadd.f32 %v3234, %v3263
        %v3265 = vand.u32 %v3162, 4294901760
        %v3266 = vsub.f32 %v3162, %v3265
        %3267 = vmatmul.f32.gmra.mxu0 %v3266
        %v3268 = vpop.f32.mrf.mxu0
        %v3269 = vadd.f32 %v3238, %v3268
        %3270 = vdwg.mxu0
        %3271 = vmatpush.xpose.msra.mxu0 0.0
        %3272 = vmatpush.xpose.msra.mxu0 0.0
        %3273 = vmatpush.xpose.msra.mxu0 0.0
        %3274 = vmatpush.xpose.msra.mxu0 0.0
        %3275 = vmatpush.xpose.msra.mxu0 0.0
        %3276 = vmatpush.xpose.msra.mxu0 0.0
        %3277 = vmatpush.xpose.msra.mxu0 0.0
        %3278 = vmatpush.xpose.msra.mxu0 0.0
        %3279 = vmatpush.xpose.msra.mxu0 0.0
        %3280 = vmatpush.xpose.msra.mxu0 0.0
        %3281 = vmatpush.xpose.msra.mxu0 0.0
        %3282 = vmatpush.xpose.msra.mxu0 0.0
        %3283 = vmatpush.xpose.msra.mxu0 0.0
        %3284 = vmatpush.xpose.msra.mxu0 0.0
        %v3285 = vand.u32 %v3168, 4294901760
        %3286 = vmatpush.xpose.msra.mxu0 %v3285
        %v3287 = vand.u32 %v3165, 4294901760
        %3288 = vmatpush.xpose.msra.mxu0 %v3287
        %v3289 = vand.u32 %v3159, 4294901760
        %v3290 = vsub.f32 %v3159, %v3289
        %v3291 = vand.u32 %v3290, 4294901760
        %3292 = vmatmul.f32.gmra.mxu0 %v3291
        %v3293 = vpop.f32.mrf.mxu0
        %v3294 = vadd.f32 %v3264, %v3293
        %v3295 = vand.u32 %v3162, 4294901760
        %v3296 = vsub.f32 %v3162, %v3295
        %v3297 = vand.u32 %v3296, 4294901760
        %3298 = vmatmul.f32.gmra.mxu0 %v3297
        %v3299 = vpop.f32.mrf.mxu0
        %v3300 = vadd.f32 %v3269, %v3299
        %3301 = vdwg.mxu0
        %3302 = vmatpush.xpose.msra.mxu0 0.0
        %3303 = vmatpush.xpose.msra.mxu0 0.0
        %3304 = vmatpush.xpose.msra.mxu0 0.0
        %3305 = vmatpush.xpose.msra.mxu0 0.0
        %3306 = vmatpush.xpose.msra.mxu0 0.0
        %3307 = vmatpush.xpose.msra.mxu0 0.0
        %3308 = vmatpush.xpose.msra.mxu0 0.0
        %3309 = vmatpush.xpose.msra.mxu0 0.0
        %3310 = vmatpush.xpose.msra.mxu0 0.0
        %3311 = vmatpush.xpose.msra.mxu0 0.0
        %3312 = vmatpush.xpose.msra.mxu0 0.0
        %3313 = vmatpush.xpose.msra.mxu0 0.0
        %3314 = vmatpush.xpose.msra.mxu0 0.0
        %3315 = vmatpush.xpose.msra.mxu0 0.0
        %v3316 = vand.u32 %v3168, 4294901760
        %v3317 = vsub.f32 %v3168, %v3316
        %v3318 = vand.u32 %v3317, 4294901760
        %3319 = vmatpush.xpose.msra.mxu0 %v3318
        %v3320 = vand.u32 %v3165, 4294901760
        %v3321 = vsub.f32 %v3165, %v3320
        %v3322 = vand.u32 %v3321, 4294901760
        %3323 = vmatpush.xpose.msra.mxu0 %v3322
        %v3324 = vand.u32 %v3159, 4294901760
        %3325 = vmatmul.f32.gmra.mxu0 %v3324
        %v3326 = vpop.f32.mrf.mxu0
        %v3327 = vadd.f32 %v3294, %v3326
        %v3328 = vand.u32 %v3162, 4294901760
        %3329 = vmatmul.f32.gmra.mxu0 %v3328
        %v3330 = vpop.f32.mrf.mxu0
        %v3331 = vadd.f32 %v3300, %v3330
        %3332 = vdwg.mxu0
        %3333 = vmatpush.xpose.msra.mxu0 0.0
        %3334 = vmatpush.xpose.msra.mxu0 0.0
        %3335 = vmatpush.xpose.msra.mxu0 0.0
        %3336 = vmatpush.xpose.msra.mxu0 0.0
        %3337 = vmatpush.xpose.msra.mxu0 0.0
        %3338 = vmatpush.xpose.msra.mxu0 0.0
        %3339 = vmatpush.xpose.msra.mxu0 0.0
        %3340 = vmatpush.xpose.msra.mxu0 0.0
        %3341 = vmatpush.xpose.msra.mxu0 0.0
        %3342 = vmatpush.xpose.msra.mxu0 0.0
        %3343 = vmatpush.xpose.msra.mxu0 0.0
        %3344 = vmatpush.xpose.msra.mxu0 0.0
        %3345 = vmatpush.xpose.msra.mxu0 0.0
        %3346 = vmatpush.xpose.msra.mxu0 0.0
        %v3347 = vand.u32 %v3168, 4294901760
        %3348 = vmatpush.xpose.msra.mxu0 %v3347
        %v3349 = vand.u32 %v3165, 4294901760
        %3350 = vmatpush.xpose.msra.mxu0 %v3349
        %v3351 = vand.u32 %v3159, 4294901760
        %3352 = vmatmul.f32.gmra.mxu0 %v3351
        %v3353 = vpop.f32.mrf.mxu0
        %v3354 = vadd.f32 %v3327, %v3353
        %v3355 = vand.u32 %v3162, 4294901760
        %3356 = vmatmul.f32.gmra.mxu0 %v3355
        %v3357 = vpop.f32.mrf.mxu0
        %v3358 = vadd.f32 %v3331, %v3357
        %3359 = vdwg.mxu0
        %v3360 = vsel %vm966, %v3354, -inf
        %3361 = vmax.xlane.f32.xlu0 %v3360
        %v3362 = vpop.xlane.xlu0 %3361
        %v3363 = vsel %vm966, %v3358, -inf
        %3364 = vmax.xlane.f32.xlu0 %v3363
        %v3365 = vpop.xlane.xlu0 %3364
        %v3366 = vsub.f32 %v3354, %v3362
        %v3367 = vsub.f32 %v3358, %v3365
        %v3368 = vmul.f32 %v3366, 1.442695
        %v3369 = vpow.pop %v3368
        %v3370 = vmul.f32 %v3367, 1.442695
        %v3371 = vpow.pop %v3370
        %v3372 = vsel %vm966, %v3369, 0.0
        %3373 = vadd.xlane.f32.xlu0 %v3372
        %v3374 = vpop.xlane.xlu0 %3373
        %v3375 = vsel %vm966, %v3371, 0.0
        %3376 = vadd.xlane.f32.xlu0 %v3375
        %v3377 = vpop.xlane.xlu0 %3376
        %v3378 = vrcp.pop %v3374
        %v3379 = vmul.f32 %v3374, %v3378
        %v3380 = vsub.f32 1.0, %v3379
        %v3381 = vmul.f32 %v3378, %v3380
        %v3382 = vadd.f32 %v3378, %v3381
        %vm3383 = vweird.f32 %v3374
        %vm3384 = vweird.f32 %v3378
        %vm3385 = vmor %vm3383, %vm3384
        %v3386 = vsel %vm3385, %v3378, %v3382
        %v3387 = vand.u32 2147483647, %v3374
        %vm3388 = vcmp.eq.f32.partialorder %v3387, 8.507059e+37
        %v3389 = vand.u32 %v3374, 2147483648
        %v3390 = vor.u32 1.1754944e-38, %v3389
        %v3391 = vsel %vm3388, %v3390, %v3386
        %v3392 = vmul.f32 %v3369, %v3391
        %v3393 = vrcp.pop %v3377
        %v3394 = vmul.f32 %v3377, %v3393
        %v3395 = vsub.f32 1.0, %v3394
        %v3396 = vmul.f32 %v3393, %v3395
        %v3397 = vadd.f32 %v3393, %v3396
        %vm3398 = vweird.f32 %v3377
        %vm3399 = vweird.f32 %v3393
        %vm3400 = vmor %vm3398, %vm3399
        %v3401 = vsel %vm3400, %v3393, %v3397
        %v3402 = vand.u32 2147483647, %v3377
        %vm3403 = vcmp.eq.f32.partialorder %v3402, 8.507059e+37
        %v3404 = vand.u32 %v3377, 2147483648
        %v3405 = vor.u32 1.1754944e-38, %v3404
        %v3406 = vsel %vm3403, %v3405, %v3401
        %v3407 = vmul.f32 %v3371, %v3406
        %s3408 = scalar_lea.vmem %s190, 48 [#allocation2]
        %3409 = vst.msk [vmem:[%s3408] sm:$0xff] %vm966, %v3392
        %3410 = vst.msk [vmem:[%s3408 + $0x8] sm:$0xff] %vm966, %v3407
        %s3411 = scalar_lea.vmem %s200, 64
        %v3412 = vld [vmem:[%s3411] sm:$0xff]
        %v3413 = vld [vmem:[%s3411 + $0x8] sm:$0xff]
        %v3415 = vsel %vm221, %v3412, 0
        %v3418 = vsel %vm221, %v3413, 0
        %3420 = vmatpush.msra.mxu0 0.0
        %3421 = vmatpush.msra.mxu0 0.0
        %3422 = vmatpush.msra.mxu0 0.0
        %3423 = vmatpush.msra.mxu0 0.0
        %3424 = vmatpush.msra.mxu0 0.0
        %3425 = vmatpush.msra.mxu0 0.0
        %3426 = vmatpush.msra.mxu0 0.0
        %3427 = vmatpush.msra.mxu0 0.0
        %v3428 = vand.u32 %v210, 4294901760
        %3429 = vmatpush.msra.mxu0 %v3428
        %v3430 = vand.u32 %v209, 4294901760
        %3431 = vmatpush.msra.mxu0 %v3430
        %v3432 = vand.u32 %v208, 4294901760
        %3433 = vmatpush.msra.mxu0 %v3432
        %v3434 = vand.u32 %v207, 4294901760
        %3435 = vmatpush.msra.mxu0 %v3434
        %v3436 = vand.u32 %v206, 4294901760
        %3437 = vmatpush.msra.mxu0 %v3436
        %v3438 = vand.u32 %v205, 4294901760
        %3439 = vmatpush.msra.mxu0 %v3438
        %v3440 = vand.u32 %v204, 4294901760
        %3441 = vmatpush.msra.mxu0 %v3440
        %v3442 = vand.u32 %v203, 4294901760
        %3443 = vmatpush.msra.mxu0 %v3442
        %v3444 = vand.u32 %v3415, 4294901760
        %v3445 = vsub.f32 %v3415, %v3444
        %v3446 = vand.u32 %v3445, 4294901760
        %v3447 = vsub.f32 %v3445, %v3446
        %v3448 = vand.u32 %v3447, 4294901760
        %3449 = vmatmul.f32.gmra.mxu0 %v3448
        %v3450 = vpop.f32.mrf.mxu0
        %v3451 = vadd.f32 0.0, %v3450
        %v3452 = vand.u32 %v3418, 4294901760
        %v3453 = vsub.f32 %v3418, %v3452
        %v3454 = vand.u32 %v3453, 4294901760
        %v3455 = vsub.f32 %v3453, %v3454
        %v3456 = vand.u32 %v3455, 4294901760
        %3457 = vmatmul.f32.gmra.mxu0 %v3456
        %v3458 = vpop.f32.mrf.mxu0
        %v3459 = vadd.f32 0.0, %v3458
        %3460 = vdwg.mxu0
        %3461 = vmatpush.msra.mxu0 0.0
        %3462 = vmatpush.msra.mxu0 0.0
        %3463 = vmatpush.msra.mxu0 0.0
        %3464 = vmatpush.msra.mxu0 0.0
        %3465 = vmatpush.msra.mxu0 0.0
        %3466 = vmatpush.msra.mxu0 0.0
        %3467 = vmatpush.msra.mxu0 0.0
        %3468 = vmatpush.msra.mxu0 0.0
        %v3469 = vand.u32 %v210, 4294901760
        %v3470 = vsub.f32 %v210, %v3469
        %v3471 = vand.u32 %v3470, 4294901760
        %v3472 = vsub.f32 %v3470, %v3471
        %v3473 = vand.u32 %v3472, 4294901760
        %3474 = vmatpush.msra.mxu0 %v3473
        %v3475 = vand.u32 %v209, 4294901760
        %v3476 = vsub.f32 %v209, %v3475
        %v3477 = vand.u32 %v3476, 4294901760
        %v3478 = vsub.f32 %v3476, %v3477
        %v3479 = vand.u32 %v3478, 4294901760
        %3480 = vmatpush.msra.mxu0 %v3479
        %v3481 = vand.u32 %v208, 4294901760
        %v3482 = vsub.f32 %v208, %v3481
        %v3483 = vand.u32 %v3482, 4294901760
        %v3484 = vsub.f32 %v3482, %v3483
        %v3485 = vand.u32 %v3484, 4294901760
        %3486 = vmatpush.msra.mxu0 %v3485
        %v3487 = vand.u32 %v207, 4294901760
        %v3488 = vsub.f32 %v207, %v3487
        %v3489 = vand.u32 %v3488, 4294901760
        %v3490 = vsub.f32 %v3488, %v3489
        %v3491 = vand.u32 %v3490, 4294901760
        %3492 = vmatpush.msra.mxu0 %v3491
        %v3493 = vand.u32 %v206, 4294901760
        %v3494 = vsub.f32 %v206, %v3493
        %v3495 = vand.u32 %v3494, 4294901760
        %v3496 = vsub.f32 %v3494, %v3495
        %v3497 = vand.u32 %v3496, 4294901760
        %3498 = vmatpush.msra.mxu0 %v3497
        %v3499 = vand.u32 %v205, 4294901760
        %v3500 = vsub.f32 %v205, %v3499
        %v3501 = vand.u32 %v3500, 4294901760
        %v3502 = vsub.f32 %v3500, %v3501
        %v3503 = vand.u32 %v3502, 4294901760
        %3504 = vmatpush.msra.mxu0 %v3503
        %v3505 = vand.u32 %v204, 4294901760
        %v3506 = vsub.f32 %v204, %v3505
        %v3507 = vand.u32 %v3506, 4294901760
        %v3508 = vsub.f32 %v3506, %v3507
        %v3509 = vand.u32 %v3508, 4294901760
        %3510 = vmatpush.msra.mxu0 %v3509
        %v3511 = vand.u32 %v203, 4294901760
        %v3512 = vsub.f32 %v203, %v3511
        %v3513 = vand.u32 %v3512, 4294901760
        %v3514 = vsub.f32 %v3512, %v3513
        %v3515 = vand.u32 %v3514, 4294901760
        %3516 = vmatpush.msra.mxu0 %v3515
        %v3517 = vand.u32 %v3415, 4294901760
        %3518 = vmatmul.f32.gmra.mxu0 %v3517
        %v3519 = vpop.f32.mrf.mxu0
        %v3520 = vadd.f32 %v3451, %v3519
        %v3521 = vand.u32 %v3418, 4294901760
        %3522 = vmatmul.f32.gmra.mxu0 %v3521
        %v3523 = vpop.f32.mrf.mxu0
        %v3524 = vadd.f32 %v3459, %v3523
        %3525 = vdwg.mxu0
        %3526 = vmatpush.msra.mxu0 0.0
        %3527 = vmatpush.msra.mxu0 0.0
        %3528 = vmatpush.msra.mxu0 0.0
        %3529 = vmatpush.msra.mxu0 0.0
        %3530 = vmatpush.msra.mxu0 0.0
        %3531 = vmatpush.msra.mxu0 0.0
        %3532 = vmatpush.msra.mxu0 0.0
        %3533 = vmatpush.msra.mxu0 0.0
        %v3534 = vand.u32 %v210, 4294901760
        %v3535 = vsub.f32 %v210, %v3534
        %3536 = vmatpush.msra.mxu0 %v3535
        %v3537 = vand.u32 %v209, 4294901760
        %v3538 = vsub.f32 %v209, %v3537
        %3539 = vmatpush.msra.mxu0 %v3538
        %v3540 = vand.u32 %v208, 4294901760
        %v3541 = vsub.f32 %v208, %v3540
        %3542 = vmatpush.msra.mxu0 %v3541
        %v3543 = vand.u32 %v207, 4294901760
        %v3544 = vsub.f32 %v207, %v3543
        %3545 = vmatpush.msra.mxu0 %v3544
        %v3546 = vand.u32 %v206, 4294901760
        %v3547 = vsub.f32 %v206, %v3546
        %3548 = vmatpush.msra.mxu0 %v3547
        %v3549 = vand.u32 %v205, 4294901760
        %v3550 = vsub.f32 %v205, %v3549
        %3551 = vmatpush.msra.mxu0 %v3550
        %v3552 = vand.u32 %v204, 4294901760
        %v3553 = vsub.f32 %v204, %v3552
        %3554 = vmatpush.msra.mxu0 %v3553
        %v3555 = vand.u32 %v203, 4294901760
        %v3556 = vsub.f32 %v203, %v3555
        %3557 = vmatpush.msra.mxu0 %v3556
        %v3558 = vand.u32 %v3415, 4294901760
        %v3559 = vsub.f32 %v3415, %v3558
        %3560 = vmatmul.f32.gmra.mxu0 %v3559
        %v3561 = vpop.f32.mrf.mxu0
        %v3562 = vadd.f32 %v3520, %v3561
        %v3563 = vand.u32 %v3418, 4294901760
        %v3564 = vsub.f32 %v3418, %v3563
        %3565 = vmatmul.f32.gmra.mxu0 %v3564
        %v3566 = vpop.f32.mrf.mxu0
        %v3567 = vadd.f32 %v3524, %v3566
        %3568 = vdwg.mxu0
        %3569 = vmatpush.msra.mxu0 0.0
        %3570 = vmatpush.msra.mxu0 0.0
        %3571 = vmatpush.msra.mxu0 0.0
        %3572 = vmatpush.msra.mxu0 0.0
        %3573 = vmatpush.msra.mxu0 0.0
        %3574 = vmatpush.msra.mxu0 0.0
        %3575 = vmatpush.msra.mxu0 0.0
        %3576 = vmatpush.msra.mxu0 0.0
        %v3577 = vand.u32 %v210, 4294901760
        %3578 = vmatpush.msra.mxu0 %v3577
        %v3579 = vand.u32 %v209, 4294901760
        %3580 = vmatpush.msra.mxu0 %v3579
        %v3581 = vand.u32 %v208, 4294901760
        %3582 = vmatpush.msra.mxu0 %v3581
        %v3583 = vand.u32 %v207, 4294901760
        %3584 = vmatpush.msra.mxu0 %v3583
        %v3585 = vand.u32 %v206, 4294901760
        %3586 = vmatpush.msra.mxu0 %v3585
        %v3587 = vand.u32 %v205, 4294901760
        %3588 = vmatpush.msra.mxu0 %v3587
        %v3589 = vand.u32 %v204, 4294901760
        %3590 = vmatpush.msra.mxu0 %v3589
        %v3591 = vand.u32 %v203, 4294901760
        %3592 = vmatpush.msra.mxu0 %v3591
        %v3593 = vand.u32 %v3415, 4294901760
        %v3594 = vsub.f32 %v3415, %v3593
        %v3595 = vand.u32 %v3594, 4294901760
        %3596 = vmatmul.f32.gmra.mxu0 %v3595
        %v3597 = vpop.f32.mrf.mxu0
        %v3598 = vadd.f32 %v3562, %v3597
        %v3599 = vand.u32 %v3418, 4294901760
        %v3600 = vsub.f32 %v3418, %v3599
        %v3601 = vand.u32 %v3600, 4294901760
        %3602 = vmatmul.f32.gmra.mxu0 %v3601
        %v3603 = vpop.f32.mrf.mxu0
        %v3604 = vadd.f32 %v3567, %v3603
        %3605 = vdwg.mxu0
        %3606 = vmatpush.msra.mxu0 0.0
        %3607 = vmatpush.msra.mxu0 0.0
        %3608 = vmatpush.msra.mxu0 0.0
        %3609 = vmatpush.msra.mxu0 0.0
        %3610 = vmatpush.msra.mxu0 0.0
        %3611 = vmatpush.msra.mxu0 0.0
        %3612 = vmatpush.msra.mxu0 0.0
        %3613 = vmatpush.msra.mxu0 0.0
        %v3614 = vand.u32 %v210, 4294901760
        %v3615 = vsub.f32 %v210, %v3614
        %v3616 = vand.u32 %v3615, 4294901760
        %3617 = vmatpush.msra.mxu0 %v3616
        %v3618 = vand.u32 %v209, 4294901760
        %v3619 = vsub.f32 %v209, %v3618
        %v3620 = vand.u32 %v3619, 4294901760
        %3621 = vmatpush.msra.mxu0 %v3620
        %v3622 = vand.u32 %v208, 4294901760
        %v3623 = vsub.f32 %v208, %v3622
        %v3624 = vand.u32 %v3623, 4294901760
        %3625 = vmatpush.msra.mxu0 %v3624
        %v3626 = vand.u32 %v207, 4294901760
        %v3627 = vsub.f32 %v207, %v3626
        %v3628 = vand.u32 %v3627, 4294901760
        %3629 = vmatpush.msra.mxu0 %v3628
        %v3630 = vand.u32 %v206, 4294901760
        %v3631 = vsub.f32 %v206, %v3630
        %v3632 = vand.u32 %v3631, 4294901760
        %3633 = vmatpush.msra.mxu0 %v3632
        %v3634 = vand.u32 %v205, 4294901760
        %v3635 = vsub.f32 %v205, %v3634
        %v3636 = vand.u32 %v3635, 4294901760
        %3637 = vmatpush.msra.mxu0 %v3636
        %v3638 = vand.u32 %v204, 4294901760
        %v3639 = vsub.f32 %v204, %v3638
        %v3640 = vand.u32 %v3639, 4294901760
        %3641 = vmatpush.msra.mxu0 %v3640
        %v3642 = vand.u32 %v203, 4294901760
        %v3643 = vsub.f32 %v203, %v3642
        %v3644 = vand.u32 %v3643, 4294901760
        %3645 = vmatpush.msra.mxu0 %v3644
        %v3646 = vand.u32 %v3415, 4294901760
        %3647 = vmatmul.f32.gmra.mxu0 %v3646
        %v3648 = vpop.f32.mrf.mxu0
        %v3649 = vadd.f32 %v3598, %v3648
        %v3650 = vand.u32 %v3418, 4294901760
        %3651 = vmatmul.f32.gmra.mxu0 %v3650
        %v3652 = vpop.f32.mrf.mxu0
        %v3653 = vadd.f32 %v3604, %v3652
        %3654 = vdwg.mxu0
        %3655 = vmatpush.msra.mxu0 0.0
        %3656 = vmatpush.msra.mxu0 0.0
        %3657 = vmatpush.msra.mxu0 0.0
        %3658 = vmatpush.msra.mxu0 0.0
        %3659 = vmatpush.msra.mxu0 0.0
        %3660 = vmatpush.msra.mxu0 0.0
        %3661 = vmatpush.msra.mxu0 0.0
        %3662 = vmatpush.msra.mxu0 0.0
        %v3663 = vand.u32 %v210, 4294901760
        %3664 = vmatpush.msra.mxu0 %v3663
        %v3665 = vand.u32 %v209, 4294901760
        %3666 = vmatpush.msra.mxu0 %v3665
        %v3667 = vand.u32 %v208, 4294901760
        %3668 = vmatpush.msra.mxu0 %v3667
        %v3669 = vand.u32 %v207, 4294901760
        %3670 = vmatpush.msra.mxu0 %v3669
        %v3671 = vand.u32 %v206, 4294901760
        %3672 = vmatpush.msra.mxu0 %v3671
        %v3673 = vand.u32 %v205, 4294901760
        %3674 = vmatpush.msra.mxu0 %v3673
        %v3675 = vand.u32 %v204, 4294901760
        %3676 = vmatpush.msra.mxu0 %v3675
        %v3677 = vand.u32 %v203, 4294901760
        %3678 = vmatpush.msra.mxu0 %v3677
        %v3679 = vand.u32 %v3415, 4294901760
        %3680 = vmatmul.f32.gmra.mxu0 %v3679
        %v3681 = vpop.f32.mrf.mxu0
        %v3682 = vadd.f32 %v3649, %v3681
        %v3683 = vand.u32 %v3418, 4294901760
        %3684 = vmatmul.f32.gmra.mxu0 %v3683
        %v3685 = vpop.f32.mrf.mxu0
        %v3686 = vadd.f32 %v3653, %v3685
        %3687 = vdwg.mxu0
        %3688 = vmatpush.msra.mxu0 0.0
        %3689 = vmatpush.msra.mxu0 0.0
        %3690 = vmatpush.msra.mxu0 0.0
        %3691 = vmatpush.msra.mxu0 0.0
        %3692 = vmatpush.msra.mxu0 0.0
        %3693 = vmatpush.msra.mxu0 0.0
        %3694 = vmatpush.msra.mxu0 0.0
        %3695 = vmatpush.msra.mxu0 0.0
        %v3696 = vand.u32 %v218, 4294901760
        %3697 = vmatpush.msra.mxu0 %v3696
        %v3698 = vand.u32 %v217, 4294901760
        %3699 = vmatpush.msra.mxu0 %v3698
        %v3700 = vand.u32 %v216, 4294901760
        %3701 = vmatpush.msra.mxu0 %v3700
        %v3702 = vand.u32 %v215, 4294901760
        %3703 = vmatpush.msra.mxu0 %v3702
        %v3704 = vand.u32 %v214, 4294901760
        %3705 = vmatpush.msra.mxu0 %v3704
        %v3706 = vand.u32 %v213, 4294901760
        %3707 = vmatpush.msra.mxu0 %v3706
        %v3708 = vand.u32 %v212, 4294901760
        %3709 = vmatpush.msra.mxu0 %v3708
        %v3710 = vand.u32 %v211, 4294901760
        %3711 = vmatpush.msra.mxu0 %v3710
        %v3712 = vand.u32 %v3415, 4294901760
        %v3713 = vsub.f32 %v3415, %v3712
        %v3714 = vand.u32 %v3713, 4294901760
        %v3715 = vsub.f32 %v3713, %v3714
        %v3716 = vand.u32 %v3715, 4294901760
        %3717 = vmatmul.f32.gmra.mxu0 %v3716
        %v3718 = vpop.f32.mrf.mxu0
        %v3719 = vadd.f32 0.0, %v3718
        %v3720 = vand.u32 %v3418, 4294901760
        %v3721 = vsub.f32 %v3418, %v3720
        %v3722 = vand.u32 %v3721, 4294901760
        %v3723 = vsub.f32 %v3721, %v3722
        %v3724 = vand.u32 %v3723, 4294901760
        %3725 = vmatmul.f32.gmra.mxu0 %v3724
        %v3726 = vpop.f32.mrf.mxu0
        %v3727 = vadd.f32 0.0, %v3726
        %3728 = vdwg.mxu0
        %3729 = vmatpush.msra.mxu0 0.0
        %3730 = vmatpush.msra.mxu0 0.0
        %3731 = vmatpush.msra.mxu0 0.0
        %3732 = vmatpush.msra.mxu0 0.0
        %3733 = vmatpush.msra.mxu0 0.0
        %3734 = vmatpush.msra.mxu0 0.0
        %3735 = vmatpush.msra.mxu0 0.0
        %3736 = vmatpush.msra.mxu0 0.0
        %v3737 = vand.u32 %v218, 4294901760
        %v3738 = vsub.f32 %v218, %v3737
        %v3739 = vand.u32 %v3738, 4294901760
        %v3740 = vsub.f32 %v3738, %v3739
        %v3741 = vand.u32 %v3740, 4294901760
        %3742 = vmatpush.msra.mxu0 %v3741
        %v3743 = vand.u32 %v217, 4294901760
        %v3744 = vsub.f32 %v217, %v3743
        %v3745 = vand.u32 %v3744, 4294901760
        %v3746 = vsub.f32 %v3744, %v3745
        %v3747 = vand.u32 %v3746, 4294901760
        %3748 = vmatpush.msra.mxu0 %v3747
        %v3749 = vand.u32 %v216, 4294901760
        %v3750 = vsub.f32 %v216, %v3749
        %v3751 = vand.u32 %v3750, 4294901760
        %v3752 = vsub.f32 %v3750, %v3751
        %v3753 = vand.u32 %v3752, 4294901760
        %3754 = vmatpush.msra.mxu0 %v3753
        %v3755 = vand.u32 %v215, 4294901760
        %v3756 = vsub.f32 %v215, %v3755
        %v3757 = vand.u32 %v3756, 4294901760
        %v3758 = vsub.f32 %v3756, %v3757
        %v3759 = vand.u32 %v3758, 4294901760
        %3760 = vmatpush.msra.mxu0 %v3759
        %v3761 = vand.u32 %v214, 4294901760
        %v3762 = vsub.f32 %v214, %v3761
        %v3763 = vand.u32 %v3762, 4294901760
        %v3764 = vsub.f32 %v3762, %v3763
        %v3765 = vand.u32 %v3764, 4294901760
        %3766 = vmatpush.msra.mxu0 %v3765
        %v3767 = vand.u32 %v213, 4294901760
        %v3768 = vsub.f32 %v213, %v3767
        %v3769 = vand.u32 %v3768, 4294901760
        %v3770 = vsub.f32 %v3768, %v3769
        %v3771 = vand.u32 %v3770, 4294901760
        %3772 = vmatpush.msra.mxu0 %v3771
        %v3773 = vand.u32 %v212, 4294901760
        %v3774 = vsub.f32 %v212, %v3773
        %v3775 = vand.u32 %v3774, 4294901760
        %v3776 = vsub.f32 %v3774, %v3775
        %v3777 = vand.u32 %v3776, 4294901760
        %3778 = vmatpush.msra.mxu0 %v3777
        %v3779 = vand.u32 %v211, 4294901760
        %v3780 = vsub.f32 %v211, %v3779
        %v3781 = vand.u32 %v3780, 4294901760
        %v3782 = vsub.f32 %v3780, %v3781
        %v3783 = vand.u32 %v3782, 4294901760
        %3784 = vmatpush.msra.mxu0 %v3783
        %v3785 = vand.u32 %v3415, 4294901760
        %3786 = vmatmul.f32.gmra.mxu0 %v3785
        %v3787 = vpop.f32.mrf.mxu0
        %v3788 = vadd.f32 %v3719, %v3787
        %v3789 = vand.u32 %v3418, 4294901760
        %3790 = vmatmul.f32.gmra.mxu0 %v3789
        %v3791 = vpop.f32.mrf.mxu0
        %v3792 = vadd.f32 %v3727, %v3791
        %3793 = vdwg.mxu0
        %3794 = vmatpush.msra.mxu0 0.0
        %3795 = vmatpush.msra.mxu0 0.0
        %3796 = vmatpush.msra.mxu0 0.0
        %3797 = vmatpush.msra.mxu0 0.0
        %3798 = vmatpush.msra.mxu0 0.0
        %3799 = vmatpush.msra.mxu0 0.0
        %3800 = vmatpush.msra.mxu0 0.0
        %3801 = vmatpush.msra.mxu0 0.0
        %v3802 = vand.u32 %v218, 4294901760
        %v3803 = vsub.f32 %v218, %v3802
        %3804 = vmatpush.msra.mxu0 %v3803
        %v3805 = vand.u32 %v217, 4294901760
        %v3806 = vsub.f32 %v217, %v3805
        %3807 = vmatpush.msra.mxu0 %v3806
        %v3808 = vand.u32 %v216, 4294901760
        %v3809 = vsub.f32 %v216, %v3808
        %3810 = vmatpush.msra.mxu0 %v3809
        %v3811 = vand.u32 %v215, 4294901760
        %v3812 = vsub.f32 %v215, %v3811
        %3813 = vmatpush.msra.mxu0 %v3812
        %v3814 = vand.u32 %v214, 4294901760
        %v3815 = vsub.f32 %v214, %v3814
        %3816 = vmatpush.msra.mxu0 %v3815
        %v3817 = vand.u32 %v213, 4294901760
        %v3818 = vsub.f32 %v213, %v3817
        %3819 = vmatpush.msra.mxu0 %v3818
        %v3820 = vand.u32 %v212, 4294901760
        %v3821 = vsub.f32 %v212, %v3820
        %3822 = vmatpush.msra.mxu0 %v3821
        %v3823 = vand.u32 %v211, 4294901760
        %v3824 = vsub.f32 %v211, %v3823
        %3825 = vmatpush.msra.mxu0 %v3824
        %v3826 = vand.u32 %v3415, 4294901760
        %v3827 = vsub.f32 %v3415, %v3826
        %3828 = vmatmul.f32.gmra.mxu0 %v3827
        %v3829 = vpop.f32.mrf.mxu0
        %v3830 = vadd.f32 %v3788, %v3829
        %v3831 = vand.u32 %v3418, 4294901760
        %v3832 = vsub.f32 %v3418, %v3831
        %3833 = vmatmul.f32.gmra.mxu0 %v3832
        %v3834 = vpop.f32.mrf.mxu0
        %v3835 = vadd.f32 %v3792, %v3834
        %3836 = vdwg.mxu0
        %3837 = vmatpush.msra.mxu0 0.0
        %3838 = vmatpush.msra.mxu0 0.0
        %3839 = vmatpush.msra.mxu0 0.0
        %3840 = vmatpush.msra.mxu0 0.0
        %3841 = vmatpush.msra.mxu0 0.0
        %3842 = vmatpush.msra.mxu0 0.0
        %3843 = vmatpush.msra.mxu0 0.0
        %3844 = vmatpush.msra.mxu0 0.0
        %v3845 = vand.u32 %v218, 4294901760
        %3846 = vmatpush.msra.mxu0 %v3845
        %v3847 = vand.u32 %v217, 4294901760
        %3848 = vmatpush.msra.mxu0 %v3847
        %v3849 = vand.u32 %v216, 4294901760
        %3850 = vmatpush.msra.mxu0 %v3849
        %v3851 = vand.u32 %v215, 4294901760
        %3852 = vmatpush.msra.mxu0 %v3851
        %v3853 = vand.u32 %v214, 4294901760
        %3854 = vmatpush.msra.mxu0 %v3853
        %v3855 = vand.u32 %v213, 4294901760
        %3856 = vmatpush.msra.mxu0 %v3855
        %v3857 = vand.u32 %v212, 4294901760
        %3858 = vmatpush.msra.mxu0 %v3857
        %v3859 = vand.u32 %v211, 4294901760
        %3860 = vmatpush.msra.mxu0 %v3859
        %v3861 = vand.u32 %v3415, 4294901760
        %v3862 = vsub.f32 %v3415, %v3861
        %v3863 = vand.u32 %v3862, 4294901760
        %3864 = vmatmul.f32.gmra.mxu0 %v3863
        %v3865 = vpop.f32.mrf.mxu0
        %v3866 = vadd.f32 %v3830, %v3865
        %v3867 = vand.u32 %v3418, 4294901760
        %v3868 = vsub.f32 %v3418, %v3867
        %v3869 = vand.u32 %v3868, 4294901760
        %3870 = vmatmul.f32.gmra.mxu0 %v3869
        %v3871 = vpop.f32.mrf.mxu0
        %v3872 = vadd.f32 %v3835, %v3871
        %3873 = vdwg.mxu0
        %3874 = vmatpush.msra.mxu0 0.0
        %3875 = vmatpush.msra.mxu0 0.0
        %3876 = vmatpush.msra.mxu0 0.0
        %3877 = vmatpush.msra.mxu0 0.0
        %3878 = vmatpush.msra.mxu0 0.0
        %3879 = vmatpush.msra.mxu0 0.0
        %3880 = vmatpush.msra.mxu0 0.0
        %3881 = vmatpush.msra.mxu0 0.0
        %v3882 = vand.u32 %v218, 4294901760
        %v3883 = vsub.f32 %v218, %v3882
        %v3884 = vand.u32 %v3883, 4294901760
        %3885 = vmatpush.msra.mxu0 %v3884
        %v3886 = vand.u32 %v217, 4294901760
        %v3887 = vsub.f32 %v217, %v3886
        %v3888 = vand.u32 %v3887, 4294901760
        %3889 = vmatpush.msra.mxu0 %v3888
        %v3890 = vand.u32 %v216, 4294901760
        %v3891 = vsub.f32 %v216, %v3890
        %v3892 = vand.u32 %v3891, 4294901760
        %3893 = vmatpush.msra.mxu0 %v3892
        %v3894 = vand.u32 %v215, 4294901760
        %v3895 = vsub.f32 %v215, %v3894
        %v3896 = vand.u32 %v3895, 4294901760
        %3897 = vmatpush.msra.mxu0 %v3896
        %v3898 = vand.u32 %v214, 4294901760
        %v3899 = vsub.f32 %v214, %v3898
        %v3900 = vand.u32 %v3899, 4294901760
        %3901 = vmatpush.msra.mxu0 %v3900
        %v3902 = vand.u32 %v213, 4294901760
        %v3903 = vsub.f32 %v213, %v3902
        %v3904 = vand.u32 %v3903, 4294901760
        %3905 = vmatpush.msra.mxu0 %v3904
        %v3906 = vand.u32 %v212, 4294901760
        %v3907 = vsub.f32 %v212, %v3906
        %v3908 = vand.u32 %v3907, 4294901760
        %3909 = vmatpush.msra.mxu0 %v3908
        %v3910 = vand.u32 %v211, 4294901760
        %v3911 = vsub.f32 %v211, %v3910
        %v3912 = vand.u32 %v3911, 4294901760
        %3913 = vmatpush.msra.mxu0 %v3912
        %v3914 = vand.u32 %v3415, 4294901760
        %3915 = vmatmul.f32.gmra.mxu0 %v3914
        %v3916 = vpop.f32.mrf.mxu0
        %v3917 = vadd.f32 %v3866, %v3916
        %v3918 = vand.u32 %v3418, 4294901760
        %3919 = vmatmul.f32.gmra.mxu0 %v3918
        %v3920 = vpop.f32.mrf.mxu0
        %v3921 = vadd.f32 %v3872, %v3920
        %3922 = vdwg.mxu0
        %3923 = vmatpush.msra.mxu0 0.0
        %3924 = vmatpush.msra.mxu0 0.0
        %3925 = vmatpush.msra.mxu0 0.0
        %3926 = vmatpush.msra.mxu0 0.0
        %3927 = vmatpush.msra.mxu0 0.0
        %3928 = vmatpush.msra.mxu0 0.0
        %3929 = vmatpush.msra.mxu0 0.0
        %3930 = vmatpush.msra.mxu0 0.0
        %v3931 = vand.u32 %v218, 4294901760
        %3932 = vmatpush.msra.mxu0 %v3931
        %v3933 = vand.u32 %v217, 4294901760
        %3934 = vmatpush.msra.mxu0 %v3933
        %v3935 = vand.u32 %v216, 4294901760
        %3936 = vmatpush.msra.mxu0 %v3935
        %v3937 = vand.u32 %v215, 4294901760
        %3938 = vmatpush.msra.mxu0 %v3937
        %v3939 = vand.u32 %v214, 4294901760
        %3940 = vmatpush.msra.mxu0 %v3939
        %v3941 = vand.u32 %v213, 4294901760
        %3942 = vmatpush.msra.mxu0 %v3941
        %v3943 = vand.u32 %v212, 4294901760
        %3944 = vmatpush.msra.mxu0 %v3943
        %v3945 = vand.u32 %v211, 4294901760
        %3946 = vmatpush.msra.mxu0 %v3945
        %v3947 = vand.u32 %v3415, 4294901760
        %3948 = vmatmul.f32.gmra.mxu0 %v3947
        %v3949 = vpop.f32.mrf.mxu0
        %v3950 = vadd.f32 %v3917, %v3949
        %v3951 = vand.u32 %v3418, 4294901760
        %3952 = vmatmul.f32.gmra.mxu0 %v3951
        %v3953 = vpop.f32.mrf.mxu0
        %v3954 = vadd.f32 %v3921, %v3953
        %3955 = vdwg.mxu0
        %v3957 = vsel %vm221, %v3682, 0
        %v3960 = vsel %vm221, %v3686, 0
        %v3963 = vsel %vm221, %v3950, 0
        %v3966 = vsel %vm221, %v3954, 0
        %3968 = vmatpush.xpose.msra.mxu0 0.0
        %3969 = vmatpush.xpose.msra.mxu0 0.0
        %3970 = vmatpush.xpose.msra.mxu0 0.0
        %3971 = vmatpush.xpose.msra.mxu0 0.0
        %3972 = vmatpush.xpose.msra.mxu0 0.0
        %3973 = vmatpush.xpose.msra.mxu0 0.0
        %3974 = vmatpush.xpose.msra.mxu0 0.0
        %3975 = vmatpush.xpose.msra.mxu0 0.0
        %3976 = vmatpush.xpose.msra.mxu0 0.0
        %3977 = vmatpush.xpose.msra.mxu0 0.0
        %3978 = vmatpush.xpose.msra.mxu0 0.0
        %3979 = vmatpush.xpose.msra.mxu0 0.0
        %3980 = vmatpush.xpose.msra.mxu0 0.0
        %3981 = vmatpush.xpose.msra.mxu0 0.0
        %v3982 = vand.u32 %v3966, 4294901760
        %3983 = vmatpush.xpose.msra.mxu0 %v3982
        %v3984 = vand.u32 %v3963, 4294901760
        %3985 = vmatpush.xpose.msra.mxu0 %v3984
        %v3986 = vand.u32 %v3957, 4294901760
        %v3987 = vsub.f32 %v3957, %v3986
        %v3988 = vand.u32 %v3987, 4294901760
        %v3989 = vsub.f32 %v3987, %v3988
        %v3990 = vand.u32 %v3989, 4294901760
        %3991 = vmatmul.f32.gmra.mxu0 %v3990
        %v3992 = vpop.f32.mrf.mxu0
        %v3993 = vadd.f32 0.0, %v3992
        %v3994 = vand.u32 %v3960, 4294901760
        %v3995 = vsub.f32 %v3960, %v3994
        %v3996 = vand.u32 %v3995, 4294901760
        %v3997 = vsub.f32 %v3995, %v3996
        %v3998 = vand.u32 %v3997, 4294901760
        %3999 = vmatmul.f32.gmra.mxu0 %v3998
        %v4000 = vpop.f32.mrf.mxu0
        %v4001 = vadd.f32 0.0, %v4000
        %4002 = vdwg.mxu0
        %4003 = vmatpush.xpose.msra.mxu0 0.0
        %4004 = vmatpush.xpose.msra.mxu0 0.0
        %4005 = vmatpush.xpose.msra.mxu0 0.0
        %4006 = vmatpush.xpose.msra.mxu0 0.0
        %4007 = vmatpush.xpose.msra.mxu0 0.0
        %4008 = vmatpush.xpose.msra.mxu0 0.0
        %4009 = vmatpush.xpose.msra.mxu0 0.0
        %4010 = vmatpush.xpose.msra.mxu0 0.0
        %4011 = vmatpush.xpose.msra.mxu0 0.0
        %4012 = vmatpush.xpose.msra.mxu0 0.0
        %4013 = vmatpush.xpose.msra.mxu0 0.0
        %4014 = vmatpush.xpose.msra.mxu0 0.0
        %4015 = vmatpush.xpose.msra.mxu0 0.0
        %4016 = vmatpush.xpose.msra.mxu0 0.0
        %v4017 = vand.u32 %v3966, 4294901760
        %v4018 = vsub.f32 %v3966, %v4017
        %v4019 = vand.u32 %v4018, 4294901760
        %v4020 = vsub.f32 %v4018, %v4019
        %v4021 = vand.u32 %v4020, 4294901760
        %4022 = vmatpush.xpose.msra.mxu0 %v4021
        %v4023 = vand.u32 %v3963, 4294901760
        %v4024 = vsub.f32 %v3963, %v4023
        %v4025 = vand.u32 %v4024, 4294901760
        %v4026 = vsub.f32 %v4024, %v4025
        %v4027 = vand.u32 %v4026, 4294901760
        %4028 = vmatpush.xpose.msra.mxu0 %v4027
        %v4029 = vand.u32 %v3957, 4294901760
        %4030 = vmatmul.f32.gmra.mxu0 %v4029
        %v4031 = vpop.f32.mrf.mxu0
        %v4032 = vadd.f32 %v3993, %v4031
        %v4033 = vand.u32 %v3960, 4294901760
        %4034 = vmatmul.f32.gmra.mxu0 %v4033
        %v4035 = vpop.f32.mrf.mxu0
        %v4036 = vadd.f32 %v4001, %v4035
        %4037 = vdwg.mxu0
        %4038 = vmatpush.xpose.msra.mxu0 0.0
        %4039 = vmatpush.xpose.msra.mxu0 0.0
        %4040 = vmatpush.xpose.msra.mxu0 0.0
        %4041 = vmatpush.xpose.msra.mxu0 0.0
        %4042 = vmatpush.xpose.msra.mxu0 0.0
        %4043 = vmatpush.xpose.msra.mxu0 0.0
        %4044 = vmatpush.xpose.msra.mxu0 0.0
        %4045 = vmatpush.xpose.msra.mxu0 0.0
        %4046 = vmatpush.xpose.msra.mxu0 0.0
        %4047 = vmatpush.xpose.msra.mxu0 0.0
        %4048 = vmatpush.xpose.msra.mxu0 0.0
        %4049 = vmatpush.xpose.msra.mxu0 0.0
        %4050 = vmatpush.xpose.msra.mxu0 0.0
        %4051 = vmatpush.xpose.msra.mxu0 0.0
        %v4052 = vand.u32 %v3966, 4294901760
        %v4053 = vsub.f32 %v3966, %v4052
        %4054 = vmatpush.xpose.msra.mxu0 %v4053
        %v4055 = vand.u32 %v3963, 4294901760
        %v4056 = vsub.f32 %v3963, %v4055
        %4057 = vmatpush.xpose.msra.mxu0 %v4056
        %v4058 = vand.u32 %v3957, 4294901760
        %v4059 = vsub.f32 %v3957, %v4058
        %4060 = vmatmul.f32.gmra.mxu0 %v4059
        %v4061 = vpop.f32.mrf.mxu0
        %v4062 = vadd.f32 %v4032, %v4061
        %v4063 = vand.u32 %v3960, 4294901760
        %v4064 = vsub.f32 %v3960, %v4063
        %4065 = vmatmul.f32.gmra.mxu0 %v4064
        %v4066 = vpop.f32.mrf.mxu0
        %v4067 = vadd.f32 %v4036, %v4066
        %4068 = vdwg.mxu0
        %4069 = vmatpush.xpose.msra.mxu0 0.0
        %4070 = vmatpush.xpose.msra.mxu0 0.0
        %4071 = vmatpush.xpose.msra.mxu0 0.0
        %4072 = vmatpush.xpose.msra.mxu0 0.0
        %4073 = vmatpush.xpose.msra.mxu0 0.0
        %4074 = vmatpush.xpose.msra.mxu0 0.0
        %4075 = vmatpush.xpose.msra.mxu0 0.0
        %4076 = vmatpush.xpose.msra.mxu0 0.0
        %4077 = vmatpush.xpose.msra.mxu0 0.0
        %4078 = vmatpush.xpose.msra.mxu0 0.0
        %4079 = vmatpush.xpose.msra.mxu0 0.0
        %4080 = vmatpush.xpose.msra.mxu0 0.0
        %4081 = vmatpush.xpose.msra.mxu0 0.0
        %4082 = vmatpush.xpose.msra.mxu0 0.0
        %v4083 = vand.u32 %v3966, 4294901760
        %4084 = vmatpush.xpose.msra.mxu0 %v4083
        %v4085 = vand.u32 %v3963, 4294901760
        %4086 = vmatpush.xpose.msra.mxu0 %v4085
        %v4087 = vand.u32 %v3957, 4294901760
        %v4088 = vsub.f32 %v3957, %v4087
        %v4089 = vand.u32 %v4088, 4294901760
        %4090 = vmatmul.f32.gmra.mxu0 %v4089
        %v4091 = vpop.f32.mrf.mxu0
        %v4092 = vadd.f32 %v4062, %v4091
        %v4093 = vand.u32 %v3960, 4294901760
        %v4094 = vsub.f32 %v3960, %v4093
        %v4095 = vand.u32 %v4094, 4294901760
        %4096 = vmatmul.f32.gmra.mxu0 %v4095
        %v4097 = vpop.f32.mrf.mxu0
        %v4098 = vadd.f32 %v4067, %v4097
        %4099 = vdwg.mxu0
        %4100 = vmatpush.xpose.msra.mxu0 0.0
        %4101 = vmatpush.xpose.msra.mxu0 0.0
        %4102 = vmatpush.xpose.msra.mxu0 0.0
        %4103 = vmatpush.xpose.msra.mxu0 0.0
        %4104 = vmatpush.xpose.msra.mxu0 0.0
        %4105 = vmatpush.xpose.msra.mxu0 0.0
        %4106 = vmatpush.xpose.msra.mxu0 0.0
        %4107 = vmatpush.xpose.msra.mxu0 0.0
        %4108 = vmatpush.xpose.msra.mxu0 0.0
        %4109 = vmatpush.xpose.msra.mxu0 0.0
        %4110 = vmatpush.xpose.msra.mxu0 0.0
        %4111 = vmatpush.xpose.msra.mxu0 0.0
        %4112 = vmatpush.xpose.msra.mxu0 0.0
        %4113 = vmatpush.xpose.msra.mxu0 0.0
        %v4114 = vand.u32 %v3966, 4294901760
        %v4115 = vsub.f32 %v3966, %v4114
        %v4116 = vand.u32 %v4115, 4294901760
        %4117 = vmatpush.xpose.msra.mxu0 %v4116
        %v4118 = vand.u32 %v3963, 4294901760
        %v4119 = vsub.f32 %v3963, %v4118
        %v4120 = vand.u32 %v4119, 4294901760
        %4121 = vmatpush.xpose.msra.mxu0 %v4120
        %v4122 = vand.u32 %v3957, 4294901760
        %4123 = vmatmul.f32.gmra.mxu0 %v4122
        %v4124 = vpop.f32.mrf.mxu0
        %v4125 = vadd.f32 %v4092, %v4124
        %v4126 = vand.u32 %v3960, 4294901760
        %4127 = vmatmul.f32.gmra.mxu0 %v4126
        %v4128 = vpop.f32.mrf.mxu0
        %v4129 = vadd.f32 %v4098, %v4128
        %4130 = vdwg.mxu0
        %4131 = vmatpush.xpose.msra.mxu0 0.0
        %4132 = vmatpush.xpose.msra.mxu0 0.0
        %4133 = vmatpush.xpose.msra.mxu0 0.0
        %4134 = vmatpush.xpose.msra.mxu0 0.0
        %4135 = vmatpush.xpose.msra.mxu0 0.0
        %4136 = vmatpush.xpose.msra.mxu0 0.0
        %4137 = vmatpush.xpose.msra.mxu0 0.0
        %4138 = vmatpush.xpose.msra.mxu0 0.0
        %4139 = vmatpush.xpose.msra.mxu0 0.0
        %4140 = vmatpush.xpose.msra.mxu0 0.0
        %4141 = vmatpush.xpose.msra.mxu0 0.0
        %4142 = vmatpush.xpose.msra.mxu0 0.0
        %4143 = vmatpush.xpose.msra.mxu0 0.0
        %4144 = vmatpush.xpose.msra.mxu0 0.0
        %v4145 = vand.u32 %v3966, 4294901760
        %4146 = vmatpush.xpose.msra.mxu0 %v4145
        %v4147 = vand.u32 %v3963, 4294901760
        %4148 = vmatpush.xpose.msra.mxu0 %v4147
        %v4149 = vand.u32 %v3957, 4294901760
        %4150 = vmatmul.f32.gmra.mxu0 %v4149
        %v4151 = vpop.f32.mrf.mxu0
        %v4152 = vadd.f32 %v4125, %v4151
        %v4153 = vand.u32 %v3960, 4294901760
        %4154 = vmatmul.f32.gmra.mxu0 %v4153
        %v4155 = vpop.f32.mrf.mxu0
        %v4156 = vadd.f32 %v4129, %v4155
        %4157 = vdwg.mxu0
        %v4158 = vsel %vm966, %v4152, -inf
        %4159 = vmax.xlane.f32.xlu0 %v4158
        %v4160 = vpop.xlane.xlu0 %4159
        %v4161 = vsel %vm966, %v4156, -inf
        %4162 = vmax.xlane.f32.xlu0 %v4161
        %v4163 = vpop.xlane.xlu0 %4162
        %v4164 = vsub.f32 %v4152, %v4160
        %v4165 = vsub.f32 %v4156, %v4163
        %v4166 = vmul.f32 %v4164, 1.442695
        %v4167 = vpow.pop %v4166
        %v4168 = vmul.f32 %v4165, 1.442695
        %v4169 = vpow.pop %v4168
        %v4170 = vsel %vm966, %v4167, 0.0
        %4171 = vadd.xlane.f32.xlu0 %v4170
        %v4172 = vpop.xlane.xlu0 %4171
        %v4173 = vsel %vm966, %v4169, 0.0
        %4174 = vadd.xlane.f32.xlu0 %v4173
        %v4175 = vpop.xlane.xlu0 %4174
        %v4176 = vrcp.pop %v4172
        %v4177 = vmul.f32 %v4172, %v4176
        %v4178 = vsub.f32 1.0, %v4177
        %v4179 = vmul.f32 %v4176, %v4178
        %v4180 = vadd.f32 %v4176, %v4179
        %vm4181 = vweird.f32 %v4172
        %vm4182 = vweird.f32 %v4176
        %vm4183 = vmor %vm4181, %vm4182
        %v4184 = vsel %vm4183, %v4176, %v4180
        %v4185 = vand.u32 2147483647, %v4172
        %vm4186 = vcmp.eq.f32.partialorder %v4185, 8.507059e+37
        %v4187 = vand.u32 %v4172, 2147483648
        %v4188 = vor.u32 1.1754944e-38, %v4187
        %v4189 = vsel %vm4186, %v4188, %v4184
        %v4190 = vmul.f32 %v4167, %v4189
        %v4191 = vrcp.pop %v4175
        %v4192 = vmul.f32 %v4175, %v4191
        %v4193 = vsub.f32 1.0, %v4192
        %v4194 = vmul.f32 %v4191, %v4193
        %v4195 = vadd.f32 %v4191, %v4194
        %vm4196 = vweird.f32 %v4175
        %vm4197 = vweird.f32 %v4191
        %vm4198 = vmor %vm4196, %vm4197
        %v4199 = vsel %vm4198, %v4191, %v4195
        %v4200 = vand.u32 2147483647, %v4175
        %vm4201 = vcmp.eq.f32.partialorder %v4200, 8.507059e+37
        %v4202 = vand.u32 %v4175, 2147483648
        %v4203 = vor.u32 1.1754944e-38, %v4202
        %v4204 = vsel %vm4201, %v4203, %v4199
        %v4205 = vmul.f32 %v4169, %v4204
        %s4206 = scalar_lea.vmem %s190, 64 [#allocation2]
        %4207 = vst.msk [vmem:[%s4206] sm:$0xff] %vm966, %v4190
        %4208 = vst.msk [vmem:[%s4206 + $0x8] sm:$0xff] %vm966, %v4205
        %s4209 = scalar_lea.vmem %s200, 80
        %v4210 = vld [vmem:[%s4209] sm:$0xff]
        %v4211 = vld [vmem:[%s4209 + $0x8] sm:$0xff]
        %v4213 = vsel %vm221, %v4210, 0
        %v4216 = vsel %vm221, %v4211, 0
        %4218 = vmatpush.msra.mxu0 0.0
        %4219 = vmatpush.msra.mxu0 0.0
        %4220 = vmatpush.msra.mxu0 0.0
        %4221 = vmatpush.msra.mxu0 0.0
        %4222 = vmatpush.msra.mxu0 0.0
        %4223 = vmatpush.msra.mxu0 0.0
        %4224 = vmatpush.msra.mxu0 0.0
        %4225 = vmatpush.msra.mxu0 0.0
        %v4226 = vand.u32 %v210, 4294901760
        %4227 = vmatpush.msra.mxu0 %v4226
        %v4228 = vand.u32 %v209, 4294901760
        %4229 = vmatpush.msra.mxu0 %v4228
        %v4230 = vand.u32 %v208, 4294901760
        %4231 = vmatpush.msra.mxu0 %v4230
        %v4232 = vand.u32 %v207, 4294901760
        %4233 = vmatpush.msra.mxu0 %v4232
        %v4234 = vand.u32 %v206, 4294901760
        %4235 = vmatpush.msra.mxu0 %v4234
        %v4236 = vand.u32 %v205, 4294901760
        %4237 = vmatpush.msra.mxu0 %v4236
        %v4238 = vand.u32 %v204, 4294901760
        %4239 = vmatpush.msra.mxu0 %v4238
        %v4240 = vand.u32 %v203, 4294901760
        %4241 = vmatpush.msra.mxu0 %v4240
        %v4242 = vand.u32 %v4213, 4294901760
        %v4243 = vsub.f32 %v4213, %v4242
        %v4244 = vand.u32 %v4243, 4294901760
        %v4245 = vsub.f32 %v4243, %v4244
        %v4246 = vand.u32 %v4245, 4294901760
        %4247 = vmatmul.f32.gmra.mxu0 %v4246
        %v4248 = vpop.f32.mrf.mxu0
        %v4249 = vadd.f32 0.0, %v4248
        %v4250 = vand.u32 %v4216, 4294901760
        %v4251 = vsub.f32 %v4216, %v4250
        %v4252 = vand.u32 %v4251, 4294901760
        %v4253 = vsub.f32 %v4251, %v4252
        %v4254 = vand.u32 %v4253, 4294901760
        %4255 = vmatmul.f32.gmra.mxu0 %v4254
        %v4256 = vpop.f32.mrf.mxu0
        %v4257 = vadd.f32 0.0, %v4256
        %4258 = vdwg.mxu0
        %4259 = vmatpush.msra.mxu0 0.0
        %4260 = vmatpush.msra.mxu0 0.0
        %4261 = vmatpush.msra.mxu0 0.0
        %4262 = vmatpush.msra.mxu0 0.0
        %4263 = vmatpush.msra.mxu0 0.0
        %4264 = vmatpush.msra.mxu0 0.0
        %4265 = vmatpush.msra.mxu0 0.0
        %4266 = vmatpush.msra.mxu0 0.0
        %v4267 = vand.u32 %v210, 4294901760
        %v4268 = vsub.f32 %v210, %v4267
        %v4269 = vand.u32 %v4268, 4294901760
        %v4270 = vsub.f32 %v4268, %v4269
        %v4271 = vand.u32 %v4270, 4294901760
        %4272 = vmatpush.msra.mxu0 %v4271
        %v4273 = vand.u32 %v209, 4294901760
        %v4274 = vsub.f32 %v209, %v4273
        %v4275 = vand.u32 %v4274, 4294901760
        %v4276 = vsub.f32 %v4274, %v4275
        %v4277 = vand.u32 %v4276, 4294901760
        %4278 = vmatpush.msra.mxu0 %v4277
        %v4279 = vand.u32 %v208, 4294901760
        %v4280 = vsub.f32 %v208, %v4279
        %v4281 = vand.u32 %v4280, 4294901760
        %v4282 = vsub.f32 %v4280, %v4281
        %v4283 = vand.u32 %v4282, 4294901760
        %4284 = vmatpush.msra.mxu0 %v4283
        %v4285 = vand.u32 %v207, 4294901760
        %v4286 = vsub.f32 %v207, %v4285
        %v4287 = vand.u32 %v4286, 4294901760
        %v4288 = vsub.f32 %v4286, %v4287
        %v4289 = vand.u32 %v4288, 4294901760
        %4290 = vmatpush.msra.mxu0 %v4289
        %v4291 = vand.u32 %v206, 4294901760
        %v4292 = vsub.f32 %v206, %v4291
        %v4293 = vand.u32 %v4292, 4294901760
        %v4294 = vsub.f32 %v4292, %v4293
        %v4295 = vand.u32 %v4294, 4294901760
        %4296 = vmatpush.msra.mxu0 %v4295
        %v4297 = vand.u32 %v205, 4294901760
        %v4298 = vsub.f32 %v205, %v4297
        %v4299 = vand.u32 %v4298, 4294901760
        %v4300 = vsub.f32 %v4298, %v4299
        %v4301 = vand.u32 %v4300, 4294901760
        %4302 = vmatpush.msra.mxu0 %v4301
        %v4303 = vand.u32 %v204, 4294901760
        %v4304 = vsub.f32 %v204, %v4303
        %v4305 = vand.u32 %v4304, 4294901760
        %v4306 = vsub.f32 %v4304, %v4305
        %v4307 = vand.u32 %v4306, 4294901760
        %4308 = vmatpush.msra.mxu0 %v4307
        %v4309 = vand.u32 %v203, 4294901760
        %v4310 = vsub.f32 %v203, %v4309
        %v4311 = vand.u32 %v4310, 4294901760
        %v4312 = vsub.f32 %v4310, %v4311
        %v4313 = vand.u32 %v4312, 4294901760
        %4314 = vmatpush.msra.mxu0 %v4313
        %v4315 = vand.u32 %v4213, 4294901760
        %4316 = vmatmul.f32.gmra.mxu0 %v4315
        %v4317 = vpop.f32.mrf.mxu0
        %v4318 = vadd.f32 %v4249, %v4317
        %v4319 = vand.u32 %v4216, 4294901760
        %4320 = vmatmul.f32.gmra.mxu0 %v4319
        %v4321 = vpop.f32.mrf.mxu0
        %v4322 = vadd.f32 %v4257, %v4321
        %4323 = vdwg.mxu0
        %4324 = vmatpush.msra.mxu0 0.0
        %4325 = vmatpush.msra.mxu0 0.0
        %4326 = vmatpush.msra.mxu0 0.0
        %4327 = vmatpush.msra.mxu0 0.0
        %4328 = vmatpush.msra.mxu0 0.0
        %4329 = vmatpush.msra.mxu0 0.0
        %4330 = vmatpush.msra.mxu0 0.0
        %4331 = vmatpush.msra.mxu0 0.0
        %v4332 = vand.u32 %v210, 4294901760
        %v4333 = vsub.f32 %v210, %v4332
        %4334 = vmatpush.msra.mxu0 %v4333
        %v4335 = vand.u32 %v209, 4294901760
        %v4336 = vsub.f32 %v209, %v4335
        %4337 = vmatpush.msra.mxu0 %v4336
        %v4338 = vand.u32 %v208, 4294901760
        %v4339 = vsub.f32 %v208, %v4338
        %4340 = vmatpush.msra.mxu0 %v4339
        %v4341 = vand.u32 %v207, 4294901760
        %v4342 = vsub.f32 %v207, %v4341
        %4343 = vmatpush.msra.mxu0 %v4342
        %v4344 = vand.u32 %v206, 4294901760
        %v4345 = vsub.f32 %v206, %v4344
        %4346 = vmatpush.msra.mxu0 %v4345
        %v4347 = vand.u32 %v205, 4294901760
        %v4348 = vsub.f32 %v205, %v4347
        %4349 = vmatpush.msra.mxu0 %v4348
        %v4350 = vand.u32 %v204, 4294901760
        %v4351 = vsub.f32 %v204, %v4350
        %4352 = vmatpush.msra.mxu0 %v4351
        %v4353 = vand.u32 %v203, 4294901760
        %v4354 = vsub.f32 %v203, %v4353
        %4355 = vmatpush.msra.mxu0 %v4354
        %v4356 = vand.u32 %v4213, 4294901760
        %v4357 = vsub.f32 %v4213, %v4356
        %4358 = vmatmul.f32.gmra.mxu0 %v4357
        %v4359 = vpop.f32.mrf.mxu0
        %v4360 = vadd.f32 %v4318, %v4359
        %v4361 = vand.u32 %v4216, 4294901760
        %v4362 = vsub.f32 %v4216, %v4361
        %4363 = vmatmul.f32.gmra.mxu0 %v4362
        %v4364 = vpop.f32.mrf.mxu0
        %v4365 = vadd.f32 %v4322, %v4364
        %4366 = vdwg.mxu0
        %4367 = vmatpush.msra.mxu0 0.0
        %4368 = vmatpush.msra.mxu0 0.0
        %4369 = vmatpush.msra.mxu0 0.0
        %4370 = vmatpush.msra.mxu0 0.0
        %4371 = vmatpush.msra.mxu0 0.0
        %4372 = vmatpush.msra.mxu0 0.0
        %4373 = vmatpush.msra.mxu0 0.0
        %4374 = vmatpush.msra.mxu0 0.0
        %v4375 = vand.u32 %v210, 4294901760
        %4376 = vmatpush.msra.mxu0 %v4375
        %v4377 = vand.u32 %v209, 4294901760
        %4378 = vmatpush.msra.mxu0 %v4377
        %v4379 = vand.u32 %v208, 4294901760
        %4380 = vmatpush.msra.mxu0 %v4379
        %v4381 = vand.u32 %v207, 4294901760
        %4382 = vmatpush.msra.mxu0 %v4381
        %v4383 = vand.u32 %v206, 4294901760
        %4384 = vmatpush.msra.mxu0 %v4383
        %v4385 = vand.u32 %v205, 4294901760
        %4386 = vmatpush.msra.mxu0 %v4385
        %v4387 = vand.u32 %v204, 4294901760
        %4388 = vmatpush.msra.mxu0 %v4387
        %v4389 = vand.u32 %v203, 4294901760
        %4390 = vmatpush.msra.mxu0 %v4389
        %v4391 = vand.u32 %v4213, 4294901760
        %v4392 = vsub.f32 %v4213, %v4391
        %v4393 = vand.u32 %v4392, 4294901760
        %4394 = vmatmul.f32.gmra.mxu0 %v4393
        %v4395 = vpop.f32.mrf.mxu0
        %v4396 = vadd.f32 %v4360, %v4395
        %v4397 = vand.u32 %v4216, 4294901760
        %v4398 = vsub.f32 %v4216, %v4397
        %v4399 = vand.u32 %v4398, 4294901760
        %4400 = vmatmul.f32.gmra.mxu0 %v4399
        %v4401 = vpop.f32.mrf.mxu0
        %v4402 = vadd.f32 %v4365, %v4401
        %4403 = vdwg.mxu0
        %4404 = vmatpush.msra.mxu0 0.0
        %4405 = vmatpush.msra.mxu0 0.0
        %4406 = vmatpush.msra.mxu0 0.0
        %4407 = vmatpush.msra.mxu0 0.0
        %4408 = vmatpush.msra.mxu0 0.0
        %4409 = vmatpush.msra.mxu0 0.0
        %4410 = vmatpush.msra.mxu0 0.0
        %4411 = vmatpush.msra.mxu0 0.0
        %v4412 = vand.u32 %v210, 4294901760
        %v4413 = vsub.f32 %v210, %v4412
        %v4414 = vand.u32 %v4413, 4294901760
        %4415 = vmatpush.msra.mxu0 %v4414
        %v4416 = vand.u32 %v209, 4294901760
        %v4417 = vsub.f32 %v209, %v4416
        %v4418 = vand.u32 %v4417, 4294901760
        %4419 = vmatpush.msra.mxu0 %v4418
        %v4420 = vand.u32 %v208, 4294901760
        %v4421 = vsub.f32 %v208, %v4420
        %v4422 = vand.u32 %v4421, 4294901760
        %4423 = vmatpush.msra.mxu0 %v4422
        %v4424 = vand.u32 %v207, 4294901760
        %v4425 = vsub.f32 %v207, %v4424
        %v4426 = vand.u32 %v4425, 4294901760
        %4427 = vmatpush.msra.mxu0 %v4426
        %v4428 = vand.u32 %v206, 4294901760
        %v4429 = vsub.f32 %v206, %v4428
        %v4430 = vand.u32 %v4429, 4294901760
        %4431 = vmatpush.msra.mxu0 %v4430
        %v4432 = vand.u32 %v205, 4294901760
        %v4433 = vsub.f32 %v205, %v4432
        %v4434 = vand.u32 %v4433, 4294901760
        %4435 = vmatpush.msra.mxu0 %v4434
        %v4436 = vand.u32 %v204, 4294901760
        %v4437 = vsub.f32 %v204, %v4436
        %v4438 = vand.u32 %v4437, 4294901760
        %4439 = vmatpush.msra.mxu0 %v4438
        %v4440 = vand.u32 %v203, 4294901760
        %v4441 = vsub.f32 %v203, %v4440
        %v4442 = vand.u32 %v4441, 4294901760
        %4443 = vmatpush.msra.mxu0 %v4442
        %v4444 = vand.u32 %v4213, 4294901760
        %4445 = vmatmul.f32.gmra.mxu0 %v4444
        %v4446 = vpop.f32.mrf.mxu0
        %v4447 = vadd.f32 %v4396, %v4446
        %v4448 = vand.u32 %v4216, 4294901760
        %4449 = vmatmul.f32.gmra.mxu0 %v4448
        %v4450 = vpop.f32.mrf.mxu0
        %v4451 = vadd.f32 %v4402, %v4450
        %4452 = vdwg.mxu0
        %4453 = vmatpush.msra.mxu0 0.0
        %4454 = vmatpush.msra.mxu0 0.0
        %4455 = vmatpush.msra.mxu0 0.0
        %4456 = vmatpush.msra.mxu0 0.0
        %4457 = vmatpush.msra.mxu0 0.0
        %4458 = vmatpush.msra.mxu0 0.0
        %4459 = vmatpush.msra.mxu0 0.0
        %4460 = vmatpush.msra.mxu0 0.0
        %v4461 = vand.u32 %v210, 4294901760
        %4462 = vmatpush.msra.mxu0 %v4461
        %v4463 = vand.u32 %v209, 4294901760
        %4464 = vmatpush.msra.mxu0 %v4463
        %v4465 = vand.u32 %v208, 4294901760
        %4466 = vmatpush.msra.mxu0 %v4465
        %v4467 = vand.u32 %v207, 4294901760
        %4468 = vmatpush.msra.mxu0 %v4467
        %v4469 = vand.u32 %v206, 4294901760
        %4470 = vmatpush.msra.mxu0 %v4469
        %v4471 = vand.u32 %v205, 4294901760
        %4472 = vmatpush.msra.mxu0 %v4471
        %v4473 = vand.u32 %v204, 4294901760
        %4474 = vmatpush.msra.mxu0 %v4473
        %v4475 = vand.u32 %v203, 4294901760
        %4476 = vmatpush.msra.mxu0 %v4475
        %v4477 = vand.u32 %v4213, 4294901760
        %4478 = vmatmul.f32.gmra.mxu0 %v4477
        %v4479 = vpop.f32.mrf.mxu0
        %v4480 = vadd.f32 %v4447, %v4479
        %v4481 = vand.u32 %v4216, 4294901760
        %4482 = vmatmul.f32.gmra.mxu0 %v4481
        %v4483 = vpop.f32.mrf.mxu0
        %v4484 = vadd.f32 %v4451, %v4483
        %4485 = vdwg.mxu0
        %4486 = vmatpush.msra.mxu0 0.0
        %4487 = vmatpush.msra.mxu0 0.0
        %4488 = vmatpush.msra.mxu0 0.0
        %4489 = vmatpush.msra.mxu0 0.0
        %4490 = vmatpush.msra.mxu0 0.0
        %4491 = vmatpush.msra.mxu0 0.0
        %4492 = vmatpush.msra.mxu0 0.0
        %4493 = vmatpush.msra.mxu0 0.0
        %v4494 = vand.u32 %v218, 4294901760
        %4495 = vmatpush.msra.mxu0 %v4494
        %v4496 = vand.u32 %v217, 4294901760
        %4497 = vmatpush.msra.mxu0 %v4496
        %v4498 = vand.u32 %v216, 4294901760
        %4499 = vmatpush.msra.mxu0 %v4498
        %v4500 = vand.u32 %v215, 4294901760
        %4501 = vmatpush.msra.mxu0 %v4500
        %v4502 = vand.u32 %v214, 4294901760
        %4503 = vmatpush.msra.mxu0 %v4502
        %v4504 = vand.u32 %v213, 4294901760
        %4505 = vmatpush.msra.mxu0 %v4504
        %v4506 = vand.u32 %v212, 4294901760
        %4507 = vmatpush.msra.mxu0 %v4506
        %v4508 = vand.u32 %v211, 4294901760
        %4509 = vmatpush.msra.mxu0 %v4508
        %v4510 = vand.u32 %v4213, 4294901760
        %v4511 = vsub.f32 %v4213, %v4510
        %v4512 = vand.u32 %v4511, 4294901760
        %v4513 = vsub.f32 %v4511, %v4512
        %v4514 = vand.u32 %v4513, 4294901760
        %4515 = vmatmul.f32.gmra.mxu0 %v4514
        %v4516 = vpop.f32.mrf.mxu0
        %v4517 = vadd.f32 0.0, %v4516
        %v4518 = vand.u32 %v4216, 4294901760
        %v4519 = vsub.f32 %v4216, %v4518
        %v4520 = vand.u32 %v4519, 4294901760
        %v4521 = vsub.f32 %v4519, %v4520
        %v4522 = vand.u32 %v4521, 4294901760
        %4523 = vmatmul.f32.gmra.mxu0 %v4522
        %v4524 = vpop.f32.mrf.mxu0
        %v4525 = vadd.f32 0.0, %v4524
        %4526 = vdwg.mxu0
        %4527 = vmatpush.msra.mxu0 0.0
        %4528 = vmatpush.msra.mxu0 0.0
        %4529 = vmatpush.msra.mxu0 0.0
        %4530 = vmatpush.msra.mxu0 0.0
        %4531 = vmatpush.msra.mxu0 0.0
        %4532 = vmatpush.msra.mxu0 0.0
        %4533 = vmatpush.msra.mxu0 0.0
        %4534 = vmatpush.msra.mxu0 0.0
        %v4535 = vand.u32 %v218, 4294901760
        %v4536 = vsub.f32 %v218, %v4535
        %v4537 = vand.u32 %v4536, 4294901760
        %v4538 = vsub.f32 %v4536, %v4537
        %v4539 = vand.u32 %v4538, 4294901760
        %4540 = vmatpush.msra.mxu0 %v4539
        %v4541 = vand.u32 %v217, 4294901760
        %v4542 = vsub.f32 %v217, %v4541
        %v4543 = vand.u32 %v4542, 4294901760
        %v4544 = vsub.f32 %v4542, %v4543
        %v4545 = vand.u32 %v4544, 4294901760
        %4546 = vmatpush.msra.mxu0 %v4545
        %v4547 = vand.u32 %v216, 4294901760
        %v4548 = vsub.f32 %v216, %v4547
        %v4549 = vand.u32 %v4548, 4294901760
        %v4550 = vsub.f32 %v4548, %v4549
        %v4551 = vand.u32 %v4550, 4294901760
        %4552 = vmatpush.msra.mxu0 %v4551
        %v4553 = vand.u32 %v215, 4294901760
        %v4554 = vsub.f32 %v215, %v4553
        %v4555 = vand.u32 %v4554, 4294901760
        %v4556 = vsub.f32 %v4554, %v4555
        %v4557 = vand.u32 %v4556, 4294901760
        %4558 = vmatpush.msra.mxu0 %v4557
        %v4559 = vand.u32 %v214, 4294901760
        %v4560 = vsub.f32 %v214, %v4559
        %v4561 = vand.u32 %v4560, 4294901760
        %v4562 = vsub.f32 %v4560, %v4561
        %v4563 = vand.u32 %v4562, 4294901760
        %4564 = vmatpush.msra.mxu0 %v4563
        %v4565 = vand.u32 %v213, 4294901760
        %v4566 = vsub.f32 %v213, %v4565
        %v4567 = vand.u32 %v4566, 4294901760
        %v4568 = vsub.f32 %v4566, %v4567
        %v4569 = vand.u32 %v4568, 4294901760
        %4570 = vmatpush.msra.mxu0 %v4569
        %v4571 = vand.u32 %v212, 4294901760
        %v4572 = vsub.f32 %v212, %v4571
        %v4573 = vand.u32 %v4572, 4294901760
        %v4574 = vsub.f32 %v4572, %v4573
        %v4575 = vand.u32 %v4574, 4294901760
        %4576 = vmatpush.msra.mxu0 %v4575
        %v4577 = vand.u32 %v211, 4294901760
        %v4578 = vsub.f32 %v211, %v4577
        %v4579 = vand.u32 %v4578, 4294901760
        %v4580 = vsub.f32 %v4578, %v4579
        %v4581 = vand.u32 %v4580, 4294901760
        %4582 = vmatpush.msra.mxu0 %v4581
        %v4583 = vand.u32 %v4213, 4294901760
        %4584 = vmatmul.f32.gmra.mxu0 %v4583
        %v4585 = vpop.f32.mrf.mxu0
        %v4586 = vadd.f32 %v4517, %v4585
        %v4587 = vand.u32 %v4216, 4294901760
        %4588 = vmatmul.f32.gmra.mxu0 %v4587
        %v4589 = vpop.f32.mrf.mxu0
        %v4590 = vadd.f32 %v4525, %v4589
        %4591 = vdwg.mxu0
        %4592 = vmatpush.msra.mxu0 0.0
        %4593 = vmatpush.msra.mxu0 0.0
        %4594 = vmatpush.msra.mxu0 0.0
        %4595 = vmatpush.msra.mxu0 0.0
        %4596 = vmatpush.msra.mxu0 0.0
        %4597 = vmatpush.msra.mxu0 0.0
        %4598 = vmatpush.msra.mxu0 0.0
        %4599 = vmatpush.msra.mxu0 0.0
        %v4600 = vand.u32 %v218, 4294901760
        %v4601 = vsub.f32 %v218, %v4600
        %4602 = vmatpush.msra.mxu0 %v4601
        %v4603 = vand.u32 %v217, 4294901760
        %v4604 = vsub.f32 %v217, %v4603
        %4605 = vmatpush.msra.mxu0 %v4604
        %v4606 = vand.u32 %v216, 4294901760
        %v4607 = vsub.f32 %v216, %v4606
        %4608 = vmatpush.msra.mxu0 %v4607
        %v4609 = vand.u32 %v215, 4294901760
        %v4610 = vsub.f32 %v215, %v4609
        %4611 = vmatpush.msra.mxu0 %v4610
        %v4612 = vand.u32 %v214, 4294901760
        %v4613 = vsub.f32 %v214, %v4612
        %4614 = vmatpush.msra.mxu0 %v4613
        %v4615 = vand.u32 %v213, 4294901760
        %v4616 = vsub.f32 %v213, %v4615
        %4617 = vmatpush.msra.mxu0 %v4616
        %v4618 = vand.u32 %v212, 4294901760
        %v4619 = vsub.f32 %v212, %v4618
        %4620 = vmatpush.msra.mxu0 %v4619
        %v4621 = vand.u32 %v211, 4294901760
        %v4622 = vsub.f32 %v211, %v4621
        %4623 = vmatpush.msra.mxu0 %v4622
        %v4624 = vand.u32 %v4213, 4294901760
        %v4625 = vsub.f32 %v4213, %v4624
        %4626 = vmatmul.f32.gmra.mxu0 %v4625
        %v4627 = vpop.f32.mrf.mxu0
        %v4628 = vadd.f32 %v4586, %v4627
        %v4629 = vand.u32 %v4216, 4294901760
        %v4630 = vsub.f32 %v4216, %v4629
        %4631 = vmatmul.f32.gmra.mxu0 %v4630
        %v4632 = vpop.f32.mrf.mxu0
        %v4633 = vadd.f32 %v4590, %v4632
        %4634 = vdwg.mxu0
        %4635 = vmatpush.msra.mxu0 0.0
        %4636 = vmatpush.msra.mxu0 0.0
        %4637 = vmatpush.msra.mxu0 0.0
        %4638 = vmatpush.msra.mxu0 0.0
        %4639 = vmatpush.msra.mxu0 0.0
        %4640 = vmatpush.msra.mxu0 0.0
        %4641 = vmatpush.msra.mxu0 0.0
        %4642 = vmatpush.msra.mxu0 0.0
        %v4643 = vand.u32 %v218, 4294901760
        %4644 = vmatpush.msra.mxu0 %v4643
        %v4645 = vand.u32 %v217, 4294901760
        %4646 = vmatpush.msra.mxu0 %v4645
        %v4647 = vand.u32 %v216, 4294901760
        %4648 = vmatpush.msra.mxu0 %v4647
        %v4649 = vand.u32 %v215, 4294901760
        %4650 = vmatpush.msra.mxu0 %v4649
        %v4651 = vand.u32 %v214, 4294901760
        %4652 = vmatpush.msra.mxu0 %v4651
        %v4653 = vand.u32 %v213, 4294901760
        %4654 = vmatpush.msra.mxu0 %v4653
        %v4655 = vand.u32 %v212, 4294901760
        %4656 = vmatpush.msra.mxu0 %v4655
        %v4657 = vand.u32 %v211, 4294901760
        %4658 = vmatpush.msra.mxu0 %v4657
        %v4659 = vand.u32 %v4213, 4294901760
        %v4660 = vsub.f32 %v4213, %v4659
        %v4661 = vand.u32 %v4660, 4294901760
        %4662 = vmatmul.f32.gmra.mxu0 %v4661
        %v4663 = vpop.f32.mrf.mxu0
        %v4664 = vadd.f32 %v4628, %v4663
        %v4665 = vand.u32 %v4216, 4294901760
        %v4666 = vsub.f32 %v4216, %v4665
        %v4667 = vand.u32 %v4666, 4294901760
        %4668 = vmatmul.f32.gmra.mxu0 %v4667
        %v4669 = vpop.f32.mrf.mxu0
        %v4670 = vadd.f32 %v4633, %v4669
        %4671 = vdwg.mxu0
        %4672 = vmatpush.msra.mxu0 0.0
        %4673 = vmatpush.msra.mxu0 0.0
        %4674 = vmatpush.msra.mxu0 0.0
        %4675 = vmatpush.msra.mxu0 0.0
        %4676 = vmatpush.msra.mxu0 0.0
        %4677 = vmatpush.msra.mxu0 0.0
        %4678 = vmatpush.msra.mxu0 0.0
        %4679 = vmatpush.msra.mxu0 0.0
        %v4680 = vand.u32 %v218, 4294901760
        %v4681 = vsub.f32 %v218, %v4680
        %v4682 = vand.u32 %v4681, 4294901760
        %4683 = vmatpush.msra.mxu0 %v4682
        %v4684 = vand.u32 %v217, 4294901760
        %v4685 = vsub.f32 %v217, %v4684
        %v4686 = vand.u32 %v4685, 4294901760
        %4687 = vmatpush.msra.mxu0 %v4686
        %v4688 = vand.u32 %v216, 4294901760
        %v4689 = vsub.f32 %v216, %v4688
        %v4690 = vand.u32 %v4689, 4294901760
        %4691 = vmatpush.msra.mxu0 %v4690
        %v4692 = vand.u32 %v215, 4294901760
        %v4693 = vsub.f32 %v215, %v4692
        %v4694 = vand.u32 %v4693, 4294901760
        %4695 = vmatpush.msra.mxu0 %v4694
        %v4696 = vand.u32 %v214, 4294901760
        %v4697 = vsub.f32 %v214, %v4696
        %v4698 = vand.u32 %v4697, 4294901760
        %4699 = vmatpush.msra.mxu0 %v4698
        %v4700 = vand.u32 %v213, 4294901760
        %v4701 = vsub.f32 %v213, %v4700
        %v4702 = vand.u32 %v4701, 4294901760
        %4703 = vmatpush.msra.mxu0 %v4702
        %v4704 = vand.u32 %v212, 4294901760
        %v4705 = vsub.f32 %v212, %v4704
        %v4706 = vand.u32 %v4705, 4294901760
        %4707 = vmatpush.msra.mxu0 %v4706
        %v4708 = vand.u32 %v211, 4294901760
        %v4709 = vsub.f32 %v211, %v4708
        %v4710 = vand.u32 %v4709, 4294901760
        %4711 = vmatpush.msra.mxu0 %v4710
        %v4712 = vand.u32 %v4213, 4294901760
        %4713 = vmatmul.f32.gmra.mxu0 %v4712
        %v4714 = vpop.f32.mrf.mxu0
        %v4715 = vadd.f32 %v4664, %v4714
        %v4716 = vand.u32 %v4216, 4294901760
        %4717 = vmatmul.f32.gmra.mxu0 %v4716
        %v4718 = vpop.f32.mrf.mxu0
        %v4719 = vadd.f32 %v4670, %v4718
        %4720 = vdwg.mxu0
        %4721 = vmatpush.msra.mxu0 0.0
        %4722 = vmatpush.msra.mxu0 0.0
        %4723 = vmatpush.msra.mxu0 0.0
        %4724 = vmatpush.msra.mxu0 0.0
        %4725 = vmatpush.msra.mxu0 0.0
        %4726 = vmatpush.msra.mxu0 0.0
        %4727 = vmatpush.msra.mxu0 0.0
        %4728 = vmatpush.msra.mxu0 0.0
        %v4729 = vand.u32 %v218, 4294901760
        %4730 = vmatpush.msra.mxu0 %v4729
        %v4731 = vand.u32 %v217, 4294901760
        %4732 = vmatpush.msra.mxu0 %v4731
        %v4733 = vand.u32 %v216, 4294901760
        %4734 = vmatpush.msra.mxu0 %v4733
        %v4735 = vand.u32 %v215, 4294901760
        %4736 = vmatpush.msra.mxu0 %v4735
        %v4737 = vand.u32 %v214, 4294901760
        %4738 = vmatpush.msra.mxu0 %v4737
        %v4739 = vand.u32 %v213, 4294901760
        %4740 = vmatpush.msra.mxu0 %v4739
        %v4741 = vand.u32 %v212, 4294901760
        %4742 = vmatpush.msra.mxu0 %v4741
        %v4743 = vand.u32 %v211, 4294901760
        %4744 = vmatpush.msra.mxu0 %v4743
        %v4745 = vand.u32 %v4213, 4294901760
        %4746 = vmatmul.f32.gmra.mxu0 %v4745
        %v4747 = vpop.f32.mrf.mxu0
        %v4748 = vadd.f32 %v4715, %v4747
        %v4749 = vand.u32 %v4216, 4294901760
        %4750 = vmatmul.f32.gmra.mxu0 %v4749
        %v4751 = vpop.f32.mrf.mxu0
        %v4752 = vadd.f32 %v4719, %v4751
        %4753 = vdwg.mxu0
        %v4755 = vsel %vm221, %v4480, 0
        %v4758 = vsel %vm221, %v4484, 0
        %v4761 = vsel %vm221, %v4748, 0
        %v4764 = vsel %vm221, %v4752, 0
        %4766 = vmatpush.xpose.msra.mxu0 0.0
        %4767 = vmatpush.xpose.msra.mxu0 0.0
        %4768 = vmatpush.xpose.msra.mxu0 0.0
        %4769 = vmatpush.xpose.msra.mxu0 0.0
        %4770 = vmatpush.xpose.msra.mxu0 0.0
        %4771 = vmatpush.xpose.msra.mxu0 0.0
        %4772 = vmatpush.xpose.msra.mxu0 0.0
        %4773 = vmatpush.xpose.msra.mxu0 0.0
        %4774 = vmatpush.xpose.msra.mxu0 0.0
        %4775 = vmatpush.xpose.msra.mxu0 0.0
        %4776 = vmatpush.xpose.msra.mxu0 0.0
        %4777 = vmatpush.xpose.msra.mxu0 0.0
        %4778 = vmatpush.xpose.msra.mxu0 0.0
        %4779 = vmatpush.xpose.msra.mxu0 0.0
        %v4780 = vand.u32 %v4764, 4294901760
        %4781 = vmatpush.xpose.msra.mxu0 %v4780
        %v4782 = vand.u32 %v4761, 4294901760
        %4783 = vmatpush.xpose.msra.mxu0 %v4782
        %v4784 = vand.u32 %v4755, 4294901760
        %v4785 = vsub.f32 %v4755, %v4784
        %v4786 = vand.u32 %v4785, 4294901760
        %v4787 = vsub.f32 %v4785, %v4786
        %v4788 = vand.u32 %v4787, 4294901760
        %4789 = vmatmul.f32.gmra.mxu0 %v4788
        %v4790 = vpop.f32.mrf.mxu0
        %v4791 = vadd.f32 0.0, %v4790
        %v4792 = vand.u32 %v4758, 4294901760
        %v4793 = vsub.f32 %v4758, %v4792
        %v4794 = vand.u32 %v4793, 4294901760
        %v4795 = vsub.f32 %v4793, %v4794
        %v4796 = vand.u32 %v4795, 4294901760
        %4797 = vmatmul.f32.gmra.mxu0 %v4796
        %v4798 = vpop.f32.mrf.mxu0
        %v4799 = vadd.f32 0.0, %v4798
        %4800 = vdwg.mxu0
        %4801 = vmatpush.xpose.msra.mxu0 0.0
        %4802 = vmatpush.xpose.msra.mxu0 0.0
        %4803 = vmatpush.xpose.msra.mxu0 0.0
        %4804 = vmatpush.xpose.msra.mxu0 0.0
        %4805 = vmatpush.xpose.msra.mxu0 0.0
        %4806 = vmatpush.xpose.msra.mxu0 0.0
        %4807 = vmatpush.xpose.msra.mxu0 0.0
        %4808 = vmatpush.xpose.msra.mxu0 0.0
        %4809 = vmatpush.xpose.msra.mxu0 0.0
        %4810 = vmatpush.xpose.msra.mxu0 0.0
        %4811 = vmatpush.xpose.msra.mxu0 0.0
        %4812 = vmatpush.xpose.msra.mxu0 0.0
        %4813 = vmatpush.xpose.msra.mxu0 0.0
        %4814 = vmatpush.xpose.msra.mxu0 0.0
        %v4815 = vand.u32 %v4764, 4294901760
        %v4816 = vsub.f32 %v4764, %v4815
        %v4817 = vand.u32 %v4816, 4294901760
        %v4818 = vsub.f32 %v4816, %v4817
        %v4819 = vand.u32 %v4818, 4294901760
        %4820 = vmatpush.xpose.msra.mxu0 %v4819
        %v4821 = vand.u32 %v4761, 4294901760
        %v4822 = vsub.f32 %v4761, %v4821
        %v4823 = vand.u32 %v4822, 4294901760
        %v4824 = vsub.f32 %v4822, %v4823
        %v4825 = vand.u32 %v4824, 4294901760
        %4826 = vmatpush.xpose.msra.mxu0 %v4825
        %v4827 = vand.u32 %v4755, 4294901760
        %4828 = vmatmul.f32.gmra.mxu0 %v4827
        %v4829 = vpop.f32.mrf.mxu0
        %v4830 = vadd.f32 %v4791, %v4829
        %v4831 = vand.u32 %v4758, 4294901760
        %4832 = vmatmul.f32.gmra.mxu0 %v4831
        %v4833 = vpop.f32.mrf.mxu0
        %v4834 = vadd.f32 %v4799, %v4833
        %4835 = vdwg.mxu0
        %4836 = vmatpush.xpose.msra.mxu0 0.0
        %4837 = vmatpush.xpose.msra.mxu0 0.0
        %4838 = vmatpush.xpose.msra.mxu0 0.0
        %4839 = vmatpush.xpose.msra.mxu0 0.0
        %4840 = vmatpush.xpose.msra.mxu0 0.0
        %4841 = vmatpush.xpose.msra.mxu0 0.0
        %4842 = vmatpush.xpose.msra.mxu0 0.0
        %4843 = vmatpush.xpose.msra.mxu0 0.0
        %4844 = vmatpush.xpose.msra.mxu0 0.0
        %4845 = vmatpush.xpose.msra.mxu0 0.0
        %4846 = vmatpush.xpose.msra.mxu0 0.0
        %4847 = vmatpush.xpose.msra.mxu0 0.0
        %4848 = vmatpush.xpose.msra.mxu0 0.0
        %4849 = vmatpush.xpose.msra.mxu0 0.0
        %v4850 = vand.u32 %v4764, 4294901760
        %v4851 = vsub.f32 %v4764, %v4850
        %4852 = vmatpush.xpose.msra.mxu0 %v4851
        %v4853 = vand.u32 %v4761, 4294901760
        %v4854 = vsub.f32 %v4761, %v4853
        %4855 = vmatpush.xpose.msra.mxu0 %v4854
        %v4856 = vand.u32 %v4755, 4294901760
        %v4857 = vsub.f32 %v4755, %v4856
        %4858 = vmatmul.f32.gmra.mxu0 %v4857
        %v4859 = vpop.f32.mrf.mxu0
        %v4860 = vadd.f32 %v4830, %v4859
        %v4861 = vand.u32 %v4758, 4294901760
        %v4862 = vsub.f32 %v4758, %v4861
        %4863 = vmatmul.f32.gmra.mxu0 %v4862
        %v4864 = vpop.f32.mrf.mxu0
        %v4865 = vadd.f32 %v4834, %v4864
        %4866 = vdwg.mxu0
        %4867 = vmatpush.xpose.msra.mxu0 0.0
        %4868 = vmatpush.xpose.msra.mxu0 0.0
        %4869 = vmatpush.xpose.msra.mxu0 0.0
        %4870 = vmatpush.xpose.msra.mxu0 0.0
        %4871 = vmatpush.xpose.msra.mxu0 0.0
        %4872 = vmatpush.xpose.msra.mxu0 0.0
        %4873 = vmatpush.xpose.msra.mxu0 0.0
        %4874 = vmatpush.xpose.msra.mxu0 0.0
        %4875 = vmatpush.xpose.msra.mxu0 0.0
        %4876 = vmatpush.xpose.msra.mxu0 0.0
        %4877 = vmatpush.xpose.msra.mxu0 0.0
        %4878 = vmatpush.xpose.msra.mxu0 0.0
        %4879 = vmatpush.xpose.msra.mxu0 0.0
        %4880 = vmatpush.xpose.msra.mxu0 0.0
        %v4881 = vand.u32 %v4764, 4294901760
        %4882 = vmatpush.xpose.msra.mxu0 %v4881
        %v4883 = vand.u32 %v4761, 4294901760
        %4884 = vmatpush.xpose.msra.mxu0 %v4883
        %v4885 = vand.u32 %v4755, 4294901760
        %v4886 = vsub.f32 %v4755, %v4885
        %v4887 = vand.u32 %v4886, 4294901760
        %4888 = vmatmul.f32.gmra.mxu0 %v4887
        %v4889 = vpop.f32.mrf.mxu0
        %v4890 = vadd.f32 %v4860, %v4889
        %v4891 = vand.u32 %v4758, 4294901760
        %v4892 = vsub.f32 %v4758, %v4891
        %v4893 = vand.u32 %v4892, 4294901760
        %4894 = vmatmul.f32.gmra.mxu0 %v4893
        %v4895 = vpop.f32.mrf.mxu0
        %v4896 = vadd.f32 %v4865, %v4895
        %4897 = vdwg.mxu0
        %4898 = vmatpush.xpose.msra.mxu0 0.0
        %4899 = vmatpush.xpose.msra.mxu0 0.0
        %4900 = vmatpush.xpose.msra.mxu0 0.0
        %4901 = vmatpush.xpose.msra.mxu0 0.0
        %4902 = vmatpush.xpose.msra.mxu0 0.0
        %4903 = vmatpush.xpose.msra.mxu0 0.0
        %4904 = vmatpush.xpose.msra.mxu0 0.0
        %4905 = vmatpush.xpose.msra.mxu0 0.0
        %4906 = vmatpush.xpose.msra.mxu0 0.0
        %4907 = vmatpush.xpose.msra.mxu0 0.0
        %4908 = vmatpush.xpose.msra.mxu0 0.0
        %4909 = vmatpush.xpose.msra.mxu0 0.0
        %4910 = vmatpush.xpose.msra.mxu0 0.0
        %4911 = vmatpush.xpose.msra.mxu0 0.0
        %v4912 = vand.u32 %v4764, 4294901760
        %v4913 = vsub.f32 %v4764, %v4912
        %v4914 = vand.u32 %v4913, 4294901760
        %4915 = vmatpush.xpose.msra.mxu0 %v4914
        %v4916 = vand.u32 %v4761, 4294901760
        %v4917 = vsub.f32 %v4761, %v4916
        %v4918 = vand.u32 %v4917, 4294901760
        %4919 = vmatpush.xpose.msra.mxu0 %v4918
        %v4920 = vand.u32 %v4755, 4294901760
        %4921 = vmatmul.f32.gmra.mxu0 %v4920
        %v4922 = vpop.f32.mrf.mxu0
        %v4923 = vadd.f32 %v4890, %v4922
        %v4924 = vand.u32 %v4758, 4294901760
        %4925 = vmatmul.f32.gmra.mxu0 %v4924
        %v4926 = vpop.f32.mrf.mxu0
        %v4927 = vadd.f32 %v4896, %v4926
        %4928 = vdwg.mxu0
        %4929 = vmatpush.xpose.msra.mxu0 0.0
        %4930 = vmatpush.xpose.msra.mxu0 0.0
        %4931 = vmatpush.xpose.msra.mxu0 0.0
        %4932 = vmatpush.xpose.msra.mxu0 0.0
        %4933 = vmatpush.xpose.msra.mxu0 0.0
        %4934 = vmatpush.xpose.msra.mxu0 0.0
        %4935 = vmatpush.xpose.msra.mxu0 0.0
        %4936 = vmatpush.xpose.msra.mxu0 0.0
        %4937 = vmatpush.xpose.msra.mxu0 0.0
        %4938 = vmatpush.xpose.msra.mxu0 0.0
        %4939 = vmatpush.xpose.msra.mxu0 0.0
        %4940 = vmatpush.xpose.msra.mxu0 0.0
        %4941 = vmatpush.xpose.msra.mxu0 0.0
        %4942 = vmatpush.xpose.msra.mxu0 0.0
        %v4943 = vand.u32 %v4764, 4294901760
        %4944 = vmatpush.xpose.msra.mxu0 %v4943
        %v4945 = vand.u32 %v4761, 4294901760
        %4946 = vmatpush.xpose.msra.mxu0 %v4945
        %v4947 = vand.u32 %v4755, 4294901760
        %4948 = vmatmul.f32.gmra.mxu0 %v4947
        %v4949 = vpop.f32.mrf.mxu0
        %v4950 = vadd.f32 %v4923, %v4949
        %v4951 = vand.u32 %v4758, 4294901760
        %4952 = vmatmul.f32.gmra.mxu0 %v4951
        %v4953 = vpop.f32.mrf.mxu0
        %v4954 = vadd.f32 %v4927, %v4953
        %4955 = vdwg.mxu0
        %v4956 = vsel %vm966, %v4950, -inf
        %4957 = vmax.xlane.f32.xlu0 %v4956
        %v4958 = vpop.xlane.xlu0 %4957
        %v4959 = vsel %vm966, %v4954, -inf
        %4960 = vmax.xlane.f32.xlu0 %v4959
        %v4961 = vpop.xlane.xlu0 %4960
        %v4962 = vsub.f32 %v4950, %v4958
        %v4963 = vsub.f32 %v4954, %v4961
        %v4964 = vmul.f32 %v4962, 1.442695
        %v4965 = vpow.pop %v4964
        %v4966 = vmul.f32 %v4963, 1.442695
        %v4967 = vpow.pop %v4966
        %v4968 = vsel %vm966, %v4965, 0.0
        %4969 = vadd.xlane.f32.xlu0 %v4968
        %v4970 = vpop.xlane.xlu0 %4969
        %v4971 = vsel %vm966, %v4967, 0.0
        %4972 = vadd.xlane.f32.xlu0 %v4971
        %v4973 = vpop.xlane.xlu0 %4972
        %v4974 = vrcp.pop %v4970
        %v4975 = vmul.f32 %v4970, %v4974
        %v4976 = vsub.f32 1.0, %v4975
        %v4977 = vmul.f32 %v4974, %v4976
        %v4978 = vadd.f32 %v4974, %v4977
        %vm4979 = vweird.f32 %v4970
        %vm4980 = vweird.f32 %v4974
        %vm4981 = vmor %vm4979, %vm4980
        %v4982 = vsel %vm4981, %v4974, %v4978
        %v4983 = vand.u32 2147483647, %v4970
        %vm4984 = vcmp.eq.f32.partialorder %v4983, 8.507059e+37
        %v4985 = vand.u32 %v4970, 2147483648
        %v4986 = vor.u32 1.1754944e-38, %v4985
        %v4987 = vsel %vm4984, %v4986, %v4982
        %v4988 = vmul.f32 %v4965, %v4987
        %v4989 = vrcp.pop %v4973
        %v4990 = vmul.f32 %v4973, %v4989
        %v4991 = vsub.f32 1.0, %v4990
        %v4992 = vmul.f32 %v4989, %v4991
        %v4993 = vadd.f32 %v4989, %v4992
        %vm4994 = vweird.f32 %v4973
        %vm4995 = vweird.f32 %v4989
        %vm4996 = vmor %vm4994, %vm4995
        %v4997 = vsel %vm4996, %v4989, %v4993
        %v4998 = vand.u32 2147483647, %v4973
        %vm4999 = vcmp.eq.f32.partialorder %v4998, 8.507059e+37
        %v5000 = vand.u32 %v4973, 2147483648
        %v5001 = vor.u32 1.1754944e-38, %v5000
        %v5002 = vsel %vm4999, %v5001, %v4997
        %v5003 = vmul.f32 %v4967, %v5002
        %s5004 = scalar_lea.vmem %s190, 80 [#allocation2]
        %5005 = vst.msk [vmem:[%s5004] sm:$0xff] %vm966, %v4988
        %5006 = vst.msk [vmem:[%s5004 + $0x8] sm:$0xff] %vm966, %v5003
        %s5007 = scalar_lea.vmem %s200, 96
        %v5008 = vld [vmem:[%s5007] sm:$0xff]
        %v5009 = vld [vmem:[%s5007 + $0x8] sm:$0xff]
        %v5011 = vsel %vm221, %v5008, 0
        %v5014 = vsel %vm221, %v5009, 0
        %5016 = vmatpush.msra.mxu0 0.0
        %5017 = vmatpush.msra.mxu0 0.0
        %5018 = vmatpush.msra.mxu0 0.0
        %5019 = vmatpush.msra.mxu0 0.0
        %5020 = vmatpush.msra.mxu0 0.0
        %5021 = vmatpush.msra.mxu0 0.0
        %5022 = vmatpush.msra.mxu0 0.0
        %5023 = vmatpush.msra.mxu0 0.0
        %v5024 = vand.u32 %v210, 4294901760
        %5025 = vmatpush.msra.mxu0 %v5024
        %v5026 = vand.u32 %v209, 4294901760
        %5027 = vmatpush.msra.mxu0 %v5026
        %v5028 = vand.u32 %v208, 4294901760
        %5029 = vmatpush.msra.mxu0 %v5028
        %v5030 = vand.u32 %v207, 4294901760
        %5031 = vmatpush.msra.mxu0 %v5030
        %v5032 = vand.u32 %v206, 4294901760
        %5033 = vmatpush.msra.mxu0 %v5032
        %v5034 = vand.u32 %v205, 4294901760
        %5035 = vmatpush.msra.mxu0 %v5034
        %v5036 = vand.u32 %v204, 4294901760
        %5037 = vmatpush.msra.mxu0 %v5036
        %v5038 = vand.u32 %v203, 4294901760
        %5039 = vmatpush.msra.mxu0 %v5038
        %v5040 = vand.u32 %v5011, 4294901760
        %v5041 = vsub.f32 %v5011, %v5040
        %v5042 = vand.u32 %v5041, 4294901760
        %v5043 = vsub.f32 %v5041, %v5042
        %v5044 = vand.u32 %v5043, 4294901760
        %5045 = vmatmul.f32.gmra.mxu0 %v5044
        %v5046 = vpop.f32.mrf.mxu0
        %v5047 = vadd.f32 0.0, %v5046
        %v5048 = vand.u32 %v5014, 4294901760
        %v5049 = vsub.f32 %v5014, %v5048
        %v5050 = vand.u32 %v5049, 4294901760
        %v5051 = vsub.f32 %v5049, %v5050
        %v5052 = vand.u32 %v5051, 4294901760
        %5053 = vmatmul.f32.gmra.mxu0 %v5052
        %v5054 = vpop.f32.mrf.mxu0
        %v5055 = vadd.f32 0.0, %v5054
        %5056 = vdwg.mxu0
        %5057 = vmatpush.msra.mxu0 0.0
        %5058 = vmatpush.msra.mxu0 0.0
        %5059 = vmatpush.msra.mxu0 0.0
        %5060 = vmatpush.msra.mxu0 0.0
        %5061 = vmatpush.msra.mxu0 0.0
        %5062 = vmatpush.msra.mxu0 0.0
        %5063 = vmatpush.msra.mxu0 0.0
        %5064 = vmatpush.msra.mxu0 0.0
        %v5065 = vand.u32 %v210, 4294901760
        %v5066 = vsub.f32 %v210, %v5065
        %v5067 = vand.u32 %v5066, 4294901760
        %v5068 = vsub.f32 %v5066, %v5067
        %v5069 = vand.u32 %v5068, 4294901760
        %5070 = vmatpush.msra.mxu0 %v5069
        %v5071 = vand.u32 %v209, 4294901760
        %v5072 = vsub.f32 %v209, %v5071
        %v5073 = vand.u32 %v5072, 4294901760
        %v5074 = vsub.f32 %v5072, %v5073
        %v5075 = vand.u32 %v5074, 4294901760
        %5076 = vmatpush.msra.mxu0 %v5075
        %v5077 = vand.u32 %v208, 4294901760
        %v5078 = vsub.f32 %v208, %v5077
        %v5079 = vand.u32 %v5078, 4294901760
        %v5080 = vsub.f32 %v5078, %v5079
        %v5081 = vand.u32 %v5080, 4294901760
        %5082 = vmatpush.msra.mxu0 %v5081
        %v5083 = vand.u32 %v207, 4294901760
        %v5084 = vsub.f32 %v207, %v5083
        %v5085 = vand.u32 %v5084, 4294901760
        %v5086 = vsub.f32 %v5084, %v5085
        %v5087 = vand.u32 %v5086, 4294901760
        %5088 = vmatpush.msra.mxu0 %v5087
        %v5089 = vand.u32 %v206, 4294901760
        %v5090 = vsub.f32 %v206, %v5089
        %v5091 = vand.u32 %v5090, 4294901760
        %v5092 = vsub.f32 %v5090, %v5091
        %v5093 = vand.u32 %v5092, 4294901760
        %5094 = vmatpush.msra.mxu0 %v5093
        %v5095 = vand.u32 %v205, 4294901760
        %v5096 = vsub.f32 %v205, %v5095
        %v5097 = vand.u32 %v5096, 4294901760
        %v5098 = vsub.f32 %v5096, %v5097
        %v5099 = vand.u32 %v5098, 4294901760
        %5100 = vmatpush.msra.mxu0 %v5099
        %v5101 = vand.u32 %v204, 4294901760
        %v5102 = vsub.f32 %v204, %v5101
        %v5103 = vand.u32 %v5102, 4294901760
        %v5104 = vsub.f32 %v5102, %v5103
        %v5105 = vand.u32 %v5104, 4294901760
        %5106 = vmatpush.msra.mxu0 %v5105
        %v5107 = vand.u32 %v203, 4294901760
        %v5108 = vsub.f32 %v203, %v5107
        %v5109 = vand.u32 %v5108, 4294901760
        %v5110 = vsub.f32 %v5108, %v5109
        %v5111 = vand.u32 %v5110, 4294901760
        %5112 = vmatpush.msra.mxu0 %v5111
        %v5113 = vand.u32 %v5011, 4294901760
        %5114 = vmatmul.f32.gmra.mxu0 %v5113
        %v5115 = vpop.f32.mrf.mxu0
        %v5116 = vadd.f32 %v5047, %v5115
        %v5117 = vand.u32 %v5014, 4294901760
        %5118 = vmatmul.f32.gmra.mxu0 %v5117
        %v5119 = vpop.f32.mrf.mxu0
        %v5120 = vadd.f32 %v5055, %v5119
        %5121 = vdwg.mxu0
        %5122 = vmatpush.msra.mxu0 0.0
        %5123 = vmatpush.msra.mxu0 0.0
        %5124 = vmatpush.msra.mxu0 0.0
        %5125 = vmatpush.msra.mxu0 0.0
        %5126 = vmatpush.msra.mxu0 0.0
        %5127 = vmatpush.msra.mxu0 0.0
        %5128 = vmatpush.msra.mxu0 0.0
        %5129 = vmatpush.msra.mxu0 0.0
        %v5130 = vand.u32 %v210, 4294901760
        %v5131 = vsub.f32 %v210, %v5130
        %5132 = vmatpush.msra.mxu0 %v5131
        %v5133 = vand.u32 %v209, 4294901760
        %v5134 = vsub.f32 %v209, %v5133
        %5135 = vmatpush.msra.mxu0 %v5134
        %v5136 = vand.u32 %v208, 4294901760
        %v5137 = vsub.f32 %v208, %v5136
        %5138 = vmatpush.msra.mxu0 %v5137
        %v5139 = vand.u32 %v207, 4294901760
        %v5140 = vsub.f32 %v207, %v5139
        %5141 = vmatpush.msra.mxu0 %v5140
        %v5142 = vand.u32 %v206, 4294901760
        %v5143 = vsub.f32 %v206, %v5142
        %5144 = vmatpush.msra.mxu0 %v5143
        %v5145 = vand.u32 %v205, 4294901760
        %v5146 = vsub.f32 %v205, %v5145
        %5147 = vmatpush.msra.mxu0 %v5146
        %v5148 = vand.u32 %v204, 4294901760
        %v5149 = vsub.f32 %v204, %v5148
        %5150 = vmatpush.msra.mxu0 %v5149
        %v5151 = vand.u32 %v203, 4294901760
        %v5152 = vsub.f32 %v203, %v5151
        %5153 = vmatpush.msra.mxu0 %v5152
        %v5154 = vand.u32 %v5011, 4294901760
        %v5155 = vsub.f32 %v5011, %v5154
        %5156 = vmatmul.f32.gmra.mxu0 %v5155
        %v5157 = vpop.f32.mrf.mxu0
        %v5158 = vadd.f32 %v5116, %v5157
        %v5159 = vand.u32 %v5014, 4294901760
        %v5160 = vsub.f32 %v5014, %v5159
        %5161 = vmatmul.f32.gmra.mxu0 %v5160
        %v5162 = vpop.f32.mrf.mxu0
        %v5163 = vadd.f32 %v5120, %v5162
        %5164 = vdwg.mxu0
        %5165 = vmatpush.msra.mxu0 0.0
        %5166 = vmatpush.msra.mxu0 0.0
        %5167 = vmatpush.msra.mxu0 0.0
        %5168 = vmatpush.msra.mxu0 0.0
        %5169 = vmatpush.msra.mxu0 0.0
        %5170 = vmatpush.msra.mxu0 0.0
        %5171 = vmatpush.msra.mxu0 0.0
        %5172 = vmatpush.msra.mxu0 0.0
        %v5173 = vand.u32 %v210, 4294901760
        %5174 = vmatpush.msra.mxu0 %v5173
        %v5175 = vand.u32 %v209, 4294901760
        %5176 = vmatpush.msra.mxu0 %v5175
        %v5177 = vand.u32 %v208, 4294901760
        %5178 = vmatpush.msra.mxu0 %v5177
        %v5179 = vand.u32 %v207, 4294901760
        %5180 = vmatpush.msra.mxu0 %v5179
        %v5181 = vand.u32 %v206, 4294901760
        %5182 = vmatpush.msra.mxu0 %v5181
        %v5183 = vand.u32 %v205, 4294901760
        %5184 = vmatpush.msra.mxu0 %v5183
        %v5185 = vand.u32 %v204, 4294901760
        %5186 = vmatpush.msra.mxu0 %v5185
        %v5187 = vand.u32 %v203, 4294901760
        %5188 = vmatpush.msra.mxu0 %v5187
        %v5189 = vand.u32 %v5011, 4294901760
        %v5190 = vsub.f32 %v5011, %v5189
        %v5191 = vand.u32 %v5190, 4294901760
        %5192 = vmatmul.f32.gmra.mxu0 %v5191
        %v5193 = vpop.f32.mrf.mxu0
        %v5194 = vadd.f32 %v5158, %v5193
        %v5195 = vand.u32 %v5014, 4294901760
        %v5196 = vsub.f32 %v5014, %v5195
        %v5197 = vand.u32 %v5196, 4294901760
        %5198 = vmatmul.f32.gmra.mxu0 %v5197
        %v5199 = vpop.f32.mrf.mxu0
        %v5200 = vadd.f32 %v5163, %v5199
        %5201 = vdwg.mxu0
        %5202 = vmatpush.msra.mxu0 0.0
        %5203 = vmatpush.msra.mxu0 0.0
        %5204 = vmatpush.msra.mxu0 0.0
        %5205 = vmatpush.msra.mxu0 0.0
        %5206 = vmatpush.msra.mxu0 0.0
        %5207 = vmatpush.msra.mxu0 0.0
        %5208 = vmatpush.msra.mxu0 0.0
        %5209 = vmatpush.msra.mxu0 0.0
        %v5210 = vand.u32 %v210, 4294901760
        %v5211 = vsub.f32 %v210, %v5210
        %v5212 = vand.u32 %v5211, 4294901760
        %5213 = vmatpush.msra.mxu0 %v5212
        %v5214 = vand.u32 %v209, 4294901760
        %v5215 = vsub.f32 %v209, %v5214
        %v5216 = vand.u32 %v5215, 4294901760
        %5217 = vmatpush.msra.mxu0 %v5216
        %v5218 = vand.u32 %v208, 4294901760
        %v5219 = vsub.f32 %v208, %v5218
        %v5220 = vand.u32 %v5219, 4294901760
        %5221 = vmatpush.msra.mxu0 %v5220
        %v5222 = vand.u32 %v207, 4294901760
        %v5223 = vsub.f32 %v207, %v5222
        %v5224 = vand.u32 %v5223, 4294901760
        %5225 = vmatpush.msra.mxu0 %v5224
        %v5226 = vand.u32 %v206, 4294901760
        %v5227 = vsub.f32 %v206, %v5226
        %v5228 = vand.u32 %v5227, 4294901760
        %5229 = vmatpush.msra.mxu0 %v5228
        %v5230 = vand.u32 %v205, 4294901760
        %v5231 = vsub.f32 %v205, %v5230
        %v5232 = vand.u32 %v5231, 4294901760
        %5233 = vmatpush.msra.mxu0 %v5232
        %v5234 = vand.u32 %v204, 4294901760
        %v5235 = vsub.f32 %v204, %v5234
        %v5236 = vand.u32 %v5235, 4294901760
        %5237 = vmatpush.msra.mxu0 %v5236
        %v5238 = vand.u32 %v203, 4294901760
        %v5239 = vsub.f32 %v203, %v5238
        %v5240 = vand.u32 %v5239, 4294901760
        %5241 = vmatpush.msra.mxu0 %v5240
        %v5242 = vand.u32 %v5011, 4294901760
        %5243 = vmatmul.f32.gmra.mxu0 %v5242
        %v5244 = vpop.f32.mrf.mxu0
        %v5245 = vadd.f32 %v5194, %v5244
        %v5246 = vand.u32 %v5014, 4294901760
        %5247 = vmatmul.f32.gmra.mxu0 %v5246
        %v5248 = vpop.f32.mrf.mxu0
        %v5249 = vadd.f32 %v5200, %v5248
        %5250 = vdwg.mxu0
        %5251 = vmatpush.msra.mxu0 0.0
        %5252 = vmatpush.msra.mxu0 0.0
        %5253 = vmatpush.msra.mxu0 0.0
        %5254 = vmatpush.msra.mxu0 0.0
        %5255 = vmatpush.msra.mxu0 0.0
        %5256 = vmatpush.msra.mxu0 0.0
        %5257 = vmatpush.msra.mxu0 0.0
        %5258 = vmatpush.msra.mxu0 0.0
        %v5259 = vand.u32 %v210, 4294901760
        %5260 = vmatpush.msra.mxu0 %v5259
        %v5261 = vand.u32 %v209, 4294901760
        %5262 = vmatpush.msra.mxu0 %v5261
        %v5263 = vand.u32 %v208, 4294901760
        %5264 = vmatpush.msra.mxu0 %v5263
        %v5265 = vand.u32 %v207, 4294901760
        %5266 = vmatpush.msra.mxu0 %v5265
        %v5267 = vand.u32 %v206, 4294901760
        %5268 = vmatpush.msra.mxu0 %v5267
        %v5269 = vand.u32 %v205, 4294901760
        %5270 = vmatpush.msra.mxu0 %v5269
        %v5271 = vand.u32 %v204, 4294901760
        %5272 = vmatpush.msra.mxu0 %v5271
        %v5273 = vand.u32 %v203, 4294901760
        %5274 = vmatpush.msra.mxu0 %v5273
        %v5275 = vand.u32 %v5011, 4294901760
        %5276 = vmatmul.f32.gmra.mxu0 %v5275
        %v5277 = vpop.f32.mrf.mxu0
        %v5278 = vadd.f32 %v5245, %v5277
        %v5279 = vand.u32 %v5014, 4294901760
        %5280 = vmatmul.f32.gmra.mxu0 %v5279
        %v5281 = vpop.f32.mrf.mxu0
        %v5282 = vadd.f32 %v5249, %v5281
        %5283 = vdwg.mxu0
        %5284 = vmatpush.msra.mxu0 0.0
        %5285 = vmatpush.msra.mxu0 0.0
        %5286 = vmatpush.msra.mxu0 0.0
        %5287 = vmatpush.msra.mxu0 0.0
        %5288 = vmatpush.msra.mxu0 0.0
        %5289 = vmatpush.msra.mxu0 0.0
        %5290 = vmatpush.msra.mxu0 0.0
        %5291 = vmatpush.msra.mxu0 0.0
        %v5292 = vand.u32 %v218, 4294901760
        %5293 = vmatpush.msra.mxu0 %v5292
        %v5294 = vand.u32 %v217, 4294901760
        %5295 = vmatpush.msra.mxu0 %v5294
        %v5296 = vand.u32 %v216, 4294901760
        %5297 = vmatpush.msra.mxu0 %v5296
        %v5298 = vand.u32 %v215, 4294901760
        %5299 = vmatpush.msra.mxu0 %v5298
        %v5300 = vand.u32 %v214, 4294901760
        %5301 = vmatpush.msra.mxu0 %v5300
        %v5302 = vand.u32 %v213, 4294901760
        %5303 = vmatpush.msra.mxu0 %v5302
        %v5304 = vand.u32 %v212, 4294901760
        %5305 = vmatpush.msra.mxu0 %v5304
        %v5306 = vand.u32 %v211, 4294901760
        %5307 = vmatpush.msra.mxu0 %v5306
        %v5308 = vand.u32 %v5011, 4294901760
        %v5309 = vsub.f32 %v5011, %v5308
        %v5310 = vand.u32 %v5309, 4294901760
        %v5311 = vsub.f32 %v5309, %v5310
        %v5312 = vand.u32 %v5311, 4294901760
        %5313 = vmatmul.f32.gmra.mxu0 %v5312
        %v5314 = vpop.f32.mrf.mxu0
        %v5315 = vadd.f32 0.0, %v5314
        %v5316 = vand.u32 %v5014, 4294901760
        %v5317 = vsub.f32 %v5014, %v5316
        %v5318 = vand.u32 %v5317, 4294901760
        %v5319 = vsub.f32 %v5317, %v5318
        %v5320 = vand.u32 %v5319, 4294901760
        %5321 = vmatmul.f32.gmra.mxu0 %v5320
        %v5322 = vpop.f32.mrf.mxu0
        %v5323 = vadd.f32 0.0, %v5322
        %5324 = vdwg.mxu0
        %5325 = vmatpush.msra.mxu0 0.0
        %5326 = vmatpush.msra.mxu0 0.0
        %5327 = vmatpush.msra.mxu0 0.0
        %5328 = vmatpush.msra.mxu0 0.0
        %5329 = vmatpush.msra.mxu0 0.0
        %5330 = vmatpush.msra.mxu0 0.0
        %5331 = vmatpush.msra.mxu0 0.0
        %5332 = vmatpush.msra.mxu0 0.0
        %v5333 = vand.u32 %v218, 4294901760
        %v5334 = vsub.f32 %v218, %v5333
        %v5335 = vand.u32 %v5334, 4294901760
        %v5336 = vsub.f32 %v5334, %v5335
        %v5337 = vand.u32 %v5336, 4294901760
        %5338 = vmatpush.msra.mxu0 %v5337
        %v5339 = vand.u32 %v217, 4294901760
        %v5340 = vsub.f32 %v217, %v5339
        %v5341 = vand.u32 %v5340, 4294901760
        %v5342 = vsub.f32 %v5340, %v5341
        %v5343 = vand.u32 %v5342, 4294901760
        %5344 = vmatpush.msra.mxu0 %v5343
        %v5345 = vand.u32 %v216, 4294901760
        %v5346 = vsub.f32 %v216, %v5345
        %v5347 = vand.u32 %v5346, 4294901760
        %v5348 = vsub.f32 %v5346, %v5347
        %v5349 = vand.u32 %v5348, 4294901760
        %5350 = vmatpush.msra.mxu0 %v5349
        %v5351 = vand.u32 %v215, 4294901760
        %v5352 = vsub.f32 %v215, %v5351
        %v5353 = vand.u32 %v5352, 4294901760
        %v5354 = vsub.f32 %v5352, %v5353
        %v5355 = vand.u32 %v5354, 4294901760
        %5356 = vmatpush.msra.mxu0 %v5355
        %v5357 = vand.u32 %v214, 4294901760
        %v5358 = vsub.f32 %v214, %v5357
        %v5359 = vand.u32 %v5358, 4294901760
        %v5360 = vsub.f32 %v5358, %v5359
        %v5361 = vand.u32 %v5360, 4294901760
        %5362 = vmatpush.msra.mxu0 %v5361
        %v5363 = vand.u32 %v213, 4294901760
        %v5364 = vsub.f32 %v213, %v5363
        %v5365 = vand.u32 %v5364, 4294901760
        %v5366 = vsub.f32 %v5364, %v5365
        %v5367 = vand.u32 %v5366, 4294901760
        %5368 = vmatpush.msra.mxu0 %v5367
        %v5369 = vand.u32 %v212, 4294901760
        %v5370 = vsub.f32 %v212, %v5369
        %v5371 = vand.u32 %v5370, 4294901760
        %v5372 = vsub.f32 %v5370, %v5371
        %v5373 = vand.u32 %v5372, 4294901760
        %5374 = vmatpush.msra.mxu0 %v5373
        %v5375 = vand.u32 %v211, 4294901760
        %v5376 = vsub.f32 %v211, %v5375
        %v5377 = vand.u32 %v5376, 4294901760
        %v5378 = vsub.f32 %v5376, %v5377
        %v5379 = vand.u32 %v5378, 4294901760
        %5380 = vmatpush.msra.mxu0 %v5379
        %v5381 = vand.u32 %v5011, 4294901760
        %5382 = vmatmul.f32.gmra.mxu0 %v5381
        %v5383 = vpop.f32.mrf.mxu0
        %v5384 = vadd.f32 %v5315, %v5383
        %v5385 = vand.u32 %v5014, 4294901760
        %5386 = vmatmul.f32.gmra.mxu0 %v5385
        %v5387 = vpop.f32.mrf.mxu0
        %v5388 = vadd.f32 %v5323, %v5387
        %5389 = vdwg.mxu0
        %5390 = vmatpush.msra.mxu0 0.0
        %5391 = vmatpush.msra.mxu0 0.0
        %5392 = vmatpush.msra.mxu0 0.0
        %5393 = vmatpush.msra.mxu0 0.0
        %5394 = vmatpush.msra.mxu0 0.0
        %5395 = vmatpush.msra.mxu0 0.0
        %5396 = vmatpush.msra.mxu0 0.0
        %5397 = vmatpush.msra.mxu0 0.0
        %v5398 = vand.u32 %v218, 4294901760
        %v5399 = vsub.f32 %v218, %v5398
        %5400 = vmatpush.msra.mxu0 %v5399
        %v5401 = vand.u32 %v217, 4294901760
        %v5402 = vsub.f32 %v217, %v5401
        %5403 = vmatpush.msra.mxu0 %v5402
        %v5404 = vand.u32 %v216, 4294901760
        %v5405 = vsub.f32 %v216, %v5404
        %5406 = vmatpush.msra.mxu0 %v5405
        %v5407 = vand.u32 %v215, 4294901760
        %v5408 = vsub.f32 %v215, %v5407
        %5409 = vmatpush.msra.mxu0 %v5408
        %v5410 = vand.u32 %v214, 4294901760
        %v5411 = vsub.f32 %v214, %v5410
        %5412 = vmatpush.msra.mxu0 %v5411
        %v5413 = vand.u32 %v213, 4294901760
        %v5414 = vsub.f32 %v213, %v5413
        %5415 = vmatpush.msra.mxu0 %v5414
        %v5416 = vand.u32 %v212, 4294901760
        %v5417 = vsub.f32 %v212, %v5416
        %5418 = vmatpush.msra.mxu0 %v5417
        %v5419 = vand.u32 %v211, 4294901760
        %v5420 = vsub.f32 %v211, %v5419
        %5421 = vmatpush.msra.mxu0 %v5420
        %v5422 = vand.u32 %v5011, 4294901760
        %v5423 = vsub.f32 %v5011, %v5422
        %5424 = vmatmul.f32.gmra.mxu0 %v5423
        %v5425 = vpop.f32.mrf.mxu0
        %v5426 = vadd.f32 %v5384, %v5425
        %v5427 = vand.u32 %v5014, 4294901760
        %v5428 = vsub.f32 %v5014, %v5427
        %5429 = vmatmul.f32.gmra.mxu0 %v5428
        %v5430 = vpop.f32.mrf.mxu0
        %v5431 = vadd.f32 %v5388, %v5430
        %5432 = vdwg.mxu0
        %5433 = vmatpush.msra.mxu0 0.0
        %5434 = vmatpush.msra.mxu0 0.0
        %5435 = vmatpush.msra.mxu0 0.0
        %5436 = vmatpush.msra.mxu0 0.0
        %5437 = vmatpush.msra.mxu0 0.0
        %5438 = vmatpush.msra.mxu0 0.0
        %5439 = vmatpush.msra.mxu0 0.0
        %5440 = vmatpush.msra.mxu0 0.0
        %v5441 = vand.u32 %v218, 4294901760
        %5442 = vmatpush.msra.mxu0 %v5441
        %v5443 = vand.u32 %v217, 4294901760
        %5444 = vmatpush.msra.mxu0 %v5443
        %v5445 = vand.u32 %v216, 4294901760
        %5446 = vmatpush.msra.mxu0 %v5445
        %v5447 = vand.u32 %v215, 4294901760
        %5448 = vmatpush.msra.mxu0 %v5447
        %v5449 = vand.u32 %v214, 4294901760
        %5450 = vmatpush.msra.mxu0 %v5449
        %v5451 = vand.u32 %v213, 4294901760
        %5452 = vmatpush.msra.mxu0 %v5451
        %v5453 = vand.u32 %v212, 4294901760
        %5454 = vmatpush.msra.mxu0 %v5453
        %v5455 = vand.u32 %v211, 4294901760
        %5456 = vmatpush.msra.mxu0 %v5455
        %v5457 = vand.u32 %v5011, 4294901760
        %v5458 = vsub.f32 %v5011, %v5457
        %v5459 = vand.u32 %v5458, 4294901760
        %5460 = vmatmul.f32.gmra.mxu0 %v5459
        %v5461 = vpop.f32.mrf.mxu0
        %v5462 = vadd.f32 %v5426, %v5461
        %v5463 = vand.u32 %v5014, 4294901760
        %v5464 = vsub.f32 %v5014, %v5463
        %v5465 = vand.u32 %v5464, 4294901760
        %5466 = vmatmul.f32.gmra.mxu0 %v5465
        %v5467 = vpop.f32.mrf.mxu0
        %v5468 = vadd.f32 %v5431, %v5467
        %5469 = vdwg.mxu0
        %5470 = vmatpush.msra.mxu0 0.0
        %5471 = vmatpush.msra.mxu0 0.0
        %5472 = vmatpush.msra.mxu0 0.0
        %5473 = vmatpush.msra.mxu0 0.0
        %5474 = vmatpush.msra.mxu0 0.0
        %5475 = vmatpush.msra.mxu0 0.0
        %5476 = vmatpush.msra.mxu0 0.0
        %5477 = vmatpush.msra.mxu0 0.0
        %v5478 = vand.u32 %v218, 4294901760
        %v5479 = vsub.f32 %v218, %v5478
        %v5480 = vand.u32 %v5479, 4294901760
        %5481 = vmatpush.msra.mxu0 %v5480
        %v5482 = vand.u32 %v217, 4294901760
        %v5483 = vsub.f32 %v217, %v5482
        %v5484 = vand.u32 %v5483, 4294901760
        %5485 = vmatpush.msra.mxu0 %v5484
        %v5486 = vand.u32 %v216, 4294901760
        %v5487 = vsub.f32 %v216, %v5486
        %v5488 = vand.u32 %v5487, 4294901760
        %5489 = vmatpush.msra.mxu0 %v5488
        %v5490 = vand.u32 %v215, 4294901760
        %v5491 = vsub.f32 %v215, %v5490
        %v5492 = vand.u32 %v5491, 4294901760
        %5493 = vmatpush.msra.mxu0 %v5492
        %v5494 = vand.u32 %v214, 4294901760
        %v5495 = vsub.f32 %v214, %v5494
        %v5496 = vand.u32 %v5495, 4294901760
        %5497 = vmatpush.msra.mxu0 %v5496
        %v5498 = vand.u32 %v213, 4294901760
        %v5499 = vsub.f32 %v213, %v5498
        %v5500 = vand.u32 %v5499, 4294901760
        %5501 = vmatpush.msra.mxu0 %v5500
        %v5502 = vand.u32 %v212, 4294901760
        %v5503 = vsub.f32 %v212, %v5502
        %v5504 = vand.u32 %v5503, 4294901760
        %5505 = vmatpush.msra.mxu0 %v5504
        %v5506 = vand.u32 %v211, 4294901760
        %v5507 = vsub.f32 %v211, %v5506
        %v5508 = vand.u32 %v5507, 4294901760
        %5509 = vmatpush.msra.mxu0 %v5508
        %v5510 = vand.u32 %v5011, 4294901760
        %5511 = vmatmul.f32.gmra.mxu0 %v5510
        %v5512 = vpop.f32.mrf.mxu0
        %v5513 = vadd.f32 %v5462, %v5512
        %v5514 = vand.u32 %v5014, 4294901760
        %5515 = vmatmul.f32.gmra.mxu0 %v5514
        %v5516 = vpop.f32.mrf.mxu0
        %v5517 = vadd.f32 %v5468, %v5516
        %5518 = vdwg.mxu0
        %5519 = vmatpush.msra.mxu0 0.0
        %5520 = vmatpush.msra.mxu0 0.0
        %5521 = vmatpush.msra.mxu0 0.0
        %5522 = vmatpush.msra.mxu0 0.0
        %5523 = vmatpush.msra.mxu0 0.0
        %5524 = vmatpush.msra.mxu0 0.0
        %5525 = vmatpush.msra.mxu0 0.0
        %5526 = vmatpush.msra.mxu0 0.0
        %v5527 = vand.u32 %v218, 4294901760
        %5528 = vmatpush.msra.mxu0 %v5527
        %v5529 = vand.u32 %v217, 4294901760
        %5530 = vmatpush.msra.mxu0 %v5529
        %v5531 = vand.u32 %v216, 4294901760
        %5532 = vmatpush.msra.mxu0 %v5531
        %v5533 = vand.u32 %v215, 4294901760
        %5534 = vmatpush.msra.mxu0 %v5533
        %v5535 = vand.u32 %v214, 4294901760
        %5536 = vmatpush.msra.mxu0 %v5535
        %v5537 = vand.u32 %v213, 4294901760
        %5538 = vmatpush.msra.mxu0 %v5537
        %v5539 = vand.u32 %v212, 4294901760
        %5540 = vmatpush.msra.mxu0 %v5539
        %v5541 = vand.u32 %v211, 4294901760
        %5542 = vmatpush.msra.mxu0 %v5541
        %v5543 = vand.u32 %v5011, 4294901760
        %5544 = vmatmul.f32.gmra.mxu0 %v5543
        %v5545 = vpop.f32.mrf.mxu0
        %v5546 = vadd.f32 %v5513, %v5545
        %v5547 = vand.u32 %v5014, 4294901760
        %5548 = vmatmul.f32.gmra.mxu0 %v5547
        %v5549 = vpop.f32.mrf.mxu0
        %v5550 = vadd.f32 %v5517, %v5549
        %5551 = vdwg.mxu0
        %v5553 = vsel %vm221, %v5278, 0
        %v5556 = vsel %vm221, %v5282, 0
        %v5559 = vsel %vm221, %v5546, 0
        %v5562 = vsel %vm221, %v5550, 0
        %5564 = vmatpush.xpose.msra.mxu0 0.0
        %5565 = vmatpush.xpose.msra.mxu0 0.0
        %5566 = vmatpush.xpose.msra.mxu0 0.0
        %5567 = vmatpush.xpose.msra.mxu0 0.0
        %5568 = vmatpush.xpose.msra.mxu0 0.0
        %5569 = vmatpush.xpose.msra.mxu0 0.0
        %5570 = vmatpush.xpose.msra.mxu0 0.0
        %5571 = vmatpush.xpose.msra.mxu0 0.0
        %5572 = vmatpush.xpose.msra.mxu0 0.0
        %5573 = vmatpush.xpose.msra.mxu0 0.0
        %5574 = vmatpush.xpose.msra.mxu0 0.0
        %5575 = vmatpush.xpose.msra.mxu0 0.0
        %5576 = vmatpush.xpose.msra.mxu0 0.0
        %5577 = vmatpush.xpose.msra.mxu0 0.0
        %v5578 = vand.u32 %v5562, 4294901760
        %5579 = vmatpush.xpose.msra.mxu0 %v5578
        %v5580 = vand.u32 %v5559, 4294901760
        %5581 = vmatpush.xpose.msra.mxu0 %v5580
        %v5582 = vand.u32 %v5553, 4294901760
        %v5583 = vsub.f32 %v5553, %v5582
        %v5584 = vand.u32 %v5583, 4294901760
        %v5585 = vsub.f32 %v5583, %v5584
        %v5586 = vand.u32 %v5585, 4294901760
        %5587 = vmatmul.f32.gmra.mxu0 %v5586
        %v5588 = vpop.f32.mrf.mxu0
        %v5589 = vadd.f32 0.0, %v5588
        %v5590 = vand.u32 %v5556, 4294901760
        %v5591 = vsub.f32 %v5556, %v5590
        %v5592 = vand.u32 %v5591, 4294901760
        %v5593 = vsub.f32 %v5591, %v5592
        %v5594 = vand.u32 %v5593, 4294901760
        %5595 = vmatmul.f32.gmra.mxu0 %v5594
        %v5596 = vpop.f32.mrf.mxu0
        %v5597 = vadd.f32 0.0, %v5596
        %5598 = vdwg.mxu0
        %5599 = vmatpush.xpose.msra.mxu0 0.0
        %5600 = vmatpush.xpose.msra.mxu0 0.0
        %5601 = vmatpush.xpose.msra.mxu0 0.0
        %5602 = vmatpush.xpose.msra.mxu0 0.0
        %5603 = vmatpush.xpose.msra.mxu0 0.0
        %5604 = vmatpush.xpose.msra.mxu0 0.0
        %5605 = vmatpush.xpose.msra.mxu0 0.0
        %5606 = vmatpush.xpose.msra.mxu0 0.0
        %5607 = vmatpush.xpose.msra.mxu0 0.0
        %5608 = vmatpush.xpose.msra.mxu0 0.0
        %5609 = vmatpush.xpose.msra.mxu0 0.0
        %5610 = vmatpush.xpose.msra.mxu0 0.0
        %5611 = vmatpush.xpose.msra.mxu0 0.0
        %5612 = vmatpush.xpose.msra.mxu0 0.0
        %v5613 = vand.u32 %v5562, 4294901760
        %v5614 = vsub.f32 %v5562, %v5613
        %v5615 = vand.u32 %v5614, 4294901760
        %v5616 = vsub.f32 %v5614, %v5615
        %v5617 = vand.u32 %v5616, 4294901760
        %5618 = vmatpush.xpose.msra.mxu0 %v5617
        %v5619 = vand.u32 %v5559, 4294901760
        %v5620 = vsub.f32 %v5559, %v5619
        %v5621 = vand.u32 %v5620, 4294901760
        %v5622 = vsub.f32 %v5620, %v5621
        %v5623 = vand.u32 %v5622, 4294901760
        %5624 = vmatpush.xpose.msra.mxu0 %v5623
        %v5625 = vand.u32 %v5553, 4294901760
        %5626 = vmatmul.f32.gmra.mxu0 %v5625
        %v5627 = vpop.f32.mrf.mxu0
        %v5628 = vadd.f32 %v5589, %v5627
        %v5629 = vand.u32 %v5556, 4294901760
        %5630 = vmatmul.f32.gmra.mxu0 %v5629
        %v5631 = vpop.f32.mrf.mxu0
        %v5632 = vadd.f32 %v5597, %v5631
        %5633 = vdwg.mxu0
        %5634 = vmatpush.xpose.msra.mxu0 0.0
        %5635 = vmatpush.xpose.msra.mxu0 0.0
        %5636 = vmatpush.xpose.msra.mxu0 0.0
        %5637 = vmatpush.xpose.msra.mxu0 0.0
        %5638 = vmatpush.xpose.msra.mxu0 0.0
        %5639 = vmatpush.xpose.msra.mxu0 0.0
        %5640 = vmatpush.xpose.msra.mxu0 0.0
        %5641 = vmatpush.xpose.msra.mxu0 0.0
        %5642 = vmatpush.xpose.msra.mxu0 0.0
        %5643 = vmatpush.xpose.msra.mxu0 0.0
        %5644 = vmatpush.xpose.msra.mxu0 0.0
        %5645 = vmatpush.xpose.msra.mxu0 0.0
        %5646 = vmatpush.xpose.msra.mxu0 0.0
        %5647 = vmatpush.xpose.msra.mxu0 0.0
        %v5648 = vand.u32 %v5562, 4294901760
        %v5649 = vsub.f32 %v5562, %v5648
        %5650 = vmatpush.xpose.msra.mxu0 %v5649
        %v5651 = vand.u32 %v5559, 4294901760
        %v5652 = vsub.f32 %v5559, %v5651
        %5653 = vmatpush.xpose.msra.mxu0 %v5652
        %v5654 = vand.u32 %v5553, 4294901760
        %v5655 = vsub.f32 %v5553, %v5654
        %5656 = vmatmul.f32.gmra.mxu0 %v5655
        %v5657 = vpop.f32.mrf.mxu0
        %v5658 = vadd.f32 %v5628, %v5657
        %v5659 = vand.u32 %v5556, 4294901760
        %v5660 = vsub.f32 %v5556, %v5659
        %5661 = vmatmul.f32.gmra.mxu0 %v5660
        %v5662 = vpop.f32.mrf.mxu0
        %v5663 = vadd.f32 %v5632, %v5662
        %5664 = vdwg.mxu0
        %5665 = vmatpush.xpose.msra.mxu0 0.0
        %5666 = vmatpush.xpose.msra.mxu0 0.0
        %5667 = vmatpush.xpose.msra.mxu0 0.0
        %5668 = vmatpush.xpose.msra.mxu0 0.0
        %5669 = vmatpush.xpose.msra.mxu0 0.0
        %5670 = vmatpush.xpose.msra.mxu0 0.0
        %5671 = vmatpush.xpose.msra.mxu0 0.0
        %5672 = vmatpush.xpose.msra.mxu0 0.0
        %5673 = vmatpush.xpose.msra.mxu0 0.0
        %5674 = vmatpush.xpose.msra.mxu0 0.0
        %5675 = vmatpush.xpose.msra.mxu0 0.0
        %5676 = vmatpush.xpose.msra.mxu0 0.0
        %5677 = vmatpush.xpose.msra.mxu0 0.0
        %5678 = vmatpush.xpose.msra.mxu0 0.0
        %v5679 = vand.u32 %v5562, 4294901760
        %5680 = vmatpush.xpose.msra.mxu0 %v5679
        %v5681 = vand.u32 %v5559, 4294901760
        %5682 = vmatpush.xpose.msra.mxu0 %v5681
        %v5683 = vand.u32 %v5553, 4294901760
        %v5684 = vsub.f32 %v5553, %v5683
        %v5685 = vand.u32 %v5684, 4294901760
        %5686 = vmatmul.f32.gmra.mxu0 %v5685
        %v5687 = vpop.f32.mrf.mxu0
        %v5688 = vadd.f32 %v5658, %v5687
        %v5689 = vand.u32 %v5556, 4294901760
        %v5690 = vsub.f32 %v5556, %v5689
        %v5691 = vand.u32 %v5690, 4294901760
        %5692 = vmatmul.f32.gmra.mxu0 %v5691
        %v5693 = vpop.f32.mrf.mxu0
        %v5694 = vadd.f32 %v5663, %v5693
        %5695 = vdwg.mxu0
        %5696 = vmatpush.xpose.msra.mxu0 0.0
        %5697 = vmatpush.xpose.msra.mxu0 0.0
        %5698 = vmatpush.xpose.msra.mxu0 0.0
        %5699 = vmatpush.xpose.msra.mxu0 0.0
        %5700 = vmatpush.xpose.msra.mxu0 0.0
        %5701 = vmatpush.xpose.msra.mxu0 0.0
        %5702 = vmatpush.xpose.msra.mxu0 0.0
        %5703 = vmatpush.xpose.msra.mxu0 0.0
        %5704 = vmatpush.xpose.msra.mxu0 0.0
        %5705 = vmatpush.xpose.msra.mxu0 0.0
        %5706 = vmatpush.xpose.msra.mxu0 0.0
        %5707 = vmatpush.xpose.msra.mxu0 0.0
        %5708 = vmatpush.xpose.msra.mxu0 0.0
        %5709 = vmatpush.xpose.msra.mxu0 0.0
        %v5710 = vand.u32 %v5562, 4294901760
        %v5711 = vsub.f32 %v5562, %v5710
        %v5712 = vand.u32 %v5711, 4294901760
        %5713 = vmatpush.xpose.msra.mxu0 %v5712
        %v5714 = vand.u32 %v5559, 4294901760
        %v5715 = vsub.f32 %v5559, %v5714
        %v5716 = vand.u32 %v5715, 4294901760
        %5717 = vmatpush.xpose.msra.mxu0 %v5716
        %v5718 = vand.u32 %v5553, 4294901760
        %5719 = vmatmul.f32.gmra.mxu0 %v5718
        %v5720 = vpop.f32.mrf.mxu0
        %v5721 = vadd.f32 %v5688, %v5720
        %v5722 = vand.u32 %v5556, 4294901760
        %5723 = vmatmul.f32.gmra.mxu0 %v5722
        %v5724 = vpop.f32.mrf.mxu0
        %v5725 = vadd.f32 %v5694, %v5724
        %5726 = vdwg.mxu0
        %5727 = vmatpush.xpose.msra.mxu0 0.0
        %5728 = vmatpush.xpose.msra.mxu0 0.0
        %5729 = vmatpush.xpose.msra.mxu0 0.0
        %5730 = vmatpush.xpose.msra.mxu0 0.0
        %5731 = vmatpush.xpose.msra.mxu0 0.0
        %5732 = vmatpush.xpose.msra.mxu0 0.0
        %5733 = vmatpush.xpose.msra.mxu0 0.0
        %5734 = vmatpush.xpose.msra.mxu0 0.0
        %5735 = vmatpush.xpose.msra.mxu0 0.0
        %5736 = vmatpush.xpose.msra.mxu0 0.0
        %5737 = vmatpush.xpose.msra.mxu0 0.0
        %5738 = vmatpush.xpose.msra.mxu0 0.0
        %5739 = vmatpush.xpose.msra.mxu0 0.0
        %5740 = vmatpush.xpose.msra.mxu0 0.0
        %v5741 = vand.u32 %v5562, 4294901760
        %5742 = vmatpush.xpose.msra.mxu0 %v5741
        %v5743 = vand.u32 %v5559, 4294901760
        %5744 = vmatpush.xpose.msra.mxu0 %v5743
        %v5745 = vand.u32 %v5553, 4294901760
        %5746 = vmatmul.f32.gmra.mxu0 %v5745
        %v5747 = vpop.f32.mrf.mxu0
        %v5748 = vadd.f32 %v5721, %v5747
        %v5749 = vand.u32 %v5556, 4294901760
        %5750 = vmatmul.f32.gmra.mxu0 %v5749
        %v5751 = vpop.f32.mrf.mxu0
        %v5752 = vadd.f32 %v5725, %v5751
        %5753 = vdwg.mxu0
        %v5754 = vsel %vm966, %v5748, -inf
        %5755 = vmax.xlane.f32.xlu0 %v5754
        %v5756 = vpop.xlane.xlu0 %5755
        %v5757 = vsel %vm966, %v5752, -inf
        %5758 = vmax.xlane.f32.xlu0 %v5757
        %v5759 = vpop.xlane.xlu0 %5758
        %v5760 = vsub.f32 %v5748, %v5756
        %v5761 = vsub.f32 %v5752, %v5759
        %v5762 = vmul.f32 %v5760, 1.442695
        %v5763 = vpow.pop %v5762
        %v5764 = vmul.f32 %v5761, 1.442695
        %v5765 = vpow.pop %v5764
        %v5766 = vsel %vm966, %v5763, 0.0
        %5767 = vadd.xlane.f32.xlu0 %v5766
        %v5768 = vpop.xlane.xlu0 %5767
        %v5769 = vsel %vm966, %v5765, 0.0
        %5770 = vadd.xlane.f32.xlu0 %v5769
        %v5771 = vpop.xlane.xlu0 %5770
        %v5772 = vrcp.pop %v5768
        %v5773 = vmul.f32 %v5768, %v5772
        %v5774 = vsub.f32 1.0, %v5773
        %v5775 = vmul.f32 %v5772, %v5774
        %v5776 = vadd.f32 %v5772, %v5775
        %vm5777 = vweird.f32 %v5768
        %vm5778 = vweird.f32 %v5772
        %vm5779 = vmor %vm5777, %vm5778
        %v5780 = vsel %vm5779, %v5772, %v5776
        %v5781 = vand.u32 2147483647, %v5768
        %vm5782 = vcmp.eq.f32.partialorder %v5781, 8.507059e+37
        %v5783 = vand.u32 %v5768, 2147483648
        %v5784 = vor.u32 1.1754944e-38, %v5783
        %v5785 = vsel %vm5782, %v5784, %v5780
        %v5786 = vmul.f32 %v5763, %v5785
        %v5787 = vrcp.pop %v5771
        %v5788 = vmul.f32 %v5771, %v5787
        %v5789 = vsub.f32 1.0, %v5788
        %v5790 = vmul.f32 %v5787, %v5789
        %v5791 = vadd.f32 %v5787, %v5790
        %vm5792 = vweird.f32 %v5771
        %vm5793 = vweird.f32 %v5787
        %vm5794 = vmor %vm5792, %vm5793
        %v5795 = vsel %vm5794, %v5787, %v5791
        %v5796 = vand.u32 2147483647, %v5771
        %vm5797 = vcmp.eq.f32.partialorder %v5796, 8.507059e+37
        %v5798 = vand.u32 %v5771, 2147483648
        %v5799 = vor.u32 1.1754944e-38, %v5798
        %v5800 = vsel %vm5797, %v5799, %v5795
        %v5801 = vmul.f32 %v5765, %v5800
        %s5802 = scalar_lea.vmem %s190, 96 [#allocation2]
        %5803 = vst.msk [vmem:[%s5802] sm:$0xff] %vm966, %v5786
        %5804 = vst.msk [vmem:[%s5802 + $0x8] sm:$0xff] %vm966, %v5801
        %s5805 = scalar_lea.vmem %s200, 112
        %v5806 = vld [vmem:[%s5805] sm:$0xff]
        %v5807 = vld [vmem:[%s5805 + $0x8] sm:$0xff]
        %v5809 = vsel %vm221, %v5806, 0
        %v5812 = vsel %vm221, %v5807, 0
        %5814 = vmatpush.msra.mxu0 0.0
        %5815 = vmatpush.msra.mxu0 0.0
        %5816 = vmatpush.msra.mxu0 0.0
        %5817 = vmatpush.msra.mxu0 0.0
        %5818 = vmatpush.msra.mxu0 0.0
        %5819 = vmatpush.msra.mxu0 0.0
        %5820 = vmatpush.msra.mxu0 0.0
        %5821 = vmatpush.msra.mxu0 0.0
        %v5822 = vand.u32 %v210, 4294901760
        %5823 = vmatpush.msra.mxu0 %v5822
        %v5824 = vand.u32 %v209, 4294901760
        %5825 = vmatpush.msra.mxu0 %v5824
        %v5826 = vand.u32 %v208, 4294901760
        %5827 = vmatpush.msra.mxu0 %v5826
        %v5828 = vand.u32 %v207, 4294901760
        %5829 = vmatpush.msra.mxu0 %v5828
        %v5830 = vand.u32 %v206, 4294901760
        %5831 = vmatpush.msra.mxu0 %v5830
        %v5832 = vand.u32 %v205, 4294901760
        %5833 = vmatpush.msra.mxu0 %v5832
        %v5834 = vand.u32 %v204, 4294901760
        %5835 = vmatpush.msra.mxu0 %v5834
        %v5836 = vand.u32 %v203, 4294901760
        %5837 = vmatpush.msra.mxu0 %v5836
        %v5838 = vand.u32 %v5809, 4294901760
        %v5839 = vsub.f32 %v5809, %v5838
        %v5840 = vand.u32 %v5839, 4294901760
        %v5841 = vsub.f32 %v5839, %v5840
        %v5842 = vand.u32 %v5841, 4294901760
        %5843 = vmatmul.f32.gmra.mxu0 %v5842
        %v5844 = vpop.f32.mrf.mxu0
        %v5845 = vadd.f32 0.0, %v5844
        %v5846 = vand.u32 %v5812, 4294901760
        %v5847 = vsub.f32 %v5812, %v5846
        %v5848 = vand.u32 %v5847, 4294901760
        %v5849 = vsub.f32 %v5847, %v5848
        %v5850 = vand.u32 %v5849, 4294901760
        %5851 = vmatmul.f32.gmra.mxu0 %v5850
        %v5852 = vpop.f32.mrf.mxu0
        %v5853 = vadd.f32 0.0, %v5852
        %5854 = vdwg.mxu0
        %5855 = vmatpush.msra.mxu0 0.0
        %5856 = vmatpush.msra.mxu0 0.0
        %5857 = vmatpush.msra.mxu0 0.0
        %5858 = vmatpush.msra.mxu0 0.0
        %5859 = vmatpush.msra.mxu0 0.0
        %5860 = vmatpush.msra.mxu0 0.0
        %5861 = vmatpush.msra.mxu0 0.0
        %5862 = vmatpush.msra.mxu0 0.0
        %v5863 = vand.u32 %v210, 4294901760
        %v5864 = vsub.f32 %v210, %v5863
        %v5865 = vand.u32 %v5864, 4294901760
        %v5866 = vsub.f32 %v5864, %v5865
        %v5867 = vand.u32 %v5866, 4294901760
        %5868 = vmatpush.msra.mxu0 %v5867
        %v5869 = vand.u32 %v209, 4294901760
        %v5870 = vsub.f32 %v209, %v5869
        %v5871 = vand.u32 %v5870, 4294901760
        %v5872 = vsub.f32 %v5870, %v5871
        %v5873 = vand.u32 %v5872, 4294901760
        %5874 = vmatpush.msra.mxu0 %v5873
        %v5875 = vand.u32 %v208, 4294901760
        %v5876 = vsub.f32 %v208, %v5875
        %v5877 = vand.u32 %v5876, 4294901760
        %v5878 = vsub.f32 %v5876, %v5877
        %v5879 = vand.u32 %v5878, 4294901760
        %5880 = vmatpush.msra.mxu0 %v5879
        %v5881 = vand.u32 %v207, 4294901760
        %v5882 = vsub.f32 %v207, %v5881
        %v5883 = vand.u32 %v5882, 4294901760
        %v5884 = vsub.f32 %v5882, %v5883
        %v5885 = vand.u32 %v5884, 4294901760
        %5886 = vmatpush.msra.mxu0 %v5885
        %v5887 = vand.u32 %v206, 4294901760
        %v5888 = vsub.f32 %v206, %v5887
        %v5889 = vand.u32 %v5888, 4294901760
        %v5890 = vsub.f32 %v5888, %v5889
        %v5891 = vand.u32 %v5890, 4294901760
        %5892 = vmatpush.msra.mxu0 %v5891
        %v5893 = vand.u32 %v205, 4294901760
        %v5894 = vsub.f32 %v205, %v5893
        %v5895 = vand.u32 %v5894, 4294901760
        %v5896 = vsub.f32 %v5894, %v5895
        %v5897 = vand.u32 %v5896, 4294901760
        %5898 = vmatpush.msra.mxu0 %v5897
        %v5899 = vand.u32 %v204, 4294901760
        %v5900 = vsub.f32 %v204, %v5899
        %v5901 = vand.u32 %v5900, 4294901760
        %v5902 = vsub.f32 %v5900, %v5901
        %v5903 = vand.u32 %v5902, 4294901760
        %5904 = vmatpush.msra.mxu0 %v5903
        %v5905 = vand.u32 %v203, 4294901760
        %v5906 = vsub.f32 %v203, %v5905
        %v5907 = vand.u32 %v5906, 4294901760
        %v5908 = vsub.f32 %v5906, %v5907
        %v5909 = vand.u32 %v5908, 4294901760
        %5910 = vmatpush.msra.mxu0 %v5909
        %v5911 = vand.u32 %v5809, 4294901760
        %5912 = vmatmul.f32.gmra.mxu0 %v5911
        %v5913 = vpop.f32.mrf.mxu0
        %v5914 = vadd.f32 %v5845, %v5913
        %v5915 = vand.u32 %v5812, 4294901760
        %5916 = vmatmul.f32.gmra.mxu0 %v5915
        %v5917 = vpop.f32.mrf.mxu0
        %v5918 = vadd.f32 %v5853, %v5917
        %5919 = vdwg.mxu0
        %5920 = vmatpush.msra.mxu0 0.0
        %5921 = vmatpush.msra.mxu0 0.0
        %5922 = vmatpush.msra.mxu0 0.0
        %5923 = vmatpush.msra.mxu0 0.0
        %5924 = vmatpush.msra.mxu0 0.0
        %5925 = vmatpush.msra.mxu0 0.0
        %5926 = vmatpush.msra.mxu0 0.0
        %5927 = vmatpush.msra.mxu0 0.0
        %v5928 = vand.u32 %v210, 4294901760
        %v5929 = vsub.f32 %v210, %v5928
        %5930 = vmatpush.msra.mxu0 %v5929
        %v5931 = vand.u32 %v209, 4294901760
        %v5932 = vsub.f32 %v209, %v5931
        %5933 = vmatpush.msra.mxu0 %v5932
        %v5934 = vand.u32 %v208, 4294901760
        %v5935 = vsub.f32 %v208, %v5934
        %5936 = vmatpush.msra.mxu0 %v5935
        %v5937 = vand.u32 %v207, 4294901760
        %v5938 = vsub.f32 %v207, %v5937
        %5939 = vmatpush.msra.mxu0 %v5938
        %v5940 = vand.u32 %v206, 4294901760
        %v5941 = vsub.f32 %v206, %v5940
        %5942 = vmatpush.msra.mxu0 %v5941
        %v5943 = vand.u32 %v205, 4294901760
        %v5944 = vsub.f32 %v205, %v5943
        %5945 = vmatpush.msra.mxu0 %v5944
        %v5946 = vand.u32 %v204, 4294901760
        %v5947 = vsub.f32 %v204, %v5946
        %5948 = vmatpush.msra.mxu0 %v5947
        %v5949 = vand.u32 %v203, 4294901760
        %v5950 = vsub.f32 %v203, %v5949
        %5951 = vmatpush.msra.mxu0 %v5950
        %v5952 = vand.u32 %v5809, 4294901760
        %v5953 = vsub.f32 %v5809, %v5952
        %5954 = vmatmul.f32.gmra.mxu0 %v5953
        %v5955 = vpop.f32.mrf.mxu0
        %v5956 = vadd.f32 %v5914, %v5955
        %v5957 = vand.u32 %v5812, 4294901760
        %v5958 = vsub.f32 %v5812, %v5957
        %5959 = vmatmul.f32.gmra.mxu0 %v5958
        %v5960 = vpop.f32.mrf.mxu0
        %v5961 = vadd.f32 %v5918, %v5960
        %5962 = vdwg.mxu0
        %5963 = vmatpush.msra.mxu0 0.0
        %5964 = vmatpush.msra.mxu0 0.0
        %5965 = vmatpush.msra.mxu0 0.0
        %5966 = vmatpush.msra.mxu0 0.0
        %5967 = vmatpush.msra.mxu0 0.0
        %5968 = vmatpush.msra.mxu0 0.0
        %5969 = vmatpush.msra.mxu0 0.0
        %5970 = vmatpush.msra.mxu0 0.0
        %v5971 = vand.u32 %v210, 4294901760
        %5972 = vmatpush.msra.mxu0 %v5971
        %v5973 = vand.u32 %v209, 4294901760
        %5974 = vmatpush.msra.mxu0 %v5973
        %v5975 = vand.u32 %v208, 4294901760
        %5976 = vmatpush.msra.mxu0 %v5975
        %v5977 = vand.u32 %v207, 4294901760
        %5978 = vmatpush.msra.mxu0 %v5977
        %v5979 = vand.u32 %v206, 4294901760
        %5980 = vmatpush.msra.mxu0 %v5979
        %v5981 = vand.u32 %v205, 4294901760
        %5982 = vmatpush.msra.mxu0 %v5981
        %v5983 = vand.u32 %v204, 4294901760
        %5984 = vmatpush.msra.mxu0 %v5983
        %v5985 = vand.u32 %v203, 4294901760
        %5986 = vmatpush.msra.mxu0 %v5985
        %v5987 = vand.u32 %v5809, 4294901760
        %v5988 = vsub.f32 %v5809, %v5987
        %v5989 = vand.u32 %v5988, 4294901760
        %5990 = vmatmul.f32.gmra.mxu0 %v5989
        %v5991 = vpop.f32.mrf.mxu0
        %v5992 = vadd.f32 %v5956, %v5991
        %v5993 = vand.u32 %v5812, 4294901760
        %v5994 = vsub.f32 %v5812, %v5993
        %v5995 = vand.u32 %v5994, 4294901760
        %5996 = vmatmul.f32.gmra.mxu0 %v5995
        %v5997 = vpop.f32.mrf.mxu0
        %v5998 = vadd.f32 %v5961, %v5997
        %5999 = vdwg.mxu0
        %6000 = vmatpush.msra.mxu0 0.0
        %6001 = vmatpush.msra.mxu0 0.0
        %6002 = vmatpush.msra.mxu0 0.0
        %6003 = vmatpush.msra.mxu0 0.0
        %6004 = vmatpush.msra.mxu0 0.0
        %6005 = vmatpush.msra.mxu0 0.0
        %6006 = vmatpush.msra.mxu0 0.0
        %6007 = vmatpush.msra.mxu0 0.0
        %v6008 = vand.u32 %v210, 4294901760
        %v6009 = vsub.f32 %v210, %v6008
        %v6010 = vand.u32 %v6009, 4294901760
        %6011 = vmatpush.msra.mxu0 %v6010
        %v6012 = vand.u32 %v209, 4294901760
        %v6013 = vsub.f32 %v209, %v6012
        %v6014 = vand.u32 %v6013, 4294901760
        %6015 = vmatpush.msra.mxu0 %v6014
        %v6016 = vand.u32 %v208, 4294901760
        %v6017 = vsub.f32 %v208, %v6016
        %v6018 = vand.u32 %v6017, 4294901760
        %6019 = vmatpush.msra.mxu0 %v6018
        %v6020 = vand.u32 %v207, 4294901760
        %v6021 = vsub.f32 %v207, %v6020
        %v6022 = vand.u32 %v6021, 4294901760
        %6023 = vmatpush.msra.mxu0 %v6022
        %v6024 = vand.u32 %v206, 4294901760
        %v6025 = vsub.f32 %v206, %v6024
        %v6026 = vand.u32 %v6025, 4294901760
        %6027 = vmatpush.msra.mxu0 %v6026
        %v6028 = vand.u32 %v205, 4294901760
        %v6029 = vsub.f32 %v205, %v6028
        %v6030 = vand.u32 %v6029, 4294901760
        %6031 = vmatpush.msra.mxu0 %v6030
        %v6032 = vand.u32 %v204, 4294901760
        %v6033 = vsub.f32 %v204, %v6032
        %v6034 = vand.u32 %v6033, 4294901760
        %6035 = vmatpush.msra.mxu0 %v6034
        %v6036 = vand.u32 %v203, 4294901760
        %v6037 = vsub.f32 %v203, %v6036
        %v6038 = vand.u32 %v6037, 4294901760
        %6039 = vmatpush.msra.mxu0 %v6038
        %v6040 = vand.u32 %v5809, 4294901760
        %6041 = vmatmul.f32.gmra.mxu0 %v6040
        %v6042 = vpop.f32.mrf.mxu0
        %v6043 = vadd.f32 %v5992, %v6042
        %v6044 = vand.u32 %v5812, 4294901760
        %6045 = vmatmul.f32.gmra.mxu0 %v6044
        %v6046 = vpop.f32.mrf.mxu0
        %v6047 = vadd.f32 %v5998, %v6046
        %6048 = vdwg.mxu0
        %6049 = vmatpush.msra.mxu0 0.0
        %6050 = vmatpush.msra.mxu0 0.0
        %6051 = vmatpush.msra.mxu0 0.0
        %6052 = vmatpush.msra.mxu0 0.0
        %6053 = vmatpush.msra.mxu0 0.0
        %6054 = vmatpush.msra.mxu0 0.0
        %6055 = vmatpush.msra.mxu0 0.0
        %6056 = vmatpush.msra.mxu0 0.0
        %v6057 = vand.u32 %v210, 4294901760
        %6058 = vmatpush.msra.mxu0 %v6057
        %v6059 = vand.u32 %v209, 4294901760
        %6060 = vmatpush.msra.mxu0 %v6059
        %v6061 = vand.u32 %v208, 4294901760
        %6062 = vmatpush.msra.mxu0 %v6061
        %v6063 = vand.u32 %v207, 4294901760
        %6064 = vmatpush.msra.mxu0 %v6063
        %v6065 = vand.u32 %v206, 4294901760
        %6066 = vmatpush.msra.mxu0 %v6065
        %v6067 = vand.u32 %v205, 4294901760
        %6068 = vmatpush.msra.mxu0 %v6067
        %v6069 = vand.u32 %v204, 4294901760
        %6070 = vmatpush.msra.mxu0 %v6069
        %v6071 = vand.u32 %v203, 4294901760
        %6072 = vmatpush.msra.mxu0 %v6071
        %v6073 = vand.u32 %v5809, 4294901760
        %6074 = vmatmul.f32.gmra.mxu0 %v6073
        %v6075 = vpop.f32.mrf.mxu0
        %v6076 = vadd.f32 %v6043, %v6075
        %v6077 = vand.u32 %v5812, 4294901760
        %6078 = vmatmul.f32.gmra.mxu0 %v6077
        %v6079 = vpop.f32.mrf.mxu0
        %v6080 = vadd.f32 %v6047, %v6079
        %6081 = vdwg.mxu0
        %6082 = vmatpush.msra.mxu0 0.0
        %6083 = vmatpush.msra.mxu0 0.0
        %6084 = vmatpush.msra.mxu0 0.0
        %6085 = vmatpush.msra.mxu0 0.0
        %6086 = vmatpush.msra.mxu0 0.0
        %6087 = vmatpush.msra.mxu0 0.0
        %6088 = vmatpush.msra.mxu0 0.0
        %6089 = vmatpush.msra.mxu0 0.0
        %v6090 = vand.u32 %v218, 4294901760
        %6091 = vmatpush.msra.mxu0 %v6090
        %v6092 = vand.u32 %v217, 4294901760
        %6093 = vmatpush.msra.mxu0 %v6092
        %v6094 = vand.u32 %v216, 4294901760
        %6095 = vmatpush.msra.mxu0 %v6094
        %v6096 = vand.u32 %v215, 4294901760
        %6097 = vmatpush.msra.mxu0 %v6096
        %v6098 = vand.u32 %v214, 4294901760
        %6099 = vmatpush.msra.mxu0 %v6098
        %v6100 = vand.u32 %v213, 4294901760
        %6101 = vmatpush.msra.mxu0 %v6100
        %v6102 = vand.u32 %v212, 4294901760
        %6103 = vmatpush.msra.mxu0 %v6102
        %v6104 = vand.u32 %v211, 4294901760
        %6105 = vmatpush.msra.mxu0 %v6104
        %v6106 = vand.u32 %v5809, 4294901760
        %v6107 = vsub.f32 %v5809, %v6106
        %v6108 = vand.u32 %v6107, 4294901760
        %v6109 = vsub.f32 %v6107, %v6108
        %v6110 = vand.u32 %v6109, 4294901760
        %6111 = vmatmul.f32.gmra.mxu0 %v6110
        %v6112 = vpop.f32.mrf.mxu0
        %v6113 = vadd.f32 0.0, %v6112
        %v6114 = vand.u32 %v5812, 4294901760
        %v6115 = vsub.f32 %v5812, %v6114
        %v6116 = vand.u32 %v6115, 4294901760
        %v6117 = vsub.f32 %v6115, %v6116
        %v6118 = vand.u32 %v6117, 4294901760
        %6119 = vmatmul.f32.gmra.mxu0 %v6118
        %v6120 = vpop.f32.mrf.mxu0
        %v6121 = vadd.f32 0.0, %v6120
        %6122 = vdwg.mxu0
        %6123 = vmatpush.msra.mxu0 0.0
        %6124 = vmatpush.msra.mxu0 0.0
        %6125 = vmatpush.msra.mxu0 0.0
        %6126 = vmatpush.msra.mxu0 0.0
        %6127 = vmatpush.msra.mxu0 0.0
        %6128 = vmatpush.msra.mxu0 0.0
        %6129 = vmatpush.msra.mxu0 0.0
        %6130 = vmatpush.msra.mxu0 0.0
        %v6131 = vand.u32 %v218, 4294901760
        %v6132 = vsub.f32 %v218, %v6131
        %v6133 = vand.u32 %v6132, 4294901760
        %v6134 = vsub.f32 %v6132, %v6133
        %v6135 = vand.u32 %v6134, 4294901760
        %6136 = vmatpush.msra.mxu0 %v6135
        %v6137 = vand.u32 %v217, 4294901760
        %v6138 = vsub.f32 %v217, %v6137
        %v6139 = vand.u32 %v6138, 4294901760
        %v6140 = vsub.f32 %v6138, %v6139
        %v6141 = vand.u32 %v6140, 4294901760
        %6142 = vmatpush.msra.mxu0 %v6141
        %v6143 = vand.u32 %v216, 4294901760
        %v6144 = vsub.f32 %v216, %v6143
        %v6145 = vand.u32 %v6144, 4294901760
        %v6146 = vsub.f32 %v6144, %v6145
        %v6147 = vand.u32 %v6146, 4294901760
        %6148 = vmatpush.msra.mxu0 %v6147
        %v6149 = vand.u32 %v215, 4294901760
        %v6150 = vsub.f32 %v215, %v6149
        %v6151 = vand.u32 %v6150, 4294901760
        %v6152 = vsub.f32 %v6150, %v6151
        %v6153 = vand.u32 %v6152, 4294901760
        %6154 = vmatpush.msra.mxu0 %v6153
        %v6155 = vand.u32 %v214, 4294901760
        %v6156 = vsub.f32 %v214, %v6155
        %v6157 = vand.u32 %v6156, 4294901760
        %v6158 = vsub.f32 %v6156, %v6157
        %v6159 = vand.u32 %v6158, 4294901760
        %6160 = vmatpush.msra.mxu0 %v6159
        %v6161 = vand.u32 %v213, 4294901760
        %v6162 = vsub.f32 %v213, %v6161
        %v6163 = vand.u32 %v6162, 4294901760
        %v6164 = vsub.f32 %v6162, %v6163
        %v6165 = vand.u32 %v6164, 4294901760
        %6166 = vmatpush.msra.mxu0 %v6165
        %v6167 = vand.u32 %v212, 4294901760
        %v6168 = vsub.f32 %v212, %v6167
        %v6169 = vand.u32 %v6168, 4294901760
        %v6170 = vsub.f32 %v6168, %v6169
        %v6171 = vand.u32 %v6170, 4294901760
        %6172 = vmatpush.msra.mxu0 %v6171
        %v6173 = vand.u32 %v211, 4294901760
        %v6174 = vsub.f32 %v211, %v6173
        %v6175 = vand.u32 %v6174, 4294901760
        %v6176 = vsub.f32 %v6174, %v6175
        %v6177 = vand.u32 %v6176, 4294901760
        %6178 = vmatpush.msra.mxu0 %v6177
        %v6179 = vand.u32 %v5809, 4294901760
        %6180 = vmatmul.f32.gmra.mxu0 %v6179
        %v6181 = vpop.f32.mrf.mxu0
        %v6182 = vadd.f32 %v6113, %v6181
        %v6183 = vand.u32 %v5812, 4294901760
        %6184 = vmatmul.f32.gmra.mxu0 %v6183
        %v6185 = vpop.f32.mrf.mxu0
        %v6186 = vadd.f32 %v6121, %v6185
        %6187 = vdwg.mxu0
        %6188 = vmatpush.msra.mxu0 0.0
        %6189 = vmatpush.msra.mxu0 0.0
        %6190 = vmatpush.msra.mxu0 0.0
        %6191 = vmatpush.msra.mxu0 0.0
        %6192 = vmatpush.msra.mxu0 0.0
        %6193 = vmatpush.msra.mxu0 0.0
        %6194 = vmatpush.msra.mxu0 0.0
        %6195 = vmatpush.msra.mxu0 0.0
        %v6196 = vand.u32 %v218, 4294901760
        %v6197 = vsub.f32 %v218, %v6196
        %6198 = vmatpush.msra.mxu0 %v6197
        %v6199 = vand.u32 %v217, 4294901760
        %v6200 = vsub.f32 %v217, %v6199
        %6201 = vmatpush.msra.mxu0 %v6200
        %v6202 = vand.u32 %v216, 4294901760
        %v6203 = vsub.f32 %v216, %v6202
        %6204 = vmatpush.msra.mxu0 %v6203
        %v6205 = vand.u32 %v215, 4294901760
        %v6206 = vsub.f32 %v215, %v6205
        %6207 = vmatpush.msra.mxu0 %v6206
        %v6208 = vand.u32 %v214, 4294901760
        %v6209 = vsub.f32 %v214, %v6208
        %6210 = vmatpush.msra.mxu0 %v6209
        %v6211 = vand.u32 %v213, 4294901760
        %v6212 = vsub.f32 %v213, %v6211
        %6213 = vmatpush.msra.mxu0 %v6212
        %v6214 = vand.u32 %v212, 4294901760
        %v6215 = vsub.f32 %v212, %v6214
        %6216 = vmatpush.msra.mxu0 %v6215
        %v6217 = vand.u32 %v211, 4294901760
        %v6218 = vsub.f32 %v211, %v6217
        %6219 = vmatpush.msra.mxu0 %v6218
        %v6220 = vand.u32 %v5809, 4294901760
        %v6221 = vsub.f32 %v5809, %v6220
        %6222 = vmatmul.f32.gmra.mxu0 %v6221
        %v6223 = vpop.f32.mrf.mxu0
        %v6224 = vadd.f32 %v6182, %v6223
        %v6225 = vand.u32 %v5812, 4294901760
        %v6226 = vsub.f32 %v5812, %v6225
        %6227 = vmatmul.f32.gmra.mxu0 %v6226
        %v6228 = vpop.f32.mrf.mxu0
        %v6229 = vadd.f32 %v6186, %v6228
        %6230 = vdwg.mxu0
        %6231 = vmatpush.msra.mxu0 0.0
        %6232 = vmatpush.msra.mxu0 0.0
        %6233 = vmatpush.msra.mxu0 0.0
        %6234 = vmatpush.msra.mxu0 0.0
        %6235 = vmatpush.msra.mxu0 0.0
        %6236 = vmatpush.msra.mxu0 0.0
        %6237 = vmatpush.msra.mxu0 0.0
        %6238 = vmatpush.msra.mxu0 0.0
        %v6239 = vand.u32 %v218, 4294901760
        %6240 = vmatpush.msra.mxu0 %v6239
        %v6241 = vand.u32 %v217, 4294901760
        %6242 = vmatpush.msra.mxu0 %v6241
        %v6243 = vand.u32 %v216, 4294901760
        %6244 = vmatpush.msra.mxu0 %v6243
        %v6245 = vand.u32 %v215, 4294901760
        %6246 = vmatpush.msra.mxu0 %v6245
        %v6247 = vand.u32 %v214, 4294901760
        %6248 = vmatpush.msra.mxu0 %v6247
        %v6249 = vand.u32 %v213, 4294901760
        %6250 = vmatpush.msra.mxu0 %v6249
        %v6251 = vand.u32 %v212, 4294901760
        %6252 = vmatpush.msra.mxu0 %v6251
        %v6253 = vand.u32 %v211, 4294901760
        %6254 = vmatpush.msra.mxu0 %v6253
        %v6255 = vand.u32 %v5809, 4294901760
        %v6256 = vsub.f32 %v5809, %v6255
        %v6257 = vand.u32 %v6256, 4294901760
        %6258 = vmatmul.f32.gmra.mxu0 %v6257
        %v6259 = vpop.f32.mrf.mxu0
        %v6260 = vadd.f32 %v6224, %v6259
        %v6261 = vand.u32 %v5812, 4294901760
        %v6262 = vsub.f32 %v5812, %v6261
        %v6263 = vand.u32 %v6262, 4294901760
        %6264 = vmatmul.f32.gmra.mxu0 %v6263
        %v6265 = vpop.f32.mrf.mxu0
        %v6266 = vadd.f32 %v6229, %v6265
        %6267 = vdwg.mxu0
        %6268 = vmatpush.msra.mxu0 0.0
        %6269 = vmatpush.msra.mxu0 0.0
        %6270 = vmatpush.msra.mxu0 0.0
        %6271 = vmatpush.msra.mxu0 0.0
        %6272 = vmatpush.msra.mxu0 0.0
        %6273 = vmatpush.msra.mxu0 0.0
        %6274 = vmatpush.msra.mxu0 0.0
        %6275 = vmatpush.msra.mxu0 0.0
        %v6276 = vand.u32 %v218, 4294901760
        %v6277 = vsub.f32 %v218, %v6276
        %v6278 = vand.u32 %v6277, 4294901760
        %6279 = vmatpush.msra.mxu0 %v6278
        %v6280 = vand.u32 %v217, 4294901760
        %v6281 = vsub.f32 %v217, %v6280
        %v6282 = vand.u32 %v6281, 4294901760
        %6283 = vmatpush.msra.mxu0 %v6282
        %v6284 = vand.u32 %v216, 4294901760
        %v6285 = vsub.f32 %v216, %v6284
        %v6286 = vand.u32 %v6285, 4294901760
        %6287 = vmatpush.msra.mxu0 %v6286
        %v6288 = vand.u32 %v215, 4294901760
        %v6289 = vsub.f32 %v215, %v6288
        %v6290 = vand.u32 %v6289, 4294901760
        %6291 = vmatpush.msra.mxu0 %v6290
        %v6292 = vand.u32 %v214, 4294901760
        %v6293 = vsub.f32 %v214, %v6292
        %v6294 = vand.u32 %v6293, 4294901760
        %6295 = vmatpush.msra.mxu0 %v6294
        %v6296 = vand.u32 %v213, 4294901760
        %v6297 = vsub.f32 %v213, %v6296
        %v6298 = vand.u32 %v6297, 4294901760
        %6299 = vmatpush.msra.mxu0 %v6298
        %v6300 = vand.u32 %v212, 4294901760
        %v6301 = vsub.f32 %v212, %v6300
        %v6302 = vand.u32 %v6301, 4294901760
        %6303 = vmatpush.msra.mxu0 %v6302
        %v6304 = vand.u32 %v211, 4294901760
        %v6305 = vsub.f32 %v211, %v6304
        %v6306 = vand.u32 %v6305, 4294901760
        %6307 = vmatpush.msra.mxu0 %v6306
        %v6308 = vand.u32 %v5809, 4294901760
        %6309 = vmatmul.f32.gmra.mxu0 %v6308
        %v6310 = vpop.f32.mrf.mxu0
        %v6311 = vadd.f32 %v6260, %v6310
        %v6312 = vand.u32 %v5812, 4294901760
        %6313 = vmatmul.f32.gmra.mxu0 %v6312
        %v6314 = vpop.f32.mrf.mxu0
        %v6315 = vadd.f32 %v6266, %v6314
        %6316 = vdwg.mxu0
        %6317 = vmatpush.msra.mxu0 0.0
        %6318 = vmatpush.msra.mxu0 0.0
        %6319 = vmatpush.msra.mxu0 0.0
        %6320 = vmatpush.msra.mxu0 0.0
        %6321 = vmatpush.msra.mxu0 0.0
        %6322 = vmatpush.msra.mxu0 0.0
        %6323 = vmatpush.msra.mxu0 0.0
        %6324 = vmatpush.msra.mxu0 0.0
        %v6325 = vand.u32 %v218, 4294901760
        %6326 = vmatpush.msra.mxu0 %v6325
        %v6327 = vand.u32 %v217, 4294901760
        %6328 = vmatpush.msra.mxu0 %v6327
        %v6329 = vand.u32 %v216, 4294901760
        %6330 = vmatpush.msra.mxu0 %v6329
        %v6331 = vand.u32 %v215, 4294901760
        %6332 = vmatpush.msra.mxu0 %v6331
        %v6333 = vand.u32 %v214, 4294901760
        %6334 = vmatpush.msra.mxu0 %v6333
        %v6335 = vand.u32 %v213, 4294901760
        %6336 = vmatpush.msra.mxu0 %v6335
        %v6337 = vand.u32 %v212, 4294901760
        %6338 = vmatpush.msra.mxu0 %v6337
        %v6339 = vand.u32 %v211, 4294901760
        %6340 = vmatpush.msra.mxu0 %v6339
        %v6341 = vand.u32 %v5809, 4294901760
        %6342 = vmatmul.f32.gmra.mxu0 %v6341
        %v6343 = vpop.f32.mrf.mxu0
        %v6344 = vadd.f32 %v6311, %v6343
        %v6345 = vand.u32 %v5812, 4294901760
        %6346 = vmatmul.f32.gmra.mxu0 %v6345
        %v6347 = vpop.f32.mrf.mxu0
        %v6348 = vadd.f32 %v6315, %v6347
        %6349 = vdwg.mxu0
        %v6351 = vsel %vm221, %v6076, 0
        %v6354 = vsel %vm221, %v6080, 0
        %v6357 = vsel %vm221, %v6344, 0
        %v6360 = vsel %vm221, %v6348, 0
        %6362 = vmatpush.xpose.msra.mxu0 0.0
        %6363 = vmatpush.xpose.msra.mxu0 0.0
        %6364 = vmatpush.xpose.msra.mxu0 0.0
        %6365 = vmatpush.xpose.msra.mxu0 0.0
        %6366 = vmatpush.xpose.msra.mxu0 0.0
        %6367 = vmatpush.xpose.msra.mxu0 0.0
        %6368 = vmatpush.xpose.msra.mxu0 0.0
        %6369 = vmatpush.xpose.msra.mxu0 0.0
        %6370 = vmatpush.xpose.msra.mxu0 0.0
        %6371 = vmatpush.xpose.msra.mxu0 0.0
        %6372 = vmatpush.xpose.msra.mxu0 0.0
        %6373 = vmatpush.xpose.msra.mxu0 0.0
        %6374 = vmatpush.xpose.msra.mxu0 0.0
        %6375 = vmatpush.xpose.msra.mxu0 0.0
        %v6376 = vand.u32 %v6360, 4294901760
        %6377 = vmatpush.xpose.msra.mxu0 %v6376
        %v6378 = vand.u32 %v6357, 4294901760
        %6379 = vmatpush.xpose.msra.mxu0 %v6378
        %v6380 = vand.u32 %v6351, 4294901760
        %v6381 = vsub.f32 %v6351, %v6380
        %v6382 = vand.u32 %v6381, 4294901760
        %v6383 = vsub.f32 %v6381, %v6382
        %v6384 = vand.u32 %v6383, 4294901760
        %6385 = vmatmul.f32.gmra.mxu0 %v6384
        %v6386 = vpop.f32.mrf.mxu0
        %v6387 = vadd.f32 0.0, %v6386
        %v6388 = vand.u32 %v6354, 4294901760
        %v6389 = vsub.f32 %v6354, %v6388
        %v6390 = vand.u32 %v6389, 4294901760
        %v6391 = vsub.f32 %v6389, %v6390
        %v6392 = vand.u32 %v6391, 4294901760
        %6393 = vmatmul.f32.gmra.mxu0 %v6392
        %v6394 = vpop.f32.mrf.mxu0
        %v6395 = vadd.f32 0.0, %v6394
        %6396 = vdwg.mxu0
        %6397 = vmatpush.xpose.msra.mxu0 0.0
        %6398 = vmatpush.xpose.msra.mxu0 0.0
        %6399 = vmatpush.xpose.msra.mxu0 0.0
        %6400 = vmatpush.xpose.msra.mxu0 0.0
        %6401 = vmatpush.xpose.msra.mxu0 0.0
        %6402 = vmatpush.xpose.msra.mxu0 0.0
        %6403 = vmatpush.xpose.msra.mxu0 0.0
        %6404 = vmatpush.xpose.msra.mxu0 0.0
        %6405 = vmatpush.xpose.msra.mxu0 0.0
        %6406 = vmatpush.xpose.msra.mxu0 0.0
        %6407 = vmatpush.xpose.msra.mxu0 0.0
        %6408 = vmatpush.xpose.msra.mxu0 0.0
        %6409 = vmatpush.xpose.msra.mxu0 0.0
        %6410 = vmatpush.xpose.msra.mxu0 0.0
        %v6411 = vand.u32 %v6360, 4294901760
        %v6412 = vsub.f32 %v6360, %v6411
        %v6413 = vand.u32 %v6412, 4294901760
        %v6414 = vsub.f32 %v6412, %v6413
        %v6415 = vand.u32 %v6414, 4294901760
        %6416 = vmatpush.xpose.msra.mxu0 %v6415
        %v6417 = vand.u32 %v6357, 4294901760
        %v6418 = vsub.f32 %v6357, %v6417
        %v6419 = vand.u32 %v6418, 4294901760
        %v6420 = vsub.f32 %v6418, %v6419
        %v6421 = vand.u32 %v6420, 4294901760
        %6422 = vmatpush.xpose.msra.mxu0 %v6421
        %v6423 = vand.u32 %v6351, 4294901760
        %6424 = vmatmul.f32.gmra.mxu0 %v6423
        %v6425 = vpop.f32.mrf.mxu0
        %v6426 = vadd.f32 %v6387, %v6425
        %v6427 = vand.u32 %v6354, 4294901760
        %6428 = vmatmul.f32.gmra.mxu0 %v6427
        %v6429 = vpop.f32.mrf.mxu0
        %v6430 = vadd.f32 %v6395, %v6429
        %6431 = vdwg.mxu0
        %6432 = vmatpush.xpose.msra.mxu0 0.0
        %6433 = vmatpush.xpose.msra.mxu0 0.0
        %6434 = vmatpush.xpose.msra.mxu0 0.0
        %6435 = vmatpush.xpose.msra.mxu0 0.0
        %6436 = vmatpush.xpose.msra.mxu0 0.0
        %6437 = vmatpush.xpose.msra.mxu0 0.0
        %6438 = vmatpush.xpose.msra.mxu0 0.0
        %6439 = vmatpush.xpose.msra.mxu0 0.0
        %6440 = vmatpush.xpose.msra.mxu0 0.0
        %6441 = vmatpush.xpose.msra.mxu0 0.0
        %6442 = vmatpush.xpose.msra.mxu0 0.0
        %6443 = vmatpush.xpose.msra.mxu0 0.0
        %6444 = vmatpush.xpose.msra.mxu0 0.0
        %6445 = vmatpush.xpose.msra.mxu0 0.0
        %v6446 = vand.u32 %v6360, 4294901760
        %v6447 = vsub.f32 %v6360, %v6446
        %6448 = vmatpush.xpose.msra.mxu0 %v6447
        %v6449 = vand.u32 %v6357, 4294901760
        %v6450 = vsub.f32 %v6357, %v6449
        %6451 = vmatpush.xpose.msra.mxu0 %v6450
        %v6452 = vand.u32 %v6351, 4294901760
        %v6453 = vsub.f32 %v6351, %v6452
        %6454 = vmatmul.f32.gmra.mxu0 %v6453
        %v6455 = vpop.f32.mrf.mxu0
        %v6456 = vadd.f32 %v6426, %v6455
        %v6457 = vand.u32 %v6354, 4294901760
        %v6458 = vsub.f32 %v6354, %v6457
        %6459 = vmatmul.f32.gmra.mxu0 %v6458
        %v6460 = vpop.f32.mrf.mxu0
        %v6461 = vadd.f32 %v6430, %v6460
        %6462 = vdwg.mxu0
        %6463 = vmatpush.xpose.msra.mxu0 0.0
        %6464 = vmatpush.xpose.msra.mxu0 0.0
        %6465 = vmatpush.xpose.msra.mxu0 0.0
        %6466 = vmatpush.xpose.msra.mxu0 0.0
        %6467 = vmatpush.xpose.msra.mxu0 0.0
        %6468 = vmatpush.xpose.msra.mxu0 0.0
        %6469 = vmatpush.xpose.msra.mxu0 0.0
        %6470 = vmatpush.xpose.msra.mxu0 0.0
        %6471 = vmatpush.xpose.msra.mxu0 0.0
        %6472 = vmatpush.xpose.msra.mxu0 0.0
        %6473 = vmatpush.xpose.msra.mxu0 0.0
        %6474 = vmatpush.xpose.msra.mxu0 0.0
        %6475 = vmatpush.xpose.msra.mxu0 0.0
        %6476 = vmatpush.xpose.msra.mxu0 0.0
        %v6477 = vand.u32 %v6360, 4294901760
        %6478 = vmatpush.xpose.msra.mxu0 %v6477
        %v6479 = vand.u32 %v6357, 4294901760
        %6480 = vmatpush.xpose.msra.mxu0 %v6479
        %v6481 = vand.u32 %v6351, 4294901760
        %v6482 = vsub.f32 %v6351, %v6481
        %v6483 = vand.u32 %v6482, 4294901760
        %6484 = vmatmul.f32.gmra.mxu0 %v6483
        %v6485 = vpop.f32.mrf.mxu0
        %v6486 = vadd.f32 %v6456, %v6485
        %v6487 = vand.u32 %v6354, 4294901760
        %v6488 = vsub.f32 %v6354, %v6487
        %v6489 = vand.u32 %v6488, 4294901760
        %6490 = vmatmul.f32.gmra.mxu0 %v6489
        %v6491 = vpop.f32.mrf.mxu0
        %v6492 = vadd.f32 %v6461, %v6491
        %6493 = vdwg.mxu0
        %6494 = vmatpush.xpose.msra.mxu0 0.0
        %6495 = vmatpush.xpose.msra.mxu0 0.0
        %6496 = vmatpush.xpose.msra.mxu0 0.0
        %6497 = vmatpush.xpose.msra.mxu0 0.0
        %6498 = vmatpush.xpose.msra.mxu0 0.0
        %6499 = vmatpush.xpose.msra.mxu0 0.0
        %6500 = vmatpush.xpose.msra.mxu0 0.0
        %6501 = vmatpush.xpose.msra.mxu0 0.0
        %6502 = vmatpush.xpose.msra.mxu0 0.0
        %6503 = vmatpush.xpose.msra.mxu0 0.0
        %6504 = vmatpush.xpose.msra.mxu0 0.0
        %6505 = vmatpush.xpose.msra.mxu0 0.0
        %6506 = vmatpush.xpose.msra.mxu0 0.0
        %6507 = vmatpush.xpose.msra.mxu0 0.0
        %v6508 = vand.u32 %v6360, 4294901760
        %v6509 = vsub.f32 %v6360, %v6508
        %v6510 = vand.u32 %v6509, 4294901760
        %6511 = vmatpush.xpose.msra.mxu0 %v6510
        %v6512 = vand.u32 %v6357, 4294901760
        %v6513 = vsub.f32 %v6357, %v6512
        %v6514 = vand.u32 %v6513, 4294901760
        %6515 = vmatpush.xpose.msra.mxu0 %v6514
        %v6516 = vand.u32 %v6351, 4294901760
        %6517 = vmatmul.f32.gmra.mxu0 %v6516
        %v6518 = vpop.f32.mrf.mxu0
        %v6519 = vadd.f32 %v6486, %v6518
        %v6520 = vand.u32 %v6354, 4294901760
        %6521 = vmatmul.f32.gmra.mxu0 %v6520
        %v6522 = vpop.f32.mrf.mxu0
        %v6523 = vadd.f32 %v6492, %v6522
        %6524 = vdwg.mxu0
        %6525 = vmatpush.xpose.msra.mxu0 0.0
        %6526 = vmatpush.xpose.msra.mxu0 0.0
        %6527 = vmatpush.xpose.msra.mxu0 0.0
        %6528 = vmatpush.xpose.msra.mxu0 0.0
        %6529 = vmatpush.xpose.msra.mxu0 0.0
        %6530 = vmatpush.xpose.msra.mxu0 0.0
        %6531 = vmatpush.xpose.msra.mxu0 0.0
        %6532 = vmatpush.xpose.msra.mxu0 0.0
        %6533 = vmatpush.xpose.msra.mxu0 0.0
        %6534 = vmatpush.xpose.msra.mxu0 0.0
        %6535 = vmatpush.xpose.msra.mxu0 0.0
        %6536 = vmatpush.xpose.msra.mxu0 0.0
        %6537 = vmatpush.xpose.msra.mxu0 0.0
        %6538 = vmatpush.xpose.msra.mxu0 0.0
        %v6539 = vand.u32 %v6360, 4294901760
        %6540 = vmatpush.xpose.msra.mxu0 %v6539
        %v6541 = vand.u32 %v6357, 4294901760
        %6542 = vmatpush.xpose.msra.mxu0 %v6541
        %v6543 = vand.u32 %v6351, 4294901760
        %6544 = vmatmul.f32.gmra.mxu0 %v6543
        %v6545 = vpop.f32.mrf.mxu0
        %v6546 = vadd.f32 %v6519, %v6545
        %v6547 = vand.u32 %v6354, 4294901760
        %6548 = vmatmul.f32.gmra.mxu0 %v6547
        %v6549 = vpop.f32.mrf.mxu0
        %v6550 = vadd.f32 %v6523, %v6549
        %6551 = vdwg.mxu0
        %v6552 = vsel %vm966, %v6546, -inf
        %6553 = vmax.xlane.f32.xlu0 %v6552
        %v6554 = vpop.xlane.xlu0 %6553
        %v6555 = vsel %vm966, %v6550, -inf
        %6556 = vmax.xlane.f32.xlu0 %v6555
        %v6557 = vpop.xlane.xlu0 %6556
        %v6558 = vsub.f32 %v6546, %v6554
        %v6559 = vsub.f32 %v6550, %v6557
        %v6560 = vmul.f32 %v6558, 1.442695
        %v6561 = vpow.pop %v6560
        %v6562 = vmul.f32 %v6559, 1.442695
        %v6563 = vpow.pop %v6562
        %v6564 = vsel %vm966, %v6561, 0.0
        %6565 = vadd.xlane.f32.xlu0 %v6564
        %v6566 = vpop.xlane.xlu0 %6565
        %v6567 = vsel %vm966, %v6563, 0.0
        %6568 = vadd.xlane.f32.xlu0 %v6567
        %v6569 = vpop.xlane.xlu0 %6568
        %v6570 = vrcp.pop %v6566
        %v6571 = vmul.f32 %v6566, %v6570
        %v6572 = vsub.f32 1.0, %v6571
        %v6573 = vmul.f32 %v6570, %v6572
        %v6574 = vadd.f32 %v6570, %v6573
        %vm6575 = vweird.f32 %v6566
        %vm6576 = vweird.f32 %v6570
        %vm6577 = vmor %vm6575, %vm6576
        %v6578 = vsel %vm6577, %v6570, %v6574
        %v6579 = vand.u32 2147483647, %v6566
        %vm6580 = vcmp.eq.f32.partialorder %v6579, 8.507059e+37
        %v6581 = vand.u32 %v6566, 2147483648
        %v6582 = vor.u32 1.1754944e-38, %v6581
        %v6583 = vsel %vm6580, %v6582, %v6578
        %v6584 = vmul.f32 %v6561, %v6583
        %v6585 = vrcp.pop %v6569
        %v6586 = vmul.f32 %v6569, %v6585
        %v6587 = vsub.f32 1.0, %v6586
        %v6588 = vmul.f32 %v6585, %v6587
        %v6589 = vadd.f32 %v6585, %v6588
        %vm6590 = vweird.f32 %v6569
        %vm6591 = vweird.f32 %v6585
        %vm6592 = vmor %vm6590, %vm6591
        %v6593 = vsel %vm6592, %v6585, %v6589
        %v6594 = vand.u32 2147483647, %v6569
        %vm6595 = vcmp.eq.f32.partialorder %v6594, 8.507059e+37
        %v6596 = vand.u32 %v6569, 2147483648
        %v6597 = vor.u32 1.1754944e-38, %v6596
        %v6598 = vsel %vm6595, %v6597, %v6593
        %v6599 = vmul.f32 %v6563, %v6598
        %s6600 = scalar_lea.vmem %s190, 112 [#allocation2]
        %6601 = vst.msk [vmem:[%s6600] sm:$0xff] %vm966, %v6584
        %6602 = vst.msk [vmem:[%s6600 + $0x8] sm:$0xff] %vm966, %v6599
        %s6603 = sand.u32 %s109, 1
        %s6604 = scalar_lea.sflag [#allocation3], %s6603
        %s6605 = sand.u32 %s109, 1
        %s6606 = smul.addr %s6605, 128
        %s6607 = scalar_lea.vmem [#allocation2], %s6606
        // Predicated region
        $region33: #{compute_g_spa.1} parent=31 // pred_check
          %p6608 = pneg %p119
        $region34: #{compute_g_spa.1} parent=31 // pred_check_branch
          %6610 = sbr.rel (%p6608) target = $region36
        $region35: #{compute_g_spa.1} parent=31 // pred_region
          %s6611 = smul.u32 8, %s22
          %6613 = vsyncadd %s6604, 0
          %s6614 = smul.addr %s6611, 2
          %s6615 = smul.addr %s21, 16
          %s6616 = sadd.s32 %s6614, %s6615
          %s6617 = smul.addr %s6616, 8
          %s6618 = scalar_lea.hbm %s3, %s6617
          %s6619 = sshll.u32 %s6607, 4
          %s6620 = int_to_ptr.vmem [resolvable:$true] %s6619
          %s6621 = sshll.u32 %s6618, 4
          %s6622 = int_to_ptr.hbm [resolvable:$true] %s6621
          %6627 = dma.vmem_to_hbm [thread:$0]  %s6620, 2048, %s6622, %s6604, 128, 128, 8
        $region36: #{compute_g_spa.1} parent=31 // pred_fallthru
          _
      $region32: #{compute_g_spa.1} parent=5 // pred_fallthru
        _
      %p6628 = scmp.le.s32.totalorder 2, %s12
      // Predicated region
      $region37: #{compute_g_spa.1} parent=5 // pred_check
        %p6629 = pneg %p6628
      $region38: #{compute_g_spa.1} parent=5 // pred_check_branch
        %6631 = sbr.rel (%p6629) target = $region40
      $region39: #{compute_g_spa.1} parent=5 // pred_region
        %s6632 = ssub.s32 %s12, 2
        // Predicated region
        $region41: #{compute_g_spa.1} parent=39 // pred_check
          %p6633 = pneg %p125
        $region42: #{compute_g_spa.1} parent=39 // pred_check_branch
          %6635 = sbr.rel (%p6633) target = $region44
        $region43: #{compute_g_spa.1} parent=39 // pred_region
          %s6636 = sand.u32 %s110, 1
          %s6637 = scalar_lea.sflag [#allocation3], %s6636
          %s6638 = sand.u32 %s110, 1
          %s6639 = smul.addr %s6638, 128
          %s6640 = scalar_lea.vmem [#allocation2], %s6639
          %6642 = dma.done %s6637, 2048
        $region44: #{compute_g_spa.1} parent=39 // pred_fallthru
          _
      $region40: #{compute_g_spa.1} parent=5 // pred_fallthru
        _
    $region6: #{compute_g_spa.1} parent=1 // loop_footer
      %s16 = sadd.s32 1, %s12
    $region7: #{compute_g_spa.1} parent=1 // loop_footer_branch
      %11 = sbr.rel target = $region3
    $region8: #{compute_g_spa.1} parent=1 // loop_exit
      _
    %6643 = vsyncpa [#allocation3], 1
    %s6644 = scalar_lea.sflag [#allocation3], 1
    %6645 = vsyncpa %s6644, 1

</llo_original>
